<compile_context>
chip_gen: v7x
topology: tpu7x:2x2x1
jax: 0.10.0
libtpu: 0.0.40
codegen_flags: <defaults>
</compile_context>

<pallas_src>
import math

import jax
import jax.numpy as jnp
from jax.experimental import pallas as pl
from jax.experimental.pallas import tpu as pltpu


# --------------------------- fused forward kernel ---------------------------

def _build_forward_kernel(num_layers, num_heads):
    """Ref order: feat, lap, mask_bias, u_sel, i_sel,
    [wqkv, bqkv, wo, bo, aff_w, aff_b] * num_layers, out."""

    def kernel(*refs):
        feat_ref, lap_ref, bias_ref, usel_ref, isel_ref = refs[:5]
        layer_refs = refs[5:5 + 6 * num_layers]
        o_ref = refs[5 + 6 * num_layers]

        feat = feat_ref[...]
        lap = lap_ref[...]
        bias = bias_ref[...]
        usel = usel_ref[...]
        isel = isel_ref[...]
        n_nodes = feat.shape[0]

        def seg_score(x):
            # gather(userIdx) / gather(itemIdx) as one-hot matmuls + row dot;
            # summing per-segment dots == row_dot on the concatenated finalEmbd.
            u = jnp.dot(usel, x, preferred_element_type=jnp.float32)
            v = jnp.dot(isel, x, preferred_element_type=jnp.float32)
            return jnp.sum(u * v, axis=-1, keepdims=True)

        score = seg_score(feat)

        for layer in range(num_layers):
            (wqkv_ref, bqkv_ref, wo_ref, bo_ref,
             affw_ref, affb_ref) = layer_refs[6 * layer:6 * layer + 6]
            d = wqkv_ref.shape[0]
            dh = d // num_heads
            scale = 1.0 / math.sqrt(dh)

            # --- ATTLayer_mask ---
            # TODO(synk): ATTLayer_mask's source was not provided; implemented
            # as a standard multi-head masked scaled-dot-product self-attention
            # with an output projection; dropout (droprate) omitted (eval).
            qkv = (jnp.dot(feat, wqkv_ref[...], preferred_element_type=jnp.float32)
                   + bqkv_ref[...])
            q = qkv[:, 0 * d:1 * d] * scale        # fold scale in once
            k = qkv[:, 1 * d:2 * d]
            v = qkv[:, 2 * d:3 * d]
            wo = wo_ref[...]

            # concat(head_outs) @ wo  ==  sum_h head_out_h @ wo[h*dh:(h+1)*dh, :]
            proj = jnp.zeros((n_nodes, d), jnp.float32)
            for h in range(num_heads):
                sl = slice(h * dh, (h + 1) * dh)
                qh, kh, vh = q[:, sl], k[:, sl], v[:, sl]
                s = jax.lax.dot_general(
                    qh, kh, (((1,), (1,)), ((), ())),
                    preferred_element_type=jnp.float32)
                s = s + bias                                  # additive mask
                s = s - jnp.max(s, axis=-1, keepdims=True)
                p = jnp.exp(s)
                p = p * pl.reciprocal(jnp.sum(p, axis=-1, keepdims=True),
                                      approx=True)
                oh = jnp.dot(p, vh, preferred_element_type=jnp.float32)
                proj = proj + jnp.dot(oh, wo[sl, :],
                                      preferred_element_type=jnp.float32)
            proj = proj + bo_ref[...]

            # --- GPLayer: (L + selfLoop) @ F  ==  L @ F + F ---
            gp = jnp.dot(lap, proj, preferred_element_type=jnp.float32) + proj

            # --- Affine + ReLU ---
            feat = jnp.maximum(
                jnp.dot(gp, affw_ref[...], preferred_element_type=jnp.float32)
                + affb_ref[...], 0.0)

            score = score + seg_score(feat)

        # lane-dense output tile: scores replicated across 128 lanes.
        o_ref[...] = jnp.broadcast_to(score, o_ref.shape)

    return kernel


# ----------------------------- Model forward -------------------------------

def _selection_matrix(idx, rows_pad, n_cols):
    sel = jax.nn.one_hot(idx, n_cols, dtype=jnp.float32)
    pad = rows_pad - sel.shape[0]
    if pad > 0:
        sel = jnp.concatenate([sel, jnp.zeros((pad, n_cols), jnp.float32)], axis=0)
    return sel


def gacf_mask_forward(params, lap, mask, user_idx, item_idx, user_num):
    # getFeatureMat: cat(userEmbd, itemEmbd) along the node axis.
    features = jnp.concatenate([params["uEmbd"], params["iEmbd"]], axis=0)
    n = features.shape[0]
    num_layers = len(params["layers"])
    num_heads = params["layers"][0]["att"]["num_heads"]

    # additive mask bias computed once (0 where allowed, -1e9 where masked).
    mask_bias = (mask.astype(jnp.float32) - 1.0) * 1e9

    b = int(user_idx.shape[0])
    b_pad = max(8, ((b + 7) // 8) * 8)
    u_sel = _selection_matrix(user_idx, b_pad, n)
    i_sel = _selection_matrix(item_idx + user_num, b_pad, n)

    layer_args = []
    for lp in params["layers"]:
        att = lp["att"]
        wqkv = jnp.concatenate([att["wq"], att["wk"], att["wv"]], axis=1)   # (D, 3D)
        bqkv = jnp.concatenate([att["bq"], att["bk"], att["bv"]])[None, :]  # (1, 3D)
        layer_args += [wqkv, bqkv, att["wo"], att["bo"][None, :],
                       lp["aff_w"], lp["aff_b"][None, :]]

    inputs = [features, lap, mask_bias, u_sel, i_sel] + layer_args

    kernel = _build_forward_kernel(num_layers, num_heads)
    vmem = pl.BlockSpec(memory_space=pltpu.MemorySpace.VMEM)
    out = pl.pallas_call(
        kernel,
        out_shape=jax.ShapeDtypeStruct((b_pad, 128), jnp.float32),
        in_specs=[vmem] * len(inputs),
        out_specs=vmem,
        compiler_params=pltpu.CompilerParams(vmem_limit_bytes=32 * 1024 * 1024),
    )(*inputs)
    return out[:b, 0]


# ----------------------------- Init (deterministic) ------------------------

def xavier_uniform(key, shape):
    fan_in, fan_out = shape
    limit = math.sqrt(6.0 / (fan_in + fan_out))
    return jax.random.uniform(key, shape, jnp.float32, -limit, limit)


def init_params(key, user_num, item_num, embed_size, layers, num_heads=8):
    n_pairs = len(layers) - 1
    keys = jax.random.split(key, 2 + 5 * n_pairs)
    params = {
        "uEmbd": 0.01 * jax.random.normal(keys[0], (user_num, embed_size), jnp.float32),
        "iEmbd": 0.01 * jax.random.normal(keys[1], (item_num, embed_size), jnp.float32),
        "layers": [],
    }
    ki = 2
    for frm, to in zip(layers[:-1], layers[1:]):
        att = {
            "num_heads": num_heads,
            "wq": xavier_uniform(keys[ki + 0], (frm, frm)), "bq": jnp.zeros((frm,), jnp.float32),
            "wk": xavier_uniform(keys[ki + 1], (frm, frm)), "bk": jnp.zeros((frm,), jnp.float32),
            "wv": xavier_uniform(keys[ki + 2], (frm, frm)), "bv": jnp.zeros((frm,), jnp.float32),
            "wo": xavier_uniform(keys[ki + 3], (frm, frm)), "bo": jnp.zeros((frm,), jnp.float32),
        }
        params["layers"].append({
            "att": att,
            "aff_w": xavier_uniform(keys[ki + 4], (frm, to)),  # x @ W (transposed vs torch)
            "aff_b": jnp.zeros((to,), jnp.float32),
        })
        ki += 5
    return params


# ----------------------------------- Main -----------------------------------

if __name__ == "__main__":
    user_num, item_num = 8, 8
    embed_size = 32
    layers = [32, 16, 16]
    droprate = 0.2  # unused: deterministic/eval mode
    n = user_num + item_num

    key = jax.random.PRNGKey(0)
    k_param, k_adj, k_mask = jax.random.split(key, 3)

    params = init_params(k_param, user_num, item_num, embed_size, layers)

    # Dense stand-in for the sparse normalized adjacency / laplacian `adj`.
    adj_bin = (jax.random.uniform(k_adj, (n, n)) < 0.3).astype(jnp.float32)
    adj_bin = jnp.maximum(adj_bin, adj_bin.T)
    deg = jnp.maximum(adj_bin.sum(axis=1, keepdims=True), 1.0)
    lap = adj_bin / deg  # (n, n) float32

    # attention mask: 1 = allowed, 0 = masked; keep self-attention allowed.
    mask = (jax.random.uniform(k_mask, (n, n)) < 0.5).astype(jnp.float32)
    mask = jnp.maximum(mask, jnp.eye(n, dtype=jnp.float32))

    user_idx = jnp.array([0, 1, 2, 3], dtype=jnp.int32)
    item_idx = jnp.array([0, 1, 2, 3], dtype=jnp.int32)

    out = gacf_mask_forward(params, lap, mask, user_idx, item_idx, user_num)
    out = jax.block_until_ready(out)
    assert out.shape == (4,) and out.dtype == jnp.float32
    print("KERNEL_OK")
</pallas_src>

<mosaic_0001>
module attributes {stable_mosaic.version = 11 : i64} {
  func.func @kernel(%arg0: memref<16x32xf32, #tpu.memory_space<vmem>>, %arg1: memref<16x16xf32, #tpu.memory_space<vmem>>, %arg2: memref<16x16xf32, #tpu.memory_space<vmem>>, %arg3: memref<8x16xf32, #tpu.memory_space<vmem>>, %arg4: memref<8x16xf32, #tpu.memory_space<vmem>>, %arg5: memref<32x96xf32, #tpu.memory_space<vmem>>, %arg6: memref<1x96xf32, #tpu.memory_space<vmem>>, %arg7: memref<32x32xf32, #tpu.memory_space<vmem>>, %arg8: memref<1x32xf32, #tpu.memory_space<vmem>>, %arg9: memref<32x16xf32, #tpu.memory_space<vmem>>, %arg10: memref<1x16xf32, #tpu.memory_space<vmem>>, %arg11: memref<16x48xf32, #tpu.memory_space<vmem>>, %arg12: memref<1x48xf32, #tpu.memory_space<vmem>>, %arg13: memref<16x16xf32, #tpu.memory_space<vmem>>, %arg14: memref<1x16xf32, #tpu.memory_space<vmem>>, %arg15: memref<16x16xf32, #tpu.memory_space<vmem>>, %arg16: memref<1x16xf32, #tpu.memory_space<vmem>>, %arg17: memref<8x128xf32, #tpu.memory_space<vmem>>) attributes {dimension_semantics = [], scalar_prefetch = 0 : i64, scratch_operands = 0 : i64, tpu.core_type = #tpu.core_type<tc>} {
    %c0 = arith.constant 0 : index
    %c0_0 = arith.constant 0 : index
    %0 = vector.load %arg0[%c0, %c0_0] : memref<16x32xf32, #tpu.memory_space<vmem>>, vector<16x32xf32>
    %c0_1 = arith.constant 0 : index
    %c0_2 = arith.constant 0 : index
    %1 = vector.load %arg1[%c0_1, %c0_2] : memref<16x16xf32, #tpu.memory_space<vmem>>, vector<16x16xf32>
    %c0_3 = arith.constant 0 : index
    %c0_4 = arith.constant 0 : index
    %2 = vector.load %arg2[%c0_3, %c0_4] : memref<16x16xf32, #tpu.memory_space<vmem>>, vector<16x16xf32>
    %c0_5 = arith.constant 0 : index
    %c0_6 = arith.constant 0 : index
    %3 = vector.load %arg3[%c0_5, %c0_6] : memref<8x16xf32, #tpu.memory_space<vmem>>, vector<8x16xf32>
    %c0_7 = arith.constant 0 : index
    %c0_8 = arith.constant 0 : index
    %4 = vector.load %arg4[%c0_7, %c0_8] : memref<8x16xf32, #tpu.memory_space<vmem>>, vector<8x16xf32>
    %cst = arith.constant dense<0.000000e+00> : vector<8x32xf32>
    %5 = tpu.matmul %3, %0, %cst {dimension_numbers = #tpu.dot_dimension_numbers<[1], [0], [0], [1], [0, 0, 1, 1], [], []>} : vector<8x16xf32>, vector<16x32xf32>, vector<8x32xf32> -> vector<8x32xf32>
    %cst_9 = arith.constant dense<0.000000e+00> : vector<8x32xf32>
    %6 = tpu.matmul %4, %0, %cst_9 {dimension_numbers = #tpu.dot_dimension_numbers<[1], [0], [0], [1], [0, 0, 1, 1], [], []>} : vector<8x16xf32>, vector<16x32xf32>, vector<8x32xf32> -> vector<8x32xf32>
    %7 = arith.mulf %5, %6 : vector<8x32xf32>
    %cst_10 = arith.constant dense<0.000000e+00> : vector<8xf32>
    %8 = vector.multi_reduction <add>, %7, %cst_10 [1] : vector<8x32xf32> to vector<8xf32>
    %9 = vector.shape_cast %8 : vector<8xf32> to vector<8x1xf32>
    %c0_11 = arith.constant 0 : index
    %c0_12 = arith.constant 0 : index
    %10 = vector.load %arg5[%c0_11, %c0_12] : memref<32x96xf32, #tpu.memory_space<vmem>>, vector<32x96xf32>
    %cst_13 = arith.constant dense<0.000000e+00> : vector<16x96xf32>
    %11 = tpu.matmul %0, %10, %cst_13 {dimension_numbers = #tpu.dot_dimension_numbers<[1], [0], [0], [1], [0, 0, 1, 1], [], []>} : vector<16x32xf32>, vector<32x96xf32>, vector<16x96xf32> -> vector<16x96xf32>
    %c0_14 = arith.constant 0 : index
    %c0_15 = arith.constant 0 : index
    %12 = vector.load %arg6[%c0_14, %c0_15] : memref<1x96xf32, #tpu.memory_space<vmem>>, vector<1x96xf32>
    %13 = vector.broadcast %12 : vector<1x96xf32> to vector<16x96xf32>
    %14 = arith.addf %11, %13 : vector<16x96xf32>
    %15 = vector.extract_strided_slice %14 {offsets = [0, 0], sizes = [16, 32], strides = [1, 1]} : vector<16x96xf32> to vector<16x32xf32>
    %cst_16 = arith.constant 5.000000e-01 : f32
    %16 = vector.broadcast %cst_16 : f32 to vector<16x32xf32>
    %17 = arith.mulf %15, %16 : vector<16x32xf32>
    %18 = vector.extract_strided_slice %14 {offsets = [0, 32], sizes = [16, 32], strides = [1, 1]} : vector<16x96xf32> to vector<16x32xf32>
    %19 = vector.extract_strided_slice %14 {offsets = [0, 64], sizes = [16, 32], strides = [1, 1]} : vector<16x96xf32> to vector<16x32xf32>
    %c0_17 = arith.constant 0 : index
    %c0_18 = arith.constant 0 : index
    %20 = vector.load %arg7[%c0_17, %c0_18] : memref<32x32xf32, #tpu.memory_space<vmem>>, vector<32x32xf32>
    %cst_19 = arith.constant 0.000000e+00 : f32
    %21 = vector.broadcast %cst_19 : f32 to vector<16x32xf32>
    %22 = vector.extract_strided_slice %17 {offsets = [0, 0], sizes = [16, 4], strides = [1, 1]} : vector<16x32xf32> to vector<16x4xf32>
    %23 = vector.extract_strided_slice %18 {offsets = [0, 0], sizes = [16, 4], strides = [1, 1]} : vector<16x32xf32> to vector<16x4xf32>
    %24 = vector.extract_strided_slice %19 {offsets = [0, 0], sizes = [16, 4], strides = [1, 1]} : vector<16x32xf32> to vector<16x4xf32>
    %cst_20 = arith.constant dense<0.000000e+00> : vector<16x16xf32>
    %25 = tpu.matmul %22, %23, %cst_20 {dimension_numbers = #tpu.dot_dimension_numbers<[1], [1], [0], [0], [0, 0, 1, 0], [], []>} : vector<16x4xf32>, vector<16x4xf32>, vector<16x16xf32> -> vector<16x16xf32>
    %26 = arith.addf %25, %2 : vector<16x16xf32>
    %cst_21 = arith.constant dense<0xFF800000> : vector<16xf32>
    %27 = vector.multi_reduction <maximumf>, %26, %cst_21 [1] : vector<16x16xf32> to vector<16xf32>
    %28 = vector.shape_cast %27 : vector<16xf32> to vector<16x1xf32>
    %29 = vector.broadcast %28 : vector<16x1xf32> to vector<16x16xf32>
    %30 = arith.subf %26, %29 : vector<16x16xf32>
    %31 = math.exp %30 : vector<16x16xf32>
    %cst_22 = arith.constant dense<0.000000e+00> : vector<16xf32>
    %32 = vector.multi_reduction <add>, %31, %cst_22 [1] : vector<16x16xf32> to vector<16xf32>
    %33 = vector.shape_cast %32 : vector<16xf32> to vector<16x1xf32>
    %34 = tpu.reciprocal %33 {approx = true} : vector<16x1xf32> -> vector<16x1xf32>
    %35 = vector.broadcast %34 : vector<16x1xf32> to vector<16x16xf32>
    %36 = arith.mulf %31, %35 : vector<16x16xf32>
    %cst_23 = arith.constant dense<0.000000e+00> : vector<16x4xf32>
    %37 = tpu.matmul %36, %24, %cst_23 {dimension_numbers = #tpu.dot_dimension_numbers<[1], [0], [0], [1], [0, 0, 1, 1], [], []>} : vector<16x16xf32>, vector<16x4xf32>, vector<16x4xf32> -> vector<16x4xf32>
    %38 = vector.extract_strided_slice %20 {offsets = [0, 0], sizes = [4, 32], strides = [1, 1]} : vector<32x32xf32> to vector<4x32xf32>
    %cst_24 = arith.constant dense<0.000000e+00> : vector<16x32xf32>
    %39 = tpu.matmul %37, %38, %cst_24 {dimension_numbers = #tpu.dot_dimension_numbers<[1], [0], [0], [1], [0, 0, 1, 1], [], []>} : vector<16x4xf32>, vector<4x32xf32>, vector<16x32xf32> -> vector<16x32xf32>
    %40 = arith.addf %21, %39 : vector<16x32xf32>
    %41 = vector.extract_strided_slice %17 {offsets = [0, 4], sizes = [16, 4], strides = [1, 1]} : vector<16x32xf32> to vector<16x4xf32>
    %42 = vector.extract_strided_slice %18 {offsets = [0, 4], sizes = [16, 4], strides = [1, 1]} : vector<16x32xf32> to vector<16x4xf32>
    %43 = vector.extract_strided_slice %19 {offsets = [0, 4], sizes = [16, 4], strides = [1, 1]} : vector<16x32xf32> to vector<16x4xf32>
    %cst_25 = arith.constant dense<0.000000e+00> : vector<16x16xf32>
    %44 = tpu.matmul %41, %42, %cst_25 {dimension_numbers = #tpu.dot_dimension_numbers<[1], [1], [0], [0], [0, 0, 1, 0], [], []>} : vector<16x4xf32>, vector<16x4xf32>, vector<16x16xf32> -> vector<16x16xf32>
    %45 = arith.addf %44, %2 : vector<16x16xf32>
    %cst_26 = arith.constant dense<0xFF800000> : vector<16xf32>
    %46 = vector.multi_reduction <maximumf>, %45, %cst_26 [1] : vector<16x16xf32> to vector<16xf32>
    %47 = vector.shape_cast %46 : vector<16xf32> to vector<16x1xf32>
    %48 = vector.broadcast %47 : vector<16x1xf32> to vector<16x16xf32>
    %49 = arith.subf %45, %48 : vector<16x16xf32>
    %50 = math.exp %49 : vector<16x16xf32>
    %cst_27 = arith.constant dense<0.000000e+00> : vector<16xf32>
    %51 = vector.multi_reduction <add>, %50, %cst_27 [1] : vector<16x16xf32> to vector<16xf32>
    %52 = vector.shape_cast %51 : vector<16xf32> to vector<16x1xf32>
    %53 = tpu.reciprocal %52 {approx = true} : vector<16x1xf32> -> vector<16x1xf32>
    %54 = vector.broadcast %53 : vector<16x1xf32> to vector<16x16xf32>
    %55 = arith.mulf %50, %54 : vector<16x16xf32>
    %cst_28 = arith.constant dense<0.000000e+00> : vector<16x4xf32>
    %56 = tpu.matmul %55, %43, %cst_28 {dimension_numbers = #tpu.dot_dimension_numbers<[1], [0], [0], [1], [0, 0, 1, 1], [], []>} : vector<16x16xf32>, vector<16x4xf32>, vector<16x4xf32> -> vector<16x4xf32>
    %57 = vector.extract_strided_slice %20 {offsets = [4, 0], sizes = [4, 32], strides = [1, 1]} : vector<32x32xf32> to vector<4x32xf32>
    %cst_29 = arith.constant dense<0.000000e+00> : vector<16x32xf32>
    %58 = tpu.matmul %56, %57, %cst_29 {dimension_numbers = #tpu.dot_dimension_numbers<[1], [0], [0], [1], [0, 0, 1, 1], [], []>} : vector<16x4xf32>, vector<4x32xf32>, vector<16x32xf32> -> vector<16x32xf32>
    %59 = arith.addf %40, %58 : vector<16x32xf32>
    %60 = vector.extract_strided_slice %17 {offsets = [0, 8], sizes = [16, 4], strides = [1, 1]} : vector<16x32xf32> to vector<16x4xf32>
    %61 = vector.extract_strided_slice %18 {offsets = [0, 8], sizes = [16, 4], strides = [1, 1]} : vector<16x32xf32> to vector<16x4xf32>
    %62 = vector.extract_strided_slice %19 {offsets = [0, 8], sizes = [16, 4], strides = [1, 1]} : vector<16x32xf32> to vector<16x4xf32>
    %cst_30 = arith.constant dense<0.000000e+00> : vector<16x16xf32>
    %63 = tpu.matmul %60, %61, %cst_30 {dimension_numbers = #tpu.dot_dimension_numbers<[1], [1], [0], [0], [0, 0, 1, 0], [], []>} : vector<16x4xf32>, vector<16x4xf32>, vector<16x16xf32> -> vector<16x16xf32>
    %64 = arith.addf %63, %2 : vector<16x16xf32>
    %cst_31 = arith.constant dense<0xFF800000> : vector<16xf32>
    %65 = vector.multi_reduction <maximumf>, %64, %cst_31 [1] : vector<16x16xf32> to vector<16xf32>
    %66 = vector.shape_cast %65 : vector<16xf32> to vector<16x1xf32>
    %67 = vector.broadcast %66 : vector<16x1xf32> to vector<16x16xf32>
    %68 = arith.subf %64, %67 : vector<16x16xf32>
    %69 = math.exp %68 : vector<16x16xf32>
    %cst_32 = arith.constant dense<0.000000e+00> : vector<16xf32>
    %70 = vector.multi_reduction <add>, %69, %cst_32 [1] : vector<16x16xf32> to vector<16xf32>
    %71 = vector.shape_cast %70 : vector<16xf32> to vector<16x1xf32>
    %72 = tpu.reciprocal %71 {approx = true} : vector<16x1xf32> -> vector<16x1xf32>
    %73 = vector.broadcast %72 : vector<16x1xf32> to vector<16x16xf32>
    %74 = arith.mulf %69, %73 : vector<16x16xf32>
    %cst_33 = arith.constant dense<0.000000e+00> : vector<16x4xf32>
    %75 = tpu.matmul %74, %62, %cst_33 {dimension_numbers = #tpu.dot_dimension_numbers<[1], [0], [0], [1], [0, 0, 1, 1], [], []>} : vector<16x16xf32>, vector<16x4xf32>, vector<16x4xf32> -> vector<16x4xf32>
    %76 = vector.extract_strided_slice %20 {offsets = [8, 0], sizes = [4, 32], strides = [1, 1]} : vector<32x32xf32> to vector<4x32xf32>
    %cst_34 = arith.constant dense<0.000000e+00> : vector<16x32xf32>
    %77 = tpu.matmul %75, %76, %cst_34 {dimension_numbers = #tpu.dot_dimension_numbers<[1], [0], [0], [1], [0, 0, 1, 1], [], []>} : vector<16x4xf32>, vector<4x32xf32>, vector<16x32xf32> -> vector<16x32xf32>
    %78 = arith.addf %59, %77 : vector<16x32xf32>
    %79 = vector.extract_strided_slice %17 {offsets = [0, 12], sizes = [16, 4], strides = [1, 1]} : vector<16x32xf32> to vector<16x4xf32>
    %80 = vector.extract_strided_slice %18 {offsets = [0, 12], sizes = [16, 4], strides = [1, 1]} : vector<16x32xf32> to vector<16x4xf32>
    %81 = vector.extract_strided_slice %19 {offsets = [0, 12], sizes = [16, 4], strides = [1, 1]} : vector<16x32xf32> to vector<16x4xf32>
    %cst_35 = arith.constant dense<0.000000e+00> : vector<16x16xf32>
    %82 = tpu.matmul %79, %80, %cst_35 {dimension_numbers = #tpu.dot_dimension_numbers<[1], [1], [0], [0], [0, 0, 1, 0], [], []>} : vector<16x4xf32>, vector<16x4xf32>, vector<16x16xf32> -> vector<16x16xf32>
    %83 = arith.addf %82, %2 : vector<16x16xf32>
    %cst_36 = arith.constant dense<0xFF800000> : vector<16xf32>
    %84 = vector.multi_reduction <maximumf>, %83, %cst_36 [1] : vector<16x16xf32> to vector<16xf32>
    %85 = vector.shape_cast %84 : vector<16xf32> to vector<16x1xf32>
    %86 = vector.broadcast %85 : vector<16x1xf32> to vector<16x16xf32>
    %87 = arith.subf %83, %86 : vector<16x16xf32>
    %88 = math.exp %87 : vector<16x16xf32>
    %cst_37 = arith.constant dense<0.000000e+00> : vector<16xf32>
    %89 = vector.multi_reduction <add>, %88, %cst_37 [1] : vector<16x16xf32> to vector<16xf32>
    %90 = vector.shape_cast %89 : vector<16xf32> to vector<16x1xf32>
    %91 = tpu.reciprocal %90 {approx = true} : vector<16x1xf32> -> vector<16x1xf32>
    %92 = vector.broadcast %91 : vector<16x1xf32> to vector<16x16xf32>
    %93 = arith.mulf %88, %92 : vector<16x16xf32>
    %cst_38 = arith.constant dense<0.000000e+00> : vector<16x4xf32>
    %94 = tpu.matmul %93, %81, %cst_38 {dimension_numbers = #tpu.dot_dimension_numbers<[1], [0], [0], [1], [0, 0, 1, 1], [], []>} : vector<16x16xf32>, vector<16x4xf32>, vector<16x4xf32> -> vector<16x4xf32>
    %95 = vector.extract_strided_slice %20 {offsets = [12, 0], sizes = [4, 32], strides = [1, 1]} : vector<32x32xf32> to vector<4x32xf32>
    %cst_39 = arith.constant dense<0.000000e+00> : vector<16x32xf32>
    %96 = tpu.matmul %94, %95, %cst_39 {dimension_numbers = #tpu.dot_dimension_numbers<[1], [0], [0], [1], [0, 0, 1, 1], [], []>} : vector<16x4xf32>, vector<4x32xf32>, vector<16x32xf32> -> vector<16x32xf32>
    %97 = arith.addf %78, %96 : vector<16x32xf32>
    %98 = vector.extract_strided_slice %17 {offsets = [0, 16], sizes = [16, 4], strides = [1, 1]} : vector<16x32xf32> to vector<16x4xf32>
    %99 = vector.extract_strided_slice %18 {offsets = [0, 16], sizes = [16, 4], strides = [1, 1]} : vector<16x32xf32> to vector<16x4xf32>
    %100 = vector.extract_strided_slice %19 {offsets = [0, 16], sizes = [16, 4], strides = [1, 1]} : vector<16x32xf32> to vector<16x4xf32>
    %cst_40 = arith.constant dense<0.000000e+00> : vector<16x16xf32>
    %101 = tpu.matmul %98, %99, %cst_40 {dimension_numbers = #tpu.dot_dimension_numbers<[1], [1], [0], [0], [0, 0, 1, 0], [], []>} : vector<16x4xf32>, vector<16x4xf32>, vector<16x16xf32> -> vector<16x16xf32>
    %102 = arith.addf %101, %2 : vector<16x16xf32>
    %cst_41 = arith.constant dense<0xFF800000> : vector<16xf32>
    %103 = vector.multi_reduction <maximumf>, %102, %cst_41 [1] : vector<16x16xf32> to vector<16xf32>
    %104 = vector.shape_cast %103 : vector<16xf32> to vector<16x1xf32>
    %105 = vector.broadcast %104 : vector<16x1xf32> to vector<16x16xf32>
    %106 = arith.subf %102, %105 : vector<16x16xf32>
    %107 = math.exp %106 : vector<16x16xf32>
    %cst_42 = arith.constant dense<0.000000e+00> : vector<16xf32>
    %108 = vector.multi_reduction <add>, %107, %cst_42 [1] : vector<16x16xf32> to vector<16xf32>
    %109 = vector.shape_cast %108 : vector<16xf32> to vector<16x1xf32>
    %110 = tpu.reciprocal %109 {approx = true} : vector<16x1xf32> -> vector<16x1xf32>
    %111 = vector.broadcast %110 : vector<16x1xf32> to vector<16x16xf32>
    %112 = arith.mulf %107, %111 : vector<16x16xf32>
    %cst_43 = arith.constant dense<0.000000e+00> : vector<16x4xf32>
    %113 = tpu.matmul %112, %100, %cst_43 {dimension_numbers = #tpu.dot_dimension_numbers<[1], [0], [0], [1], [0, 0, 1, 1], [], []>} : vector<16x16xf32>, vector<16x4xf32>, vector<16x4xf32> -> vector<16x4xf32>
    %114 = vector.extract_strided_slice %20 {offsets = [16, 0], sizes = [4, 32], strides = [1, 1]} : vector<32x32xf32> to vector<4x32xf32>
    %cst_44 = arith.constant dense<0.000000e+00> : vector<16x32xf32>
    %115 = tpu.matmul %113, %114, %cst_44 {dimension_numbers = #tpu.dot_dimension_numbers<[1], [0], [0], [1], [0, 0, 1, 1], [], []>} : vector<16x4xf32>, vector<4x32xf32>, vector<16x32xf32> -> vector<16x32xf32>
    %116 = arith.addf %97, %115 : vector<16x32xf32>
    %117 = vector.extract_strided_slice %17 {offsets = [0, 20], sizes = [16, 4], strides = [1, 1]} : vector<16x32xf32> to vector<16x4xf32>
    %118 = vector.extract_strided_slice %18 {offsets = [0, 20], sizes = [16, 4], strides = [1, 1]} : vector<16x32xf32> to vector<16x4xf32>
    %119 = vector.extract_strided_slice %19 {offsets = [0, 20], sizes = [16, 4], strides = [1, 1]} : vector<16x32xf32> to vector<16x4xf32>
    %cst_45 = arith.constant dense<0.000000e+00> : vector<16x16xf32>
    %120 = tpu.matmul %117, %118, %cst_45 {dimension_numbers = #tpu.dot_dimension_numbers<[1], [1], [0], [0], [0, 0, 1, 0], [], []>} : vector<16x4xf32>, vector<16x4xf32>, vector<16x16xf32> -> vector<16x16xf32>
    %121 = arith.addf %120, %2 : vector<16x16xf32>
    %cst_46 = arith.constant dense<0xFF800000> : vector<16xf32>
    %122 = vector.multi_reduction <maximumf>, %121, %cst_46 [1] : vector<16x16xf32> to vector<16xf32>
    %123 = vector.shape_cast %122 : vector<16xf32> to vector<16x1xf32>
    %124 = vector.broadcast %123 : vector<16x1xf32> to vector<16x16xf32>
    %125 = arith.subf %121, %124 : vector<16x16xf32>
    %126 = math.exp %125 : vector<16x16xf32>
    %cst_47 = arith.constant dense<0.000000e+00> : vector<16xf32>
    %127 = vector.multi_reduction <add>, %126, %cst_47 [1] : vector<16x16xf32> to vector<16xf32>
    %128 = vector.shape_cast %127 : vector<16xf32> to vector<16x1xf32>
    %129 = tpu.reciprocal %128 {approx = true} : vector<16x1xf32> -> vector<16x1xf32>
    %130 = vector.broadcast %129 : vector<16x1xf32> to vector<16x16xf32>
    %131 = arith.mulf %126, %130 : vector<16x16xf32>
    %cst_48 = arith.constant dense<0.000000e+00> : vector<16x4xf32>
    %132 = tpu.matmul %131, %119, %cst_48 {dimension_numbers = #tpu.dot_dimension_numbers<[1], [0], [0], [1], [0, 0, 1, 1], [], []>} : vector<16x16xf32>, vector<16x4xf32>, vector<16x4xf32> -> vector<16x4xf32>
    %133 = vector.extract_strided_slice %20 {offsets = [20, 0], sizes = [4, 32], strides = [1, 1]} : vector<32x32xf32> to vector<4x32xf32>
    %cst_49 = arith.constant dense<0.000000e+00> : vector<16x32xf32>
    %134 = tpu.matmul %132, %133, %cst_49 {dimension_numbers = #tpu.dot_dimension_numbers<[1], [0], [0], [1], [0, 0, 1, 1], [], []>} : vector<16x4xf32>, vector<4x32xf32>, vector<16x32xf32> -> vector<16x32xf32>
    %135 = arith.addf %116, %134 : vector<16x32xf32>
    %136 = vector.extract_strided_slice %17 {offsets = [0, 24], sizes = [16, 4], strides = [1, 1]} : vector<16x32xf32> to vector<16x4xf32>
    %137 = vector.extract_strided_slice %18 {offsets = [0, 24], sizes = [16, 4], strides = [1, 1]} : vector<16x32xf32> to vector<16x4xf32>
    %138 = vector.extract_strided_slice %19 {offsets = [0, 24], sizes = [16, 4], strides = [1, 1]} : vector<16x32xf32> to vector<16x4xf32>
    %cst_50 = arith.constant dense<0.000000e+00> : vector<16x16xf32>
    %139 = tpu.matmul %136, %137, %cst_50 {dimension_numbers = #tpu.dot_dimension_numbers<[1], [1], [0], [0], [0, 0, 1, 0], [], []>} : vector<16x4xf32>, vector<16x4xf32>, vector<16x16xf32> -> vector<16x16xf32>
    %140 = arith.addf %139, %2 : vector<16x16xf32>
    %cst_51 = arith.constant dense<0xFF800000> : vector<16xf32>
    %141 = vector.multi_reduction <maximumf>, %140, %cst_51 [1] : vector<16x16xf32> to vector<16xf32>
    %142 = vector.shape_cast %141 : vector<16xf32> to vector<16x1xf32>
    %143 = vector.broadcast %142 : vector<16x1xf32> to vector<16x16xf32>
    %144 = arith.subf %140, %143 : vector<16x16xf32>
    %145 = math.exp %144 : vector<16x16xf32>
    %cst_52 = arith.constant dense<0.000000e+00> : vector<16xf32>
    %146 = vector.multi_reduction <add>, %145, %cst_52 [1] : vector<16x16xf32> to vector<16xf32>
    %147 = vector.shape_cast %146 : vector<16xf32> to vector<16x1xf32>
    %148 = tpu.reciprocal %147 {approx = true} : vector<16x1xf32> -> vector<16x1xf32>
    %149 = vector.broadcast %148 : vector<16x1xf32> to vector<16x16xf32>
    %150 = arith.mulf %145, %149 : vector<16x16xf32>
    %cst_53 = arith.constant dense<0.000000e+00> : vector<16x4xf32>
    %151 = tpu.matmul %150, %138, %cst_53 {dimension_numbers = #tpu.dot_dimension_numbers<[1], [0], [0], [1], [0, 0, 1, 1], [], []>} : vector<16x16xf32>, vector<16x4xf32>, vector<16x4xf32> -> vector<16x4xf32>
    %152 = vector.extract_strided_slice %20 {offsets = [24, 0], sizes = [4, 32], strides = [1, 1]} : vector<32x32xf32> to vector<4x32xf32>
    %cst_54 = arith.constant dense<0.000000e+00> : vector<16x32xf32>
    %153 = tpu.matmul %151, %152, %cst_54 {dimension_numbers = #tpu.dot_dimension_numbers<[1], [0], [0], [1], [0, 0, 1, 1], [], []>} : vector<16x4xf32>, vector<4x32xf32>, vector<16x32xf32> -> vector<16x32xf32>
    %154 = arith.addf %135, %153 : vector<16x32xf32>
    %155 = vector.extract_strided_slice %17 {offsets = [0, 28], sizes = [16, 4], strides = [1, 1]} : vector<16x32xf32> to vector<16x4xf32>
    %156 = vector.extract_strided_slice %18 {offsets = [0, 28], sizes = [16, 4], strides = [1, 1]} : vector<16x32xf32> to vector<16x4xf32>
    %157 = vector.extract_strided_slice %19 {offsets = [0, 28], sizes = [16, 4], strides = [1, 1]} : vector<16x32xf32> to vector<16x4xf32>
    %cst_55 = arith.constant dense<0.000000e+00> : vector<16x16xf32>
    %158 = tpu.matmul %155, %156, %cst_55 {dimension_numbers = #tpu.dot_dimension_numbers<[1], [1], [0], [0], [0, 0, 1, 0], [], []>} : vector<16x4xf32>, vector<16x4xf32>, vector<16x16xf32> -> vector<16x16xf32>
    %159 = arith.addf %158, %2 : vector<16x16xf32>
    %cst_56 = arith.constant dense<0xFF800000> : vector<16xf32>
    %160 = vector.multi_reduction <maximumf>, %159, %cst_56 [1] : vector<16x16xf32> to vector<16xf32>
    %161 = vector.shape_cast %160 : vector<16xf32> to vector<16x1xf32>
    %162 = vector.broadcast %161 : vector<16x1xf32> to vector<16x16xf32>
    %163 = arith.subf %159, %162 : vector<16x16xf32>
    %164 = math.exp %163 : vector<16x16xf32>
    %cst_57 = arith.constant dense<0.000000e+00> : vector<16xf32>
    %165 = vector.multi_reduction <add>, %164, %cst_57 [1] : vector<16x16xf32> to vector<16xf32>
    %166 = vector.shape_cast %165 : vector<16xf32> to vector<16x1xf32>
    %167 = tpu.reciprocal %166 {approx = true} : vector<16x1xf32> -> vector<16x1xf32>
    %168 = vector.broadcast %167 : vector<16x1xf32> to vector<16x16xf32>
    %169 = arith.mulf %164, %168 : vector<16x16xf32>
    %cst_58 = arith.constant dense<0.000000e+00> : vector<16x4xf32>
    %170 = tpu.matmul %169, %157, %cst_58 {dimension_numbers = #tpu.dot_dimension_numbers<[1], [0], [0], [1], [0, 0, 1, 1], [], []>} : vector<16x16xf32>, vector<16x4xf32>, vector<16x4xf32> -> vector<16x4xf32>
    %171 = vector.extract_strided_slice %20 {offsets = [28, 0], sizes = [4, 32], strides = [1, 1]} : vector<32x32xf32> to vector<4x32xf32>
    %cst_59 = arith.constant dense<0.000000e+00> : vector<16x32xf32>
    %172 = tpu.matmul %170, %171, %cst_59 {dimension_numbers = #tpu.dot_dimension_numbers<[1], [0], [0], [1], [0, 0, 1, 1], [], []>} : vector<16x4xf32>, vector<4x32xf32>, vector<16x32xf32> -> vector<16x32xf32>
    %173 = arith.addf %154, %172 : vector<16x32xf32>
    %c0_60 = arith.constant 0 : index
    %c0_61 = arith.constant 0 : index
    %174 = vector.load %arg8[%c0_60, %c0_61] : memref<1x32xf32, #tpu.memory_space<vmem>>, vector<1x32xf32>
    %175 = vector.broadcast %174 : vector<1x32xf32> to vector<16x32xf32>
    %176 = arith.addf %173, %175 : vector<16x32xf32>
    %cst_62 = arith.constant dense<0.000000e+00> : vector<16x32xf32>
    %177 = tpu.matmul %1, %176, %cst_62 {dimension_numbers = #tpu.dot_dimension_numbers<[1], [0], [0], [1], [0, 0, 1, 1], [], []>} : vector<16x16xf32>, vector<16x32xf32>, vector<16x32xf32> -> vector<16x32xf32>
    %178 = arith.addf %177, %176 : vector<16x32xf32>
    %c0_63 = arith.constant 0 : index
    %c0_64 = arith.constant 0 : index
    %179 = vector.load %arg9[%c0_63, %c0_64] : memref<32x16xf32, #tpu.memory_space<vmem>>, vector<32x16xf32>
    %cst_65 = arith.constant dense<0.000000e+00> : vector<16x16xf32>
    %180 = tpu.matmul %178, %179, %cst_65 {dimension_numbers = #tpu.dot_dimension_numbers<[1], [0], [0], [1], [0, 0, 1, 1], [], []>} : vector<16x32xf32>, vector<32x16xf32>, vector<16x16xf32> -> vector<16x16xf32>
    %c0_66 = arith.constant 0 : index
    %c0_67 = arith.constant 0 : index
    %181 = vector.load %arg10[%c0_66, %c0_67] : memref<1x16xf32, #tpu.memory_space<vmem>>, vector<1x16xf32>
    %182 = vector.broadcast %181 : vector<1x16xf32> to vector<16x16xf32>
    %183 = arith.addf %180, %182 : vector<16x16xf32>
    %cst_68 = arith.constant 0.000000e+00 : f32
    %184 = vector.broadcast %cst_68 : f32 to vector<16x16xf32>
    %185 = arith.maximumf %183, %184 : vector<16x16xf32>
    %cst_69 = arith.constant dense<0.000000e+00> : vector<8x16xf32>
    %186 = tpu.matmul %3, %185, %cst_69 {dimension_numbers = #tpu.dot_dimension_numbers<[1], [0], [0], [1], [0, 0, 1, 1], [], []>} : vector<8x16xf32>, vector<16x16xf32>, vector<8x16xf32> -> vector<8x16xf32>
    %cst_70 = arith.constant dense<0.000000e+00> : vector<8x16xf32>
    %187 = tpu.matmul %4, %185, %cst_70 {dimension_numbers = #tpu.dot_dimension_numbers<[1], [0], [0], [1], [0, 0, 1, 1], [], []>} : vector<8x16xf32>, vector<16x16xf32>, vector<8x16xf32> -> vector<8x16xf32>
    %188 = arith.mulf %186, %187 : vector<8x16xf32>
    %cst_71 = arith.constant dense<0.000000e+00> : vector<8xf32>
    %189 = vector.multi_reduction <add>, %188, %cst_71 [1] : vector<8x16xf32> to vector<8xf32>
    %190 = vector.shape_cast %189 : vector<8xf32> to vector<8x1xf32>
    %191 = arith.addf %9, %190 : vector<8x1xf32>
    %c0_72 = arith.constant 0 : index
    %c0_73 = arith.constant 0 : index
    %192 = vector.load %arg11[%c0_72, %c0_73] : memref<16x48xf32, #tpu.memory_space<vmem>>, vector<16x48xf32>
    %cst_74 = arith.constant dense<0.000000e+00> : vector<16x48xf32>
    %193 = tpu.matmul %185, %192, %cst_74 {dimension_numbers = #tpu.dot_dimension_numbers<[1], [0], [0], [1], [0, 0, 1, 1], [], []>} : vector<16x16xf32>, vector<16x48xf32>, vector<16x48xf32> -> vector<16x48xf32>
    %c0_75 = arith.constant 0 : index
    %c0_76 = arith.constant 0 : index
    %194 = vector.load %arg12[%c0_75, %c0_76] : memref<1x48xf32, #tpu.memory_space<vmem>>, vector<1x48xf32>
    %195 = vector.broadcast %194 : vector<1x48xf32> to vector<16x48xf32>
    %196 = arith.addf %193, %195 : vector<16x48xf32>
    %197 = vector.extract_strided_slice %196 {offsets = [0, 0], sizes = [16, 16], strides = [1, 1]} : vector<16x48xf32> to vector<16x16xf32>
    %cst_77 = arith.constant 0.707106769 : f32
    %198 = vector.broadcast %cst_77 : f32 to vector<16x16xf32>
    %199 = arith.mulf %197, %198 : vector<16x16xf32>
    %200 = vector.extract_strided_slice %196 {offsets = [0, 16], sizes = [16, 16], strides = [1, 1]} : vector<16x48xf32> to vector<16x16xf32>
    %201 = vector.extract_strided_slice %196 {offsets = [0, 32], sizes = [16, 16], strides = [1, 1]} : vector<16x48xf32> to vector<16x16xf32>
    %c0_78 = arith.constant 0 : index
    %c0_79 = arith.constant 0 : index
    %202 = vector.load %arg13[%c0_78, %c0_79] : memref<16x16xf32, #tpu.memory_space<vmem>>, vector<16x16xf32>
    %cst_80 = arith.constant 0.000000e+00 : f32
    %203 = vector.broadcast %cst_80 : f32 to vector<16x16xf32>
    %204 = vector.extract_strided_slice %199 {offsets = [0, 0], sizes = [16, 2], strides = [1, 1]} : vector<16x16xf32> to vector<16x2xf32>
    %205 = vector.extract_strided_slice %200 {offsets = [0, 0], sizes = [16, 2], strides = [1, 1]} : vector<16x16xf32> to vector<16x2xf32>
    %206 = vector.extract_strided_slice %201 {offsets = [0, 0], sizes = [16, 2], strides = [1, 1]} : vector<16x16xf32> to vector<16x2xf32>
    %cst_81 = arith.constant dense<0.000000e+00> : vector<16x16xf32>
    %207 = tpu.matmul %204, %205, %cst_81 {dimension_numbers = #tpu.dot_dimension_numbers<[1], [1], [0], [0], [0, 0, 1, 0], [], []>} : vector<16x2xf32>, vector<16x2xf32>, vector<16x16xf32> -> vector<16x16xf32>
    %208 = arith.addf %207, %2 : vector<16x16xf32>
    %cst_82 = arith.constant dense<0xFF800000> : vector<16xf32>
    %209 = vector.multi_reduction <maximumf>, %208, %cst_82 [1] : vector<16x16xf32> to vector<16xf32>
    %210 = vector.shape_cast %209 : vector<16xf32> to vector<16x1xf32>
    %211 = vector.broadcast %210 : vector<16x1xf32> to vector<16x16xf32>
    %212 = arith.subf %208, %211 : vector<16x16xf32>
    %213 = math.exp %212 : vector<16x16xf32>
    %cst_83 = arith.constant dense<0.000000e+00> : vector<16xf32>
    %214 = vector.multi_reduction <add>, %213, %cst_83 [1] : vector<16x16xf32> to vector<16xf32>
    %215 = vector.shape_cast %214 : vector<16xf32> to vector<16x1xf32>
    %216 = tpu.reciprocal %215 {approx = true} : vector<16x1xf32> -> vector<16x1xf32>
    %217 = vector.broadcast %216 : vector<16x1xf32> to vector<16x16xf32>
    %218 = arith.mulf %213, %217 : vector<16x16xf32>
    %cst_84 = arith.constant dense<0.000000e+00> : vector<16x2xf32>
    %219 = tpu.matmul %218, %206, %cst_84 {dimension_numbers = #tpu.dot_dimension_numbers<[1], [0], [0], [1], [0, 0, 1, 1], [], []>} : vector<16x16xf32>, vector<16x2xf32>, vector<16x2xf32> -> vector<16x2xf32>
    %220 = vector.extract_strided_slice %202 {offsets = [0, 0], sizes = [2, 16], strides = [1, 1]} : vector<16x16xf32> to vector<2x16xf32>
    %cst_85 = arith.constant dense<0.000000e+00> : vector<16x16xf32>
    %221 = tpu.matmul %219, %220, %cst_85 {dimension_numbers = #tpu.dot_dimension_numbers<[1], [0], [0], [1], [0, 0, 1, 1], [], []>} : vector<16x2xf32>, vector<2x16xf32>, vector<16x16xf32> -> vector<16x16xf32>
    %222 = arith.addf %203, %221 : vector<16x16xf32>
    %223 = vector.extract_strided_slice %199 {offsets = [0, 2], sizes = [16, 2], strides = [1, 1]} : vector<16x16xf32> to vector<16x2xf32>
    %224 = vector.extract_strided_slice %200 {offsets = [0, 2], sizes = [16, 2], strides = [1, 1]} : vector<16x16xf32> to vector<16x2xf32>
    %225 = vector.extract_strided_slice %201 {offsets = [0, 2], sizes = [16, 2], strides = [1, 1]} : vector<16x16xf32> to vector<16x2xf32>
    %cst_86 = arith.constant dense<0.000000e+00> : vector<16x16xf32>
    %226 = tpu.matmul %223, %224, %cst_86 {dimension_numbers = #tpu.dot_dimension_numbers<[1], [1], [0], [0], [0, 0, 1, 0], [], []>} : vector<16x2xf32>, vector<16x2xf32>, vector<16x16xf32> -> vector<16x16xf32>
    %227 = arith.addf %226, %2 : vector<16x16xf32>
    %cst_87 = arith.constant dense<0xFF800000> : vector<16xf32>
    %228 = vector.multi_reduction <maximumf>, %227, %cst_87 [1] : vector<16x16xf32> to vector<16xf32>
    %229 = vector.shape_cast %228 : vector<16xf32> to vector<16x1xf32>
    %230 = vector.broadcast %229 : vector<16x1xf32> to vector<16x16xf32>
    %231 = arith.subf %227, %230 : vector<16x16xf32>
    %232 = math.exp %231 : vector<16x16xf32>
    %cst_88 = arith.constant dense<0.000000e+00> : vector<16xf32>
    %233 = vector.multi_reduction <add>, %232, %cst_88 [1] : vector<16x16xf32> to vector<16xf32>
    %234 = vector.shape_cast %233 : vector<16xf32> to vector<16x1xf32>
    %235 = tpu.reciprocal %234 {approx = true} : vector<16x1xf32> -> vector<16x1xf32>
    %236 = vector.broadcast %235 : vector<16x1xf32> to vector<16x16xf32>
    %237 = arith.mulf %232, %236 : vector<16x16xf32>
    %cst_89 = arith.constant dense<0.000000e+00> : vector<16x2xf32>
    %238 = tpu.matmul %237, %225, %cst_89 {dimension_numbers = #tpu.dot_dimension_numbers<[1], [0], [0], [1], [0, 0, 1, 1], [], []>} : vector<16x16xf32>, vector<16x2xf32>, vector<16x2xf32> -> vector<16x2xf32>
    %239 = vector.extract_strided_slice %202 {offsets = [2, 0], sizes = [2, 16], strides = [1, 1]} : vector<16x16xf32> to vector<2x16xf32>
    %cst_90 = arith.constant dense<0.000000e+00> : vector<16x16xf32>
    %240 = tpu.matmul %238, %239, %cst_90 {dimension_numbers = #tpu.dot_dimension_numbers<[1], [0], [0], [1], [0, 0, 1, 1], [], []>} : vector<16x2xf32>, vector<2x16xf32>, vector<16x16xf32> -> vector<16x16xf32>
    %241 = arith.addf %222, %240 : vector<16x16xf32>
    %242 = vector.extract_strided_slice %199 {offsets = [0, 4], sizes = [16, 2], strides = [1, 1]} : vector<16x16xf32> to vector<16x2xf32>
    %243 = vector.extract_strided_slice %200 {offsets = [0, 4], sizes = [16, 2], strides = [1, 1]} : vector<16x16xf32> to vector<16x2xf32>
    %244 = vector.extract_strided_slice %201 {offsets = [0, 4], sizes = [16, 2], strides = [1, 1]} : vector<16x16xf32> to vector<16x2xf32>
    %cst_91 = arith.constant dense<0.000000e+00> : vector<16x16xf32>
    %245 = tpu.matmul %242, %243, %cst_91 {dimension_numbers = #tpu.dot_dimension_numbers<[1], [1], [0], [0], [0, 0, 1, 0], [], []>} : vector<16x2xf32>, vector<16x2xf32>, vector<16x16xf32> -> vector<16x16xf32>
    %246 = arith.addf %245, %2 : vector<16x16xf32>
    %cst_92 = arith.constant dense<0xFF800000> : vector<16xf32>
    %247 = vector.multi_reduction <maximumf>, %246, %cst_92 [1] : vector<16x16xf32> to vector<16xf32>
    %248 = vector.shape_cast %247 : vector<16xf32> to vector<16x1xf32>
    %249 = vector.broadcast %248 : vector<16x1xf32> to vector<16x16xf32>
    %250 = arith.subf %246, %249 : vector<16x16xf32>
    %251 = math.exp %250 : vector<16x16xf32>
    %cst_93 = arith.constant dense<0.000000e+00> : vector<16xf32>
    %252 = vector.multi_reduction <add>, %251, %cst_93 [1] : vector<16x16xf32> to vector<16xf32>
    %253 = vector.shape_cast %252 : vector<16xf32> to vector<16x1xf32>
    %254 = tpu.reciprocal %253 {approx = true} : vector<16x1xf32> -> vector<16x1xf32>
    %255 = vector.broadcast %254 : vector<16x1xf32> to vector<16x16xf32>
    %256 = arith.mulf %251, %255 : vector<16x16xf32>
    %cst_94 = arith.constant dense<0.000000e+00> : vector<16x2xf32>
    %257 = tpu.matmul %256, %244, %cst_94 {dimension_numbers = #tpu.dot_dimension_numbers<[1], [0], [0], [1], [0, 0, 1, 1], [], []>} : vector<16x16xf32>, vector<16x2xf32>, vector<16x2xf32> -> vector<16x2xf32>
    %258 = vector.extract_strided_slice %202 {offsets = [4, 0], sizes = [2, 16], strides = [1, 1]} : vector<16x16xf32> to vector<2x16xf32>
    %cst_95 = arith.constant dense<0.000000e+00> : vector<16x16xf32>
    %259 = tpu.matmul %257, %258, %cst_95 {dimension_numbers = #tpu.dot_dimension_numbers<[1], [0], [0], [1], [0, 0, 1, 1], [], []>} : vector<16x2xf32>, vector<2x16xf32>, vector<16x16xf32> -> vector<16x16xf32>
    %260 = arith.addf %241, %259 : vector<16x16xf32>
    %261 = vector.extract_strided_slice %199 {offsets = [0, 6], sizes = [16, 2], strides = [1, 1]} : vector<16x16xf32> to vector<16x2xf32>
    %262 = vector.extract_strided_slice %200 {offsets = [0, 6], sizes = [16, 2], strides = [1, 1]} : vector<16x16xf32> to vector<16x2xf32>
    %263 = vector.extract_strided_slice %201 {offsets = [0, 6], sizes = [16, 2], strides = [1, 1]} : vector<16x16xf32> to vector<16x2xf32>
    %cst_96 = arith.constant dense<0.000000e+00> : vector<16x16xf32>
    %264 = tpu.matmul %261, %262, %cst_96 {dimension_numbers = #tpu.dot_dimension_numbers<[1], [1], [0], [0], [0, 0, 1, 0], [], []>} : vector<16x2xf32>, vector<16x2xf32>, vector<16x16xf32> -> vector<16x16xf32>
    %265 = arith.addf %264, %2 : vector<16x16xf32>
    %cst_97 = arith.constant dense<0xFF800000> : vector<16xf32>
    %266 = vector.multi_reduction <maximumf>, %265, %cst_97 [1] : vector<16x16xf32> to vector<16xf32>
    %267 = vector.shape_cast %266 : vector<16xf32> to vector<16x1xf32>
    %268 = vector.broadcast %267 : vector<16x1xf32> to vector<16x16xf32>
    %269 = arith.subf %265, %268 : vector<16x16xf32>
    %270 = math.exp %269 : vector<16x16xf32>
    %cst_98 = arith.constant dense<0.000000e+00> : vector<16xf32>
    %271 = vector.multi_reduction <add>, %270, %cst_98 [1] : vector<16x16xf32> to vector<16xf32>
    %272 = vector.shape_cast %271 : vector<16xf32> to vector<16x1xf32>
    %273 = tpu.reciprocal %272 {approx = true} : vector<16x1xf32> -> vector<16x1xf32>
    %274 = vector.broadcast %273 : vector<16x1xf32> to vector<16x16xf32>
    %275 = arith.mulf %270, %274 : vector<16x16xf32>
    %cst_99 = arith.constant dense<0.000000e+00> : vector<16x2xf32>
    %276 = tpu.matmul %275, %263, %cst_99 {dimension_numbers = #tpu.dot_dimension_numbers<[1], [0], [0], [1], [0, 0, 1, 1], [], []>} : vector<16x16xf32>, vector<16x2xf32>, vector<16x2xf32> -> vector<16x2xf32>
    %277 = vector.extract_strided_slice %202 {offsets = [6, 0], sizes = [2, 16], strides = [1, 1]} : vector<16x16xf32> to vector<2x16xf32>
    %cst_100 = arith.constant dense<0.000000e+00> : vector<16x16xf32>
    %278 = tpu.matmul %276, %277, %cst_100 {dimension_numbers = #tpu.dot_dimension_numbers<[1], [0], [0], [1], [0, 0, 1, 1], [], []>} : vector<16x2xf32>, vector<2x16xf32>, vector<16x16xf32> -> vector<16x16xf32>
    %279 = arith.addf %260, %278 : vector<16x16xf32>
    %280 = vector.extract_strided_slice %199 {offsets = [0, 8], sizes = [16, 2], strides = [1, 1]} : vector<16x16xf32> to vector<16x2xf32>
    %281 = vector.extract_strided_slice %200 {offsets = [0, 8], sizes = [16, 2], strides = [1, 1]} : vector<16x16xf32> to vector<16x2xf32>
    %282 = vector.extract_strided_slice %201 {offsets = [0, 8], sizes = [16, 2], strides = [1, 1]} : vector<16x16xf32> to vector<16x2xf32>
    %cst_101 = arith.constant dense<0.000000e+00> : vector<16x16xf32>
    %283 = tpu.matmul %280, %281, %cst_101 {dimension_numbers = #tpu.dot_dimension_numbers<[1], [1], [0], [0], [0, 0, 1, 0], [], []>} : vector<16x2xf32>, vector<16x2xf32>, vector<16x16xf32> -> vector<16x16xf32>
    %284 = arith.addf %283, %2 : vector<16x16xf32>
    %cst_102 = arith.constant dense<0xFF800000> : vector<16xf32>
    %285 = vector.multi_reduction <maximumf>, %284, %cst_102 [1] : vector<16x16xf32> to vector<16xf32>
    %286 = vector.shape_cast %285 : vector<16xf32> to vector<16x1xf32>
    %287 = vector.broadcast %286 : vector<16x1xf32> to vector<16x16xf32>
    %288 = arith.subf %284, %287 : vector<16x16xf32>
    %289 = math.exp %288 : vector<16x16xf32>
    %cst_103 = arith.constant dense<0.000000e+00> : vector<16xf32>
    %290 = vector.multi_reduction <add>, %289, %cst_103 [1] : vector<16x16xf32> to vector<16xf32>
    %291 = vector.shape_cast %290 : vector<16xf32> to vector<16x1xf32>
    %292 = tpu.reciprocal %291 {approx = true} : vector<16x1xf32> -> vector<16x1xf32>
    %293 = vector.broadcast %292 : vector<16x1xf32> to vector<16x16xf32>
    %294 = arith.mulf %289, %293 : vector<16x16xf32>
    %cst_104 = arith.constant dense<0.000000e+00> : vector<16x2xf32>
    %295 = tpu.matmul %294, %282, %cst_104 {dimension_numbers = #tpu.dot_dimension_numbers<[1], [0], [0], [1], [0, 0, 1, 1], [], []>} : vector<16x16xf32>, vector<16x2xf32>, vector<16x2xf32> -> vector<16x2xf32>
    %296 = vector.extract_strided_slice %202 {offsets = [8, 0], sizes = [2, 16], strides = [1, 1]} : vector<16x16xf32> to vector<2x16xf32>
    %cst_105 = arith.constant dense<0.000000e+00> : vector<16x16xf32>
    %297 = tpu.matmul %295, %296, %cst_105 {dimension_numbers = #tpu.dot_dimension_numbers<[1], [0], [0], [1], [0, 0, 1, 1], [], []>} : vector<16x2xf32>, vector<2x16xf32>, vector<16x16xf32> -> vector<16x16xf32>
    %298 = arith.addf %279, %297 : vector<16x16xf32>
    %299 = vector.extract_strided_slice %199 {offsets = [0, 10], sizes = [16, 2], strides = [1, 1]} : vector<16x16xf32> to vector<16x2xf32>
    %300 = vector.extract_strided_slice %200 {offsets = [0, 10], sizes = [16, 2], strides = [1, 1]} : vector<16x16xf32> to vector<16x2xf32>
    %301 = vector.extract_strided_slice %201 {offsets = [0, 10], sizes = [16, 2], strides = [1, 1]} : vector<16x16xf32> to vector<16x2xf32>
    %cst_106 = arith.constant dense<0.000000e+00> : vector<16x16xf32>
    %302 = tpu.matmul %299, %300, %cst_106 {dimension_numbers = #tpu.dot_dimension_numbers<[1], [1], [0], [0], [0, 0, 1, 0], [], []>} : vector<16x2xf32>, vector<16x2xf32>, vector<16x16xf32> -> vector<16x16xf32>
    %303 = arith.addf %302, %2 : vector<16x16xf32>
    %cst_107 = arith.constant dense<0xFF800000> : vector<16xf32>
    %304 = vector.multi_reduction <maximumf>, %303, %cst_107 [1] : vector<16x16xf32> to vector<16xf32>
    %305 = vector.shape_cast %304 : vector<16xf32> to vector<16x1xf32>
    %306 = vector.broadcast %305 : vector<16x1xf32> to vector<16x16xf32>
    %307 = arith.subf %303, %306 : vector<16x16xf32>
    %308 = math.exp %307 : vector<16x16xf32>
    %cst_108 = arith.constant dense<0.000000e+00> : vector<16xf32>
    %309 = vector.multi_reduction <add>, %308, %cst_108 [1] : vector<16x16xf32> to vector<16xf32>
    %310 = vector.shape_cast %309 : vector<16xf32> to vector<16x1xf32>
    %311 = tpu.reciprocal %310 {approx = true} : vector<16x1xf32> -> vector<16x1xf32>
    %312 = vector.broadcast %311 : vector<16x1xf32> to vector<16x16xf32>
    %313 = arith.mulf %308, %312 : vector<16x16xf32>
    %cst_109 = arith.constant dense<0.000000e+00> : vector<16x2xf32>
    %314 = tpu.matmul %313, %301, %cst_109 {dimension_numbers = #tpu.dot_dimension_numbers<[1], [0], [0], [1], [0, 0, 1, 1], [], []>} : vector<16x16xf32>, vector<16x2xf32>, vector<16x2xf32> -> vector<16x2xf32>
    %315 = vector.extract_strided_slice %202 {offsets = [10, 0], sizes = [2, 16], strides = [1, 1]} : vector<16x16xf32> to vector<2x16xf32>
    %cst_110 = arith.constant dense<0.000000e+00> : vector<16x16xf32>
    %316 = tpu.matmul %314, %315, %cst_110 {dimension_numbers = #tpu.dot_dimension_numbers<[1], [0], [0], [1], [0, 0, 1, 1], [], []>} : vector<16x2xf32>, vector<2x16xf32>, vector<16x16xf32> -> vector<16x16xf32>
    %317 = arith.addf %298, %316 : vector<16x16xf32>
    %318 = vector.extract_strided_slice %199 {offsets = [0, 12], sizes = [16, 2], strides = [1, 1]} : vector<16x16xf32> to vector<16x2xf32>
    %319 = vector.extract_strided_slice %200 {offsets = [0, 12], sizes = [16, 2], strides = [1, 1]} : vector<16x16xf32> to vector<16x2xf32>
    %320 = vector.extract_strided_slice %201 {offsets = [0, 12], sizes = [16, 2], strides = [1, 1]} : vector<16x16xf32> to vector<16x2xf32>
    %cst_111 = arith.constant dense<0.000000e+00> : vector<16x16xf32>
    %321 = tpu.matmul %318, %319, %cst_111 {dimension_numbers = #tpu.dot_dimension_numbers<[1], [1], [0], [0], [0, 0, 1, 0], [], []>} : vector<16x2xf32>, vector<16x2xf32>, vector<16x16xf32> -> vector<16x16xf32>
    %322 = arith.addf %321, %2 : vector<16x16xf32>
    %cst_112 = arith.constant dense<0xFF800000> : vector<16xf32>
    %323 = vector.multi_reduction <maximumf>, %322, %cst_112 [1] : vector<16x16xf32> to vector<16xf32>
    %324 = vector.shape_cast %323 : vector<16xf32> to vector<16x1xf32>
    %325 = vector.broadcast %324 : vector<16x1xf32> to vector<16x16xf32>
    %326 = arith.subf %322, %325 : vector<16x16xf32>
    %327 = math.exp %326 : vector<16x16xf32>
    %cst_113 = arith.constant dense<0.000000e+00> : vector<16xf32>
    %328 = vector.multi_reduction <add>, %327, %cst_113 [1] : vector<16x16xf32> to vector<16xf32>
    %329 = vector.shape_cast %328 : vector<16xf32> to vector<16x1xf32>
    %330 = tpu.reciprocal %329 {approx = true} : vector<16x1xf32> -> vector<16x1xf32>
    %331 = vector.broadcast %330 : vector<16x1xf32> to vector<16x16xf32>
    %332 = arith.mulf %327, %331 : vector<16x16xf32>
    %cst_114 = arith.constant dense<0.000000e+00> : vector<16x2xf32>
    %333 = tpu.matmul %332, %320, %cst_114 {dimension_numbers = #tpu.dot_dimension_numbers<[1], [0], [0], [1], [0, 0, 1, 1], [], []>} : vector<16x16xf32>, vector<16x2xf32>, vector<16x2xf32> -> vector<16x2xf32>
    %334 = vector.extract_strided_slice %202 {offsets = [12, 0], sizes = [2, 16], strides = [1, 1]} : vector<16x16xf32> to vector<2x16xf32>
    %cst_115 = arith.constant dense<0.000000e+00> : vector<16x16xf32>
    %335 = tpu.matmul %333, %334, %cst_115 {dimension_numbers = #tpu.dot_dimension_numbers<[1], [0], [0], [1], [0, 0, 1, 1], [], []>} : vector<16x2xf32>, vector<2x16xf32>, vector<16x16xf32> -> vector<16x16xf32>
    %336 = arith.addf %317, %335 : vector<16x16xf32>
    %337 = vector.extract_strided_slice %199 {offsets = [0, 14], sizes = [16, 2], strides = [1, 1]} : vector<16x16xf32> to vector<16x2xf32>
    %338 = vector.extract_strided_slice %200 {offsets = [0, 14], sizes = [16, 2], strides = [1, 1]} : vector<16x16xf32> to vector<16x2xf32>
    %339 = vector.extract_strided_slice %201 {offsets = [0, 14], sizes = [16, 2], strides = [1, 1]} : vector<16x16xf32> to vector<16x2xf32>
    %cst_116 = arith.constant dense<0.000000e+00> : vector<16x16xf32>
    %340 = tpu.matmul %337, %338, %cst_116 {dimension_numbers = #tpu.dot_dimension_numbers<[1], [1], [0], [0], [0, 0, 1, 0], [], []>} : vector<16x2xf32>, vector<16x2xf32>, vector<16x16xf32> -> vector<16x16xf32>
    %341 = arith.addf %340, %2 : vector<16x16xf32>
    %cst_117 = arith.constant dense<0xFF800000> : vector<16xf32>
    %342 = vector.multi_reduction <maximumf>, %341, %cst_117 [1] : vector<16x16xf32> to vector<16xf32>
    %343 = vector.shape_cast %342 : vector<16xf32> to vector<16x1xf32>
    %344 = vector.broadcast %343 : vector<16x1xf32> to vector<16x16xf32>
    %345 = arith.subf %341, %344 : vector<16x16xf32>
    %346 = math.exp %345 : vector<16x16xf32>
    %cst_118 = arith.constant dense<0.000000e+00> : vector<16xf32>
    %347 = vector.multi_reduction <add>, %346, %cst_118 [1] : vector<16x16xf32> to vector<16xf32>
    %348 = vector.shape_cast %347 : vector<16xf32> to vector<16x1xf32>
    %349 = tpu.reciprocal %348 {approx = true} : vector<16x1xf32> -> vector<16x1xf32>
    %350 = vector.broadcast %349 : vector<16x1xf32> to vector<16x16xf32>
    %351 = arith.mulf %346, %350 : vector<16x16xf32>
    %cst_119 = arith.constant dense<0.000000e+00> : vector<16x2xf32>
    %352 = tpu.matmul %351, %339, %cst_119 {dimension_numbers = #tpu.dot_dimension_numbers<[1], [0], [0], [1], [0, 0, 1, 1], [], []>} : vector<16x16xf32>, vector<16x2xf32>, vector<16x2xf32> -> vector<16x2xf32>
    %353 = vector.extract_strided_slice %202 {offsets = [14, 0], sizes = [2, 16], strides = [1, 1]} : vector<16x16xf32> to vector<2x16xf32>
    %cst_120 = arith.constant dense<0.000000e+00> : vector<16x16xf32>
    %354 = tpu.matmul %352, %353, %cst_120 {dimension_numbers = #tpu.dot_dimension_numbers<[1], [0], [0], [1], [0, 0, 1, 1], [], []>} : vector<16x2xf32>, vector<2x16xf32>, vector<16x16xf32> -> vector<16x16xf32>
    %355 = arith.addf %336, %354 : vector<16x16xf32>
    %c0_121 = arith.constant 0 : index
    %c0_122 = arith.constant 0 : index
    %356 = vector.load %arg14[%c0_121, %c0_122] : memref<1x16xf32, #tpu.memory_space<vmem>>, vector<1x16xf32>
    %357 = vector.broadcast %356 : vector<1x16xf32> to vector<16x16xf32>
    %358 = arith.addf %355, %357 : vector<16x16xf32>
    %cst_123 = arith.constant dense<0.000000e+00> : vector<16x16xf32>
    %359 = tpu.matmul %1, %358, %cst_123 {dimension_numbers = #tpu.dot_dimension_numbers<[1], [0], [0], [1], [0, 0, 1, 1], [], []>} : vector<16x16xf32>, vector<16x16xf32>, vector<16x16xf32> -> vector<16x16xf32>
    %360 = arith.addf %359, %358 : vector<16x16xf32>
    %c0_124 = arith.constant 0 : index
    %c0_125 = arith.constant 0 : index
    %361 = vector.load %arg15[%c0_124, %c0_125] : memref<16x16xf32, #tpu.memory_space<vmem>>, vector<16x16xf32>
    %cst_126 = arith.constant dense<0.000000e+00> : vector<16x16xf32>
    %362 = tpu.matmul %360, %361, %cst_126 {dimension_numbers = #tpu.dot_dimension_numbers<[1], [0], [0], [1], [0, 0, 1, 1], [], []>} : vector<16x16xf32>, vector<16x16xf32>, vector<16x16xf32> -> vector<16x16xf32>
    %c0_127 = arith.constant 0 : index
    %c0_128 = arith.constant 0 : index
    %363 = vector.load %arg16[%c0_127, %c0_128] : memref<1x16xf32, #tpu.memory_space<vmem>>, vector<1x16xf32>
    %364 = vector.broadcast %363 : vector<1x16xf32> to vector<16x16xf32>
    %365 = arith.addf %362, %364 : vector<16x16xf32>
    %cst_129 = arith.constant 0.000000e+00 : f32
    %366 = vector.broadcast %cst_129 : f32 to vector<16x16xf32>
    %367 = arith.maximumf %365, %366 : vector<16x16xf32>
    %cst_130 = arith.constant dense<0.000000e+00> : vector<8x16xf32>
    %368 = tpu.matmul %3, %367, %cst_130 {dimension_numbers = #tpu.dot_dimension_numbers<[1], [0], [0], [1], [0, 0, 1, 1], [], []>} : vector<8x16xf32>, vector<16x16xf32>, vector<8x16xf32> -> vector<8x16xf32>
    %cst_131 = arith.constant dense<0.000000e+00> : vector<8x16xf32>
    %369 = tpu.matmul %4, %367, %cst_131 {dimension_numbers = #tpu.dot_dimension_numbers<[1], [0], [0], [1], [0, 0, 1, 1], [], []>} : vector<8x16xf32>, vector<16x16xf32>, vector<8x16xf32> -> vector<8x16xf32>
    %370 = arith.mulf %368, %369 : vector<8x16xf32>
    %cst_132 = arith.constant dense<0.000000e+00> : vector<8xf32>
    %371 = vector.multi_reduction <add>, %370, %cst_132 [1] : vector<8x16xf32> to vector<8xf32>
    %372 = vector.shape_cast %371 : vector<8xf32> to vector<8x1xf32>
    %373 = arith.addf %191, %372 : vector<8x1xf32>
    %374 = vector.shape_cast %373 : vector<8x1xf32> to vector<8x1xf32>
    %375 = vector.broadcast %374 : vector<8x1xf32> to vector<8x128xf32>
    %c0_133 = arith.constant 0 : index
    %c0_134 = arith.constant 0 : index
    %376 = vector.load %arg17[%c0_133, %c0_134] : memref<8x128xf32, #tpu.memory_space<vmem>>, vector<8x128xf32>
    tpu.vector_store %arg17[%c0_133, %c0_134], %375 {strides = array<i32>} : memref<8x128xf32, #tpu.memory_space<vmem>>, vector<8x128xf32>,
    return
  }
}

</mosaic_0001>

<llo_original>
// kernel: tpu_custom_call.1
$region0: #{tpu_custom_call.1}
  #allocation0 [shape = 'u32[]', space=smem, size = 0x4, offset = 0x4, fixed_abs, tag = 'smem constant byte address 0x4 - core index']
  #allocation1 [shape = 'u32[144,128]{1,0:T(1,128)}', space=vmem, size = 0x12000, scoped, tag = 'internal scratch']
  %s0 = inlined_call_operand.hbm [shape: f32[16,32], index: 0, kind: input, shape index: {}]
  %s1 = inlined_call_operand.hbm [shape: f32[16,16], index: 1, kind: input, shape index: {}]
  %s2 = inlined_call_operand.hbm [shape: f32[16,16], index: 2, kind: input, shape index: {}]
  %s3 = inlined_call_operand.hbm [shape: f32[8,16], index: 3, kind: input, shape index: {}]
  %s4 = inlined_call_operand.hbm [shape: f32[8,16], index: 4, kind: input, shape index: {}]
  %s5 = inlined_call_operand.vmem [shape: f32[32,96], index: 5, kind: input, shape index: {}]
  %s6 = inlined_call_operand.vmem [shape: f32[1,96], index: 6, kind: input, shape index: {}]
  %s7 = inlined_call_operand.vmem [shape: f32[32,32], index: 7, kind: input, shape index: {}]
  %s8 = inlined_call_operand.hbm [shape: f32[1,32], index: 8, kind: input, shape index: {}]
  %s9 = inlined_call_operand.vmem [shape: f32[32,16], index: 9, kind: input, shape index: {}]
  %s10 = inlined_call_operand.hbm [shape: f32[1,16], index: 10, kind: input, shape index: {}]
  %s11 = inlined_call_operand.hbm [shape: f32[16,48], index: 11, kind: input, shape index: {}]
  %s12 = inlined_call_operand.hbm [shape: f32[1,48], index: 12, kind: input, shape index: {}]
  %s13 = inlined_call_operand.vmem [shape: f32[16,16], index: 13, kind: input, shape index: {}]
  %s14 = inlined_call_operand.vmem [shape: f32[1,16], index: 14, kind: input, shape index: {}]
  %s15 = inlined_call_operand.hbm [shape: f32[16,16], index: 15, kind: input, shape index: {}]
  %s16 = inlined_call_operand.vmem [shape: f32[1,16], index: 16, kind: input, shape index: {}]
  %s17 = inlined_call_operand.hbm [shape: f32[8,128], index: 17, kind: output, shape index: {}]
  %s18 = sld [smem:[#allocation0]]
  $region118: #{tpu_custom_call.1} parent=0
    _
  %s20 = ssub.s32 1, %s18
  %s21 = scalar_select 0, %s20, %s18
  $region1: #{tpu_custom_call.1} parent=0
    #allocation2 [shape = 'u8[8192]{0}', space=vmem, size = 0x2000, scoped, tag = 'input window, operand 0, single buffered']
    #allocation3 [shape = 's32[1]{0}', space=sflag, size = 0x4, scoped, tag = 'scoped memory for tpu_custom_call.1']
    #allocation4 [shape = 's32[1]{0}', space=sflag, size = 0x4, scoped, tag = 'scoped memory for tpu_custom_call.1']
    #allocation5 [shape = 'u8[8192]{0}', space=vmem, size = 0x2000, scoped, tag = 'input window, operand 1, single buffered']
    #allocation6 [shape = 's32[1]{0}', space=sflag, size = 0x4, scoped, tag = 'scoped memory for tpu_custom_call.1']
    #allocation7 [shape = 'u8[8192]{0}', space=vmem, size = 0x2000, scoped, tag = 'input window, operand 2, single buffered']
    #allocation8 [shape = 'u8[4096]{0}', space=vmem, size = 0x1000, scoped, tag = 'input window, operand 3, single buffered']
    #allocation9 [shape = 's32[1]{0}', space=sflag, size = 0x4, scoped, tag = 'scoped memory for tpu_custom_call.1']
    #allocation10 [shape = 'u8[4096]{0}', space=vmem, size = 0x1000, scoped, tag = 'input window, operand 4, single buffered']
    #allocation11 [shape = 'u8[512]{0}', space=vmem, size = 0x400, scoped, tag = 'input window, operand 8, single buffered']
    #allocation12 [shape = 's32[1]{0}', space=sflag, size = 0x4, scoped, tag = 'scoped memory for tpu_custom_call.1']
    #allocation13 [shape = 'u8[512]{0}', space=vmem, size = 0x400, scoped, tag = 'input window, operand 10, single buffered']
    #allocation14 [shape = 'u8[8192]{0}', space=vmem, size = 0x2000, scoped, tag = 'input window, operand 11, single buffered']
    #allocation15 [shape = 's32[1]{0}', space=sflag, size = 0x4, scoped, tag = 'scoped memory for tpu_custom_call.1']
    #allocation16 [shape = 'u8[512]{0}', space=vmem, size = 0x400, scoped, tag = 'input window, operand 12, single buffered']
    #allocation17 [shape = 'u8[8192]{0}', space=vmem, size = 0x2000, scoped, tag = 'input window, operand 15, single buffered']
    #allocation18 [shape = 's32[1]{0}', space=sflag, size = 0x4, scoped, tag = 'scoped memory for tpu_custom_call.1']
    #allocation19 [shape = 'u8[4096]{0}', space=vmem, size = 0x1000, scoped, tag = 'output window, operand 0, single buffered']
    %22 = vsyncpa [#allocation3], 0
    %23 = vsyncpa [#allocation6], 0
    %24 = vsyncpa [#allocation9], 0
    %25 = vsyncpa [#allocation12], 0
    %26 = vsyncpa [#allocation15], 0
    %27 = vsyncpa [#allocation18], 0
    %28 = vsyncpa [#allocation4], 0
    // Predicated region
    $region2: #{tpu_custom_call.1} parent=1 // pred_check
      _
    $region3: #{tpu_custom_call.1} parent=1 // pred_check_branch
      %30 = sbr.rel (0) target = $region5
    $region4: #{tpu_custom_call.1} parent=1 // pred_region
      %s32 = ssub.s32 256, 256
      %33 = vsyncadd [#allocation3], %s32
      %s34 = sshll.u32 [#allocation2], 4
      %s35 = int_to_ptr.vmem [resolvable:$true] %s34
      %40 = dma.hbm_to_vmem [thread:$0]  %s0, 256, %s35, [#allocation3], 128, 128, 8
    $region5: #{tpu_custom_call.1} parent=1 // pred_fallthru
      _
    // Predicated region
    $region6: #{tpu_custom_call.1} parent=1 // pred_check
      _
    $region7: #{tpu_custom_call.1} parent=1 // pred_check_branch
      %42 = sbr.rel (0) target = $region9
    $region8: #{tpu_custom_call.1} parent=1 // pred_region
      %s44 = ssub.s32 256, 256
      %45 = vsyncadd [#allocation6], %s44
      %s46 = sshll.u32 [#allocation5], 4
      %s47 = int_to_ptr.vmem [resolvable:$true] %s46
      %52 = dma.hbm_to_vmem [thread:$0]  %s1, 256, %s47, [#allocation6], 128, 128, 8
    $region9: #{tpu_custom_call.1} parent=1 // pred_fallthru
      _
    // Predicated region
    $region10: #{tpu_custom_call.1} parent=1 // pred_check
      _
    $region11: #{tpu_custom_call.1} parent=1 // pred_check_branch
      %54 = sbr.rel (0) target = $region13
    $region12: #{tpu_custom_call.1} parent=1 // pred_region
      %s56 = ssub.s32 256, 256
      %57 = vsyncadd [#allocation6], %s56
      %s58 = sshll.u32 [#allocation7], 4
      %s59 = int_to_ptr.vmem [resolvable:$true] %s58
      %64 = dma.hbm_to_vmem [thread:$0]  %s2, 256, %s59, [#allocation6], 128, 128, 8
    $region13: #{tpu_custom_call.1} parent=1 // pred_fallthru
      _
    // Predicated region
    $region14: #{tpu_custom_call.1} parent=1 // pred_check
      _
    $region15: #{tpu_custom_call.1} parent=1 // pred_check_branch
      %66 = sbr.rel (0) target = $region17
    $region16: #{tpu_custom_call.1} parent=1 // pred_region
      %s68 = ssub.s32 128, 128
      %69 = vsyncadd [#allocation9], %s68
      %s71 = sshll.u32 [#allocation8], 4
      %s72 = int_to_ptr.vmem [resolvable:$true] %s71
      %74 = dma.hbm_to_vmem [thread:$0]  %s3, 128, %s72, [#allocation9]
    $region17: #{tpu_custom_call.1} parent=1 // pred_fallthru
      _
    // Predicated region
    $region18: #{tpu_custom_call.1} parent=1 // pred_check
      _
    $region19: #{tpu_custom_call.1} parent=1 // pred_check_branch
      %76 = sbr.rel (0) target = $region21
    $region20: #{tpu_custom_call.1} parent=1 // pred_region
      %s78 = ssub.s32 128, 128
      %79 = vsyncadd [#allocation9], %s78
      %s81 = sshll.u32 [#allocation10], 4
      %s82 = int_to_ptr.vmem [resolvable:$true] %s81
      %84 = dma.hbm_to_vmem [thread:$0]  %s4, 128, %s82, [#allocation9]
    $region21: #{tpu_custom_call.1} parent=1 // pred_fallthru
      _
    // Predicated region
    $region22: #{tpu_custom_call.1} parent=1 // pred_check
      _
    $region23: #{tpu_custom_call.1} parent=1 // pred_check_branch
      %86 = sbr.rel (0) target = $region25
    $region24: #{tpu_custom_call.1} parent=1 // pred_region
      _
    $region25: #{tpu_custom_call.1} parent=1 // pred_fallthru
      _
    // Predicated region
    $region26: #{tpu_custom_call.1} parent=1 // pred_check
      _
    $region27: #{tpu_custom_call.1} parent=1 // pred_check_branch
      %88 = sbr.rel (0) target = $region29
    $region28: #{tpu_custom_call.1} parent=1 // pred_region
      _
    $region29: #{tpu_custom_call.1} parent=1 // pred_fallthru
      _
    // Predicated region
    $region30: #{tpu_custom_call.1} parent=1 // pred_check
      _
    $region31: #{tpu_custom_call.1} parent=1 // pred_check_branch
      %90 = sbr.rel (0) target = $region33
    $region32: #{tpu_custom_call.1} parent=1 // pred_region
      _
    $region33: #{tpu_custom_call.1} parent=1 // pred_fallthru
      _
    // Predicated region
    $region34: #{tpu_custom_call.1} parent=1 // pred_check
      _
    $region35: #{tpu_custom_call.1} parent=1 // pred_check_branch
      %92 = sbr.rel (0) target = $region37
    $region36: #{tpu_custom_call.1} parent=1 // pred_region
      %s94 = ssub.s32 16, 16
      %95 = vsyncadd [#allocation12], %s94
      %s97 = sshll.u32 [#allocation11], 4
      %s98 = int_to_ptr.vmem [resolvable:$true] %s97
      %100 = dma.hbm_to_vmem [thread:$0]  %s8, 16, %s98, [#allocation12]
    $region37: #{tpu_custom_call.1} parent=1 // pred_fallthru
      _
    // Predicated region
    $region38: #{tpu_custom_call.1} parent=1 // pred_check
      _
    $region39: #{tpu_custom_call.1} parent=1 // pred_check_branch
      %102 = sbr.rel (0) target = $region41
    $region40: #{tpu_custom_call.1} parent=1 // pred_region
      _
    $region41: #{tpu_custom_call.1} parent=1 // pred_fallthru
      _
    // Predicated region
    $region42: #{tpu_custom_call.1} parent=1 // pred_check
      _
    $region43: #{tpu_custom_call.1} parent=1 // pred_check_branch
      %104 = sbr.rel (0) target = $region45
    $region44: #{tpu_custom_call.1} parent=1 // pred_region
      %s106 = ssub.s32 16, 16
      %107 = vsyncadd [#allocation12], %s106
      %s109 = sshll.u32 [#allocation13], 4
      %s110 = int_to_ptr.vmem [resolvable:$true] %s109
      %112 = dma.hbm_to_vmem [thread:$0]  %s10, 16, %s110, [#allocation12]
    $region45: #{tpu_custom_call.1} parent=1 // pred_fallthru
      _
    // Predicated region
    $region46: #{tpu_custom_call.1} parent=1 // pred_check
      _
    $region47: #{tpu_custom_call.1} parent=1 // pred_check_branch
      %114 = sbr.rel (0) target = $region49
    $region48: #{tpu_custom_call.1} parent=1 // pred_region
      %s116 = ssub.s32 256, 256
      %117 = vsyncadd [#allocation15], %s116
      %s118 = sshll.u32 [#allocation14], 4
      %s119 = int_to_ptr.vmem [resolvable:$true] %s118
      %124 = dma.hbm_to_vmem [thread:$0]  %s11, 256, %s119, [#allocation15], 128, 128, 8
    $region49: #{tpu_custom_call.1} parent=1 // pred_fallthru
      _
    // Predicated region
    $region50: #{tpu_custom_call.1} parent=1 // pred_check
      _
    $region51: #{tpu_custom_call.1} parent=1 // pred_check_branch
      %126 = sbr.rel (0) target = $region53
    $region52: #{tpu_custom_call.1} parent=1 // pred_region
      %s128 = ssub.s32 16, 16
      %129 = vsyncadd [#allocation15], %s128
      %s131 = sshll.u32 [#allocation16], 4
      %s132 = int_to_ptr.vmem [resolvable:$true] %s131
      %134 = dma.hbm_to_vmem [thread:$0]  %s12, 16, %s132, [#allocation15]
    $region53: #{tpu_custom_call.1} parent=1 // pred_fallthru
      _
    // Predicated region
    $region54: #{tpu_custom_call.1} parent=1 // pred_check
      _
    $region55: #{tpu_custom_call.1} parent=1 // pred_check_branch
      %136 = sbr.rel (0) target = $region57
    $region56: #{tpu_custom_call.1} parent=1 // pred_region
      _
    $region57: #{tpu_custom_call.1} parent=1 // pred_fallthru
      _
    // Predicated region
    $region58: #{tpu_custom_call.1} parent=1 // pred_check
      _
    $region59: #{tpu_custom_call.1} parent=1 // pred_check_branch
      %138 = sbr.rel (0) target = $region61
    $region60: #{tpu_custom_call.1} parent=1 // pred_region
      _
    $region61: #{tpu_custom_call.1} parent=1 // pred_fallthru
      _
    // Predicated region
    $region62: #{tpu_custom_call.1} parent=1 // pred_check
      _
    $region63: #{tpu_custom_call.1} parent=1 // pred_check_branch
      %140 = sbr.rel (0) target = $region65
    $region64: #{tpu_custom_call.1} parent=1 // pred_region
      %s142 = ssub.s32 256, 256
      %143 = vsyncadd [#allocation18], %s142
      %s144 = sshll.u32 [#allocation17], 4
      %s145 = int_to_ptr.vmem [resolvable:$true] %s144
      %150 = dma.hbm_to_vmem [thread:$0]  %s15, 256, %s145, [#allocation18], 128, 128, 8
    $region65: #{tpu_custom_call.1} parent=1 // pred_fallthru
      _
    // Predicated region
    $region66: #{tpu_custom_call.1} parent=1 // pred_check
      _
    $region67: #{tpu_custom_call.1} parent=1 // pred_check_branch
      %152 = sbr.rel (0) target = $region69
    $region68: #{tpu_custom_call.1} parent=1 // pred_region
      _
    $region69: #{tpu_custom_call.1} parent=1 // pred_fallthru
      _
    // Predicated region
    $region70: #{tpu_custom_call.1} parent=1 // pred_check
      _
    $region71: #{tpu_custom_call.1} parent=1 // pred_check_branch
      %154 = sbr.rel (0) target = $region73
    $region72: #{tpu_custom_call.1} parent=1 // pred_region
      %155 = dma.done [#allocation3], 256
    $region73: #{tpu_custom_call.1} parent=1 // pred_fallthru
      _
    // Predicated region
    $region74: #{tpu_custom_call.1} parent=1 // pred_check
      _
    $region75: #{tpu_custom_call.1} parent=1 // pred_check_branch
      %157 = sbr.rel (0) target = $region77
    $region76: #{tpu_custom_call.1} parent=1 // pred_region
      %158 = dma.done [#allocation6], 256
    $region77: #{tpu_custom_call.1} parent=1 // pred_fallthru
      _
    // Predicated region
    $region78: #{tpu_custom_call.1} parent=1 // pred_check
      _
    $region79: #{tpu_custom_call.1} parent=1 // pred_check_branch
      %160 = sbr.rel (0) target = $region81
    $region80: #{tpu_custom_call.1} parent=1 // pred_region
      %161 = dma.done [#allocation6], 256
    $region81: #{tpu_custom_call.1} parent=1 // pred_fallthru
      _
    // Predicated region
    $region82: #{tpu_custom_call.1} parent=1 // pred_check
      _
    $region83: #{tpu_custom_call.1} parent=1 // pred_check_branch
      %163 = sbr.rel (0) target = $region85
    $region84: #{tpu_custom_call.1} parent=1 // pred_region
      %164 = dma.done [#allocation9], 128
    $region85: #{tpu_custom_call.1} parent=1 // pred_fallthru
      _
    // Predicated region
    $region86: #{tpu_custom_call.1} parent=1 // pred_check
      _
    $region87: #{tpu_custom_call.1} parent=1 // pred_check_branch
      %166 = sbr.rel (0) target = $region89
    $region88: #{tpu_custom_call.1} parent=1 // pred_region
      %167 = dma.done [#allocation9], 128
    $region89: #{tpu_custom_call.1} parent=1 // pred_fallthru
      _
    // Predicated region
    $region90: #{tpu_custom_call.1} parent=1 // pred_check
      _
    $region91: #{tpu_custom_call.1} parent=1 // pred_check_branch
      %169 = sbr.rel (0) target = $region93
    $region92: #{tpu_custom_call.1} parent=1 // pred_region
      %170 = dma.done [#allocation12], 16
    $region93: #{tpu_custom_call.1} parent=1 // pred_fallthru
      _
    // Predicated region
    $region94: #{tpu_custom_call.1} parent=1 // pred_check
      _
    $region95: #{tpu_custom_call.1} parent=1 // pred_check_branch
      %172 = sbr.rel (0) target = $region97
    $region96: #{tpu_custom_call.1} parent=1 // pred_region
      %173 = dma.done [#allocation12], 16
    $region97: #{tpu_custom_call.1} parent=1 // pred_fallthru
      _
    // Predicated region
    $region98: #{tpu_custom_call.1} parent=1 // pred_check
      _
    $region99: #{tpu_custom_call.1} parent=1 // pred_check_branch
      %175 = sbr.rel (0) target = $region101
    $region100: #{tpu_custom_call.1} parent=1 // pred_region
      %176 = dma.done [#allocation15], 256
    $region101: #{tpu_custom_call.1} parent=1 // pred_fallthru
      _
    // Predicated region
    $region102: #{tpu_custom_call.1} parent=1 // pred_check
      _
    $region103: #{tpu_custom_call.1} parent=1 // pred_check_branch
      %178 = sbr.rel (0) target = $region105
    $region104: #{tpu_custom_call.1} parent=1 // pred_region
      %179 = dma.done [#allocation15], 16
    $region105: #{tpu_custom_call.1} parent=1 // pred_fallthru
      _
    // Predicated region
    $region106: #{tpu_custom_call.1} parent=1 // pred_check
      _
    $region107: #{tpu_custom_call.1} parent=1 // pred_check_branch
      %181 = sbr.rel (0) target = $region109
    $region108: #{tpu_custom_call.1} parent=1 // pred_region
      %182 = dma.done [#allocation18], 256
    $region109: #{tpu_custom_call.1} parent=1 // pred_fallthru
      _
    %v183 = vld [vmem:[#allocation2] sm:$0xff]
    %v184 = vld [vmem:[#allocation2 + $0x8] sm:$0xff]
    %v185 = vld [vmem:[#allocation5] sm:$0xff]
    %v186 = vld [vmem:[#allocation5 + $0x8] sm:$0xff]
    %v187 = vld [vmem:[#allocation7] sm:$0xff]
    %v188 = vld [vmem:[#allocation7 + $0x8] sm:$0xff]
    %v189 = vld [vmem:[#allocation8] sm:$0xff]
    %v190 = vld [vmem:[#allocation10] sm:$0xff]
    %vm191 = vcmask 130048
    %v193 = vsel %vm191, %v189, 0
    %195 = vmatprep.subr.mxu0 0.0
    %196 = vmatpush1.msra.mxu0 %v183
    %197 = vmatprep.subr.mxu0 0.0
    %198 = vmatpush1.msra.mxu0 %v184
    %199 = vmatprep.subr.mxu0 0.0
    %200 = vmatpush1.msra.mxu0 0.0
    %201 = vmatprep.subr.mxu0 0.0
    %202 = vmatpush1.msra.mxu0 0.0
    %203 = vmatprep.subr.mxu0 0.0
    %204 = vmatpush1.msra.mxu0 0.0
    %205 = vmatprep.subr.mxu0 0.0
    %206 = vmatpush1.msra.mxu0 0.0
    %207 = vmatprep.subr.mxu0 0.0
    %208 = vmatpush1.msra.mxu0 0.0
    %209 = vmatprep.subr.mxu0 0.0
    %210 = vmatpush1.msra.mxu0 0.0
    %211 = vmatprep.subr.mxu0 0.0
    %212 = vmatpush1.msra.mxu0 0.0
    %213 = vmatprep.subr.mxu0 0.0
    %214 = vmatpush1.msra.mxu0 0.0
    %215 = vmatprep.subr.mxu0 0.0
    %216 = vmatpush1.msra.mxu0 0.0
    %217 = vmatprep.subr.mxu0 0.0
    %218 = vmatpush1.msra.mxu0 0.0
    %219 = vmatprep.subr.mxu0 0.0
    %220 = vmatpush1.msra.mxu0 0.0
    %221 = vmatprep.subr.mxu0 0.0
    %222 = vmatpush1.msra.mxu0 0.0
    %223 = vmatprep.subr.mxu0 0.0
    %224 = vmatpush1.msra.mxu0 0.0
    %225 = vmatprep.subr.mxu0 0.0
    %226 = vmatpush1.msra.mxu0 0.0
    %227 = vmatprep.subr.mxu0 0.0
    %228 = vmatpush1.msra.mxu0 0.0
    %229 = vmatprep.subr.mxu0 0.0
    %230 = vmatpush1.msra.mxu0 0.0
    %231 = vmatprep.subr.mxu0 0.0
    %232 = vmatpush1.msra.mxu0 0.0
    %233 = vmatprep.subr.mxu0 0.0
    %234 = vmatpush1.msra.mxu0 0.0
    %235 = vmatprep.subr.mxu0 0.0
    %236 = vmatpush1.msra.mxu0 0.0
    %237 = vmatprep.subr.mxu0 0.0
    %238 = vmatpush1.msra.mxu0 0.0
    %239 = vmatprep.subr.mxu0 0.0
    %240 = vmatpush1.msra.mxu0 0.0
    %241 = vmatprep.subr.mxu0 0.0
    %242 = vmatpush1.msra.mxu0 0.0
    %243 = vmatprep.subr.mxu0 0.0
    %244 = vmatpush1.msra.mxu0 0.0
    %245 = vmatprep.subr.mxu0 0.0
    %246 = vmatpush1.msra.mxu0 0.0
    %247 = vmatprep.subr.mxu0 0.0
    %248 = vmatpush1.msra.mxu0 0.0
    %249 = vmatprep.subr.mxu0 0.0
    %250 = vmatpush1.msra.mxu0 0.0
    %251 = vmatprep.subr.mxu0 0.0
    %252 = vmatpush1.msra.mxu0 0.0
    %253 = vmatprep.subr.mxu0 0.0
    %254 = vmatpush1.msra.mxu0 0.0
    %255 = vmatprep.subr.mxu0 0.0
    %256 = vmatpush1.msra.mxu0 0.0
    %257 = vmatprep.subr.mxu0 0.0
    %258 = vmatpush1.msra.mxu0 0.0
    %259 = vmatprep.mubr.f32.mxu0 0.0
    %260 = vmatmul.mubr.f32.gmra.mrb[0].mxu0 %v193
    %v261 = vpop.f32.mrb[0].mxu0
    %v262 = vadd.f32 0.0, %v261
    %v263 = vpop.f32.mrb[0].mxu0
    %264 = vdwg.mxu0
    %v266 = vsel %vm191, %v190, 0
    %268 = vmatprep.subr.mxu0 0.0
    %269 = vmatpush1.msra.mxu0 %v183
    %270 = vmatprep.subr.mxu0 0.0
    %271 = vmatpush1.msra.mxu0 %v184
    %272 = vmatprep.subr.mxu0 0.0
    %273 = vmatpush1.msra.mxu0 0.0
    %274 = vmatprep.subr.mxu0 0.0
    %275 = vmatpush1.msra.mxu0 0.0
    %276 = vmatprep.subr.mxu0 0.0
    %277 = vmatpush1.msra.mxu0 0.0
    %278 = vmatprep.subr.mxu0 0.0
    %279 = vmatpush1.msra.mxu0 0.0
    %280 = vmatprep.subr.mxu0 0.0
    %281 = vmatpush1.msra.mxu0 0.0
    %282 = vmatprep.subr.mxu0 0.0
    %283 = vmatpush1.msra.mxu0 0.0
    %284 = vmatprep.subr.mxu0 0.0
    %285 = vmatpush1.msra.mxu0 0.0
    %286 = vmatprep.subr.mxu0 0.0
    %287 = vmatpush1.msra.mxu0 0.0
    %288 = vmatprep.subr.mxu0 0.0
    %289 = vmatpush1.msra.mxu0 0.0
    %290 = vmatprep.subr.mxu0 0.0
    %291 = vmatpush1.msra.mxu0 0.0
    %292 = vmatprep.subr.mxu0 0.0
    %293 = vmatpush1.msra.mxu0 0.0
    %294 = vmatprep.subr.mxu0 0.0
    %295 = vmatpush1.msra.mxu0 0.0
    %296 = vmatprep.subr.mxu0 0.0
    %297 = vmatpush1.msra.mxu0 0.0
    %298 = vmatprep.subr.mxu0 0.0
    %299 = vmatpush1.msra.mxu0 0.0
    %300 = vmatprep.subr.mxu0 0.0
    %301 = vmatpush1.msra.mxu0 0.0
    %302 = vmatprep.subr.mxu0 0.0
    %303 = vmatpush1.msra.mxu0 0.0
    %304 = vmatprep.subr.mxu0 0.0
    %305 = vmatpush1.msra.mxu0 0.0
    %306 = vmatprep.subr.mxu0 0.0
    %307 = vmatpush1.msra.mxu0 0.0
    %308 = vmatprep.subr.mxu0 0.0
    %309 = vmatpush1.msra.mxu0 0.0
    %310 = vmatprep.subr.mxu0 0.0
    %311 = vmatpush1.msra.mxu0 0.0
    %312 = vmatprep.subr.mxu0 0.0
    %313 = vmatpush1.msra.mxu0 0.0
    %314 = vmatprep.subr.mxu0 0.0
    %315 = vmatpush1.msra.mxu0 0.0
    %316 = vmatprep.subr.mxu0 0.0
    %317 = vmatpush1.msra.mxu0 0.0
    %318 = vmatprep.subr.mxu0 0.0
    %319 = vmatpush1.msra.mxu0 0.0
    %320 = vmatprep.subr.mxu0 0.0
    %321 = vmatpush1.msra.mxu0 0.0
    %322 = vmatprep.subr.mxu0 0.0
    %323 = vmatpush1.msra.mxu0 0.0
    %324 = vmatprep.subr.mxu0 0.0
    %325 = vmatpush1.msra.mxu0 0.0
    %326 = vmatprep.subr.mxu0 0.0
    %327 = vmatpush1.msra.mxu0 0.0
    %328 = vmatprep.subr.mxu0 0.0
    %329 = vmatpush1.msra.mxu0 0.0
    %330 = vmatprep.subr.mxu0 0.0
    %331 = vmatpush1.msra.mxu0 0.0
    %332 = vmatprep.mubr.f32.mxu0 0.0
    %333 = vmatmul.mubr.f32.gmra.mrb[0].mxu0 %v266
    %v334 = vpop.f32.mrb[0].mxu0
    %v335 = vadd.f32 0.0, %v334
    %v336 = vpop.f32.mrb[0].mxu0
    %337 = vdwg.mxu0
    %v338 = vmul.f32 %v262, %v335
    %vm339 = vcmask 261120
    %v340 = vsel %vm339, %v338, 0.0
    %341 = vadd.xlane.f32.xlu0 %v340
    %v342 = vpop.xlane.xlu0 %341
    %v343 = vld [vmem:[%s5] sm:$0xff]
    %v344 = vld [vmem:[%s5 + $0x8] sm:$0xff]
    %v345 = vld [vmem:[%s5 + $0x10] sm:$0xff]
    %v346 = vld [vmem:[%s5 + $0x18] sm:$0xff]
    %v347 = vld [vmem:[%s6] sm:$0x1]
    %v349 = vlaneseq
    %v350 = vshrl.u32 %v349, 7
    %v351 = vsub.s32 0, %v350
    %v352 = vrot.slane %v347, %v351
    %v355 = vsel %vm339, %v183, 0
    %v358 = vsel %vm339, %v184, 0
    %360 = vmatprep.subr.mxu0 0.0
    %361 = vmatpush1.msra.mxu0 %v343
    %362 = vmatprep.subr.mxu0 0.0
    %363 = vmatpush1.msra.mxu0 %v344
    %364 = vmatprep.subr.mxu0 0.0
    %365 = vmatpush1.msra.mxu0 %v345
    %366 = vmatprep.subr.mxu0 0.0
    %367 = vmatpush1.msra.mxu0 %v346
    %368 = vmatprep.subr.mxu0 0.0
    %369 = vmatpush1.msra.mxu0 0.0
    %370 = vmatprep.subr.mxu0 0.0
    %371 = vmatpush1.msra.mxu0 0.0
    %372 = vmatprep.subr.mxu0 0.0
    %373 = vmatpush1.msra.mxu0 0.0
    %374 = vmatprep.subr.mxu0 0.0
    %375 = vmatpush1.msra.mxu0 0.0
    %376 = vmatprep.subr.mxu0 0.0
    %377 = vmatpush1.msra.mxu0 0.0
    %378 = vmatprep.subr.mxu0 0.0
    %379 = vmatpush1.msra.mxu0 0.0
    %380 = vmatprep.subr.mxu0 0.0
    %381 = vmatpush1.msra.mxu0 0.0
    %382 = vmatprep.subr.mxu0 0.0
    %383 = vmatpush1.msra.mxu0 0.0
    %384 = vmatprep.subr.mxu0 0.0
    %385 = vmatpush1.msra.mxu0 0.0
    %386 = vmatprep.subr.mxu0 0.0
    %387 = vmatpush1.msra.mxu0 0.0
    %388 = vmatprep.subr.mxu0 0.0
    %389 = vmatpush1.msra.mxu0 0.0
    %390 = vmatprep.subr.mxu0 0.0
    %391 = vmatpush1.msra.mxu0 0.0
    %392 = vmatprep.subr.mxu0 0.0
    %393 = vmatpush1.msra.mxu0 0.0
    %394 = vmatprep.subr.mxu0 0.0
    %395 = vmatpush1.msra.mxu0 0.0
    %396 = vmatprep.subr.mxu0 0.0
    %397 = vmatpush1.msra.mxu0 0.0
    %398 = vmatprep.subr.mxu0 0.0
    %399 = vmatpush1.msra.mxu0 0.0
    %400 = vmatprep.subr.mxu0 0.0
    %401 = vmatpush1.msra.mxu0 0.0
    %402 = vmatprep.subr.mxu0 0.0
    %403 = vmatpush1.msra.mxu0 0.0
    %404 = vmatprep.subr.mxu0 0.0
    %405 = vmatpush1.msra.mxu0 0.0
    %406 = vmatprep.subr.mxu0 0.0
    %407 = vmatpush1.msra.mxu0 0.0
    %408 = vmatprep.subr.mxu0 0.0
    %409 = vmatpush1.msra.mxu0 0.0
    %410 = vmatprep.subr.mxu0 0.0
    %411 = vmatpush1.msra.mxu0 0.0
    %412 = vmatprep.subr.mxu0 0.0
    %413 = vmatpush1.msra.mxu0 0.0
    %414 = vmatprep.subr.mxu0 0.0
    %415 = vmatpush1.msra.mxu0 0.0
    %416 = vmatprep.subr.mxu0 0.0
    %417 = vmatpush1.msra.mxu0 0.0
    %418 = vmatprep.subr.mxu0 0.0
    %419 = vmatpush1.msra.mxu0 0.0
    %420 = vmatprep.subr.mxu0 0.0
    %421 = vmatpush1.msra.mxu0 0.0
    %422 = vmatprep.subr.mxu0 0.0
    %423 = vmatpush1.msra.mxu0 0.0
    %424 = vmatprep.mubr.f32.mxu0 0.0
    %425 = vmatmul.mubr.f32.gmra.mrb[0].mxu0 %v355
    %v426 = vpop.f32.mrb[0].mxu0
    %v427 = vadd.f32 %v352, %v426
    %v428 = vpop.f32.mrb[0].mxu0
    %429 = vmatprep.mubr.f32.mxu0 0.0
    %430 = vmatmul.mubr.f32.gmra.mrb[0].mxu0 %v358
    %v431 = vpop.f32.mrb[0].mxu0
    %v432 = vadd.f32 %v352, %v431
    %v433 = vpop.f32.mrb[0].mxu0
    %434 = vdwg.mxu0
    %v435 = vmul.f32 %v427, 0.5
    %v436 = vmul.f32 %v432, 0.5
    %v437 = vld [vmem:[%s7] sm:$0xff]
    %v438 = vld [vmem:[%s7 + $0x8] sm:$0xff]
    %v439 = vld [vmem:[%s7 + $0x10] sm:$0xff]
    %v440 = vld [vmem:[%s7 + $0x18] sm:$0xff]
    %443 = vrot.lane.b32.xlu0 %v427, 96
    %v444 = vpop.permute.xlu0 %443
    %445 = vrot.lane.b32.xlu0 %v432, 96
    %v446 = vpop.permute.xlu0 %445
    %vm447 = vcmask 31744
    %v449 = vsel %vm447, %v435, 0
    %v452 = vsel %vm447, %v436, 0
    %v454 = vsel %vm447, %v444, 0
    %v456 = vsel %vm447, %v446, 0
    %458 = vmatprep.subr.mxu0 0.0
    %459 = vmatpush1.xpose.msra.mxu0 %v454
    %460 = vmatprep.subr.mxu0 0.0
    %461 = vmatpush1.xpose.msra.mxu0 %v456
    %462 = vmatprep.subr.mxu0 0.0
    %463 = vmatpush1.xpose.msra.mxu0 0.0
    %464 = vmatprep.subr.mxu0 0.0
    %465 = vmatpush1.xpose.msra.mxu0 0.0
    %466 = vmatprep.subr.mxu0 0.0
    %467 = vmatpush1.xpose.msra.mxu0 0.0
    %468 = vmatprep.subr.mxu0 0.0
    %469 = vmatpush1.xpose.msra.mxu0 0.0
    %470 = vmatprep.subr.mxu0 0.0
    %471 = vmatpush1.xpose.msra.mxu0 0.0
    %472 = vmatprep.subr.mxu0 0.0
    %473 = vmatpush1.xpose.msra.mxu0 0.0
    %474 = vmatprep.subr.mxu0 0.0
    %475 = vmatpush1.xpose.msra.mxu0 0.0
    %476 = vmatprep.subr.mxu0 0.0
    %477 = vmatpush1.xpose.msra.mxu0 0.0
    %478 = vmatprep.subr.mxu0 0.0
    %479 = vmatpush1.xpose.msra.mxu0 0.0
    %480 = vmatprep.subr.mxu0 0.0
    %481 = vmatpush1.xpose.msra.mxu0 0.0
    %482 = vmatprep.subr.mxu0 0.0
    %483 = vmatpush1.xpose.msra.mxu0 0.0
    %484 = vmatprep.subr.mxu0 0.0
    %485 = vmatpush1.xpose.msra.mxu0 0.0
    %486 = vmatprep.subr.mxu0 0.0
    %487 = vmatpush1.xpose.msra.mxu0 0.0
    %488 = vmatprep.subr.mxu0 0.0
    %489 = vmatpush1.xpose.msra.mxu0 0.0
    %490 = vmatprep.subr.mxu0 0.0
    %491 = vmatpush1.xpose.msra.mxu0 0.0
    %492 = vmatprep.subr.mxu0 0.0
    %493 = vmatpush1.xpose.msra.mxu0 0.0
    %494 = vmatprep.subr.mxu0 0.0
    %495 = vmatpush1.xpose.msra.mxu0 0.0
    %496 = vmatprep.subr.mxu0 0.0
    %497 = vmatpush1.xpose.msra.mxu0 0.0
    %498 = vmatprep.subr.mxu0 0.0
    %499 = vmatpush1.xpose.msra.mxu0 0.0
    %500 = vmatprep.subr.mxu0 0.0
    %501 = vmatpush1.xpose.msra.mxu0 0.0
    %502 = vmatprep.subr.mxu0 0.0
    %503 = vmatpush1.xpose.msra.mxu0 0.0
    %504 = vmatprep.subr.mxu0 0.0
    %505 = vmatpush1.xpose.msra.mxu0 0.0
    %506 = vmatprep.subr.mxu0 0.0
    %507 = vmatpush1.xpose.msra.mxu0 0.0
    %508 = vmatprep.subr.mxu0 0.0
    %509 = vmatpush1.xpose.msra.mxu0 0.0
    %510 = vmatprep.subr.mxu0 0.0
    %511 = vmatpush1.xpose.msra.mxu0 0.0
    %512 = vmatprep.subr.mxu0 0.0
    %513 = vmatpush1.xpose.msra.mxu0 0.0
    %514 = vmatprep.subr.mxu0 0.0
    %515 = vmatpush1.xpose.msra.mxu0 0.0
    %516 = vmatprep.subr.mxu0 0.0
    %517 = vmatpush1.xpose.msra.mxu0 0.0
    %518 = vmatprep.subr.mxu0 0.0
    %519 = vmatpush1.xpose.msra.mxu0 0.0
    %520 = vmatprep.subr.mxu0 0.0
    %521 = vmatpush1.xpose.msra.mxu0 0.0
    %522 = vmatprep.mubr.f32.mxu0 0.0
    %523 = vmatmul.mubr.f32.gmra.mrb[0].mxu0 %v449
    %v524 = vpop.f32.mrb[0].mxu0
    %v525 = vadd.f32 %v187, %v524
    %v526 = vpop.f32.mrb[0].mxu0
    %527 = vmatprep.mubr.f32.mxu0 0.0
    %528 = vmatmul.mubr.f32.gmra.mrb[0].mxu0 %v452
    %v529 = vpop.f32.mrb[0].mxu0
    %v530 = vadd.f32 %v188, %v529
    %v531 = vpop.f32.mrb[0].mxu0
    %532 = vdwg.mxu0
    %v533 = vsel %vm191, %v525, -inf
    %534 = vmax.xlane.f32.xlu0 %v533
    %v535 = vpop.xlane.xlu0 %534
    %v536 = vsel %vm191, %v530, -inf
    %537 = vmax.xlane.f32.xlu0 %v536
    %v538 = vpop.xlane.xlu0 %537
    %v539 = vsub.f32 %v525, %v535
    %v540 = vsub.f32 %v530, %v538
    %v541 = vmul.f32 %v539, 1.442695
    %v542 = vpow.pop %v541
    %v543 = vmul.f32 %v540, 1.442695
    %v544 = vpow.pop %v543
    %v545 = vsel %vm191, %v542, 0.0
    %546 = vadd.xlane.f32.xlu0 %v545
    %v547 = vpop.xlane.xlu0 %546
    %v548 = vsel %vm191, %v544, 0.0
    %549 = vadd.xlane.f32.xlu0 %v548
    %v550 = vpop.xlane.xlu0 %549
    %v551 = vrcp.pop %v547
    %v552 = vrcp.pop %v550
    %v553 = vmul.f32 %v542, %v551
    %v554 = vmul.f32 %v544, %v552
    %555 = vrot.lane.b32.xlu0 %v427, 64
    %v556 = vpop.permute.xlu0 %555
    %557 = vrot.lane.b32.xlu0 %v432, 64
    %v558 = vpop.permute.xlu0 %557
    %v562 = vsel %vm191, %v553, 0
    %v565 = vsel %vm191, %v554, 0
    %567 = vmatprep.subr.mxu0 0.0
    %568 = vmatpush1.msra.mxu0 %v556
    %569 = vmatprep.subr.mxu0 0.0
    %570 = vmatpush1.msra.mxu0 %v558
    %571 = vmatprep.subr.mxu0 0.0
    %572 = vmatpush1.msra.mxu0 0.0
    %573 = vmatprep.subr.mxu0 0.0
    %574 = vmatpush1.msra.mxu0 0.0
    %575 = vmatprep.subr.mxu0 0.0
    %576 = vmatpush1.msra.mxu0 0.0
    %577 = vmatprep.subr.mxu0 0.0
    %578 = vmatpush1.msra.mxu0 0.0
    %579 = vmatprep.subr.mxu0 0.0
    %580 = vmatpush1.msra.mxu0 0.0
    %581 = vmatprep.subr.mxu0 0.0
    %582 = vmatpush1.msra.mxu0 0.0
    %583 = vmatprep.subr.mxu0 0.0
    %584 = vmatpush1.msra.mxu0 0.0
    %585 = vmatprep.subr.mxu0 0.0
    %586 = vmatpush1.msra.mxu0 0.0
    %587 = vmatprep.subr.mxu0 0.0
    %588 = vmatpush1.msra.mxu0 0.0
    %589 = vmatprep.subr.mxu0 0.0
    %590 = vmatpush1.msra.mxu0 0.0
    %591 = vmatprep.subr.mxu0 0.0
    %592 = vmatpush1.msra.mxu0 0.0
    %593 = vmatprep.subr.mxu0 0.0
    %594 = vmatpush1.msra.mxu0 0.0
    %595 = vmatprep.subr.mxu0 0.0
    %596 = vmatpush1.msra.mxu0 0.0
    %597 = vmatprep.subr.mxu0 0.0
    %598 = vmatpush1.msra.mxu0 0.0
    %599 = vmatprep.subr.mxu0 0.0
    %600 = vmatpush1.msra.mxu0 0.0
    %601 = vmatprep.subr.mxu0 0.0
    %602 = vmatpush1.msra.mxu0 0.0
    %603 = vmatprep.subr.mxu0 0.0
    %604 = vmatpush1.msra.mxu0 0.0
    %605 = vmatprep.subr.mxu0 0.0
    %606 = vmatpush1.msra.mxu0 0.0
    %607 = vmatprep.subr.mxu0 0.0
    %608 = vmatpush1.msra.mxu0 0.0
    %609 = vmatprep.subr.mxu0 0.0
    %610 = vmatpush1.msra.mxu0 0.0
    %611 = vmatprep.subr.mxu0 0.0
    %612 = vmatpush1.msra.mxu0 0.0
    %613 = vmatprep.subr.mxu0 0.0
    %614 = vmatpush1.msra.mxu0 0.0
    %615 = vmatprep.subr.mxu0 0.0
    %616 = vmatpush1.msra.mxu0 0.0
    %617 = vmatprep.subr.mxu0 0.0
    %618 = vmatpush1.msra.mxu0 0.0
    %619 = vmatprep.subr.mxu0 0.0
    %620 = vmatpush1.msra.mxu0 0.0
    %621 = vmatprep.subr.mxu0 0.0
    %622 = vmatpush1.msra.mxu0 0.0
    %623 = vmatprep.subr.mxu0 0.0
    %624 = vmatpush1.msra.mxu0 0.0
    %625 = vmatprep.subr.mxu0 0.0
    %626 = vmatpush1.msra.mxu0 0.0
    %627 = vmatprep.subr.mxu0 0.0
    %628 = vmatpush1.msra.mxu0 0.0
    %629 = vmatprep.subr.mxu0 0.0
    %630 = vmatpush1.msra.mxu0 0.0
    %631 = vmatprep.mubr.f32.mxu0 0.0
    %632 = vmatmul.mubr.f32.gmra.mrb[0].mxu0 %v562
    %v633 = vpop.f32.mrb[0].mxu0
    %v634 = vadd.f32 0.0, %v633
    %v635 = vpop.f32.mrb[0].mxu0
    %636 = vmatprep.mubr.f32.mxu0 0.0
    %637 = vmatmul.mubr.f32.gmra.mrb[0].mxu0 %v565
    %v638 = vpop.f32.mrb[0].mxu0
    %v639 = vadd.f32 0.0, %v638
    %v640 = vpop.f32.mrb[0].mxu0
    %641 = vdwg.mxu0
    %642 = vrot.lane.b32.xlu0 %v435, 124
    %v643 = vpop.permute.xlu0 %642
    %644 = vrot.lane.b32.xlu0 %v436, 124
    %v645 = vpop.permute.xlu0 %644
    %646 = vrot.lane.b32.xlu0 %v427, 92
    %v647 = vpop.permute.xlu0 %646
    %648 = vrot.lane.b32.xlu0 %v432, 92
    %v649 = vpop.permute.xlu0 %648
    %v650 = vsel %vm447, %v643, 0
    %v652 = vsel %vm447, %v645, 0
    %v654 = vsel %vm447, %v647, 0
    %v656 = vsel %vm447, %v649, 0
    %658 = vmatprep.subr.mxu0 0.0
    %659 = vmatpush1.xpose.msra.mxu0 %v654
    %660 = vmatprep.subr.mxu0 0.0
    %661 = vmatpush1.xpose.msra.mxu0 %v656
    %662 = vmatprep.subr.mxu0 0.0
    %663 = vmatpush1.xpose.msra.mxu0 0.0
    %664 = vmatprep.subr.mxu0 0.0
    %665 = vmatpush1.xpose.msra.mxu0 0.0
    %666 = vmatprep.subr.mxu0 0.0
    %667 = vmatpush1.xpose.msra.mxu0 0.0
    %668 = vmatprep.subr.mxu0 0.0
    %669 = vmatpush1.xpose.msra.mxu0 0.0
    %670 = vmatprep.subr.mxu0 0.0
    %671 = vmatpush1.xpose.msra.mxu0 0.0
    %672 = vmatprep.subr.mxu0 0.0
    %673 = vmatpush1.xpose.msra.mxu0 0.0
    %674 = vmatprep.subr.mxu0 0.0
    %675 = vmatpush1.xpose.msra.mxu0 0.0
    %676 = vmatprep.subr.mxu0 0.0
    %677 = vmatpush1.xpose.msra.mxu0 0.0
    %678 = vmatprep.subr.mxu0 0.0
    %679 = vmatpush1.xpose.msra.mxu0 0.0
    %680 = vmatprep.subr.mxu0 0.0
    %681 = vmatpush1.xpose.msra.mxu0 0.0
    %682 = vmatprep.subr.mxu0 0.0
    %683 = vmatpush1.xpose.msra.mxu0 0.0
    %684 = vmatprep.subr.mxu0 0.0
    %685 = vmatpush1.xpose.msra.mxu0 0.0
    %686 = vmatprep.subr.mxu0 0.0
    %687 = vmatpush1.xpose.msra.mxu0 0.0
    %688 = vmatprep.subr.mxu0 0.0
    %689 = vmatpush1.xpose.msra.mxu0 0.0
    %690 = vmatprep.subr.mxu0 0.0
    %691 = vmatpush1.xpose.msra.mxu0 0.0
    %692 = vmatprep.subr.mxu0 0.0
    %693 = vmatpush1.xpose.msra.mxu0 0.0
    %694 = vmatprep.subr.mxu0 0.0
    %695 = vmatpush1.xpose.msra.mxu0 0.0
    %696 = vmatprep.subr.mxu0 0.0
    %697 = vmatpush1.xpose.msra.mxu0 0.0
    %698 = vmatprep.subr.mxu0 0.0
    %699 = vmatpush1.xpose.msra.mxu0 0.0
    %700 = vmatprep.subr.mxu0 0.0
    %701 = vmatpush1.xpose.msra.mxu0 0.0
    %702 = vmatprep.subr.mxu0 0.0
    %703 = vmatpush1.xpose.msra.mxu0 0.0
    %704 = vmatprep.subr.mxu0 0.0
    %705 = vmatpush1.xpose.msra.mxu0 0.0
    %706 = vmatprep.subr.mxu0 0.0
    %707 = vmatpush1.xpose.msra.mxu0 0.0
    %708 = vmatprep.subr.mxu0 0.0
    %709 = vmatpush1.xpose.msra.mxu0 0.0
    %710 = vmatprep.subr.mxu0 0.0
    %711 = vmatpush1.xpose.msra.mxu0 0.0
    %712 = vmatprep.subr.mxu0 0.0
    %713 = vmatpush1.xpose.msra.mxu0 0.0
    %714 = vmatprep.subr.mxu0 0.0
    %715 = vmatpush1.xpose.msra.mxu0 0.0
    %716 = vmatprep.subr.mxu0 0.0
    %717 = vmatpush1.xpose.msra.mxu0 0.0
    %718 = vmatprep.subr.mxu0 0.0
    %719 = vmatpush1.xpose.msra.mxu0 0.0
    %720 = vmatprep.subr.mxu0 0.0
    %721 = vmatpush1.xpose.msra.mxu0 0.0
    %722 = vmatprep.mubr.f32.mxu0 0.0
    %723 = vmatmul.mubr.f32.gmra.mrb[0].mxu0 %v650
    %v724 = vpop.f32.mrb[0].mxu0
    %v725 = vadd.f32 %v187, %v724
    %v726 = vpop.f32.mrb[0].mxu0
    %727 = vmatprep.mubr.f32.mxu0 0.0
    %728 = vmatmul.mubr.f32.gmra.mrb[0].mxu0 %v652
    %v729 = vpop.f32.mrb[0].mxu0
    %v730 = vadd.f32 %v188, %v729
    %v731 = vpop.f32.mrb[0].mxu0
    %732 = vdwg.mxu0
    %v733 = vsel %vm191, %v725, -inf
    %734 = vmax.xlane.f32.xlu0 %v733
    %v735 = vpop.xlane.xlu0 %734
    %v736 = vsel %vm191, %v730, -inf
    %737 = vmax.xlane.f32.xlu0 %v736
    %v738 = vpop.xlane.xlu0 %737
    %v739 = vsub.f32 %v725, %v735
    %v740 = vsub.f32 %v730, %v738
    %v741 = vmul.f32 %v739, 1.442695
    %v742 = vpow.pop %v741
    %v743 = vmul.f32 %v740, 1.442695
    %v744 = vpow.pop %v743
    %v745 = vsel %vm191, %v742, 0.0
    %746 = vadd.xlane.f32.xlu0 %v745
    %v747 = vpop.xlane.xlu0 %746
    %v748 = vsel %vm191, %v744, 0.0
    %749 = vadd.xlane.f32.xlu0 %v748
    %v750 = vpop.xlane.xlu0 %749
    %v751 = vrcp.pop %v747
    %v752 = vrcp.pop %v750
    %v753 = vmul.f32 %v742, %v751
    %v754 = vmul.f32 %v744, %v752
    %755 = vrot.lane.b32.xlu0 %v427, 60
    %v756 = vpop.permute.xlu0 %755
    %757 = vrot.lane.b32.xlu0 %v432, 60
    %v758 = vpop.permute.xlu0 %757
    %v762 = vsel %vm191, %v753, 0
    %v765 = vsel %vm191, %v754, 0
    %767 = vmatprep.subr.mxu0 0.0
    %768 = vmatpush1.msra.mxu0 %v756
    %769 = vmatprep.subr.mxu0 0.0
    %770 = vmatpush1.msra.mxu0 %v758
    %771 = vmatprep.subr.mxu0 0.0
    %772 = vmatpush1.msra.mxu0 0.0
    %773 = vmatprep.subr.mxu0 0.0
    %774 = vmatpush1.msra.mxu0 0.0
    %775 = vmatprep.subr.mxu0 0.0
    %776 = vmatpush1.msra.mxu0 0.0
    %777 = vmatprep.subr.mxu0 0.0
    %778 = vmatpush1.msra.mxu0 0.0
    %779 = vmatprep.subr.mxu0 0.0
    %780 = vmatpush1.msra.mxu0 0.0
    %781 = vmatprep.subr.mxu0 0.0
    %782 = vmatpush1.msra.mxu0 0.0
    %783 = vmatprep.subr.mxu0 0.0
    %784 = vmatpush1.msra.mxu0 0.0
    %785 = vmatprep.subr.mxu0 0.0
    %786 = vmatpush1.msra.mxu0 0.0
    %787 = vmatprep.subr.mxu0 0.0
    %788 = vmatpush1.msra.mxu0 0.0
    %789 = vmatprep.subr.mxu0 0.0
    %790 = vmatpush1.msra.mxu0 0.0
    %791 = vmatprep.subr.mxu0 0.0
    %792 = vmatpush1.msra.mxu0 0.0
    %793 = vmatprep.subr.mxu0 0.0
    %794 = vmatpush1.msra.mxu0 0.0
    %795 = vmatprep.subr.mxu0 0.0
    %796 = vmatpush1.msra.mxu0 0.0
    %797 = vmatprep.subr.mxu0 0.0
    %798 = vmatpush1.msra.mxu0 0.0
    %799 = vmatprep.subr.mxu0 0.0
    %800 = vmatpush1.msra.mxu0 0.0
    %801 = vmatprep.subr.mxu0 0.0
    %802 = vmatpush1.msra.mxu0 0.0
    %803 = vmatprep.subr.mxu0 0.0
    %804 = vmatpush1.msra.mxu0 0.0
    %805 = vmatprep.subr.mxu0 0.0
    %806 = vmatpush1.msra.mxu0 0.0
    %807 = vmatprep.subr.mxu0 0.0
    %808 = vmatpush1.msra.mxu0 0.0
    %809 = vmatprep.subr.mxu0 0.0
    %810 = vmatpush1.msra.mxu0 0.0
    %811 = vmatprep.subr.mxu0 0.0
    %812 = vmatpush1.msra.mxu0 0.0
    %813 = vmatprep.subr.mxu0 0.0
    %814 = vmatpush1.msra.mxu0 0.0
    %815 = vmatprep.subr.mxu0 0.0
    %816 = vmatpush1.msra.mxu0 0.0
    %817 = vmatprep.subr.mxu0 0.0
    %818 = vmatpush1.msra.mxu0 0.0
    %819 = vmatprep.subr.mxu0 0.0
    %820 = vmatpush1.msra.mxu0 0.0
    %821 = vmatprep.subr.mxu0 0.0
    %822 = vmatpush1.msra.mxu0 0.0
    %823 = vmatprep.subr.mxu0 0.0
    %824 = vmatpush1.msra.mxu0 0.0
    %825 = vmatprep.subr.mxu0 0.0
    %826 = vmatpush1.msra.mxu0 0.0
    %827 = vmatprep.subr.mxu0 0.0
    %828 = vmatpush1.msra.mxu0 0.0
    %829 = vmatprep.subr.mxu0 0.0
    %830 = vmatpush1.msra.mxu0 0.0
    %831 = vmatprep.mubr.f32.mxu0 0.0
    %832 = vmatmul.mubr.f32.gmra.mrb[0].mxu0 %v762
    %v833 = vpop.f32.mrb[0].mxu0
    %v834 = vadd.f32 0.0, %v833
    %v835 = vpop.f32.mrb[0].mxu0
    %836 = vmatprep.mubr.f32.mxu0 0.0
    %837 = vmatmul.mubr.f32.gmra.mrb[0].mxu0 %v765
    %v838 = vpop.f32.mrb[0].mxu0
    %v839 = vadd.f32 0.0, %v838
    %v840 = vpop.f32.mrb[0].mxu0
    %841 = vdwg.mxu0
    %v843 = vrot.slane %v437, 4
    %v845 = vsel %vm447, %v834, 0
    %v848 = vsel %vm447, %v839, 0
    %vm850 = vcmask 1043456
    %v851 = vsel %vm850, %v843, 0
    %853 = vmatprep.subr.mxu0 0.0
    %854 = vmatpush1.msra.mxu0 %v851
    %855 = vmatprep.subr.mxu0 0.0
    %856 = vmatpush1.msra.mxu0 0.0
    %857 = vmatprep.subr.mxu0 0.0
    %858 = vmatpush1.msra.mxu0 0.0
    %859 = vmatprep.subr.mxu0 0.0
    %860 = vmatpush1.msra.mxu0 0.0
    %861 = vmatprep.subr.mxu0 0.0
    %862 = vmatpush1.msra.mxu0 0.0
    %863 = vmatprep.subr.mxu0 0.0
    %864 = vmatpush1.msra.mxu0 0.0
    %865 = vmatprep.subr.mxu0 0.0
    %866 = vmatpush1.msra.mxu0 0.0
    %867 = vmatprep.subr.mxu0 0.0
    %868 = vmatpush1.msra.mxu0 0.0
    %869 = vmatprep.subr.mxu0 0.0
    %870 = vmatpush1.msra.mxu0 0.0
    %871 = vmatprep.subr.mxu0 0.0
    %872 = vmatpush1.msra.mxu0 0.0
    %873 = vmatprep.subr.mxu0 0.0
    %874 = vmatpush1.msra.mxu0 0.0
    %875 = vmatprep.subr.mxu0 0.0
    %876 = vmatpush1.msra.mxu0 0.0
    %877 = vmatprep.subr.mxu0 0.0
    %878 = vmatpush1.msra.mxu0 0.0
    %879 = vmatprep.subr.mxu0 0.0
    %880 = vmatpush1.msra.mxu0 0.0
    %881 = vmatprep.subr.mxu0 0.0
    %882 = vmatpush1.msra.mxu0 0.0
    %883 = vmatprep.subr.mxu0 0.0
    %884 = vmatpush1.msra.mxu0 0.0
    %885 = vmatprep.subr.mxu0 0.0
    %886 = vmatpush1.msra.mxu0 0.0
    %887 = vmatprep.subr.mxu0 0.0
    %888 = vmatpush1.msra.mxu0 0.0
    %889 = vmatprep.subr.mxu0 0.0
    %890 = vmatpush1.msra.mxu0 0.0
    %891 = vmatprep.subr.mxu0 0.0
    %892 = vmatpush1.msra.mxu0 0.0
    %893 = vmatprep.subr.mxu0 0.0
    %894 = vmatpush1.msra.mxu0 0.0
    %895 = vmatprep.subr.mxu0 0.0
    %896 = vmatpush1.msra.mxu0 0.0
    %897 = vmatprep.subr.mxu0 0.0
    %898 = vmatpush1.msra.mxu0 0.0
    %899 = vmatprep.subr.mxu0 0.0
    %900 = vmatpush1.msra.mxu0 0.0
    %901 = vmatprep.subr.mxu0 0.0
    %902 = vmatpush1.msra.mxu0 0.0
    %903 = vmatprep.subr.mxu0 0.0
    %904 = vmatpush1.msra.mxu0 0.0
    %905 = vmatprep.subr.mxu0 0.0
    %906 = vmatpush1.msra.mxu0 0.0
    %907 = vmatprep.subr.mxu0 0.0
    %908 = vmatpush1.msra.mxu0 0.0
    %909 = vmatprep.subr.mxu0 0.0
    %910 = vmatpush1.msra.mxu0 0.0
    %911 = vmatprep.subr.mxu0 0.0
    %912 = vmatpush1.msra.mxu0 0.0
    %913 = vmatprep.subr.mxu0 0.0
    %914 = vmatpush1.msra.mxu0 0.0
    %915 = vmatprep.subr.mxu0 0.0
    %916 = vmatpush1.msra.mxu0 0.0
    %917 = vmatprep.mubr.f32.mxu0 0.0
    %918 = vmatmul.mubr.f32.gmra.mrb[0].mxu0 %v845
    %v919 = vpop.f32.mrb[0].mxu0
    %v920 = vadd.f32 0.0, %v919
    %v921 = vpop.f32.mrb[0].mxu0
    %922 = vmatprep.mubr.f32.mxu0 0.0
    %923 = vmatmul.mubr.f32.gmra.mrb[0].mxu0 %v848
    %v924 = vpop.f32.mrb[0].mxu0
    %v925 = vadd.f32 0.0, %v924
    %v926 = vpop.f32.mrb[0].mxu0
    %927 = vdwg.mxu0
    %v929 = vsel %vm447, %v634, 0
    %v932 = vsel %vm447, %v639, 0
    %v934 = vsel %vm850, %v437, 0
    %936 = vmatprep.subr.mxu0 0.0
    %937 = vmatpush1.msra.mxu0 %v934
    %938 = vmatprep.subr.mxu0 0.0
    %939 = vmatpush1.msra.mxu0 0.0
    %940 = vmatprep.subr.mxu0 0.0
    %941 = vmatpush1.msra.mxu0 0.0
    %942 = vmatprep.subr.mxu0 0.0
    %943 = vmatpush1.msra.mxu0 0.0
    %944 = vmatprep.subr.mxu0 0.0
    %945 = vmatpush1.msra.mxu0 0.0
    %946 = vmatprep.subr.mxu0 0.0
    %947 = vmatpush1.msra.mxu0 0.0
    %948 = vmatprep.subr.mxu0 0.0
    %949 = vmatpush1.msra.mxu0 0.0
    %950 = vmatprep.subr.mxu0 0.0
    %951 = vmatpush1.msra.mxu0 0.0
    %952 = vmatprep.subr.mxu0 0.0
    %953 = vmatpush1.msra.mxu0 0.0
    %954 = vmatprep.subr.mxu0 0.0
    %955 = vmatpush1.msra.mxu0 0.0
    %956 = vmatprep.subr.mxu0 0.0
    %957 = vmatpush1.msra.mxu0 0.0
    %958 = vmatprep.subr.mxu0 0.0
    %959 = vmatpush1.msra.mxu0 0.0
    %960 = vmatprep.subr.mxu0 0.0
    %961 = vmatpush1.msra.mxu0 0.0
    %962 = vmatprep.subr.mxu0 0.0
    %963 = vmatpush1.msra.mxu0 0.0
    %964 = vmatprep.subr.mxu0 0.0
    %965 = vmatpush1.msra.mxu0 0.0
    %966 = vmatprep.subr.mxu0 0.0
    %967 = vmatpush1.msra.mxu0 0.0
    %968 = vmatprep.subr.mxu0 0.0
    %969 = vmatpush1.msra.mxu0 0.0
    %970 = vmatprep.subr.mxu0 0.0
    %971 = vmatpush1.msra.mxu0 0.0
    %972 = vmatprep.subr.mxu0 0.0
    %973 = vmatpush1.msra.mxu0 0.0
    %974 = vmatprep.subr.mxu0 0.0
    %975 = vmatpush1.msra.mxu0 0.0
    %976 = vmatprep.subr.mxu0 0.0
    %977 = vmatpush1.msra.mxu0 0.0
    %978 = vmatprep.subr.mxu0 0.0
    %979 = vmatpush1.msra.mxu0 0.0
    %980 = vmatprep.subr.mxu0 0.0
    %981 = vmatpush1.msra.mxu0 0.0
    %982 = vmatprep.subr.mxu0 0.0
    %983 = vmatpush1.msra.mxu0 0.0
    %984 = vmatprep.subr.mxu0 0.0
    %985 = vmatpush1.msra.mxu0 0.0
    %986 = vmatprep.subr.mxu0 0.0
    %987 = vmatpush1.msra.mxu0 0.0
    %988 = vmatprep.subr.mxu0 0.0
    %989 = vmatpush1.msra.mxu0 0.0
    %990 = vmatprep.subr.mxu0 0.0
    %991 = vmatpush1.msra.mxu0 0.0
    %992 = vmatprep.subr.mxu0 0.0
    %993 = vmatpush1.msra.mxu0 0.0
    %994 = vmatprep.subr.mxu0 0.0
    %995 = vmatpush1.msra.mxu0 0.0
    %996 = vmatprep.subr.mxu0 0.0
    %997 = vmatpush1.msra.mxu0 0.0
    %998 = vmatprep.subr.mxu0 0.0
    %999 = vmatpush1.msra.mxu0 0.0
    %1000 = vmatprep.mubr.f32.mxu0 0.0
    %1001 = vmatmul.mubr.f32.gmra.mrb[0].mxu0 %v929
    %v1002 = vpop.f32.mrb[0].mxu0
    %v1003 = vadd.f32 %v920, %v1002
    %v1004 = vpop.f32.mrb[0].mxu0
    %1005 = vmatprep.mubr.f32.mxu0 0.0
    %1006 = vmatmul.mubr.f32.gmra.mrb[0].mxu0 %v932
    %v1007 = vpop.f32.mrb[0].mxu0
    %v1008 = vadd.f32 %v925, %v1007
    %v1009 = vpop.f32.mrb[0].mxu0
    %1010 = vdwg.mxu0
    %1011 = vrot.lane.b32.xlu0 %v435, 120
    %v1012 = vpop.permute.xlu0 %1011
    %1013 = vrot.lane.b32.xlu0 %v436, 120
    %v1014 = vpop.permute.xlu0 %1013
    %1015 = vrot.lane.b32.xlu0 %v427, 88
    %v1016 = vpop.permute.xlu0 %1015
    %1017 = vrot.lane.b32.xlu0 %v432, 88
    %v1018 = vpop.permute.xlu0 %1017
    %v1019 = vsel %vm447, %v1012, 0
    %v1021 = vsel %vm447, %v1014, 0
    %v1023 = vsel %vm447, %v1016, 0
    %v1025 = vsel %vm447, %v1018, 0
    %1027 = vmatprep.subr.mxu0 0.0
    %1028 = vmatpush1.xpose.msra.mxu0 %v1023
    %1029 = vmatprep.subr.mxu0 0.0
    %1030 = vmatpush1.xpose.msra.mxu0 %v1025
    %1031 = vmatprep.subr.mxu0 0.0
    %1032 = vmatpush1.xpose.msra.mxu0 0.0
    %1033 = vmatprep.subr.mxu0 0.0
    %1034 = vmatpush1.xpose.msra.mxu0 0.0
    %1035 = vmatprep.subr.mxu0 0.0
    %1036 = vmatpush1.xpose.msra.mxu0 0.0
    %1037 = vmatprep.subr.mxu0 0.0
    %1038 = vmatpush1.xpose.msra.mxu0 0.0
    %1039 = vmatprep.subr.mxu0 0.0
    %1040 = vmatpush1.xpose.msra.mxu0 0.0
    %1041 = vmatprep.subr.mxu0 0.0
    %1042 = vmatpush1.xpose.msra.mxu0 0.0
    %1043 = vmatprep.subr.mxu0 0.0
    %1044 = vmatpush1.xpose.msra.mxu0 0.0
    %1045 = vmatprep.subr.mxu0 0.0
    %1046 = vmatpush1.xpose.msra.mxu0 0.0
    %1047 = vmatprep.subr.mxu0 0.0
    %1048 = vmatpush1.xpose.msra.mxu0 0.0
    %1049 = vmatprep.subr.mxu0 0.0
    %1050 = vmatpush1.xpose.msra.mxu0 0.0
    %1051 = vmatprep.subr.mxu0 0.0
    %1052 = vmatpush1.xpose.msra.mxu0 0.0
    %1053 = vmatprep.subr.mxu0 0.0
    %1054 = vmatpush1.xpose.msra.mxu0 0.0
    %1055 = vmatprep.subr.mxu0 0.0
    %1056 = vmatpush1.xpose.msra.mxu0 0.0
    %1057 = vmatprep.subr.mxu0 0.0
    %1058 = vmatpush1.xpose.msra.mxu0 0.0
    %1059 = vmatprep.subr.mxu0 0.0
    %1060 = vmatpush1.xpose.msra.mxu0 0.0
    %1061 = vmatprep.subr.mxu0 0.0
    %1062 = vmatpush1.xpose.msra.mxu0 0.0
    %1063 = vmatprep.subr.mxu0 0.0
    %1064 = vmatpush1.xpose.msra.mxu0 0.0
    %1065 = vmatprep.subr.mxu0 0.0
    %1066 = vmatpush1.xpose.msra.mxu0 0.0
    %1067 = vmatprep.subr.mxu0 0.0
    %1068 = vmatpush1.xpose.msra.mxu0 0.0
    %1069 = vmatprep.subr.mxu0 0.0
    %1070 = vmatpush1.xpose.msra.mxu0 0.0
    %1071 = vmatprep.subr.mxu0 0.0
    %1072 = vmatpush1.xpose.msra.mxu0 0.0
    %1073 = vmatprep.subr.mxu0 0.0
    %1074 = vmatpush1.xpose.msra.mxu0 0.0
    %1075 = vmatprep.subr.mxu0 0.0
    %1076 = vmatpush1.xpose.msra.mxu0 0.0
    %1077 = vmatprep.subr.mxu0 0.0
    %1078 = vmatpush1.xpose.msra.mxu0 0.0
    %1079 = vmatprep.subr.mxu0 0.0
    %1080 = vmatpush1.xpose.msra.mxu0 0.0
    %1081 = vmatprep.subr.mxu0 0.0
    %1082 = vmatpush1.xpose.msra.mxu0 0.0
    %1083 = vmatprep.subr.mxu0 0.0
    %1084 = vmatpush1.xpose.msra.mxu0 0.0
    %1085 = vmatprep.subr.mxu0 0.0
    %1086 = vmatpush1.xpose.msra.mxu0 0.0
    %1087 = vmatprep.subr.mxu0 0.0
    %1088 = vmatpush1.xpose.msra.mxu0 0.0
    %1089 = vmatprep.subr.mxu0 0.0
    %1090 = vmatpush1.xpose.msra.mxu0 0.0
    %1091 = vmatprep.mubr.f32.mxu0 0.0
    %1092 = vmatmul.mubr.f32.gmra.mrb[0].mxu0 %v1019
    %v1093 = vpop.f32.mrb[0].mxu0
    %v1094 = vadd.f32 %v187, %v1093
    %v1095 = vpop.f32.mrb[0].mxu0
    %1096 = vmatprep.mubr.f32.mxu0 0.0
    %1097 = vmatmul.mubr.f32.gmra.mrb[0].mxu0 %v1021
    %v1098 = vpop.f32.mrb[0].mxu0
    %v1099 = vadd.f32 %v188, %v1098
    %v1100 = vpop.f32.mrb[0].mxu0
    %1101 = vdwg.mxu0
    %v1102 = vsel %vm191, %v1094, -inf
    %1103 = vmax.xlane.f32.xlu0 %v1102
    %v1104 = vpop.xlane.xlu0 %1103
    %v1105 = vsel %vm191, %v1099, -inf
    %1106 = vmax.xlane.f32.xlu0 %v1105
    %v1107 = vpop.xlane.xlu0 %1106
    %v1108 = vsub.f32 %v1094, %v1104
    %v1109 = vsub.f32 %v1099, %v1107
    %v1110 = vmul.f32 %v1108, 1.442695
    %v1111 = vpow.pop %v1110
    %v1112 = vmul.f32 %v1109, 1.442695
    %v1113 = vpow.pop %v1112
    %v1114 = vsel %vm191, %v1111, 0.0
    %1115 = vadd.xlane.f32.xlu0 %v1114
    %v1116 = vpop.xlane.xlu0 %1115
    %v1117 = vsel %vm191, %v1113, 0.0
    %1118 = vadd.xlane.f32.xlu0 %v1117
    %v1119 = vpop.xlane.xlu0 %1118
    %v1120 = vrcp.pop %v1116
    %v1121 = vrcp.pop %v1119
    %v1122 = vmul.f32 %v1111, %v1120
    %v1123 = vmul.f32 %v1113, %v1121
    %1124 = vrot.lane.b32.xlu0 %v427, 56
    %v1125 = vpop.permute.xlu0 %1124
    %1126 = vrot.lane.b32.xlu0 %v432, 56
    %v1127 = vpop.permute.xlu0 %1126
    %v1131 = vsel %vm191, %v1122, 0
    %v1134 = vsel %vm191, %v1123, 0
    %1136 = vmatprep.subr.mxu0 0.0
    %1137 = vmatpush1.msra.mxu0 %v1125
    %1138 = vmatprep.subr.mxu0 0.0
    %1139 = vmatpush1.msra.mxu0 %v1127
    %1140 = vmatprep.subr.mxu0 0.0
    %1141 = vmatpush1.msra.mxu0 0.0
    %1142 = vmatprep.subr.mxu0 0.0
    %1143 = vmatpush1.msra.mxu0 0.0
    %1144 = vmatprep.subr.mxu0 0.0
    %1145 = vmatpush1.msra.mxu0 0.0
    %1146 = vmatprep.subr.mxu0 0.0
    %1147 = vmatpush1.msra.mxu0 0.0
    %1148 = vmatprep.subr.mxu0 0.0
    %1149 = vmatpush1.msra.mxu0 0.0
    %1150 = vmatprep.subr.mxu0 0.0
    %1151 = vmatpush1.msra.mxu0 0.0
    %1152 = vmatprep.subr.mxu0 0.0
    %1153 = vmatpush1.msra.mxu0 0.0
    %1154 = vmatprep.subr.mxu0 0.0
    %1155 = vmatpush1.msra.mxu0 0.0
    %1156 = vmatprep.subr.mxu0 0.0
    %1157 = vmatpush1.msra.mxu0 0.0
    %1158 = vmatprep.subr.mxu0 0.0
    %1159 = vmatpush1.msra.mxu0 0.0
    %1160 = vmatprep.subr.mxu0 0.0
    %1161 = vmatpush1.msra.mxu0 0.0
    %1162 = vmatprep.subr.mxu0 0.0
    %1163 = vmatpush1.msra.mxu0 0.0
    %1164 = vmatprep.subr.mxu0 0.0
    %1165 = vmatpush1.msra.mxu0 0.0
    %1166 = vmatprep.subr.mxu0 0.0
    %1167 = vmatpush1.msra.mxu0 0.0
    %1168 = vmatprep.subr.mxu0 0.0
    %1169 = vmatpush1.msra.mxu0 0.0
    %1170 = vmatprep.subr.mxu0 0.0
    %1171 = vmatpush1.msra.mxu0 0.0
    %1172 = vmatprep.subr.mxu0 0.0
    %1173 = vmatpush1.msra.mxu0 0.0
    %1174 = vmatprep.subr.mxu0 0.0
    %1175 = vmatpush1.msra.mxu0 0.0
    %1176 = vmatprep.subr.mxu0 0.0
    %1177 = vmatpush1.msra.mxu0 0.0
    %1178 = vmatprep.subr.mxu0 0.0
    %1179 = vmatpush1.msra.mxu0 0.0
    %1180 = vmatprep.subr.mxu0 0.0
    %1181 = vmatpush1.msra.mxu0 0.0
    %1182 = vmatprep.subr.mxu0 0.0
    %1183 = vmatpush1.msra.mxu0 0.0
    %1184 = vmatprep.subr.mxu0 0.0
    %1185 = vmatpush1.msra.mxu0 0.0
    %1186 = vmatprep.subr.mxu0 0.0
    %1187 = vmatpush1.msra.mxu0 0.0
    %1188 = vmatprep.subr.mxu0 0.0
    %1189 = vmatpush1.msra.mxu0 0.0
    %1190 = vmatprep.subr.mxu0 0.0
    %1191 = vmatpush1.msra.mxu0 0.0
    %1192 = vmatprep.subr.mxu0 0.0
    %1193 = vmatpush1.msra.mxu0 0.0
    %1194 = vmatprep.subr.mxu0 0.0
    %1195 = vmatpush1.msra.mxu0 0.0
    %1196 = vmatprep.subr.mxu0 0.0
    %1197 = vmatpush1.msra.mxu0 0.0
    %1198 = vmatprep.subr.mxu0 0.0
    %1199 = vmatpush1.msra.mxu0 0.0
    %1200 = vmatprep.mubr.f32.mxu0 0.0
    %1201 = vmatmul.mubr.f32.gmra.mrb[0].mxu0 %v1131
    %v1202 = vpop.f32.mrb[0].mxu0
    %v1203 = vadd.f32 0.0, %v1202
    %v1204 = vpop.f32.mrb[0].mxu0
    %1205 = vmatprep.mubr.f32.mxu0 0.0
    %1206 = vmatmul.mubr.f32.gmra.mrb[0].mxu0 %v1134
    %v1207 = vpop.f32.mrb[0].mxu0
    %v1208 = vadd.f32 0.0, %v1207
    %v1209 = vpop.f32.mrb[0].mxu0
    %1210 = vdwg.mxu0
    %v1212 = vsel %vm447, %v1203, 0
    %v1215 = vsel %vm447, %v1208, 0
    %v1218 = vsel %vm850, %v438, 0
    %1220 = vmatprep.subr.mxu0 0.0
    %1221 = vmatpush1.msra.mxu0 %v1218
    %1222 = vmatprep.subr.mxu0 0.0
    %1223 = vmatpush1.msra.mxu0 0.0
    %1224 = vmatprep.subr.mxu0 0.0
    %1225 = vmatpush1.msra.mxu0 0.0
    %1226 = vmatprep.subr.mxu0 0.0
    %1227 = vmatpush1.msra.mxu0 0.0
    %1228 = vmatprep.subr.mxu0 0.0
    %1229 = vmatpush1.msra.mxu0 0.0
    %1230 = vmatprep.subr.mxu0 0.0
    %1231 = vmatpush1.msra.mxu0 0.0
    %1232 = vmatprep.subr.mxu0 0.0
    %1233 = vmatpush1.msra.mxu0 0.0
    %1234 = vmatprep.subr.mxu0 0.0
    %1235 = vmatpush1.msra.mxu0 0.0
    %1236 = vmatprep.subr.mxu0 0.0
    %1237 = vmatpush1.msra.mxu0 0.0
    %1238 = vmatprep.subr.mxu0 0.0
    %1239 = vmatpush1.msra.mxu0 0.0
    %1240 = vmatprep.subr.mxu0 0.0
    %1241 = vmatpush1.msra.mxu0 0.0
    %1242 = vmatprep.subr.mxu0 0.0
    %1243 = vmatpush1.msra.mxu0 0.0
    %1244 = vmatprep.subr.mxu0 0.0
    %1245 = vmatpush1.msra.mxu0 0.0
    %1246 = vmatprep.subr.mxu0 0.0
    %1247 = vmatpush1.msra.mxu0 0.0
    %1248 = vmatprep.subr.mxu0 0.0
    %1249 = vmatpush1.msra.mxu0 0.0
    %1250 = vmatprep.subr.mxu0 0.0
    %1251 = vmatpush1.msra.mxu0 0.0
    %1252 = vmatprep.subr.mxu0 0.0
    %1253 = vmatpush1.msra.mxu0 0.0
    %1254 = vmatprep.subr.mxu0 0.0
    %1255 = vmatpush1.msra.mxu0 0.0
    %1256 = vmatprep.subr.mxu0 0.0
    %1257 = vmatpush1.msra.mxu0 0.0
    %1258 = vmatprep.subr.mxu0 0.0
    %1259 = vmatpush1.msra.mxu0 0.0
    %1260 = vmatprep.subr.mxu0 0.0
    %1261 = vmatpush1.msra.mxu0 0.0
    %1262 = vmatprep.subr.mxu0 0.0
    %1263 = vmatpush1.msra.mxu0 0.0
    %1264 = vmatprep.subr.mxu0 0.0
    %1265 = vmatpush1.msra.mxu0 0.0
    %1266 = vmatprep.subr.mxu0 0.0
    %1267 = vmatpush1.msra.mxu0 0.0
    %1268 = vmatprep.subr.mxu0 0.0
    %1269 = vmatpush1.msra.mxu0 0.0
    %1270 = vmatprep.subr.mxu0 0.0
    %1271 = vmatpush1.msra.mxu0 0.0
    %1272 = vmatprep.subr.mxu0 0.0
    %1273 = vmatpush1.msra.mxu0 0.0
    %1274 = vmatprep.subr.mxu0 0.0
    %1275 = vmatpush1.msra.mxu0 0.0
    %1276 = vmatprep.subr.mxu0 0.0
    %1277 = vmatpush1.msra.mxu0 0.0
    %1278 = vmatprep.subr.mxu0 0.0
    %1279 = vmatpush1.msra.mxu0 0.0
    %1280 = vmatprep.subr.mxu0 0.0
    %1281 = vmatpush1.msra.mxu0 0.0
    %1282 = vmatprep.subr.mxu0 0.0
    %1283 = vmatpush1.msra.mxu0 0.0
    %1284 = vmatprep.mubr.f32.mxu0 0.0
    %1285 = vmatmul.mubr.f32.gmra.mrb[0].mxu0 %v1212
    %v1286 = vpop.f32.mrb[0].mxu0
    %v1287 = vadd.f32 0.0, %v1286
    %v1288 = vpop.f32.mrb[0].mxu0
    %1289 = vmatprep.mubr.f32.mxu0 0.0
    %1290 = vmatmul.mubr.f32.gmra.mrb[0].mxu0 %v1215
    %v1291 = vpop.f32.mrb[0].mxu0
    %v1292 = vadd.f32 0.0, %v1291
    %v1293 = vpop.f32.mrb[0].mxu0
    %1294 = vdwg.mxu0
    %v1295 = vadd.f32 %v1003, %v1287
    %v1296 = vadd.f32 %v1008, %v1292
    %1297 = vrot.lane.b32.xlu0 %v435, 116
    %v1298 = vpop.permute.xlu0 %1297
    %1299 = vrot.lane.b32.xlu0 %v436, 116
    %v1300 = vpop.permute.xlu0 %1299
    %1301 = vrot.lane.b32.xlu0 %v427, 84
    %v1302 = vpop.permute.xlu0 %1301
    %1303 = vrot.lane.b32.xlu0 %v432, 84
    %v1304 = vpop.permute.xlu0 %1303
    %v1305 = vsel %vm447, %v1298, 0
    %v1307 = vsel %vm447, %v1300, 0
    %v1309 = vsel %vm447, %v1302, 0
    %v1311 = vsel %vm447, %v1304, 0
    %1313 = vmatprep.subr.mxu0 0.0
    %1314 = vmatpush1.xpose.msra.mxu0 %v1309
    %1315 = vmatprep.subr.mxu0 0.0
    %1316 = vmatpush1.xpose.msra.mxu0 %v1311
    %1317 = vmatprep.subr.mxu0 0.0
    %1318 = vmatpush1.xpose.msra.mxu0 0.0
    %1319 = vmatprep.subr.mxu0 0.0
    %1320 = vmatpush1.xpose.msra.mxu0 0.0
    %1321 = vmatprep.subr.mxu0 0.0
    %1322 = vmatpush1.xpose.msra.mxu0 0.0
    %1323 = vmatprep.subr.mxu0 0.0
    %1324 = vmatpush1.xpose.msra.mxu0 0.0
    %1325 = vmatprep.subr.mxu0 0.0
    %1326 = vmatpush1.xpose.msra.mxu0 0.0
    %1327 = vmatprep.subr.mxu0 0.0
    %1328 = vmatpush1.xpose.msra.mxu0 0.0
    %1329 = vmatprep.subr.mxu0 0.0
    %1330 = vmatpush1.xpose.msra.mxu0 0.0
    %1331 = vmatprep.subr.mxu0 0.0
    %1332 = vmatpush1.xpose.msra.mxu0 0.0
    %1333 = vmatprep.subr.mxu0 0.0
    %1334 = vmatpush1.xpose.msra.mxu0 0.0
    %1335 = vmatprep.subr.mxu0 0.0
    %1336 = vmatpush1.xpose.msra.mxu0 0.0
    %1337 = vmatprep.subr.mxu0 0.0
    %1338 = vmatpush1.xpose.msra.mxu0 0.0
    %1339 = vmatprep.subr.mxu0 0.0
    %1340 = vmatpush1.xpose.msra.mxu0 0.0
    %1341 = vmatprep.subr.mxu0 0.0
    %1342 = vmatpush1.xpose.msra.mxu0 0.0
    %1343 = vmatprep.subr.mxu0 0.0
    %1344 = vmatpush1.xpose.msra.mxu0 0.0
    %1345 = vmatprep.subr.mxu0 0.0
    %1346 = vmatpush1.xpose.msra.mxu0 0.0
    %1347 = vmatprep.subr.mxu0 0.0
    %1348 = vmatpush1.xpose.msra.mxu0 0.0
    %1349 = vmatprep.subr.mxu0 0.0
    %1350 = vmatpush1.xpose.msra.mxu0 0.0
    %1351 = vmatprep.subr.mxu0 0.0
    %1352 = vmatpush1.xpose.msra.mxu0 0.0
    %1353 = vmatprep.subr.mxu0 0.0
    %1354 = vmatpush1.xpose.msra.mxu0 0.0
    %1355 = vmatprep.subr.mxu0 0.0
    %1356 = vmatpush1.xpose.msra.mxu0 0.0
    %1357 = vmatprep.subr.mxu0 0.0
    %1358 = vmatpush1.xpose.msra.mxu0 0.0
    %1359 = vmatprep.subr.mxu0 0.0
    %1360 = vmatpush1.xpose.msra.mxu0 0.0
    %1361 = vmatprep.subr.mxu0 0.0
    %1362 = vmatpush1.xpose.msra.mxu0 0.0
    %1363 = vmatprep.subr.mxu0 0.0
    %1364 = vmatpush1.xpose.msra.mxu0 0.0
    %1365 = vmatprep.subr.mxu0 0.0
    %1366 = vmatpush1.xpose.msra.mxu0 0.0
    %1367 = vmatprep.subr.mxu0 0.0
    %1368 = vmatpush1.xpose.msra.mxu0 0.0
    %1369 = vmatprep.subr.mxu0 0.0
    %1370 = vmatpush1.xpose.msra.mxu0 0.0
    %1371 = vmatprep.subr.mxu0 0.0
    %1372 = vmatpush1.xpose.msra.mxu0 0.0
    %1373 = vmatprep.subr.mxu0 0.0
    %1374 = vmatpush1.xpose.msra.mxu0 0.0
    %1375 = vmatprep.subr.mxu0 0.0
    %1376 = vmatpush1.xpose.msra.mxu0 0.0
    %1377 = vmatprep.mubr.f32.mxu0 0.0
    %1378 = vmatmul.mubr.f32.gmra.mrb[0].mxu0 %v1305
    %v1379 = vpop.f32.mrb[0].mxu0
    %v1380 = vadd.f32 %v187, %v1379
    %v1381 = vpop.f32.mrb[0].mxu0
    %1382 = vmatprep.mubr.f32.mxu0 0.0
    %1383 = vmatmul.mubr.f32.gmra.mrb[0].mxu0 %v1307
    %v1384 = vpop.f32.mrb[0].mxu0
    %v1385 = vadd.f32 %v188, %v1384
    %v1386 = vpop.f32.mrb[0].mxu0
    %1387 = vdwg.mxu0
    %v1388 = vsel %vm191, %v1380, -inf
    %1389 = vmax.xlane.f32.xlu0 %v1388
    %v1390 = vpop.xlane.xlu0 %1389
    %v1391 = vsel %vm191, %v1385, -inf
    %1392 = vmax.xlane.f32.xlu0 %v1391
    %v1393 = vpop.xlane.xlu0 %1392
    %v1394 = vsub.f32 %v1380, %v1390
    %v1395 = vsub.f32 %v1385, %v1393
    %v1396 = vmul.f32 %v1394, 1.442695
    %v1397 = vpow.pop %v1396
    %v1398 = vmul.f32 %v1395, 1.442695
    %v1399 = vpow.pop %v1398
    %v1400 = vsel %vm191, %v1397, 0.0
    %1401 = vadd.xlane.f32.xlu0 %v1400
    %v1402 = vpop.xlane.xlu0 %1401
    %v1403 = vsel %vm191, %v1399, 0.0
    %1404 = vadd.xlane.f32.xlu0 %v1403
    %v1405 = vpop.xlane.xlu0 %1404
    %v1406 = vrcp.pop %v1402
    %v1407 = vrcp.pop %v1405
    %v1408 = vmul.f32 %v1397, %v1406
    %v1409 = vmul.f32 %v1399, %v1407
    %1410 = vrot.lane.b32.xlu0 %v427, 52
    %v1411 = vpop.permute.xlu0 %1410
    %1412 = vrot.lane.b32.xlu0 %v432, 52
    %v1413 = vpop.permute.xlu0 %1412
    %v1417 = vsel %vm191, %v1408, 0
    %v1420 = vsel %vm191, %v1409, 0
    %1422 = vmatprep.subr.mxu0 0.0
    %1423 = vmatpush1.msra.mxu0 %v1411
    %1424 = vmatprep.subr.mxu0 0.0
    %1425 = vmatpush1.msra.mxu0 %v1413
    %1426 = vmatprep.subr.mxu0 0.0
    %1427 = vmatpush1.msra.mxu0 0.0
    %1428 = vmatprep.subr.mxu0 0.0
    %1429 = vmatpush1.msra.mxu0 0.0
    %1430 = vmatprep.subr.mxu0 0.0
    %1431 = vmatpush1.msra.mxu0 0.0
    %1432 = vmatprep.subr.mxu0 0.0
    %1433 = vmatpush1.msra.mxu0 0.0
    %1434 = vmatprep.subr.mxu0 0.0
    %1435 = vmatpush1.msra.mxu0 0.0
    %1436 = vmatprep.subr.mxu0 0.0
    %1437 = vmatpush1.msra.mxu0 0.0
    %1438 = vmatprep.subr.mxu0 0.0
    %1439 = vmatpush1.msra.mxu0 0.0
    %1440 = vmatprep.subr.mxu0 0.0
    %1441 = vmatpush1.msra.mxu0 0.0
    %1442 = vmatprep.subr.mxu0 0.0
    %1443 = vmatpush1.msra.mxu0 0.0
    %1444 = vmatprep.subr.mxu0 0.0
    %1445 = vmatpush1.msra.mxu0 0.0
    %1446 = vmatprep.subr.mxu0 0.0
    %1447 = vmatpush1.msra.mxu0 0.0
    %1448 = vmatprep.subr.mxu0 0.0
    %1449 = vmatpush1.msra.mxu0 0.0
    %1450 = vmatprep.subr.mxu0 0.0
    %1451 = vmatpush1.msra.mxu0 0.0
    %1452 = vmatprep.subr.mxu0 0.0
    %1453 = vmatpush1.msra.mxu0 0.0
    %1454 = vmatprep.subr.mxu0 0.0
    %1455 = vmatpush1.msra.mxu0 0.0
    %1456 = vmatprep.subr.mxu0 0.0
    %1457 = vmatpush1.msra.mxu0 0.0
    %1458 = vmatprep.subr.mxu0 0.0
    %1459 = vmatpush1.msra.mxu0 0.0
    %1460 = vmatprep.subr.mxu0 0.0
    %1461 = vmatpush1.msra.mxu0 0.0
    %1462 = vmatprep.subr.mxu0 0.0
    %1463 = vmatpush1.msra.mxu0 0.0
    %1464 = vmatprep.subr.mxu0 0.0
    %1465 = vmatpush1.msra.mxu0 0.0
    %1466 = vmatprep.subr.mxu0 0.0
    %1467 = vmatpush1.msra.mxu0 0.0
    %1468 = vmatprep.subr.mxu0 0.0
    %1469 = vmatpush1.msra.mxu0 0.0
    %1470 = vmatprep.subr.mxu0 0.0
    %1471 = vmatpush1.msra.mxu0 0.0
    %1472 = vmatprep.subr.mxu0 0.0
    %1473 = vmatpush1.msra.mxu0 0.0
    %1474 = vmatprep.subr.mxu0 0.0
    %1475 = vmatpush1.msra.mxu0 0.0
    %1476 = vmatprep.subr.mxu0 0.0
    %1477 = vmatpush1.msra.mxu0 0.0
    %1478 = vmatprep.subr.mxu0 0.0
    %1479 = vmatpush1.msra.mxu0 0.0
    %1480 = vmatprep.subr.mxu0 0.0
    %1481 = vmatpush1.msra.mxu0 0.0
    %1482 = vmatprep.subr.mxu0 0.0
    %1483 = vmatpush1.msra.mxu0 0.0
    %1484 = vmatprep.subr.mxu0 0.0
    %1485 = vmatpush1.msra.mxu0 0.0
    %1486 = vmatprep.mubr.f32.mxu0 0.0
    %1487 = vmatmul.mubr.f32.gmra.mrb[0].mxu0 %v1417
    %v1488 = vpop.f32.mrb[0].mxu0
    %v1489 = vadd.f32 0.0, %v1488
    %v1490 = vpop.f32.mrb[0].mxu0
    %1491 = vmatprep.mubr.f32.mxu0 0.0
    %1492 = vmatmul.mubr.f32.gmra.mrb[0].mxu0 %v1420
    %v1493 = vpop.f32.mrb[0].mxu0
    %v1494 = vadd.f32 0.0, %v1493
    %v1495 = vpop.f32.mrb[0].mxu0
    %1496 = vdwg.mxu0
    %v1497 = vrot.slane %v438, 4
    %v1499 = vsel %vm447, %v1489, 0
    %v1502 = vsel %vm447, %v1494, 0
    %v1504 = vsel %vm850, %v1497, 0
    %1506 = vmatprep.subr.mxu0 0.0
    %1507 = vmatpush1.msra.mxu0 %v1504
    %1508 = vmatprep.subr.mxu0 0.0
    %1509 = vmatpush1.msra.mxu0 0.0
    %1510 = vmatprep.subr.mxu0 0.0
    %1511 = vmatpush1.msra.mxu0 0.0
    %1512 = vmatprep.subr.mxu0 0.0
    %1513 = vmatpush1.msra.mxu0 0.0
    %1514 = vmatprep.subr.mxu0 0.0
    %1515 = vmatpush1.msra.mxu0 0.0
    %1516 = vmatprep.subr.mxu0 0.0
    %1517 = vmatpush1.msra.mxu0 0.0
    %1518 = vmatprep.subr.mxu0 0.0
    %1519 = vmatpush1.msra.mxu0 0.0
    %1520 = vmatprep.subr.mxu0 0.0
    %1521 = vmatpush1.msra.mxu0 0.0
    %1522 = vmatprep.subr.mxu0 0.0
    %1523 = vmatpush1.msra.mxu0 0.0
    %1524 = vmatprep.subr.mxu0 0.0
    %1525 = vmatpush1.msra.mxu0 0.0
    %1526 = vmatprep.subr.mxu0 0.0
    %1527 = vmatpush1.msra.mxu0 0.0
    %1528 = vmatprep.subr.mxu0 0.0
    %1529 = vmatpush1.msra.mxu0 0.0
    %1530 = vmatprep.subr.mxu0 0.0
    %1531 = vmatpush1.msra.mxu0 0.0
    %1532 = vmatprep.subr.mxu0 0.0
    %1533 = vmatpush1.msra.mxu0 0.0
    %1534 = vmatprep.subr.mxu0 0.0
    %1535 = vmatpush1.msra.mxu0 0.0
    %1536 = vmatprep.subr.mxu0 0.0
    %1537 = vmatpush1.msra.mxu0 0.0
    %1538 = vmatprep.subr.mxu0 0.0
    %1539 = vmatpush1.msra.mxu0 0.0
    %1540 = vmatprep.subr.mxu0 0.0
    %1541 = vmatpush1.msra.mxu0 0.0
    %1542 = vmatprep.subr.mxu0 0.0
    %1543 = vmatpush1.msra.mxu0 0.0
    %1544 = vmatprep.subr.mxu0 0.0
    %1545 = vmatpush1.msra.mxu0 0.0
    %1546 = vmatprep.subr.mxu0 0.0
    %1547 = vmatpush1.msra.mxu0 0.0
    %1548 = vmatprep.subr.mxu0 0.0
    %1549 = vmatpush1.msra.mxu0 0.0
    %1550 = vmatprep.subr.mxu0 0.0
    %1551 = vmatpush1.msra.mxu0 0.0
    %1552 = vmatprep.subr.mxu0 0.0
    %1553 = vmatpush1.msra.mxu0 0.0
    %1554 = vmatprep.subr.mxu0 0.0
    %1555 = vmatpush1.msra.mxu0 0.0
    %1556 = vmatprep.subr.mxu0 0.0
    %1557 = vmatpush1.msra.mxu0 0.0
    %1558 = vmatprep.subr.mxu0 0.0
    %1559 = vmatpush1.msra.mxu0 0.0
    %1560 = vmatprep.subr.mxu0 0.0
    %1561 = vmatpush1.msra.mxu0 0.0
    %1562 = vmatprep.subr.mxu0 0.0
    %1563 = vmatpush1.msra.mxu0 0.0
    %1564 = vmatprep.subr.mxu0 0.0
    %1565 = vmatpush1.msra.mxu0 0.0
    %1566 = vmatprep.subr.mxu0 0.0
    %1567 = vmatpush1.msra.mxu0 0.0
    %1568 = vmatprep.subr.mxu0 0.0
    %1569 = vmatpush1.msra.mxu0 0.0
    %1570 = vmatprep.mubr.f32.mxu0 0.0
    %1571 = vmatmul.mubr.f32.gmra.mrb[0].mxu0 %v1499
    %v1572 = vpop.f32.mrb[0].mxu0
    %v1573 = vadd.f32 0.0, %v1572
    %v1574 = vpop.f32.mrb[0].mxu0
    %1575 = vmatprep.mubr.f32.mxu0 0.0
    %1576 = vmatmul.mubr.f32.gmra.mrb[0].mxu0 %v1502
    %v1577 = vpop.f32.mrb[0].mxu0
    %v1578 = vadd.f32 0.0, %v1577
    %v1579 = vpop.f32.mrb[0].mxu0
    %1580 = vdwg.mxu0
    %v1581 = vadd.f32 %v1295, %v1573
    %v1582 = vadd.f32 %v1296, %v1578
    %1583 = vrot.lane.b32.xlu0 %v435, 112
    %v1584 = vpop.permute.xlu0 %1583
    %1585 = vrot.lane.b32.xlu0 %v436, 112
    %v1586 = vpop.permute.xlu0 %1585
    %1587 = vrot.lane.b32.xlu0 %v427, 80
    %v1588 = vpop.permute.xlu0 %1587
    %1589 = vrot.lane.b32.xlu0 %v432, 80
    %v1590 = vpop.permute.xlu0 %1589
    %v1591 = vsel %vm447, %v1584, 0
    %v1593 = vsel %vm447, %v1586, 0
    %v1595 = vsel %vm447, %v1588, 0
    %v1597 = vsel %vm447, %v1590, 0
    %1599 = vmatprep.subr.mxu0 0.0
    %1600 = vmatpush1.xpose.msra.mxu0 %v1595
    %1601 = vmatprep.subr.mxu0 0.0
    %1602 = vmatpush1.xpose.msra.mxu0 %v1597
    %1603 = vmatprep.subr.mxu0 0.0
    %1604 = vmatpush1.xpose.msra.mxu0 0.0
    %1605 = vmatprep.subr.mxu0 0.0
    %1606 = vmatpush1.xpose.msra.mxu0 0.0
    %1607 = vmatprep.subr.mxu0 0.0
    %1608 = vmatpush1.xpose.msra.mxu0 0.0
    %1609 = vmatprep.subr.mxu0 0.0
    %1610 = vmatpush1.xpose.msra.mxu0 0.0
    %1611 = vmatprep.subr.mxu0 0.0
    %1612 = vmatpush1.xpose.msra.mxu0 0.0
    %1613 = vmatprep.subr.mxu0 0.0
    %1614 = vmatpush1.xpose.msra.mxu0 0.0
    %1615 = vmatprep.subr.mxu0 0.0
    %1616 = vmatpush1.xpose.msra.mxu0 0.0
    %1617 = vmatprep.subr.mxu0 0.0
    %1618 = vmatpush1.xpose.msra.mxu0 0.0
    %1619 = vmatprep.subr.mxu0 0.0
    %1620 = vmatpush1.xpose.msra.mxu0 0.0
    %1621 = vmatprep.subr.mxu0 0.0
    %1622 = vmatpush1.xpose.msra.mxu0 0.0
    %1623 = vmatprep.subr.mxu0 0.0
    %1624 = vmatpush1.xpose.msra.mxu0 0.0
    %1625 = vmatprep.subr.mxu0 0.0
    %1626 = vmatpush1.xpose.msra.mxu0 0.0
    %1627 = vmatprep.subr.mxu0 0.0
    %1628 = vmatpush1.xpose.msra.mxu0 0.0
    %1629 = vmatprep.subr.mxu0 0.0
    %1630 = vmatpush1.xpose.msra.mxu0 0.0
    %1631 = vmatprep.subr.mxu0 0.0
    %1632 = vmatpush1.xpose.msra.mxu0 0.0
    %1633 = vmatprep.subr.mxu0 0.0
    %1634 = vmatpush1.xpose.msra.mxu0 0.0
    %1635 = vmatprep.subr.mxu0 0.0
    %1636 = vmatpush1.xpose.msra.mxu0 0.0
    %1637 = vmatprep.subr.mxu0 0.0
    %1638 = vmatpush1.xpose.msra.mxu0 0.0
    %1639 = vmatprep.subr.mxu0 0.0
    %1640 = vmatpush1.xpose.msra.mxu0 0.0
    %1641 = vmatprep.subr.mxu0 0.0
    %1642 = vmatpush1.xpose.msra.mxu0 0.0
    %1643 = vmatprep.subr.mxu0 0.0
    %1644 = vmatpush1.xpose.msra.mxu0 0.0
    %1645 = vmatprep.subr.mxu0 0.0
    %1646 = vmatpush1.xpose.msra.mxu0 0.0
    %1647 = vmatprep.subr.mxu0 0.0
    %1648 = vmatpush1.xpose.msra.mxu0 0.0
    %1649 = vmatprep.subr.mxu0 0.0
    %1650 = vmatpush1.xpose.msra.mxu0 0.0
    %1651 = vmatprep.subr.mxu0 0.0
    %1652 = vmatpush1.xpose.msra.mxu0 0.0
    %1653 = vmatprep.subr.mxu0 0.0
    %1654 = vmatpush1.xpose.msra.mxu0 0.0
    %1655 = vmatprep.subr.mxu0 0.0
    %1656 = vmatpush1.xpose.msra.mxu0 0.0
    %1657 = vmatprep.subr.mxu0 0.0
    %1658 = vmatpush1.xpose.msra.mxu0 0.0
    %1659 = vmatprep.subr.mxu0 0.0
    %1660 = vmatpush1.xpose.msra.mxu0 0.0
    %1661 = vmatprep.subr.mxu0 0.0
    %1662 = vmatpush1.xpose.msra.mxu0 0.0
    %1663 = vmatprep.mubr.f32.mxu0 0.0
    %1664 = vmatmul.mubr.f32.gmra.mrb[0].mxu0 %v1591
    %v1665 = vpop.f32.mrb[0].mxu0
    %v1666 = vadd.f32 %v187, %v1665
    %v1667 = vpop.f32.mrb[0].mxu0
    %1668 = vmatprep.mubr.f32.mxu0 0.0
    %1669 = vmatmul.mubr.f32.gmra.mrb[0].mxu0 %v1593
    %v1670 = vpop.f32.mrb[0].mxu0
    %v1671 = vadd.f32 %v188, %v1670
    %v1672 = vpop.f32.mrb[0].mxu0
    %1673 = vdwg.mxu0
    %v1674 = vsel %vm191, %v1666, -inf
    %1675 = vmax.xlane.f32.xlu0 %v1674
    %v1676 = vpop.xlane.xlu0 %1675
    %v1677 = vsel %vm191, %v1671, -inf
    %1678 = vmax.xlane.f32.xlu0 %v1677
    %v1679 = vpop.xlane.xlu0 %1678
    %v1680 = vsub.f32 %v1666, %v1676
    %v1681 = vsub.f32 %v1671, %v1679
    %v1682 = vmul.f32 %v1680, 1.442695
    %v1683 = vpow.pop %v1682
    %v1684 = vmul.f32 %v1681, 1.442695
    %v1685 = vpow.pop %v1684
    %v1686 = vsel %vm191, %v1683, 0.0
    %1687 = vadd.xlane.f32.xlu0 %v1686
    %v1688 = vpop.xlane.xlu0 %1687
    %v1689 = vsel %vm191, %v1685, 0.0
    %1690 = vadd.xlane.f32.xlu0 %v1689
    %v1691 = vpop.xlane.xlu0 %1690
    %v1692 = vrcp.pop %v1688
    %v1693 = vrcp.pop %v1691
    %v1694 = vmul.f32 %v1683, %v1692
    %v1695 = vmul.f32 %v1685, %v1693
    %1696 = vrot.lane.b32.xlu0 %v427, 48
    %v1697 = vpop.permute.xlu0 %1696
    %1698 = vrot.lane.b32.xlu0 %v432, 48
    %v1699 = vpop.permute.xlu0 %1698
    %v1703 = vsel %vm191, %v1694, 0
    %v1706 = vsel %vm191, %v1695, 0
    %1708 = vmatprep.subr.mxu0 0.0
    %1709 = vmatpush1.msra.mxu0 %v1697
    %1710 = vmatprep.subr.mxu0 0.0
    %1711 = vmatpush1.msra.mxu0 %v1699
    %1712 = vmatprep.subr.mxu0 0.0
    %1713 = vmatpush1.msra.mxu0 0.0
    %1714 = vmatprep.subr.mxu0 0.0
    %1715 = vmatpush1.msra.mxu0 0.0
    %1716 = vmatprep.subr.mxu0 0.0
    %1717 = vmatpush1.msra.mxu0 0.0
    %1718 = vmatprep.subr.mxu0 0.0
    %1719 = vmatpush1.msra.mxu0 0.0
    %1720 = vmatprep.subr.mxu0 0.0
    %1721 = vmatpush1.msra.mxu0 0.0
    %1722 = vmatprep.subr.mxu0 0.0
    %1723 = vmatpush1.msra.mxu0 0.0
    %1724 = vmatprep.subr.mxu0 0.0
    %1725 = vmatpush1.msra.mxu0 0.0
    %1726 = vmatprep.subr.mxu0 0.0
    %1727 = vmatpush1.msra.mxu0 0.0
    %1728 = vmatprep.subr.mxu0 0.0
    %1729 = vmatpush1.msra.mxu0 0.0
    %1730 = vmatprep.subr.mxu0 0.0
    %1731 = vmatpush1.msra.mxu0 0.0
    %1732 = vmatprep.subr.mxu0 0.0
    %1733 = vmatpush1.msra.mxu0 0.0
    %1734 = vmatprep.subr.mxu0 0.0
    %1735 = vmatpush1.msra.mxu0 0.0
    %1736 = vmatprep.subr.mxu0 0.0
    %1737 = vmatpush1.msra.mxu0 0.0
    %1738 = vmatprep.subr.mxu0 0.0
    %1739 = vmatpush1.msra.mxu0 0.0
    %1740 = vmatprep.subr.mxu0 0.0
    %1741 = vmatpush1.msra.mxu0 0.0
    %1742 = vmatprep.subr.mxu0 0.0
    %1743 = vmatpush1.msra.mxu0 0.0
    %1744 = vmatprep.subr.mxu0 0.0
    %1745 = vmatpush1.msra.mxu0 0.0
    %1746 = vmatprep.subr.mxu0 0.0
    %1747 = vmatpush1.msra.mxu0 0.0
    %1748 = vmatprep.subr.mxu0 0.0
    %1749 = vmatpush1.msra.mxu0 0.0
    %1750 = vmatprep.subr.mxu0 0.0
    %1751 = vmatpush1.msra.mxu0 0.0
    %1752 = vmatprep.subr.mxu0 0.0
    %1753 = vmatpush1.msra.mxu0 0.0
    %1754 = vmatprep.subr.mxu0 0.0
    %1755 = vmatpush1.msra.mxu0 0.0
    %1756 = vmatprep.subr.mxu0 0.0
    %1757 = vmatpush1.msra.mxu0 0.0
    %1758 = vmatprep.subr.mxu0 0.0
    %1759 = vmatpush1.msra.mxu0 0.0
    %1760 = vmatprep.subr.mxu0 0.0
    %1761 = vmatpush1.msra.mxu0 0.0
    %1762 = vmatprep.subr.mxu0 0.0
    %1763 = vmatpush1.msra.mxu0 0.0
    %1764 = vmatprep.subr.mxu0 0.0
    %1765 = vmatpush1.msra.mxu0 0.0
    %1766 = vmatprep.subr.mxu0 0.0
    %1767 = vmatpush1.msra.mxu0 0.0
    %1768 = vmatprep.subr.mxu0 0.0
    %1769 = vmatpush1.msra.mxu0 0.0
    %1770 = vmatprep.subr.mxu0 0.0
    %1771 = vmatpush1.msra.mxu0 0.0
    %1772 = vmatprep.mubr.f32.mxu0 0.0
    %1773 = vmatmul.mubr.f32.gmra.mrb[0].mxu0 %v1703
    %v1774 = vpop.f32.mrb[0].mxu0
    %v1775 = vadd.f32 0.0, %v1774
    %v1776 = vpop.f32.mrb[0].mxu0
    %1777 = vmatprep.mubr.f32.mxu0 0.0
    %1778 = vmatmul.mubr.f32.gmra.mrb[0].mxu0 %v1706
    %v1779 = vpop.f32.mrb[0].mxu0
    %v1780 = vadd.f32 0.0, %v1779
    %v1781 = vpop.f32.mrb[0].mxu0
    %1782 = vdwg.mxu0
    %v1784 = vsel %vm447, %v1775, 0
    %v1787 = vsel %vm447, %v1780, 0
    %v1790 = vsel %vm850, %v439, 0
    %1792 = vmatprep.subr.mxu0 0.0
    %1793 = vmatpush1.msra.mxu0 %v1790
    %1794 = vmatprep.subr.mxu0 0.0
    %1795 = vmatpush1.msra.mxu0 0.0
    %1796 = vmatprep.subr.mxu0 0.0
    %1797 = vmatpush1.msra.mxu0 0.0
    %1798 = vmatprep.subr.mxu0 0.0
    %1799 = vmatpush1.msra.mxu0 0.0
    %1800 = vmatprep.subr.mxu0 0.0
    %1801 = vmatpush1.msra.mxu0 0.0
    %1802 = vmatprep.subr.mxu0 0.0
    %1803 = vmatpush1.msra.mxu0 0.0
    %1804 = vmatprep.subr.mxu0 0.0
    %1805 = vmatpush1.msra.mxu0 0.0
    %1806 = vmatprep.subr.mxu0 0.0
    %1807 = vmatpush1.msra.mxu0 0.0
    %1808 = vmatprep.subr.mxu0 0.0
    %1809 = vmatpush1.msra.mxu0 0.0
    %1810 = vmatprep.subr.mxu0 0.0
    %1811 = vmatpush1.msra.mxu0 0.0
    %1812 = vmatprep.subr.mxu0 0.0
    %1813 = vmatpush1.msra.mxu0 0.0
    %1814 = vmatprep.subr.mxu0 0.0
    %1815 = vmatpush1.msra.mxu0 0.0
    %1816 = vmatprep.subr.mxu0 0.0
    %1817 = vmatpush1.msra.mxu0 0.0
    %1818 = vmatprep.subr.mxu0 0.0
    %1819 = vmatpush1.msra.mxu0 0.0
    %1820 = vmatprep.subr.mxu0 0.0
    %1821 = vmatpush1.msra.mxu0 0.0
    %1822 = vmatprep.subr.mxu0 0.0
    %1823 = vmatpush1.msra.mxu0 0.0
    %1824 = vmatprep.subr.mxu0 0.0
    %1825 = vmatpush1.msra.mxu0 0.0
    %1826 = vmatprep.subr.mxu0 0.0
    %1827 = vmatpush1.msra.mxu0 0.0
    %1828 = vmatprep.subr.mxu0 0.0
    %1829 = vmatpush1.msra.mxu0 0.0
    %1830 = vmatprep.subr.mxu0 0.0
    %1831 = vmatpush1.msra.mxu0 0.0
    %1832 = vmatprep.subr.mxu0 0.0
    %1833 = vmatpush1.msra.mxu0 0.0
    %1834 = vmatprep.subr.mxu0 0.0
    %1835 = vmatpush1.msra.mxu0 0.0
    %1836 = vmatprep.subr.mxu0 0.0
    %1837 = vmatpush1.msra.mxu0 0.0
    %1838 = vmatprep.subr.mxu0 0.0
    %1839 = vmatpush1.msra.mxu0 0.0
    %1840 = vmatprep.subr.mxu0 0.0
    %1841 = vmatpush1.msra.mxu0 0.0
    %1842 = vmatprep.subr.mxu0 0.0
    %1843 = vmatpush1.msra.mxu0 0.0
    %1844 = vmatprep.subr.mxu0 0.0
    %1845 = vmatpush1.msra.mxu0 0.0
    %1846 = vmatprep.subr.mxu0 0.0
    %1847 = vmatpush1.msra.mxu0 0.0
    %1848 = vmatprep.subr.mxu0 0.0
    %1849 = vmatpush1.msra.mxu0 0.0
    %1850 = vmatprep.subr.mxu0 0.0
    %1851 = vmatpush1.msra.mxu0 0.0
    %1852 = vmatprep.subr.mxu0 0.0
    %1853 = vmatpush1.msra.mxu0 0.0
    %1854 = vmatprep.subr.mxu0 0.0
    %1855 = vmatpush1.msra.mxu0 0.0
    %1856 = vmatprep.mubr.f32.mxu0 0.0
    %1857 = vmatmul.mubr.f32.gmra.mrb[0].mxu0 %v1784
    %v1858 = vpop.f32.mrb[0].mxu0
    %v1859 = vadd.f32 0.0, %v1858
    %v1860 = vpop.f32.mrb[0].mxu0
    %1861 = vmatprep.mubr.f32.mxu0 0.0
    %1862 = vmatmul.mubr.f32.gmra.mrb[0].mxu0 %v1787
    %v1863 = vpop.f32.mrb[0].mxu0
    %v1864 = vadd.f32 0.0, %v1863
    %v1865 = vpop.f32.mrb[0].mxu0
    %1866 = vdwg.mxu0
    %v1867 = vadd.f32 %v1581, %v1859
    %v1868 = vadd.f32 %v1582, %v1864
    %1869 = vrot.lane.b32.xlu0 %v435, 108
    %v1870 = vpop.permute.xlu0 %1869
    %1871 = vrot.lane.b32.xlu0 %v436, 108
    %v1872 = vpop.permute.xlu0 %1871
    %1873 = vrot.lane.b32.xlu0 %v427, 76
    %v1874 = vpop.permute.xlu0 %1873
    %1875 = vrot.lane.b32.xlu0 %v432, 76
    %v1876 = vpop.permute.xlu0 %1875
    %v1877 = vsel %vm447, %v1870, 0
    %v1879 = vsel %vm447, %v1872, 0
    %v1881 = vsel %vm447, %v1874, 0
    %v1883 = vsel %vm447, %v1876, 0
    %1885 = vmatprep.subr.mxu0 0.0
    %1886 = vmatpush1.xpose.msra.mxu0 %v1881
    %1887 = vmatprep.subr.mxu0 0.0
    %1888 = vmatpush1.xpose.msra.mxu0 %v1883
    %1889 = vmatprep.subr.mxu0 0.0
    %1890 = vmatpush1.xpose.msra.mxu0 0.0
    %1891 = vmatprep.subr.mxu0 0.0
    %1892 = vmatpush1.xpose.msra.mxu0 0.0
    %1893 = vmatprep.subr.mxu0 0.0
    %1894 = vmatpush1.xpose.msra.mxu0 0.0
    %1895 = vmatprep.subr.mxu0 0.0
    %1896 = vmatpush1.xpose.msra.mxu0 0.0
    %1897 = vmatprep.subr.mxu0 0.0
    %1898 = vmatpush1.xpose.msra.mxu0 0.0
    %1899 = vmatprep.subr.mxu0 0.0
    %1900 = vmatpush1.xpose.msra.mxu0 0.0
    %1901 = vmatprep.subr.mxu0 0.0
    %1902 = vmatpush1.xpose.msra.mxu0 0.0
    %1903 = vmatprep.subr.mxu0 0.0
    %1904 = vmatpush1.xpose.msra.mxu0 0.0
    %1905 = vmatprep.subr.mxu0 0.0
    %1906 = vmatpush1.xpose.msra.mxu0 0.0
    %1907 = vmatprep.subr.mxu0 0.0
    %1908 = vmatpush1.xpose.msra.mxu0 0.0
    %1909 = vmatprep.subr.mxu0 0.0
    %1910 = vmatpush1.xpose.msra.mxu0 0.0
    %1911 = vmatprep.subr.mxu0 0.0
    %1912 = vmatpush1.xpose.msra.mxu0 0.0
    %1913 = vmatprep.subr.mxu0 0.0
    %1914 = vmatpush1.xpose.msra.mxu0 0.0
    %1915 = vmatprep.subr.mxu0 0.0
    %1916 = vmatpush1.xpose.msra.mxu0 0.0
    %1917 = vmatprep.subr.mxu0 0.0
    %1918 = vmatpush1.xpose.msra.mxu0 0.0
    %1919 = vmatprep.subr.mxu0 0.0
    %1920 = vmatpush1.xpose.msra.mxu0 0.0
    %1921 = vmatprep.subr.mxu0 0.0
    %1922 = vmatpush1.xpose.msra.mxu0 0.0
    %1923 = vmatprep.subr.mxu0 0.0
    %1924 = vmatpush1.xpose.msra.mxu0 0.0
    %1925 = vmatprep.subr.mxu0 0.0
    %1926 = vmatpush1.xpose.msra.mxu0 0.0
    %1927 = vmatprep.subr.mxu0 0.0
    %1928 = vmatpush1.xpose.msra.mxu0 0.0
    %1929 = vmatprep.subr.mxu0 0.0
    %1930 = vmatpush1.xpose.msra.mxu0 0.0
    %1931 = vmatprep.subr.mxu0 0.0
    %1932 = vmatpush1.xpose.msra.mxu0 0.0
    %1933 = vmatprep.subr.mxu0 0.0
    %1934 = vmatpush1.xpose.msra.mxu0 0.0
    %1935 = vmatprep.subr.mxu0 0.0
    %1936 = vmatpush1.xpose.msra.mxu0 0.0
    %1937 = vmatprep.subr.mxu0 0.0
    %1938 = vmatpush1.xpose.msra.mxu0 0.0
    %1939 = vmatprep.subr.mxu0 0.0
    %1940 = vmatpush1.xpose.msra.mxu0 0.0
    %1941 = vmatprep.subr.mxu0 0.0
    %1942 = vmatpush1.xpose.msra.mxu0 0.0
    %1943 = vmatprep.subr.mxu0 0.0
    %1944 = vmatpush1.xpose.msra.mxu0 0.0
    %1945 = vmatprep.subr.mxu0 0.0
    %1946 = vmatpush1.xpose.msra.mxu0 0.0
    %1947 = vmatprep.subr.mxu0 0.0
    %1948 = vmatpush1.xpose.msra.mxu0 0.0
    %1949 = vmatprep.mubr.f32.mxu0 0.0
    %1950 = vmatmul.mubr.f32.gmra.mrb[0].mxu0 %v1877
    %v1951 = vpop.f32.mrb[0].mxu0
    %v1952 = vadd.f32 %v187, %v1951
    %v1953 = vpop.f32.mrb[0].mxu0
    %1954 = vmatprep.mubr.f32.mxu0 0.0
    %1955 = vmatmul.mubr.f32.gmra.mrb[0].mxu0 %v1879
    %v1956 = vpop.f32.mrb[0].mxu0
    %v1957 = vadd.f32 %v188, %v1956
    %v1958 = vpop.f32.mrb[0].mxu0
    %1959 = vdwg.mxu0
    %v1960 = vsel %vm191, %v1952, -inf
    %1961 = vmax.xlane.f32.xlu0 %v1960
    %v1962 = vpop.xlane.xlu0 %1961
    %v1963 = vsel %vm191, %v1957, -inf
    %1964 = vmax.xlane.f32.xlu0 %v1963
    %v1965 = vpop.xlane.xlu0 %1964
    %v1966 = vsub.f32 %v1952, %v1962
    %v1967 = vsub.f32 %v1957, %v1965
    %v1968 = vmul.f32 %v1966, 1.442695
    %v1969 = vpow.pop %v1968
    %v1970 = vmul.f32 %v1967, 1.442695
    %v1971 = vpow.pop %v1970
    %v1972 = vsel %vm191, %v1969, 0.0
    %1973 = vadd.xlane.f32.xlu0 %v1972
    %v1974 = vpop.xlane.xlu0 %1973
    %v1975 = vsel %vm191, %v1971, 0.0
    %1976 = vadd.xlane.f32.xlu0 %v1975
    %v1977 = vpop.xlane.xlu0 %1976
    %v1978 = vrcp.pop %v1974
    %v1979 = vrcp.pop %v1977
    %v1980 = vmul.f32 %v1969, %v1978
    %v1981 = vmul.f32 %v1971, %v1979
    %1982 = vrot.lane.b32.xlu0 %v427, 44
    %v1983 = vpop.permute.xlu0 %1982
    %1984 = vrot.lane.b32.xlu0 %v432, 44
    %v1985 = vpop.permute.xlu0 %1984
    %v1989 = vsel %vm191, %v1980, 0
    %v1992 = vsel %vm191, %v1981, 0
    %1994 = vmatprep.subr.mxu0 0.0
    %1995 = vmatpush1.msra.mxu0 %v1983
    %1996 = vmatprep.subr.mxu0 0.0
    %1997 = vmatpush1.msra.mxu0 %v1985
    %1998 = vmatprep.subr.mxu0 0.0
    %1999 = vmatpush1.msra.mxu0 0.0
    %2000 = vmatprep.subr.mxu0 0.0
    %2001 = vmatpush1.msra.mxu0 0.0
    %2002 = vmatprep.subr.mxu0 0.0
    %2003 = vmatpush1.msra.mxu0 0.0
    %2004 = vmatprep.subr.mxu0 0.0
    %2005 = vmatpush1.msra.mxu0 0.0
    %2006 = vmatprep.subr.mxu0 0.0
    %2007 = vmatpush1.msra.mxu0 0.0
    %2008 = vmatprep.subr.mxu0 0.0
    %2009 = vmatpush1.msra.mxu0 0.0
    %2010 = vmatprep.subr.mxu0 0.0
    %2011 = vmatpush1.msra.mxu0 0.0
    %2012 = vmatprep.subr.mxu0 0.0
    %2013 = vmatpush1.msra.mxu0 0.0
    %2014 = vmatprep.subr.mxu0 0.0
    %2015 = vmatpush1.msra.mxu0 0.0
    %2016 = vmatprep.subr.mxu0 0.0
    %2017 = vmatpush1.msra.mxu0 0.0
    %2018 = vmatprep.subr.mxu0 0.0
    %2019 = vmatpush1.msra.mxu0 0.0
    %2020 = vmatprep.subr.mxu0 0.0
    %2021 = vmatpush1.msra.mxu0 0.0
    %2022 = vmatprep.subr.mxu0 0.0
    %2023 = vmatpush1.msra.mxu0 0.0
    %2024 = vmatprep.subr.mxu0 0.0
    %2025 = vmatpush1.msra.mxu0 0.0
    %2026 = vmatprep.subr.mxu0 0.0
    %2027 = vmatpush1.msra.mxu0 0.0
    %2028 = vmatprep.subr.mxu0 0.0
    %2029 = vmatpush1.msra.mxu0 0.0
    %2030 = vmatprep.subr.mxu0 0.0
    %2031 = vmatpush1.msra.mxu0 0.0
    %2032 = vmatprep.subr.mxu0 0.0
    %2033 = vmatpush1.msra.mxu0 0.0
    %2034 = vmatprep.subr.mxu0 0.0
    %2035 = vmatpush1.msra.mxu0 0.0
    %2036 = vmatprep.subr.mxu0 0.0
    %2037 = vmatpush1.msra.mxu0 0.0
    %2038 = vmatprep.subr.mxu0 0.0
    %2039 = vmatpush1.msra.mxu0 0.0
    %2040 = vmatprep.subr.mxu0 0.0
    %2041 = vmatpush1.msra.mxu0 0.0
    %2042 = vmatprep.subr.mxu0 0.0
    %2043 = vmatpush1.msra.mxu0 0.0
    %2044 = vmatprep.subr.mxu0 0.0
    %2045 = vmatpush1.msra.mxu0 0.0
    %2046 = vmatprep.subr.mxu0 0.0
    %2047 = vmatpush1.msra.mxu0 0.0
    %2048 = vmatprep.subr.mxu0 0.0
    %2049 = vmatpush1.msra.mxu0 0.0
    %2050 = vmatprep.subr.mxu0 0.0
    %2051 = vmatpush1.msra.mxu0 0.0
    %2052 = vmatprep.subr.mxu0 0.0
    %2053 = vmatpush1.msra.mxu0 0.0
    %2054 = vmatprep.subr.mxu0 0.0
    %2055 = vmatpush1.msra.mxu0 0.0
    %2056 = vmatprep.subr.mxu0 0.0
    %2057 = vmatpush1.msra.mxu0 0.0
    %2058 = vmatprep.mubr.f32.mxu0 0.0
    %2059 = vmatmul.mubr.f32.gmra.mrb[0].mxu0 %v1989
    %v2060 = vpop.f32.mrb[0].mxu0
    %v2061 = vadd.f32 0.0, %v2060
    %v2062 = vpop.f32.mrb[0].mxu0
    %2063 = vmatprep.mubr.f32.mxu0 0.0
    %2064 = vmatmul.mubr.f32.gmra.mrb[0].mxu0 %v1992
    %v2065 = vpop.f32.mrb[0].mxu0
    %v2066 = vadd.f32 0.0, %v2065
    %v2067 = vpop.f32.mrb[0].mxu0
    %2068 = vdwg.mxu0
    %v2069 = vrot.slane %v439, 4
    %v2071 = vsel %vm447, %v2061, 0
    %v2074 = vsel %vm447, %v2066, 0
    %v2076 = vsel %vm850, %v2069, 0
    %2078 = vmatprep.subr.mxu0 0.0
    %2079 = vmatpush1.msra.mxu0 %v2076
    %2080 = vmatprep.subr.mxu0 0.0
    %2081 = vmatpush1.msra.mxu0 0.0
    %2082 = vmatprep.subr.mxu0 0.0
    %2083 = vmatpush1.msra.mxu0 0.0
    %2084 = vmatprep.subr.mxu0 0.0
    %2085 = vmatpush1.msra.mxu0 0.0
    %2086 = vmatprep.subr.mxu0 0.0
    %2087 = vmatpush1.msra.mxu0 0.0
    %2088 = vmatprep.subr.mxu0 0.0
    %2089 = vmatpush1.msra.mxu0 0.0
    %2090 = vmatprep.subr.mxu0 0.0
    %2091 = vmatpush1.msra.mxu0 0.0
    %2092 = vmatprep.subr.mxu0 0.0
    %2093 = vmatpush1.msra.mxu0 0.0
    %2094 = vmatprep.subr.mxu0 0.0
    %2095 = vmatpush1.msra.mxu0 0.0
    %2096 = vmatprep.subr.mxu0 0.0
    %2097 = vmatpush1.msra.mxu0 0.0
    %2098 = vmatprep.subr.mxu0 0.0
    %2099 = vmatpush1.msra.mxu0 0.0
    %2100 = vmatprep.subr.mxu0 0.0
    %2101 = vmatpush1.msra.mxu0 0.0
    %2102 = vmatprep.subr.mxu0 0.0
    %2103 = vmatpush1.msra.mxu0 0.0
    %2104 = vmatprep.subr.mxu0 0.0
    %2105 = vmatpush1.msra.mxu0 0.0
    %2106 = vmatprep.subr.mxu0 0.0
    %2107 = vmatpush1.msra.mxu0 0.0
    %2108 = vmatprep.subr.mxu0 0.0
    %2109 = vmatpush1.msra.mxu0 0.0
    %2110 = vmatprep.subr.mxu0 0.0
    %2111 = vmatpush1.msra.mxu0 0.0
    %2112 = vmatprep.subr.mxu0 0.0
    %2113 = vmatpush1.msra.mxu0 0.0
    %2114 = vmatprep.subr.mxu0 0.0
    %2115 = vmatpush1.msra.mxu0 0.0
    %2116 = vmatprep.subr.mxu0 0.0
    %2117 = vmatpush1.msra.mxu0 0.0
    %2118 = vmatprep.subr.mxu0 0.0
    %2119 = vmatpush1.msra.mxu0 0.0
    %2120 = vmatprep.subr.mxu0 0.0
    %2121 = vmatpush1.msra.mxu0 0.0
    %2122 = vmatprep.subr.mxu0 0.0
    %2123 = vmatpush1.msra.mxu0 0.0
    %2124 = vmatprep.subr.mxu0 0.0
    %2125 = vmatpush1.msra.mxu0 0.0
    %2126 = vmatprep.subr.mxu0 0.0
    %2127 = vmatpush1.msra.mxu0 0.0
    %2128 = vmatprep.subr.mxu0 0.0
    %2129 = vmatpush1.msra.mxu0 0.0
    %2130 = vmatprep.subr.mxu0 0.0
    %2131 = vmatpush1.msra.mxu0 0.0
    %2132 = vmatprep.subr.mxu0 0.0
    %2133 = vmatpush1.msra.mxu0 0.0
    %2134 = vmatprep.subr.mxu0 0.0
    %2135 = vmatpush1.msra.mxu0 0.0
    %2136 = vmatprep.subr.mxu0 0.0
    %2137 = vmatpush1.msra.mxu0 0.0
    %2138 = vmatprep.subr.mxu0 0.0
    %2139 = vmatpush1.msra.mxu0 0.0
    %2140 = vmatprep.subr.mxu0 0.0
    %2141 = vmatpush1.msra.mxu0 0.0
    %2142 = vmatprep.mubr.f32.mxu0 0.0
    %2143 = vmatmul.mubr.f32.gmra.mrb[0].mxu0 %v2071
    %v2144 = vpop.f32.mrb[0].mxu0
    %v2145 = vadd.f32 0.0, %v2144
    %v2146 = vpop.f32.mrb[0].mxu0
    %2147 = vmatprep.mubr.f32.mxu0 0.0
    %2148 = vmatmul.mubr.f32.gmra.mrb[0].mxu0 %v2074
    %v2149 = vpop.f32.mrb[0].mxu0
    %v2150 = vadd.f32 0.0, %v2149
    %v2151 = vpop.f32.mrb[0].mxu0
    %2152 = vdwg.mxu0
    %v2153 = vadd.f32 %v1867, %v2145
    %v2154 = vadd.f32 %v1868, %v2150
    %2155 = vrot.lane.b32.xlu0 %v435, 104
    %v2156 = vpop.permute.xlu0 %2155
    %2157 = vrot.lane.b32.xlu0 %v436, 104
    %v2158 = vpop.permute.xlu0 %2157
    %2159 = vrot.lane.b32.xlu0 %v427, 72
    %v2160 = vpop.permute.xlu0 %2159
    %2161 = vrot.lane.b32.xlu0 %v432, 72
    %v2162 = vpop.permute.xlu0 %2161
    %v2163 = vsel %vm447, %v2156, 0
    %v2165 = vsel %vm447, %v2158, 0
    %v2167 = vsel %vm447, %v2160, 0
    %v2169 = vsel %vm447, %v2162, 0
    %2171 = vmatprep.subr.mxu0 0.0
    %2172 = vmatpush1.xpose.msra.mxu0 %v2167
    %2173 = vmatprep.subr.mxu0 0.0
    %2174 = vmatpush1.xpose.msra.mxu0 %v2169
    %2175 = vmatprep.subr.mxu0 0.0
    %2176 = vmatpush1.xpose.msra.mxu0 0.0
    %2177 = vmatprep.subr.mxu0 0.0
    %2178 = vmatpush1.xpose.msra.mxu0 0.0
    %2179 = vmatprep.subr.mxu0 0.0
    %2180 = vmatpush1.xpose.msra.mxu0 0.0
    %2181 = vmatprep.subr.mxu0 0.0
    %2182 = vmatpush1.xpose.msra.mxu0 0.0
    %2183 = vmatprep.subr.mxu0 0.0
    %2184 = vmatpush1.xpose.msra.mxu0 0.0
    %2185 = vmatprep.subr.mxu0 0.0
    %2186 = vmatpush1.xpose.msra.mxu0 0.0
    %2187 = vmatprep.subr.mxu0 0.0
    %2188 = vmatpush1.xpose.msra.mxu0 0.0
    %2189 = vmatprep.subr.mxu0 0.0
    %2190 = vmatpush1.xpose.msra.mxu0 0.0
    %2191 = vmatprep.subr.mxu0 0.0
    %2192 = vmatpush1.xpose.msra.mxu0 0.0
    %2193 = vmatprep.subr.mxu0 0.0
    %2194 = vmatpush1.xpose.msra.mxu0 0.0
    %2195 = vmatprep.subr.mxu0 0.0
    %2196 = vmatpush1.xpose.msra.mxu0 0.0
    %2197 = vmatprep.subr.mxu0 0.0
    %2198 = vmatpush1.xpose.msra.mxu0 0.0
    %2199 = vmatprep.subr.mxu0 0.0
    %2200 = vmatpush1.xpose.msra.mxu0 0.0
    %2201 = vmatprep.subr.mxu0 0.0
    %2202 = vmatpush1.xpose.msra.mxu0 0.0
    %2203 = vmatprep.subr.mxu0 0.0
    %2204 = vmatpush1.xpose.msra.mxu0 0.0
    %2205 = vmatprep.subr.mxu0 0.0
    %2206 = vmatpush1.xpose.msra.mxu0 0.0
    %2207 = vmatprep.subr.mxu0 0.0
    %2208 = vmatpush1.xpose.msra.mxu0 0.0
    %2209 = vmatprep.subr.mxu0 0.0
    %2210 = vmatpush1.xpose.msra.mxu0 0.0
    %2211 = vmatprep.subr.mxu0 0.0
    %2212 = vmatpush1.xpose.msra.mxu0 0.0
    %2213 = vmatprep.subr.mxu0 0.0
    %2214 = vmatpush1.xpose.msra.mxu0 0.0
    %2215 = vmatprep.subr.mxu0 0.0
    %2216 = vmatpush1.xpose.msra.mxu0 0.0
    %2217 = vmatprep.subr.mxu0 0.0
    %2218 = vmatpush1.xpose.msra.mxu0 0.0
    %2219 = vmatprep.subr.mxu0 0.0
    %2220 = vmatpush1.xpose.msra.mxu0 0.0
    %2221 = vmatprep.subr.mxu0 0.0
    %2222 = vmatpush1.xpose.msra.mxu0 0.0
    %2223 = vmatprep.subr.mxu0 0.0
    %2224 = vmatpush1.xpose.msra.mxu0 0.0
    %2225 = vmatprep.subr.mxu0 0.0
    %2226 = vmatpush1.xpose.msra.mxu0 0.0
    %2227 = vmatprep.subr.mxu0 0.0
    %2228 = vmatpush1.xpose.msra.mxu0 0.0
    %2229 = vmatprep.subr.mxu0 0.0
    %2230 = vmatpush1.xpose.msra.mxu0 0.0
    %2231 = vmatprep.subr.mxu0 0.0
    %2232 = vmatpush1.xpose.msra.mxu0 0.0
    %2233 = vmatprep.subr.mxu0 0.0
    %2234 = vmatpush1.xpose.msra.mxu0 0.0
    %2235 = vmatprep.mubr.f32.mxu0 0.0
    %2236 = vmatmul.mubr.f32.gmra.mrb[0].mxu0 %v2163
    %v2237 = vpop.f32.mrb[0].mxu0
    %v2238 = vadd.f32 %v187, %v2237
    %v2239 = vpop.f32.mrb[0].mxu0
    %2240 = vmatprep.mubr.f32.mxu0 0.0
    %2241 = vmatmul.mubr.f32.gmra.mrb[0].mxu0 %v2165
    %v2242 = vpop.f32.mrb[0].mxu0
    %v2243 = vadd.f32 %v188, %v2242
    %v2244 = vpop.f32.mrb[0].mxu0
    %2245 = vdwg.mxu0
    %v2246 = vsel %vm191, %v2238, -inf
    %2247 = vmax.xlane.f32.xlu0 %v2246
    %v2248 = vpop.xlane.xlu0 %2247
    %v2249 = vsel %vm191, %v2243, -inf
    %2250 = vmax.xlane.f32.xlu0 %v2249
    %v2251 = vpop.xlane.xlu0 %2250
    %v2252 = vsub.f32 %v2238, %v2248
    %v2253 = vsub.f32 %v2243, %v2251
    %v2254 = vmul.f32 %v2252, 1.442695
    %v2255 = vpow.pop %v2254
    %v2256 = vmul.f32 %v2253, 1.442695
    %v2257 = vpow.pop %v2256
    %v2258 = vsel %vm191, %v2255, 0.0
    %2259 = vadd.xlane.f32.xlu0 %v2258
    %v2260 = vpop.xlane.xlu0 %2259
    %v2261 = vsel %vm191, %v2257, 0.0
    %2262 = vadd.xlane.f32.xlu0 %v2261
    %v2263 = vpop.xlane.xlu0 %2262
    %v2264 = vrcp.pop %v2260
    %v2265 = vrcp.pop %v2263
    %v2266 = vmul.f32 %v2255, %v2264
    %v2267 = vmul.f32 %v2257, %v2265
    %2268 = vrot.lane.b32.xlu0 %v427, 40
    %v2269 = vpop.permute.xlu0 %2268
    %2270 = vrot.lane.b32.xlu0 %v432, 40
    %v2271 = vpop.permute.xlu0 %2270
    %v2275 = vsel %vm191, %v2266, 0
    %v2278 = vsel %vm191, %v2267, 0
    %2280 = vmatprep.subr.mxu0 0.0
    %2281 = vmatpush1.msra.mxu0 %v2269
    %2282 = vmatprep.subr.mxu0 0.0
    %2283 = vmatpush1.msra.mxu0 %v2271
    %2284 = vmatprep.subr.mxu0 0.0
    %2285 = vmatpush1.msra.mxu0 0.0
    %2286 = vmatprep.subr.mxu0 0.0
    %2287 = vmatpush1.msra.mxu0 0.0
    %2288 = vmatprep.subr.mxu0 0.0
    %2289 = vmatpush1.msra.mxu0 0.0
    %2290 = vmatprep.subr.mxu0 0.0
    %2291 = vmatpush1.msra.mxu0 0.0
    %2292 = vmatprep.subr.mxu0 0.0
    %2293 = vmatpush1.msra.mxu0 0.0
    %2294 = vmatprep.subr.mxu0 0.0
    %2295 = vmatpush1.msra.mxu0 0.0
    %2296 = vmatprep.subr.mxu0 0.0
    %2297 = vmatpush1.msra.mxu0 0.0
    %2298 = vmatprep.subr.mxu0 0.0
    %2299 = vmatpush1.msra.mxu0 0.0
    %2300 = vmatprep.subr.mxu0 0.0
    %2301 = vmatpush1.msra.mxu0 0.0
    %2302 = vmatprep.subr.mxu0 0.0
    %2303 = vmatpush1.msra.mxu0 0.0
    %2304 = vmatprep.subr.mxu0 0.0
    %2305 = vmatpush1.msra.mxu0 0.0
    %2306 = vmatprep.subr.mxu0 0.0
    %2307 = vmatpush1.msra.mxu0 0.0
    %2308 = vmatprep.subr.mxu0 0.0
    %2309 = vmatpush1.msra.mxu0 0.0
    %2310 = vmatprep.subr.mxu0 0.0
    %2311 = vmatpush1.msra.mxu0 0.0
    %2312 = vmatprep.subr.mxu0 0.0
    %2313 = vmatpush1.msra.mxu0 0.0
    %2314 = vmatprep.subr.mxu0 0.0
    %2315 = vmatpush1.msra.mxu0 0.0
    %2316 = vmatprep.subr.mxu0 0.0
    %2317 = vmatpush1.msra.mxu0 0.0
    %2318 = vmatprep.subr.mxu0 0.0
    %2319 = vmatpush1.msra.mxu0 0.0
    %2320 = vmatprep.subr.mxu0 0.0
    %2321 = vmatpush1.msra.mxu0 0.0
    %2322 = vmatprep.subr.mxu0 0.0
    %2323 = vmatpush1.msra.mxu0 0.0
    %2324 = vmatprep.subr.mxu0 0.0
    %2325 = vmatpush1.msra.mxu0 0.0
    %2326 = vmatprep.subr.mxu0 0.0
    %2327 = vmatpush1.msra.mxu0 0.0
    %2328 = vmatprep.subr.mxu0 0.0
    %2329 = vmatpush1.msra.mxu0 0.0
    %2330 = vmatprep.subr.mxu0 0.0
    %2331 = vmatpush1.msra.mxu0 0.0
    %2332 = vmatprep.subr.mxu0 0.0
    %2333 = vmatpush1.msra.mxu0 0.0
    %2334 = vmatprep.subr.mxu0 0.0
    %2335 = vmatpush1.msra.mxu0 0.0
    %2336 = vmatprep.subr.mxu0 0.0
    %2337 = vmatpush1.msra.mxu0 0.0
    %2338 = vmatprep.subr.mxu0 0.0
    %2339 = vmatpush1.msra.mxu0 0.0
    %2340 = vmatprep.subr.mxu0 0.0
    %2341 = vmatpush1.msra.mxu0 0.0
    %2342 = vmatprep.subr.mxu0 0.0
    %2343 = vmatpush1.msra.mxu0 0.0
    %2344 = vmatprep.mubr.f32.mxu0 0.0
    %2345 = vmatmul.mubr.f32.gmra.mrb[0].mxu0 %v2275
    %v2346 = vpop.f32.mrb[0].mxu0
    %v2347 = vadd.f32 0.0, %v2346
    %v2348 = vpop.f32.mrb[0].mxu0
    %2349 = vmatprep.mubr.f32.mxu0 0.0
    %2350 = vmatmul.mubr.f32.gmra.mrb[0].mxu0 %v2278
    %v2351 = vpop.f32.mrb[0].mxu0
    %v2352 = vadd.f32 0.0, %v2351
    %v2353 = vpop.f32.mrb[0].mxu0
    %2354 = vdwg.mxu0
    %v2356 = vsel %vm447, %v2347, 0
    %v2359 = vsel %vm447, %v2352, 0
    %v2362 = vsel %vm850, %v440, 0
    %2364 = vmatprep.subr.mxu0 0.0
    %2365 = vmatpush1.msra.mxu0 %v2362
    %2366 = vmatprep.subr.mxu0 0.0
    %2367 = vmatpush1.msra.mxu0 0.0
    %2368 = vmatprep.subr.mxu0 0.0
    %2369 = vmatpush1.msra.mxu0 0.0
    %2370 = vmatprep.subr.mxu0 0.0
    %2371 = vmatpush1.msra.mxu0 0.0
    %2372 = vmatprep.subr.mxu0 0.0
    %2373 = vmatpush1.msra.mxu0 0.0
    %2374 = vmatprep.subr.mxu0 0.0
    %2375 = vmatpush1.msra.mxu0 0.0
    %2376 = vmatprep.subr.mxu0 0.0
    %2377 = vmatpush1.msra.mxu0 0.0
    %2378 = vmatprep.subr.mxu0 0.0
    %2379 = vmatpush1.msra.mxu0 0.0
    %2380 = vmatprep.subr.mxu0 0.0
    %2381 = vmatpush1.msra.mxu0 0.0
    %2382 = vmatprep.subr.mxu0 0.0
    %2383 = vmatpush1.msra.mxu0 0.0
    %2384 = vmatprep.subr.mxu0 0.0
    %2385 = vmatpush1.msra.mxu0 0.0
    %2386 = vmatprep.subr.mxu0 0.0
    %2387 = vmatpush1.msra.mxu0 0.0
    %2388 = vmatprep.subr.mxu0 0.0
    %2389 = vmatpush1.msra.mxu0 0.0
    %2390 = vmatprep.subr.mxu0 0.0
    %2391 = vmatpush1.msra.mxu0 0.0
    %2392 = vmatprep.subr.mxu0 0.0
    %2393 = vmatpush1.msra.mxu0 0.0
    %2394 = vmatprep.subr.mxu0 0.0
    %2395 = vmatpush1.msra.mxu0 0.0
    %2396 = vmatprep.subr.mxu0 0.0
    %2397 = vmatpush1.msra.mxu0 0.0
    %2398 = vmatprep.subr.mxu0 0.0
    %2399 = vmatpush1.msra.mxu0 0.0
    %2400 = vmatprep.subr.mxu0 0.0
    %2401 = vmatpush1.msra.mxu0 0.0
    %2402 = vmatprep.subr.mxu0 0.0
    %2403 = vmatpush1.msra.mxu0 0.0
    %2404 = vmatprep.subr.mxu0 0.0
    %2405 = vmatpush1.msra.mxu0 0.0
    %2406 = vmatprep.subr.mxu0 0.0
    %2407 = vmatpush1.msra.mxu0 0.0
    %2408 = vmatprep.subr.mxu0 0.0
    %2409 = vmatpush1.msra.mxu0 0.0
    %2410 = vmatprep.subr.mxu0 0.0
    %2411 = vmatpush1.msra.mxu0 0.0
    %2412 = vmatprep.subr.mxu0 0.0
    %2413 = vmatpush1.msra.mxu0 0.0
    %2414 = vmatprep.subr.mxu0 0.0
    %2415 = vmatpush1.msra.mxu0 0.0
    %2416 = vmatprep.subr.mxu0 0.0
    %2417 = vmatpush1.msra.mxu0 0.0
    %2418 = vmatprep.subr.mxu0 0.0
    %2419 = vmatpush1.msra.mxu0 0.0
    %2420 = vmatprep.subr.mxu0 0.0
    %2421 = vmatpush1.msra.mxu0 0.0
    %2422 = vmatprep.subr.mxu0 0.0
    %2423 = vmatpush1.msra.mxu0 0.0
    %2424 = vmatprep.subr.mxu0 0.0
    %2425 = vmatpush1.msra.mxu0 0.0
    %2426 = vmatprep.subr.mxu0 0.0
    %2427 = vmatpush1.msra.mxu0 0.0
    %2428 = vmatprep.mubr.f32.mxu0 0.0
    %2429 = vmatmul.mubr.f32.gmra.mrb[0].mxu0 %v2356
    %v2430 = vpop.f32.mrb[0].mxu0
    %v2431 = vadd.f32 0.0, %v2430
    %v2432 = vpop.f32.mrb[0].mxu0
    %2433 = vmatprep.mubr.f32.mxu0 0.0
    %2434 = vmatmul.mubr.f32.gmra.mrb[0].mxu0 %v2359
    %v2435 = vpop.f32.mrb[0].mxu0
    %v2436 = vadd.f32 0.0, %v2435
    %v2437 = vpop.f32.mrb[0].mxu0
    %2438 = vdwg.mxu0
    %v2439 = vadd.f32 %v2153, %v2431
    %v2440 = vadd.f32 %v2154, %v2436
    %2441 = vrot.lane.b32.xlu0 %v435, 100
    %v2442 = vpop.permute.xlu0 %2441
    %2443 = vrot.lane.b32.xlu0 %v436, 100
    %v2444 = vpop.permute.xlu0 %2443
    %2445 = vrot.lane.b32.xlu0 %v427, 68
    %v2446 = vpop.permute.xlu0 %2445
    %2447 = vrot.lane.b32.xlu0 %v432, 68
    %v2448 = vpop.permute.xlu0 %2447
    %v2449 = vsel %vm447, %v2442, 0
    %v2451 = vsel %vm447, %v2444, 0
    %v2453 = vsel %vm447, %v2446, 0
    %v2455 = vsel %vm447, %v2448, 0
    %2457 = vmatprep.subr.mxu0 0.0
    %2458 = vmatpush1.xpose.msra.mxu0 %v2453
    %2459 = vmatprep.subr.mxu0 0.0
    %2460 = vmatpush1.xpose.msra.mxu0 %v2455
    %2461 = vmatprep.subr.mxu0 0.0
    %2462 = vmatpush1.xpose.msra.mxu0 0.0
    %2463 = vmatprep.subr.mxu0 0.0
    %2464 = vmatpush1.xpose.msra.mxu0 0.0
    %2465 = vmatprep.subr.mxu0 0.0
    %2466 = vmatpush1.xpose.msra.mxu0 0.0
    %2467 = vmatprep.subr.mxu0 0.0
    %2468 = vmatpush1.xpose.msra.mxu0 0.0
    %2469 = vmatprep.subr.mxu0 0.0
    %2470 = vmatpush1.xpose.msra.mxu0 0.0
    %2471 = vmatprep.subr.mxu0 0.0
    %2472 = vmatpush1.xpose.msra.mxu0 0.0
    %2473 = vmatprep.subr.mxu0 0.0
    %2474 = vmatpush1.xpose.msra.mxu0 0.0
    %2475 = vmatprep.subr.mxu0 0.0
    %2476 = vmatpush1.xpose.msra.mxu0 0.0
    %2477 = vmatprep.subr.mxu0 0.0
    %2478 = vmatpush1.xpose.msra.mxu0 0.0
    %2479 = vmatprep.subr.mxu0 0.0
    %2480 = vmatpush1.xpose.msra.mxu0 0.0
    %2481 = vmatprep.subr.mxu0 0.0
    %2482 = vmatpush1.xpose.msra.mxu0 0.0
    %2483 = vmatprep.subr.mxu0 0.0
    %2484 = vmatpush1.xpose.msra.mxu0 0.0
    %2485 = vmatprep.subr.mxu0 0.0
    %2486 = vmatpush1.xpose.msra.mxu0 0.0
    %2487 = vmatprep.subr.mxu0 0.0
    %2488 = vmatpush1.xpose.msra.mxu0 0.0
    %2489 = vmatprep.subr.mxu0 0.0
    %2490 = vmatpush1.xpose.msra.mxu0 0.0
    %2491 = vmatprep.subr.mxu0 0.0
    %2492 = vmatpush1.xpose.msra.mxu0 0.0
    %2493 = vmatprep.subr.mxu0 0.0
    %2494 = vmatpush1.xpose.msra.mxu0 0.0
    %2495 = vmatprep.subr.mxu0 0.0
    %2496 = vmatpush1.xpose.msra.mxu0 0.0
    %2497 = vmatprep.subr.mxu0 0.0
    %2498 = vmatpush1.xpose.msra.mxu0 0.0
    %2499 = vmatprep.subr.mxu0 0.0
    %2500 = vmatpush1.xpose.msra.mxu0 0.0
    %2501 = vmatprep.subr.mxu0 0.0
    %2502 = vmatpush1.xpose.msra.mxu0 0.0
    %2503 = vmatprep.subr.mxu0 0.0
    %2504 = vmatpush1.xpose.msra.mxu0 0.0
    %2505 = vmatprep.subr.mxu0 0.0
    %2506 = vmatpush1.xpose.msra.mxu0 0.0
    %2507 = vmatprep.subr.mxu0 0.0
    %2508 = vmatpush1.xpose.msra.mxu0 0.0
    %2509 = vmatprep.subr.mxu0 0.0
    %2510 = vmatpush1.xpose.msra.mxu0 0.0
    %2511 = vmatprep.subr.mxu0 0.0
    %2512 = vmatpush1.xpose.msra.mxu0 0.0
    %2513 = vmatprep.subr.mxu0 0.0
    %2514 = vmatpush1.xpose.msra.mxu0 0.0
    %2515 = vmatprep.subr.mxu0 0.0
    %2516 = vmatpush1.xpose.msra.mxu0 0.0
    %2517 = vmatprep.subr.mxu0 0.0
    %2518 = vmatpush1.xpose.msra.mxu0 0.0
    %2519 = vmatprep.subr.mxu0 0.0
    %2520 = vmatpush1.xpose.msra.mxu0 0.0
    %2521 = vmatprep.mubr.f32.mxu0 0.0
    %2522 = vmatmul.mubr.f32.gmra.mrb[0].mxu0 %v2449
    %v2523 = vpop.f32.mrb[0].mxu0
    %v2524 = vadd.f32 %v187, %v2523
    %v2525 = vpop.f32.mrb[0].mxu0
    %2526 = vmatprep.mubr.f32.mxu0 0.0
    %2527 = vmatmul.mubr.f32.gmra.mrb[0].mxu0 %v2451
    %v2528 = vpop.f32.mrb[0].mxu0
    %v2529 = vadd.f32 %v188, %v2528
    %v2530 = vpop.f32.mrb[0].mxu0
    %2531 = vdwg.mxu0
    %v2532 = vsel %vm191, %v2524, -inf
    %2533 = vmax.xlane.f32.xlu0 %v2532
    %v2534 = vpop.xlane.xlu0 %2533
    %v2535 = vsel %vm191, %v2529, -inf
    %2536 = vmax.xlane.f32.xlu0 %v2535
    %v2537 = vpop.xlane.xlu0 %2536
    %v2538 = vsub.f32 %v2524, %v2534
    %v2539 = vsub.f32 %v2529, %v2537
    %v2540 = vmul.f32 %v2538, 1.442695
    %v2541 = vpow.pop %v2540
    %v2542 = vmul.f32 %v2539, 1.442695
    %v2543 = vpow.pop %v2542
    %v2544 = vsel %vm191, %v2541, 0.0
    %2545 = vadd.xlane.f32.xlu0 %v2544
    %v2546 = vpop.xlane.xlu0 %2545
    %v2547 = vsel %vm191, %v2543, 0.0
    %2548 = vadd.xlane.f32.xlu0 %v2547
    %v2549 = vpop.xlane.xlu0 %2548
    %v2550 = vrcp.pop %v2546
    %v2551 = vrcp.pop %v2549
    %v2552 = vmul.f32 %v2541, %v2550
    %v2553 = vmul.f32 %v2543, %v2551
    %2554 = vrot.lane.b32.xlu0 %v427, 36
    %v2555 = vpop.permute.xlu0 %2554
    %2556 = vrot.lane.b32.xlu0 %v432, 36
    %v2557 = vpop.permute.xlu0 %2556
    %v2561 = vsel %vm191, %v2552, 0
    %v2564 = vsel %vm191, %v2553, 0
    %2566 = vmatprep.subr.mxu0 0.0
    %2567 = vmatpush1.msra.mxu0 %v2555
    %2568 = vmatprep.subr.mxu0 0.0
    %2569 = vmatpush1.msra.mxu0 %v2557
    %2570 = vmatprep.subr.mxu0 0.0
    %2571 = vmatpush1.msra.mxu0 0.0
    %2572 = vmatprep.subr.mxu0 0.0
    %2573 = vmatpush1.msra.mxu0 0.0
    %2574 = vmatprep.subr.mxu0 0.0
    %2575 = vmatpush1.msra.mxu0 0.0
    %2576 = vmatprep.subr.mxu0 0.0
    %2577 = vmatpush1.msra.mxu0 0.0
    %2578 = vmatprep.subr.mxu0 0.0
    %2579 = vmatpush1.msra.mxu0 0.0
    %2580 = vmatprep.subr.mxu0 0.0
    %2581 = vmatpush1.msra.mxu0 0.0
    %2582 = vmatprep.subr.mxu0 0.0
    %2583 = vmatpush1.msra.mxu0 0.0
    %2584 = vmatprep.subr.mxu0 0.0
    %2585 = vmatpush1.msra.mxu0 0.0
    %2586 = vmatprep.subr.mxu0 0.0
    %2587 = vmatpush1.msra.mxu0 0.0
    %2588 = vmatprep.subr.mxu0 0.0
    %2589 = vmatpush1.msra.mxu0 0.0
    %2590 = vmatprep.subr.mxu0 0.0
    %2591 = vmatpush1.msra.mxu0 0.0
    %2592 = vmatprep.subr.mxu0 0.0
    %2593 = vmatpush1.msra.mxu0 0.0
    %2594 = vmatprep.subr.mxu0 0.0
    %2595 = vmatpush1.msra.mxu0 0.0
    %2596 = vmatprep.subr.mxu0 0.0
    %2597 = vmatpush1.msra.mxu0 0.0
    %2598 = vmatprep.subr.mxu0 0.0
    %2599 = vmatpush1.msra.mxu0 0.0
    %2600 = vmatprep.subr.mxu0 0.0
    %2601 = vmatpush1.msra.mxu0 0.0
    %2602 = vmatprep.subr.mxu0 0.0
    %2603 = vmatpush1.msra.mxu0 0.0
    %2604 = vmatprep.subr.mxu0 0.0
    %2605 = vmatpush1.msra.mxu0 0.0
    %2606 = vmatprep.subr.mxu0 0.0
    %2607 = vmatpush1.msra.mxu0 0.0
    %2608 = vmatprep.subr.mxu0 0.0
    %2609 = vmatpush1.msra.mxu0 0.0
    %2610 = vmatprep.subr.mxu0 0.0
    %2611 = vmatpush1.msra.mxu0 0.0
    %2612 = vmatprep.subr.mxu0 0.0
    %2613 = vmatpush1.msra.mxu0 0.0
    %2614 = vmatprep.subr.mxu0 0.0
    %2615 = vmatpush1.msra.mxu0 0.0
    %2616 = vmatprep.subr.mxu0 0.0
    %2617 = vmatpush1.msra.mxu0 0.0
    %2618 = vmatprep.subr.mxu0 0.0
    %2619 = vmatpush1.msra.mxu0 0.0
    %2620 = vmatprep.subr.mxu0 0.0
    %2621 = vmatpush1.msra.mxu0 0.0
    %2622 = vmatprep.subr.mxu0 0.0
    %2623 = vmatpush1.msra.mxu0 0.0
    %2624 = vmatprep.subr.mxu0 0.0
    %2625 = vmatpush1.msra.mxu0 0.0
    %2626 = vmatprep.subr.mxu0 0.0
    %2627 = vmatpush1.msra.mxu0 0.0
    %2628 = vmatprep.subr.mxu0 0.0
    %2629 = vmatpush1.msra.mxu0 0.0
    %2630 = vmatprep.mubr.f32.mxu0 0.0
    %2631 = vmatmul.mubr.f32.gmra.mrb[0].mxu0 %v2561
    %v2632 = vpop.f32.mrb[0].mxu0
    %v2633 = vadd.f32 0.0, %v2632
    %v2634 = vpop.f32.mrb[0].mxu0
    %2635 = vmatprep.mubr.f32.mxu0 0.0
    %2636 = vmatmul.mubr.f32.gmra.mrb[0].mxu0 %v2564
    %v2637 = vpop.f32.mrb[0].mxu0
    %v2638 = vadd.f32 0.0, %v2637
    %v2639 = vpop.f32.mrb[0].mxu0
    %2640 = vdwg.mxu0
    %v2641 = vrot.slane %v440, 4
    %v2643 = vsel %vm447, %v2633, 0
    %v2646 = vsel %vm447, %v2638, 0
    %v2648 = vsel %vm850, %v2641, 0
    %2650 = vmatprep.subr.mxu0 0.0
    %2651 = vmatpush1.msra.mxu0 %v2648
    %2652 = vmatprep.subr.mxu0 0.0
    %2653 = vmatpush1.msra.mxu0 0.0
    %2654 = vmatprep.subr.mxu0 0.0
    %2655 = vmatpush1.msra.mxu0 0.0
    %2656 = vmatprep.subr.mxu0 0.0
    %2657 = vmatpush1.msra.mxu0 0.0
    %2658 = vmatprep.subr.mxu0 0.0
    %2659 = vmatpush1.msra.mxu0 0.0
    %2660 = vmatprep.subr.mxu0 0.0
    %2661 = vmatpush1.msra.mxu0 0.0
    %2662 = vmatprep.subr.mxu0 0.0
    %2663 = vmatpush1.msra.mxu0 0.0
    %2664 = vmatprep.subr.mxu0 0.0
    %2665 = vmatpush1.msra.mxu0 0.0
    %2666 = vmatprep.subr.mxu0 0.0
    %2667 = vmatpush1.msra.mxu0 0.0
    %2668 = vmatprep.subr.mxu0 0.0
    %2669 = vmatpush1.msra.mxu0 0.0
    %2670 = vmatprep.subr.mxu0 0.0
    %2671 = vmatpush1.msra.mxu0 0.0
    %2672 = vmatprep.subr.mxu0 0.0
    %2673 = vmatpush1.msra.mxu0 0.0
    %2674 = vmatprep.subr.mxu0 0.0
    %2675 = vmatpush1.msra.mxu0 0.0
    %2676 = vmatprep.subr.mxu0 0.0
    %2677 = vmatpush1.msra.mxu0 0.0
    %2678 = vmatprep.subr.mxu0 0.0
    %2679 = vmatpush1.msra.mxu0 0.0
    %2680 = vmatprep.subr.mxu0 0.0
    %2681 = vmatpush1.msra.mxu0 0.0
    %2682 = vmatprep.subr.mxu0 0.0
    %2683 = vmatpush1.msra.mxu0 0.0
    %2684 = vmatprep.subr.mxu0 0.0
    %2685 = vmatpush1.msra.mxu0 0.0
    %2686 = vmatprep.subr.mxu0 0.0
    %2687 = vmatpush1.msra.mxu0 0.0
    %2688 = vmatprep.subr.mxu0 0.0
    %2689 = vmatpush1.msra.mxu0 0.0
    %2690 = vmatprep.subr.mxu0 0.0
    %2691 = vmatpush1.msra.mxu0 0.0
    %2692 = vmatprep.subr.mxu0 0.0
    %2693 = vmatpush1.msra.mxu0 0.0
    %2694 = vmatprep.subr.mxu0 0.0
    %2695 = vmatpush1.msra.mxu0 0.0
    %2696 = vmatprep.subr.mxu0 0.0
    %2697 = vmatpush1.msra.mxu0 0.0
    %2698 = vmatprep.subr.mxu0 0.0
    %2699 = vmatpush1.msra.mxu0 0.0
    %2700 = vmatprep.subr.mxu0 0.0
    %2701 = vmatpush1.msra.mxu0 0.0
    %2702 = vmatprep.subr.mxu0 0.0
    %2703 = vmatpush1.msra.mxu0 0.0
    %2704 = vmatprep.subr.mxu0 0.0
    %2705 = vmatpush1.msra.mxu0 0.0
    %2706 = vmatprep.subr.mxu0 0.0
    %2707 = vmatpush1.msra.mxu0 0.0
    %2708 = vmatprep.subr.mxu0 0.0
    %2709 = vmatpush1.msra.mxu0 0.0
    %2710 = vmatprep.subr.mxu0 0.0
    %2711 = vmatpush1.msra.mxu0 0.0
    %2712 = vmatprep.subr.mxu0 0.0
    %2713 = vmatpush1.msra.mxu0 0.0
    %2714 = vmatprep.mubr.f32.mxu0 0.0
    %2715 = vmatmul.mubr.f32.gmra.mrb[0].mxu0 %v2643
    %v2716 = vpop.f32.mrb[0].mxu0
    %v2717 = vadd.f32 0.0, %v2716
    %v2718 = vpop.f32.mrb[0].mxu0
    %2719 = vmatprep.mubr.f32.mxu0 0.0
    %2720 = vmatmul.mubr.f32.gmra.mrb[0].mxu0 %v2646
    %v2721 = vpop.f32.mrb[0].mxu0
    %v2722 = vadd.f32 0.0, %v2721
    %v2723 = vpop.f32.mrb[0].mxu0
    %2724 = vdwg.mxu0
    %v2725 = vadd.f32 %v2439, %v2717
    %v2726 = vadd.f32 %v2440, %v2722
    %v2727 = vld [vmem:[#allocation11] sm:$0x1]
    %v2729 = vlaneseq
    %v2730 = vshrl.u32 %v2729, 7
    %v2731 = vsub.s32 0, %v2730
    %v2732 = vrot.slane %v2727, %v2731
    %v2734 = vadd.f32 %v2725, %v2732
    %v2735 = vadd.f32 %v2726, %v2732
    %v2737 = vsel %vm191, %v185, 0
    %v2740 = vsel %vm191, %v186, 0
    %2742 = vmatprep.subr.mxu0 0.0
    %2743 = vmatpush1.msra.mxu0 %v2734
    %2744 = vmatprep.subr.mxu0 0.0
    %2745 = vmatpush1.msra.mxu0 %v2735
    %2746 = vmatprep.subr.mxu0 0.0
    %2747 = vmatpush1.msra.mxu0 0.0
    %2748 = vmatprep.subr.mxu0 0.0
    %2749 = vmatpush1.msra.mxu0 0.0
    %2750 = vmatprep.subr.mxu0 0.0
    %2751 = vmatpush1.msra.mxu0 0.0
    %2752 = vmatprep.subr.mxu0 0.0
    %2753 = vmatpush1.msra.mxu0 0.0
    %2754 = vmatprep.subr.mxu0 0.0
    %2755 = vmatpush1.msra.mxu0 0.0
    %2756 = vmatprep.subr.mxu0 0.0
    %2757 = vmatpush1.msra.mxu0 0.0
    %2758 = vmatprep.subr.mxu0 0.0
    %2759 = vmatpush1.msra.mxu0 0.0
    %2760 = vmatprep.subr.mxu0 0.0
    %2761 = vmatpush1.msra.mxu0 0.0
    %2762 = vmatprep.subr.mxu0 0.0
    %2763 = vmatpush1.msra.mxu0 0.0
    %2764 = vmatprep.subr.mxu0 0.0
    %2765 = vmatpush1.msra.mxu0 0.0
    %2766 = vmatprep.subr.mxu0 0.0
    %2767 = vmatpush1.msra.mxu0 0.0
    %2768 = vmatprep.subr.mxu0 0.0
    %2769 = vmatpush1.msra.mxu0 0.0
    %2770 = vmatprep.subr.mxu0 0.0
    %2771 = vmatpush1.msra.mxu0 0.0
    %2772 = vmatprep.subr.mxu0 0.0
    %2773 = vmatpush1.msra.mxu0 0.0
    %2774 = vmatprep.subr.mxu0 0.0
    %2775 = vmatpush1.msra.mxu0 0.0
    %2776 = vmatprep.subr.mxu0 0.0
    %2777 = vmatpush1.msra.mxu0 0.0
    %2778 = vmatprep.subr.mxu0 0.0
    %2779 = vmatpush1.msra.mxu0 0.0
    %2780 = vmatprep.subr.mxu0 0.0
    %2781 = vmatpush1.msra.mxu0 0.0
    %2782 = vmatprep.subr.mxu0 0.0
    %2783 = vmatpush1.msra.mxu0 0.0
    %2784 = vmatprep.subr.mxu0 0.0
    %2785 = vmatpush1.msra.mxu0 0.0
    %2786 = vmatprep.subr.mxu0 0.0
    %2787 = vmatpush1.msra.mxu0 0.0
    %2788 = vmatprep.subr.mxu0 0.0
    %2789 = vmatpush1.msra.mxu0 0.0
    %2790 = vmatprep.subr.mxu0 0.0
    %2791 = vmatpush1.msra.mxu0 0.0
    %2792 = vmatprep.subr.mxu0 0.0
    %2793 = vmatpush1.msra.mxu0 0.0
    %2794 = vmatprep.subr.mxu0 0.0
    %2795 = vmatpush1.msra.mxu0 0.0
    %2796 = vmatprep.subr.mxu0 0.0
    %2797 = vmatpush1.msra.mxu0 0.0
    %2798 = vmatprep.subr.mxu0 0.0
    %2799 = vmatpush1.msra.mxu0 0.0
    %2800 = vmatprep.subr.mxu0 0.0
    %2801 = vmatpush1.msra.mxu0 0.0
    %2802 = vmatprep.subr.mxu0 0.0
    %2803 = vmatpush1.msra.mxu0 0.0
    %2804 = vmatprep.subr.mxu0 0.0
    %2805 = vmatpush1.msra.mxu0 0.0
    %2806 = vmatprep.mubr.f32.mxu0 0.0
    %2807 = vmatmul.mubr.f32.gmra.mrb[0].mxu0 %v2737
    %v2808 = vpop.f32.mrb[0].mxu0
    %v2809 = vadd.f32 %v2734, %v2808
    %v2810 = vpop.f32.mrb[0].mxu0
    %2811 = vmatprep.mubr.f32.mxu0 0.0
    %2812 = vmatmul.mubr.f32.gmra.mrb[0].mxu0 %v2740
    %v2813 = vpop.f32.mrb[0].mxu0
    %v2814 = vadd.f32 %v2735, %v2813
    %v2815 = vpop.f32.mrb[0].mxu0
    %2816 = vdwg.mxu0
    %v2817 = vld [vmem:[%s9] sm:$0xff]
    %v2818 = vld [vmem:[%s9 + $0x8] sm:$0xff]
    %v2819 = vld [vmem:[%s9 + $0x10] sm:$0xff]
    %v2820 = vld [vmem:[%s9 + $0x18] sm:$0xff]
    %v2821 = vld [vmem:[#allocation13] sm:$0x1]
    %v2823 = vlaneseq
    %v2824 = vshrl.u32 %v2823, 7
    %v2825 = vsub.s32 0, %v2824
    %v2826 = vrot.slane %v2821, %v2825
    %v2829 = vsel %vm339, %v2809, 0
    %v2832 = vsel %vm339, %v2814, 0
    %2834 = vmatprep.subr.mxu0 0.0
    %2835 = vmatpush1.msra.mxu0 %v2817
    %2836 = vmatprep.subr.mxu0 0.0
    %2837 = vmatpush1.msra.mxu0 %v2818
    %2838 = vmatprep.subr.mxu0 0.0
    %2839 = vmatpush1.msra.mxu0 %v2819
    %2840 = vmatprep.subr.mxu0 0.0
    %2841 = vmatpush1.msra.mxu0 %v2820
    %2842 = vmatprep.subr.mxu0 0.0
    %2843 = vmatpush1.msra.mxu0 0.0
    %2844 = vmatprep.subr.mxu0 0.0
    %2845 = vmatpush1.msra.mxu0 0.0
    %2846 = vmatprep.subr.mxu0 0.0
    %2847 = vmatpush1.msra.mxu0 0.0
    %2848 = vmatprep.subr.mxu0 0.0
    %2849 = vmatpush1.msra.mxu0 0.0
    %2850 = vmatprep.subr.mxu0 0.0
    %2851 = vmatpush1.msra.mxu0 0.0
    %2852 = vmatprep.subr.mxu0 0.0
    %2853 = vmatpush1.msra.mxu0 0.0
    %2854 = vmatprep.subr.mxu0 0.0
    %2855 = vmatpush1.msra.mxu0 0.0
    %2856 = vmatprep.subr.mxu0 0.0
    %2857 = vmatpush1.msra.mxu0 0.0
    %2858 = vmatprep.subr.mxu0 0.0
    %2859 = vmatpush1.msra.mxu0 0.0
    %2860 = vmatprep.subr.mxu0 0.0
    %2861 = vmatpush1.msra.mxu0 0.0
    %2862 = vmatprep.subr.mxu0 0.0
    %2863 = vmatpush1.msra.mxu0 0.0
    %2864 = vmatprep.subr.mxu0 0.0
    %2865 = vmatpush1.msra.mxu0 0.0
    %2866 = vmatprep.subr.mxu0 0.0
    %2867 = vmatpush1.msra.mxu0 0.0
    %2868 = vmatprep.subr.mxu0 0.0
    %2869 = vmatpush1.msra.mxu0 0.0
    %2870 = vmatprep.subr.mxu0 0.0
    %2871 = vmatpush1.msra.mxu0 0.0
    %2872 = vmatprep.subr.mxu0 0.0
    %2873 = vmatpush1.msra.mxu0 0.0
    %2874 = vmatprep.subr.mxu0 0.0
    %2875 = vmatpush1.msra.mxu0 0.0
    %2876 = vmatprep.subr.mxu0 0.0
    %2877 = vmatpush1.msra.mxu0 0.0
    %2878 = vmatprep.subr.mxu0 0.0
    %2879 = vmatpush1.msra.mxu0 0.0
    %2880 = vmatprep.subr.mxu0 0.0
    %2881 = vmatpush1.msra.mxu0 0.0
    %2882 = vmatprep.subr.mxu0 0.0
    %2883 = vmatpush1.msra.mxu0 0.0
    %2884 = vmatprep.subr.mxu0 0.0
    %2885 = vmatpush1.msra.mxu0 0.0
    %2886 = vmatprep.subr.mxu0 0.0
    %2887 = vmatpush1.msra.mxu0 0.0
    %2888 = vmatprep.subr.mxu0 0.0
    %2889 = vmatpush1.msra.mxu0 0.0
    %2890 = vmatprep.subr.mxu0 0.0
    %2891 = vmatpush1.msra.mxu0 0.0
    %2892 = vmatprep.subr.mxu0 0.0
    %2893 = vmatpush1.msra.mxu0 0.0
    %2894 = vmatprep.subr.mxu0 0.0
    %2895 = vmatpush1.msra.mxu0 0.0
    %2896 = vmatprep.subr.mxu0 0.0
    %2897 = vmatpush1.msra.mxu0 0.0
    %2898 = vmatprep.mubr.f32.mxu0 0.0
    %2899 = vmatmul.mubr.f32.gmra.mrb[0].mxu0 %v2829
    %v2900 = vpop.f32.mrb[0].mxu0
    %v2901 = vadd.f32 %v2826, %v2900
    %v2902 = vpop.f32.mrb[0].mxu0
    %2903 = vmatprep.mubr.f32.mxu0 0.0
    %2904 = vmatmul.mubr.f32.gmra.mrb[0].mxu0 %v2832
    %v2905 = vpop.f32.mrb[0].mxu0
    %v2906 = vadd.f32 %v2826, %v2905
    %v2907 = vpop.f32.mrb[0].mxu0
    %2908 = vdwg.mxu0
    %v2909 = vmax.f32 %v2901, 0.0
    %v2910 = vmax.f32 %v2906, 0.0
    %2911 = vmatprep.subr.mxu0 0.0
    %2912 = vmatpush1.msra.mxu0 %v2909
    %2913 = vmatprep.subr.mxu0 0.0
    %2914 = vmatpush1.msra.mxu0 %v2910
    %2915 = vmatprep.subr.mxu0 0.0
    %2916 = vmatpush1.msra.mxu0 0.0
    %2917 = vmatprep.subr.mxu0 0.0
    %2918 = vmatpush1.msra.mxu0 0.0
    %2919 = vmatprep.subr.mxu0 0.0
    %2920 = vmatpush1.msra.mxu0 0.0
    %2921 = vmatprep.subr.mxu0 0.0
    %2922 = vmatpush1.msra.mxu0 0.0
    %2923 = vmatprep.subr.mxu0 0.0
    %2924 = vmatpush1.msra.mxu0 0.0
    %2925 = vmatprep.subr.mxu0 0.0
    %2926 = vmatpush1.msra.mxu0 0.0
    %2927 = vmatprep.subr.mxu0 0.0
    %2928 = vmatpush1.msra.mxu0 0.0
    %2929 = vmatprep.subr.mxu0 0.0
    %2930 = vmatpush1.msra.mxu0 0.0
    %2931 = vmatprep.subr.mxu0 0.0
    %2932 = vmatpush1.msra.mxu0 0.0
    %2933 = vmatprep.subr.mxu0 0.0
    %2934 = vmatpush1.msra.mxu0 0.0
    %2935 = vmatprep.subr.mxu0 0.0
    %2936 = vmatpush1.msra.mxu0 0.0
    %2937 = vmatprep.subr.mxu0 0.0
    %2938 = vmatpush1.msra.mxu0 0.0
    %2939 = vmatprep.subr.mxu0 0.0
    %2940 = vmatpush1.msra.mxu0 0.0
    %2941 = vmatprep.subr.mxu0 0.0
    %2942 = vmatpush1.msra.mxu0 0.0
    %2943 = vmatprep.subr.mxu0 0.0
    %2944 = vmatpush1.msra.mxu0 0.0
    %2945 = vmatprep.subr.mxu0 0.0
    %2946 = vmatpush1.msra.mxu0 0.0
    %2947 = vmatprep.subr.mxu0 0.0
    %2948 = vmatpush1.msra.mxu0 0.0
    %2949 = vmatprep.subr.mxu0 0.0
    %2950 = vmatpush1.msra.mxu0 0.0
    %2951 = vmatprep.subr.mxu0 0.0
    %2952 = vmatpush1.msra.mxu0 0.0
    %2953 = vmatprep.subr.mxu0 0.0
    %2954 = vmatpush1.msra.mxu0 0.0
    %2955 = vmatprep.subr.mxu0 0.0
    %2956 = vmatpush1.msra.mxu0 0.0
    %2957 = vmatprep.subr.mxu0 0.0
    %2958 = vmatpush1.msra.mxu0 0.0
    %2959 = vmatprep.subr.mxu0 0.0
    %2960 = vmatpush1.msra.mxu0 0.0
    %2961 = vmatprep.subr.mxu0 0.0
    %2962 = vmatpush1.msra.mxu0 0.0
    %2963 = vmatprep.subr.mxu0 0.0
    %2964 = vmatpush1.msra.mxu0 0.0
    %2965 = vmatprep.subr.mxu0 0.0
    %2966 = vmatpush1.msra.mxu0 0.0
    %2967 = vmatprep.subr.mxu0 0.0
    %2968 = vmatpush1.msra.mxu0 0.0
    %2969 = vmatprep.subr.mxu0 0.0
    %2970 = vmatpush1.msra.mxu0 0.0
    %2971 = vmatprep.subr.mxu0 0.0
    %2972 = vmatpush1.msra.mxu0 0.0
    %2973 = vmatprep.subr.mxu0 0.0
    %2974 = vmatpush1.msra.mxu0 0.0
    %2975 = vmatprep.mubr.f32.mxu0 0.0
    %2976 = vmatmul.mubr.f32.gmra.mrb[0].mxu0 %v193
    %v2977 = vpop.f32.mrb[0].mxu0
    %v2978 = vadd.f32 0.0, %v2977
    %v2979 = vpop.f32.mrb[0].mxu0
    %2980 = vdwg.mxu0
    %2981 = vmatprep.subr.mxu0 0.0
    %2982 = vmatpush1.msra.mxu0 %v2909
    %2983 = vmatprep.subr.mxu0 0.0
    %2984 = vmatpush1.msra.mxu0 %v2910
    %2985 = vmatprep.subr.mxu0 0.0
    %2986 = vmatpush1.msra.mxu0 0.0
    %2987 = vmatprep.subr.mxu0 0.0
    %2988 = vmatpush1.msra.mxu0 0.0
    %2989 = vmatprep.subr.mxu0 0.0
    %2990 = vmatpush1.msra.mxu0 0.0
    %2991 = vmatprep.subr.mxu0 0.0
    %2992 = vmatpush1.msra.mxu0 0.0
    %2993 = vmatprep.subr.mxu0 0.0
    %2994 = vmatpush1.msra.mxu0 0.0
    %2995 = vmatprep.subr.mxu0 0.0
    %2996 = vmatpush1.msra.mxu0 0.0
    %2997 = vmatprep.subr.mxu0 0.0
    %2998 = vmatpush1.msra.mxu0 0.0
    %2999 = vmatprep.subr.mxu0 0.0
    %3000 = vmatpush1.msra.mxu0 0.0
    %3001 = vmatprep.subr.mxu0 0.0
    %3002 = vmatpush1.msra.mxu0 0.0
    %3003 = vmatprep.subr.mxu0 0.0
    %3004 = vmatpush1.msra.mxu0 0.0
    %3005 = vmatprep.subr.mxu0 0.0
    %3006 = vmatpush1.msra.mxu0 0.0
    %3007 = vmatprep.subr.mxu0 0.0
    %3008 = vmatpush1.msra.mxu0 0.0
    %3009 = vmatprep.subr.mxu0 0.0
    %3010 = vmatpush1.msra.mxu0 0.0
    %3011 = vmatprep.subr.mxu0 0.0
    %3012 = vmatpush1.msra.mxu0 0.0
    %3013 = vmatprep.subr.mxu0 0.0
    %3014 = vmatpush1.msra.mxu0 0.0
    %3015 = vmatprep.subr.mxu0 0.0
    %3016 = vmatpush1.msra.mxu0 0.0
    %3017 = vmatprep.subr.mxu0 0.0
    %3018 = vmatpush1.msra.mxu0 0.0
    %3019 = vmatprep.subr.mxu0 0.0
    %3020 = vmatpush1.msra.mxu0 0.0
    %3021 = vmatprep.subr.mxu0 0.0
    %3022 = vmatpush1.msra.mxu0 0.0
    %3023 = vmatprep.subr.mxu0 0.0
    %3024 = vmatpush1.msra.mxu0 0.0
    %3025 = vmatprep.subr.mxu0 0.0
    %3026 = vmatpush1.msra.mxu0 0.0
    %3027 = vmatprep.subr.mxu0 0.0
    %3028 = vmatpush1.msra.mxu0 0.0
    %3029 = vmatprep.subr.mxu0 0.0
    %3030 = vmatpush1.msra.mxu0 0.0
    %3031 = vmatprep.subr.mxu0 0.0
    %3032 = vmatpush1.msra.mxu0 0.0
    %3033 = vmatprep.subr.mxu0 0.0
    %3034 = vmatpush1.msra.mxu0 0.0
    %3035 = vmatprep.subr.mxu0 0.0
    %3036 = vmatpush1.msra.mxu0 0.0
    %3037 = vmatprep.subr.mxu0 0.0
    %3038 = vmatpush1.msra.mxu0 0.0
    %3039 = vmatprep.subr.mxu0 0.0
    %3040 = vmatpush1.msra.mxu0 0.0
    %3041 = vmatprep.subr.mxu0 0.0
    %3042 = vmatpush1.msra.mxu0 0.0
    %3043 = vmatprep.subr.mxu0 0.0
    %3044 = vmatpush1.msra.mxu0 0.0
    %3045 = vmatprep.mubr.f32.mxu0 0.0
    %3046 = vmatmul.mubr.f32.gmra.mrb[0].mxu0 %v266
    %v3047 = vpop.f32.mrb[0].mxu0
    %v3048 = vadd.f32 0.0, %v3047
    %v3049 = vpop.f32.mrb[0].mxu0
    %3050 = vdwg.mxu0
    %v3051 = vmul.f32 %v2978, %v3048
    %v3052 = vsel %vm191, %v3051, 0.0
    %3053 = vadd.xlane.f32.xlu0 %v3052
    %v3054 = vpop.xlane.xlu0 %3053
    %v3055 = vadd.f32 %v342, %v3054
    %v3056 = vld [vmem:[#allocation14] sm:$0xff]
    %v3057 = vld [vmem:[#allocation14 + $0x8] sm:$0xff]
    %v3058 = vld [vmem:[#allocation16] sm:$0x1]
    %v3060 = vlaneseq
    %v3061 = vshrl.u32 %v3060, 7
    %v3062 = vsub.s32 0, %v3061
    %v3063 = vrot.slane %v3058, %v3062
    %v3066 = vsel %vm191, %v2909, 0
    %v3069 = vsel %vm191, %v2910, 0
    %3071 = vmatprep.subr.mxu0 0.0
    %3072 = vmatpush1.msra.mxu0 %v3056
    %3073 = vmatprep.subr.mxu0 0.0
    %3074 = vmatpush1.msra.mxu0 %v3057
    %3075 = vmatprep.subr.mxu0 0.0
    %3076 = vmatpush1.msra.mxu0 0.0
    %3077 = vmatprep.subr.mxu0 0.0
    %3078 = vmatpush1.msra.mxu0 0.0
    %3079 = vmatprep.subr.mxu0 0.0
    %3080 = vmatpush1.msra.mxu0 0.0
    %3081 = vmatprep.subr.mxu0 0.0
    %3082 = vmatpush1.msra.mxu0 0.0
    %3083 = vmatprep.subr.mxu0 0.0
    %3084 = vmatpush1.msra.mxu0 0.0
    %3085 = vmatprep.subr.mxu0 0.0
    %3086 = vmatpush1.msra.mxu0 0.0
    %3087 = vmatprep.subr.mxu0 0.0
    %3088 = vmatpush1.msra.mxu0 0.0
    %3089 = vmatprep.subr.mxu0 0.0
    %3090 = vmatpush1.msra.mxu0 0.0
    %3091 = vmatprep.subr.mxu0 0.0
    %3092 = vmatpush1.msra.mxu0 0.0
    %3093 = vmatprep.subr.mxu0 0.0
    %3094 = vmatpush1.msra.mxu0 0.0
    %3095 = vmatprep.subr.mxu0 0.0
    %3096 = vmatpush1.msra.mxu0 0.0
    %3097 = vmatprep.subr.mxu0 0.0
    %3098 = vmatpush1.msra.mxu0 0.0
    %3099 = vmatprep.subr.mxu0 0.0
    %3100 = vmatpush1.msra.mxu0 0.0
    %3101 = vmatprep.subr.mxu0 0.0
    %3102 = vmatpush1.msra.mxu0 0.0
    %3103 = vmatprep.subr.mxu0 0.0
    %3104 = vmatpush1.msra.mxu0 0.0
    %3105 = vmatprep.subr.mxu0 0.0
    %3106 = vmatpush1.msra.mxu0 0.0
    %3107 = vmatprep.subr.mxu0 0.0
    %3108 = vmatpush1.msra.mxu0 0.0
    %3109 = vmatprep.subr.mxu0 0.0
    %3110 = vmatpush1.msra.mxu0 0.0
    %3111 = vmatprep.subr.mxu0 0.0
    %3112 = vmatpush1.msra.mxu0 0.0
    %3113 = vmatprep.subr.mxu0 0.0
    %3114 = vmatpush1.msra.mxu0 0.0
    %3115 = vmatprep.subr.mxu0 0.0
    %3116 = vmatpush1.msra.mxu0 0.0
    %3117 = vmatprep.subr.mxu0 0.0
    %3118 = vmatpush1.msra.mxu0 0.0
    %3119 = vmatprep.subr.mxu0 0.0
    %3120 = vmatpush1.msra.mxu0 0.0
    %3121 = vmatprep.subr.mxu0 0.0
    %3122 = vmatpush1.msra.mxu0 0.0
    %3123 = vmatprep.subr.mxu0 0.0
    %3124 = vmatpush1.msra.mxu0 0.0
    %3125 = vmatprep.subr.mxu0 0.0
    %3126 = vmatpush1.msra.mxu0 0.0
    %3127 = vmatprep.subr.mxu0 0.0
    %3128 = vmatpush1.msra.mxu0 0.0
    %3129 = vmatprep.subr.mxu0 0.0
    %3130 = vmatpush1.msra.mxu0 0.0
    %3131 = vmatprep.subr.mxu0 0.0
    %3132 = vmatpush1.msra.mxu0 0.0
    %3133 = vmatprep.subr.mxu0 0.0
    %3134 = vmatpush1.msra.mxu0 0.0
    %3135 = vmatprep.mubr.f32.mxu0 0.0
    %3136 = vmatmul.mubr.f32.gmra.mrb[0].mxu0 %v3066
    %v3137 = vpop.f32.mrb[0].mxu0
    %v3138 = vadd.f32 %v3063, %v3137
    %v3139 = vpop.f32.mrb[0].mxu0
    %3140 = vmatprep.mubr.f32.mxu0 0.0
    %3141 = vmatmul.mubr.f32.gmra.mrb[0].mxu0 %v3069
    %v3142 = vpop.f32.mrb[0].mxu0
    %v3143 = vadd.f32 %v3063, %v3142
    %v3144 = vpop.f32.mrb[0].mxu0
    %3145 = vdwg.mxu0
    %v3146 = vmul.f32 %v3138, 0.70710677
    %v3147 = vmul.f32 %v3143, 0.70710677
    %v3148 = vld [vmem:[%s13] sm:$0xff]
    %v3149 = vld [vmem:[%s13 + $0x8] sm:$0xff]
    %3152 = vrot.lane.b32.xlu0 %v3138, 112
    %v3153 = vpop.permute.xlu0 %3152
    %3154 = vrot.lane.b32.xlu0 %v3143, 112
    %v3155 = vpop.permute.xlu0 %3154
    %vm3156 = vcmask 15360
    %v3158 = vsel %vm3156, %v3146, 0
    %v3161 = vsel %vm3156, %v3147, 0
    %v3163 = vsel %vm3156, %v3153, 0
    %v3165 = vsel %vm3156, %v3155, 0
    %3167 = vmatprep.subr.mxu0 0.0
    %3168 = vmatpush1.xpose.msra.mxu0 %v3163
    %3169 = vmatprep.subr.mxu0 0.0
    %3170 = vmatpush1.xpose.msra.mxu0 %v3165
    %3171 = vmatprep.subr.mxu0 0.0
    %3172 = vmatpush1.xpose.msra.mxu0 0.0
    %3173 = vmatprep.subr.mxu0 0.0
    %3174 = vmatpush1.xpose.msra.mxu0 0.0
    %3175 = vmatprep.subr.mxu0 0.0
    %3176 = vmatpush1.xpose.msra.mxu0 0.0
    %3177 = vmatprep.subr.mxu0 0.0
    %3178 = vmatpush1.xpose.msra.mxu0 0.0
    %3179 = vmatprep.subr.mxu0 0.0
    %3180 = vmatpush1.xpose.msra.mxu0 0.0
    %3181 = vmatprep.subr.mxu0 0.0
    %3182 = vmatpush1.xpose.msra.mxu0 0.0
    %3183 = vmatprep.subr.mxu0 0.0
    %3184 = vmatpush1.xpose.msra.mxu0 0.0
    %3185 = vmatprep.subr.mxu0 0.0
    %3186 = vmatpush1.xpose.msra.mxu0 0.0
    %3187 = vmatprep.subr.mxu0 0.0
    %3188 = vmatpush1.xpose.msra.mxu0 0.0
    %3189 = vmatprep.subr.mxu0 0.0
    %3190 = vmatpush1.xpose.msra.mxu0 0.0
    %3191 = vmatprep.subr.mxu0 0.0
    %3192 = vmatpush1.xpose.msra.mxu0 0.0
    %3193 = vmatprep.subr.mxu0 0.0
    %3194 = vmatpush1.xpose.msra.mxu0 0.0
    %3195 = vmatprep.subr.mxu0 0.0
    %3196 = vmatpush1.xpose.msra.mxu0 0.0
    %3197 = vmatprep.subr.mxu0 0.0
    %3198 = vmatpush1.xpose.msra.mxu0 0.0
    %3199 = vmatprep.subr.mxu0 0.0
    %3200 = vmatpush1.xpose.msra.mxu0 0.0
    %3201 = vmatprep.subr.mxu0 0.0
    %3202 = vmatpush1.xpose.msra.mxu0 0.0
    %3203 = vmatprep.subr.mxu0 0.0
    %3204 = vmatpush1.xpose.msra.mxu0 0.0
    %3205 = vmatprep.subr.mxu0 0.0
    %3206 = vmatpush1.xpose.msra.mxu0 0.0
    %3207 = vmatprep.subr.mxu0 0.0
    %3208 = vmatpush1.xpose.msra.mxu0 0.0
    %3209 = vmatprep.subr.mxu0 0.0
    %3210 = vmatpush1.xpose.msra.mxu0 0.0
    %3211 = vmatprep.subr.mxu0 0.0
    %3212 = vmatpush1.xpose.msra.mxu0 0.0
    %3213 = vmatprep.subr.mxu0 0.0
    %3214 = vmatpush1.xpose.msra.mxu0 0.0
    %3215 = vmatprep.subr.mxu0 0.0
    %3216 = vmatpush1.xpose.msra.mxu0 0.0
    %3217 = vmatprep.subr.mxu0 0.0
    %3218 = vmatpush1.xpose.msra.mxu0 0.0
    %3219 = vmatprep.subr.mxu0 0.0
    %3220 = vmatpush1.xpose.msra.mxu0 0.0
    %3221 = vmatprep.subr.mxu0 0.0
    %3222 = vmatpush1.xpose.msra.mxu0 0.0
    %3223 = vmatprep.subr.mxu0 0.0
    %3224 = vmatpush1.xpose.msra.mxu0 0.0
    %3225 = vmatprep.subr.mxu0 0.0
    %3226 = vmatpush1.xpose.msra.mxu0 0.0
    %3227 = vmatprep.subr.mxu0 0.0
    %3228 = vmatpush1.xpose.msra.mxu0 0.0
    %3229 = vmatprep.subr.mxu0 0.0
    %3230 = vmatpush1.xpose.msra.mxu0 0.0
    %3231 = vmatprep.mubr.f32.mxu0 0.0
    %3232 = vmatmul.mubr.f32.gmra.mrb[0].mxu0 %v3158
    %v3233 = vpop.f32.mrb[0].mxu0
    %v3234 = vadd.f32 %v187, %v3233
    %v3235 = vpop.f32.mrb[0].mxu0
    %3236 = vmatprep.mubr.f32.mxu0 0.0
    %3237 = vmatmul.mubr.f32.gmra.mrb[0].mxu0 %v3161
    %v3238 = vpop.f32.mrb[0].mxu0
    %v3239 = vadd.f32 %v188, %v3238
    %v3240 = vpop.f32.mrb[0].mxu0
    %3241 = vdwg.mxu0
    %v3242 = vsel %vm191, %v3234, -inf
    %3243 = vmax.xlane.f32.xlu0 %v3242
    %v3244 = vpop.xlane.xlu0 %3243
    %v3245 = vsel %vm191, %v3239, -inf
    %3246 = vmax.xlane.f32.xlu0 %v3245
    %v3247 = vpop.xlane.xlu0 %3246
    %v3248 = vsub.f32 %v3234, %v3244
    %v3249 = vsub.f32 %v3239, %v3247
    %v3250 = vmul.f32 %v3248, 1.442695
    %v3251 = vpow.pop %v3250
    %v3252 = vmul.f32 %v3249, 1.442695
    %v3253 = vpow.pop %v3252
    %v3254 = vsel %vm191, %v3251, 0.0
    %3255 = vadd.xlane.f32.xlu0 %v3254
    %v3256 = vpop.xlane.xlu0 %3255
    %v3257 = vsel %vm191, %v3253, 0.0
    %3258 = vadd.xlane.f32.xlu0 %v3257
    %v3259 = vpop.xlane.xlu0 %3258
    %v3260 = vrcp.pop %v3256
    %v3261 = vrcp.pop %v3259
    %v3262 = vmul.f32 %v3251, %v3260
    %v3263 = vmul.f32 %v3253, %v3261
    %3264 = vrot.lane.b32.xlu0 %v3138, 96
    %v3265 = vpop.permute.xlu0 %3264
    %3266 = vrot.lane.b32.xlu0 %v3143, 96
    %v3267 = vpop.permute.xlu0 %3266
    %v3271 = vsel %vm191, %v3262, 0
    %v3274 = vsel %vm191, %v3263, 0
    %3276 = vmatprep.subr.mxu0 0.0
    %3277 = vmatpush1.msra.mxu0 %v3265
    %3278 = vmatprep.subr.mxu0 0.0
    %3279 = vmatpush1.msra.mxu0 %v3267
    %3280 = vmatprep.subr.mxu0 0.0
    %3281 = vmatpush1.msra.mxu0 0.0
    %3282 = vmatprep.subr.mxu0 0.0
    %3283 = vmatpush1.msra.mxu0 0.0
    %3284 = vmatprep.subr.mxu0 0.0
    %3285 = vmatpush1.msra.mxu0 0.0
    %3286 = vmatprep.subr.mxu0 0.0
    %3287 = vmatpush1.msra.mxu0 0.0
    %3288 = vmatprep.subr.mxu0 0.0
    %3289 = vmatpush1.msra.mxu0 0.0
    %3290 = vmatprep.subr.mxu0 0.0
    %3291 = vmatpush1.msra.mxu0 0.0
    %3292 = vmatprep.subr.mxu0 0.0
    %3293 = vmatpush1.msra.mxu0 0.0
    %3294 = vmatprep.subr.mxu0 0.0
    %3295 = vmatpush1.msra.mxu0 0.0
    %3296 = vmatprep.subr.mxu0 0.0
    %3297 = vmatpush1.msra.mxu0 0.0
    %3298 = vmatprep.subr.mxu0 0.0
    %3299 = vmatpush1.msra.mxu0 0.0
    %3300 = vmatprep.subr.mxu0 0.0
    %3301 = vmatpush1.msra.mxu0 0.0
    %3302 = vmatprep.subr.mxu0 0.0
    %3303 = vmatpush1.msra.mxu0 0.0
    %3304 = vmatprep.subr.mxu0 0.0
    %3305 = vmatpush1.msra.mxu0 0.0
    %3306 = vmatprep.subr.mxu0 0.0
    %3307 = vmatpush1.msra.mxu0 0.0
    %3308 = vmatprep.subr.mxu0 0.0
    %3309 = vmatpush1.msra.mxu0 0.0
    %3310 = vmatprep.subr.mxu0 0.0
    %3311 = vmatpush1.msra.mxu0 0.0
    %3312 = vmatprep.subr.mxu0 0.0
    %3313 = vmatpush1.msra.mxu0 0.0
    %3314 = vmatprep.subr.mxu0 0.0
    %3315 = vmatpush1.msra.mxu0 0.0
    %3316 = vmatprep.subr.mxu0 0.0
    %3317 = vmatpush1.msra.mxu0 0.0
    %3318 = vmatprep.subr.mxu0 0.0
    %3319 = vmatpush1.msra.mxu0 0.0
    %3320 = vmatprep.subr.mxu0 0.0
    %3321 = vmatpush1.msra.mxu0 0.0
    %3322 = vmatprep.subr.mxu0 0.0
    %3323 = vmatpush1.msra.mxu0 0.0
    %3324 = vmatprep.subr.mxu0 0.0
    %3325 = vmatpush1.msra.mxu0 0.0
    %3326 = vmatprep.subr.mxu0 0.0
    %3327 = vmatpush1.msra.mxu0 0.0
    %3328 = vmatprep.subr.mxu0 0.0
    %3329 = vmatpush1.msra.mxu0 0.0
    %3330 = vmatprep.subr.mxu0 0.0
    %3331 = vmatpush1.msra.mxu0 0.0
    %3332 = vmatprep.subr.mxu0 0.0
    %3333 = vmatpush1.msra.mxu0 0.0
    %3334 = vmatprep.subr.mxu0 0.0
    %3335 = vmatpush1.msra.mxu0 0.0
    %3336 = vmatprep.subr.mxu0 0.0
    %3337 = vmatpush1.msra.mxu0 0.0
    %3338 = vmatprep.subr.mxu0 0.0
    %3339 = vmatpush1.msra.mxu0 0.0
    %3340 = vmatprep.mubr.f32.mxu0 0.0
    %3341 = vmatmul.mubr.f32.gmra.mrb[0].mxu0 %v3271
    %v3342 = vpop.f32.mrb[0].mxu0
    %v3343 = vadd.f32 0.0, %v3342
    %v3344 = vpop.f32.mrb[0].mxu0
    %3345 = vmatprep.mubr.f32.mxu0 0.0
    %3346 = vmatmul.mubr.f32.gmra.mrb[0].mxu0 %v3274
    %v3347 = vpop.f32.mrb[0].mxu0
    %v3348 = vadd.f32 0.0, %v3347
    %v3349 = vpop.f32.mrb[0].mxu0
    %3350 = vdwg.mxu0
    %3351 = vrot.lane.b32.xlu0 %v3146, 126
    %v3352 = vpop.permute.xlu0 %3351
    %3353 = vrot.lane.b32.xlu0 %v3147, 126
    %v3354 = vpop.permute.xlu0 %3353
    %3355 = vrot.lane.b32.xlu0 %v3138, 110
    %v3356 = vpop.permute.xlu0 %3355
    %3357 = vrot.lane.b32.xlu0 %v3143, 110
    %v3358 = vpop.permute.xlu0 %3357
    %v3359 = vsel %vm3156, %v3352, 0
    %v3361 = vsel %vm3156, %v3354, 0
    %v3363 = vsel %vm3156, %v3356, 0
    %v3365 = vsel %vm3156, %v3358, 0
    %3367 = vmatprep.subr.mxu0 0.0
    %3368 = vmatpush1.xpose.msra.mxu0 %v3363
    %3369 = vmatprep.subr.mxu0 0.0
    %3370 = vmatpush1.xpose.msra.mxu0 %v3365
    %3371 = vmatprep.subr.mxu0 0.0
    %3372 = vmatpush1.xpose.msra.mxu0 0.0
    %3373 = vmatprep.subr.mxu0 0.0
    %3374 = vmatpush1.xpose.msra.mxu0 0.0
    %3375 = vmatprep.subr.mxu0 0.0
    %3376 = vmatpush1.xpose.msra.mxu0 0.0
    %3377 = vmatprep.subr.mxu0 0.0
    %3378 = vmatpush1.xpose.msra.mxu0 0.0
    %3379 = vmatprep.subr.mxu0 0.0
    %3380 = vmatpush1.xpose.msra.mxu0 0.0
    %3381 = vmatprep.subr.mxu0 0.0
    %3382 = vmatpush1.xpose.msra.mxu0 0.0
    %3383 = vmatprep.subr.mxu0 0.0
    %3384 = vmatpush1.xpose.msra.mxu0 0.0
    %3385 = vmatprep.subr.mxu0 0.0
    %3386 = vmatpush1.xpose.msra.mxu0 0.0
    %3387 = vmatprep.subr.mxu0 0.0
    %3388 = vmatpush1.xpose.msra.mxu0 0.0
    %3389 = vmatprep.subr.mxu0 0.0
    %3390 = vmatpush1.xpose.msra.mxu0 0.0
    %3391 = vmatprep.subr.mxu0 0.0
    %3392 = vmatpush1.xpose.msra.mxu0 0.0
    %3393 = vmatprep.subr.mxu0 0.0
    %3394 = vmatpush1.xpose.msra.mxu0 0.0
    %3395 = vmatprep.subr.mxu0 0.0
    %3396 = vmatpush1.xpose.msra.mxu0 0.0
    %3397 = vmatprep.subr.mxu0 0.0
    %3398 = vmatpush1.xpose.msra.mxu0 0.0
    %3399 = vmatprep.subr.mxu0 0.0
    %3400 = vmatpush1.xpose.msra.mxu0 0.0
    %3401 = vmatprep.subr.mxu0 0.0
    %3402 = vmatpush1.xpose.msra.mxu0 0.0
    %3403 = vmatprep.subr.mxu0 0.0
    %3404 = vmatpush1.xpose.msra.mxu0 0.0
    %3405 = vmatprep.subr.mxu0 0.0
    %3406 = vmatpush1.xpose.msra.mxu0 0.0
    %3407 = vmatprep.subr.mxu0 0.0
    %3408 = vmatpush1.xpose.msra.mxu0 0.0
    %3409 = vmatprep.subr.mxu0 0.0
    %3410 = vmatpush1.xpose.msra.mxu0 0.0
    %3411 = vmatprep.subr.mxu0 0.0
    %3412 = vmatpush1.xpose.msra.mxu0 0.0
    %3413 = vmatprep.subr.mxu0 0.0
    %3414 = vmatpush1.xpose.msra.mxu0 0.0
    %3415 = vmatprep.subr.mxu0 0.0
    %3416 = vmatpush1.xpose.msra.mxu0 0.0
    %3417 = vmatprep.subr.mxu0 0.0
    %3418 = vmatpush1.xpose.msra.mxu0 0.0
    %3419 = vmatprep.subr.mxu0 0.0
    %3420 = vmatpush1.xpose.msra.mxu0 0.0
    %3421 = vmatprep.subr.mxu0 0.0
    %3422 = vmatpush1.xpose.msra.mxu0 0.0
    %3423 = vmatprep.subr.mxu0 0.0
    %3424 = vmatpush1.xpose.msra.mxu0 0.0
    %3425 = vmatprep.subr.mxu0 0.0
    %3426 = vmatpush1.xpose.msra.mxu0 0.0
    %3427 = vmatprep.subr.mxu0 0.0
    %3428 = vmatpush1.xpose.msra.mxu0 0.0
    %3429 = vmatprep.subr.mxu0 0.0
    %3430 = vmatpush1.xpose.msra.mxu0 0.0
    %3431 = vmatprep.mubr.f32.mxu0 0.0
    %3432 = vmatmul.mubr.f32.gmra.mrb[0].mxu0 %v3359
    %v3433 = vpop.f32.mrb[0].mxu0
    %v3434 = vadd.f32 %v187, %v3433
    %v3435 = vpop.f32.mrb[0].mxu0
    %3436 = vmatprep.mubr.f32.mxu0 0.0
    %3437 = vmatmul.mubr.f32.gmra.mrb[0].mxu0 %v3361
    %v3438 = vpop.f32.mrb[0].mxu0
    %v3439 = vadd.f32 %v188, %v3438
    %v3440 = vpop.f32.mrb[0].mxu0
    %3441 = vdwg.mxu0
    %v3442 = vsel %vm191, %v3434, -inf
    %3443 = vmax.xlane.f32.xlu0 %v3442
    %v3444 = vpop.xlane.xlu0 %3443
    %v3445 = vsel %vm191, %v3439, -inf
    %3446 = vmax.xlane.f32.xlu0 %v3445
    %v3447 = vpop.xlane.xlu0 %3446
    %v3448 = vsub.f32 %v3434, %v3444
    %v3449 = vsub.f32 %v3439, %v3447
    %v3450 = vmul.f32 %v3448, 1.442695
    %v3451 = vpow.pop %v3450
    %v3452 = vmul.f32 %v3449, 1.442695
    %v3453 = vpow.pop %v3452
    %v3454 = vsel %vm191, %v3451, 0.0
    %3455 = vadd.xlane.f32.xlu0 %v3454
    %v3456 = vpop.xlane.xlu0 %3455
    %v3457 = vsel %vm191, %v3453, 0.0
    %3458 = vadd.xlane.f32.xlu0 %v3457
    %v3459 = vpop.xlane.xlu0 %3458
    %v3460 = vrcp.pop %v3456
    %v3461 = vrcp.pop %v3459
    %v3462 = vmul.f32 %v3451, %v3460
    %v3463 = vmul.f32 %v3453, %v3461
    %3464 = vrot.lane.b32.xlu0 %v3138, 94
    %v3465 = vpop.permute.xlu0 %3464
    %3466 = vrot.lane.b32.xlu0 %v3143, 94
    %v3467 = vpop.permute.xlu0 %3466
    %v3471 = vsel %vm191, %v3462, 0
    %v3474 = vsel %vm191, %v3463, 0
    %3476 = vmatprep.subr.mxu0 0.0
    %3477 = vmatpush1.msra.mxu0 %v3465
    %3478 = vmatprep.subr.mxu0 0.0
    %3479 = vmatpush1.msra.mxu0 %v3467
    %3480 = vmatprep.subr.mxu0 0.0
    %3481 = vmatpush1.msra.mxu0 0.0
    %3482 = vmatprep.subr.mxu0 0.0
    %3483 = vmatpush1.msra.mxu0 0.0
    %3484 = vmatprep.subr.mxu0 0.0
    %3485 = vmatpush1.msra.mxu0 0.0
    %3486 = vmatprep.subr.mxu0 0.0
    %3487 = vmatpush1.msra.mxu0 0.0
    %3488 = vmatprep.subr.mxu0 0.0
    %3489 = vmatpush1.msra.mxu0 0.0
    %3490 = vmatprep.subr.mxu0 0.0
    %3491 = vmatpush1.msra.mxu0 0.0
    %3492 = vmatprep.subr.mxu0 0.0
    %3493 = vmatpush1.msra.mxu0 0.0
    %3494 = vmatprep.subr.mxu0 0.0
    %3495 = vmatpush1.msra.mxu0 0.0
    %3496 = vmatprep.subr.mxu0 0.0
    %3497 = vmatpush1.msra.mxu0 0.0
    %3498 = vmatprep.subr.mxu0 0.0
    %3499 = vmatpush1.msra.mxu0 0.0
    %3500 = vmatprep.subr.mxu0 0.0
    %3501 = vmatpush1.msra.mxu0 0.0
    %3502 = vmatprep.subr.mxu0 0.0
    %3503 = vmatpush1.msra.mxu0 0.0
    %3504 = vmatprep.subr.mxu0 0.0
    %3505 = vmatpush1.msra.mxu0 0.0
    %3506 = vmatprep.subr.mxu0 0.0
    %3507 = vmatpush1.msra.mxu0 0.0
    %3508 = vmatprep.subr.mxu0 0.0
    %3509 = vmatpush1.msra.mxu0 0.0
    %3510 = vmatprep.subr.mxu0 0.0
    %3511 = vmatpush1.msra.mxu0 0.0
    %3512 = vmatprep.subr.mxu0 0.0
    %3513 = vmatpush1.msra.mxu0 0.0
    %3514 = vmatprep.subr.mxu0 0.0
    %3515 = vmatpush1.msra.mxu0 0.0
    %3516 = vmatprep.subr.mxu0 0.0
    %3517 = vmatpush1.msra.mxu0 0.0
    %3518 = vmatprep.subr.mxu0 0.0
    %3519 = vmatpush1.msra.mxu0 0.0
    %3520 = vmatprep.subr.mxu0 0.0
    %3521 = vmatpush1.msra.mxu0 0.0
    %3522 = vmatprep.subr.mxu0 0.0
    %3523 = vmatpush1.msra.mxu0 0.0
    %3524 = vmatprep.subr.mxu0 0.0
    %3525 = vmatpush1.msra.mxu0 0.0
    %3526 = vmatprep.subr.mxu0 0.0
    %3527 = vmatpush1.msra.mxu0 0.0
    %3528 = vmatprep.subr.mxu0 0.0
    %3529 = vmatpush1.msra.mxu0 0.0
    %3530 = vmatprep.subr.mxu0 0.0
    %3531 = vmatpush1.msra.mxu0 0.0
    %3532 = vmatprep.subr.mxu0 0.0
    %3533 = vmatpush1.msra.mxu0 0.0
    %3534 = vmatprep.subr.mxu0 0.0
    %3535 = vmatpush1.msra.mxu0 0.0
    %3536 = vmatprep.subr.mxu0 0.0
    %3537 = vmatpush1.msra.mxu0 0.0
    %3538 = vmatprep.subr.mxu0 0.0
    %3539 = vmatpush1.msra.mxu0 0.0
    %3540 = vmatprep.mubr.f32.mxu0 0.0
    %3541 = vmatmul.mubr.f32.gmra.mrb[0].mxu0 %v3471
    %v3542 = vpop.f32.mrb[0].mxu0
    %v3543 = vadd.f32 0.0, %v3542
    %v3544 = vpop.f32.mrb[0].mxu0
    %3545 = vmatprep.mubr.f32.mxu0 0.0
    %3546 = vmatmul.mubr.f32.gmra.mrb[0].mxu0 %v3474
    %v3547 = vpop.f32.mrb[0].mxu0
    %v3548 = vadd.f32 0.0, %v3547
    %v3549 = vpop.f32.mrb[0].mxu0
    %3550 = vdwg.mxu0
    %v3552 = vrot.slane %v3148, 2
    %v3554 = vsel %vm3156, %v3543, 0
    %v3557 = vsel %vm3156, %v3548, 0
    %vm3559 = vcmask 1041408
    %v3560 = vsel %vm3559, %v3552, 0
    %3562 = vmatprep.subr.mxu0 0.0
    %3563 = vmatpush1.msra.mxu0 %v3560
    %3564 = vmatprep.subr.mxu0 0.0
    %3565 = vmatpush1.msra.mxu0 0.0
    %3566 = vmatprep.subr.mxu0 0.0
    %3567 = vmatpush1.msra.mxu0 0.0
    %3568 = vmatprep.subr.mxu0 0.0
    %3569 = vmatpush1.msra.mxu0 0.0
    %3570 = vmatprep.subr.mxu0 0.0
    %3571 = vmatpush1.msra.mxu0 0.0
    %3572 = vmatprep.subr.mxu0 0.0
    %3573 = vmatpush1.msra.mxu0 0.0
    %3574 = vmatprep.subr.mxu0 0.0
    %3575 = vmatpush1.msra.mxu0 0.0
    %3576 = vmatprep.subr.mxu0 0.0
    %3577 = vmatpush1.msra.mxu0 0.0
    %3578 = vmatprep.subr.mxu0 0.0
    %3579 = vmatpush1.msra.mxu0 0.0
    %3580 = vmatprep.subr.mxu0 0.0
    %3581 = vmatpush1.msra.mxu0 0.0
    %3582 = vmatprep.subr.mxu0 0.0
    %3583 = vmatpush1.msra.mxu0 0.0
    %3584 = vmatprep.subr.mxu0 0.0
    %3585 = vmatpush1.msra.mxu0 0.0
    %3586 = vmatprep.subr.mxu0 0.0
    %3587 = vmatpush1.msra.mxu0 0.0
    %3588 = vmatprep.subr.mxu0 0.0
    %3589 = vmatpush1.msra.mxu0 0.0
    %3590 = vmatprep.subr.mxu0 0.0
    %3591 = vmatpush1.msra.mxu0 0.0
    %3592 = vmatprep.subr.mxu0 0.0
    %3593 = vmatpush1.msra.mxu0 0.0
    %3594 = vmatprep.subr.mxu0 0.0
    %3595 = vmatpush1.msra.mxu0 0.0
    %3596 = vmatprep.subr.mxu0 0.0
    %3597 = vmatpush1.msra.mxu0 0.0
    %3598 = vmatprep.subr.mxu0 0.0
    %3599 = vmatpush1.msra.mxu0 0.0
    %3600 = vmatprep.subr.mxu0 0.0
    %3601 = vmatpush1.msra.mxu0 0.0
    %3602 = vmatprep.subr.mxu0 0.0
    %3603 = vmatpush1.msra.mxu0 0.0
    %3604 = vmatprep.subr.mxu0 0.0
    %3605 = vmatpush1.msra.mxu0 0.0
    %3606 = vmatprep.subr.mxu0 0.0
    %3607 = vmatpush1.msra.mxu0 0.0
    %3608 = vmatprep.subr.mxu0 0.0
    %3609 = vmatpush1.msra.mxu0 0.0
    %3610 = vmatprep.subr.mxu0 0.0
    %3611 = vmatpush1.msra.mxu0 0.0
    %3612 = vmatprep.subr.mxu0 0.0
    %3613 = vmatpush1.msra.mxu0 0.0
    %3614 = vmatprep.subr.mxu0 0.0
    %3615 = vmatpush1.msra.mxu0 0.0
    %3616 = vmatprep.subr.mxu0 0.0
    %3617 = vmatpush1.msra.mxu0 0.0
    %3618 = vmatprep.subr.mxu0 0.0
    %3619 = vmatpush1.msra.mxu0 0.0
    %3620 = vmatprep.subr.mxu0 0.0
    %3621 = vmatpush1.msra.mxu0 0.0
    %3622 = vmatprep.subr.mxu0 0.0
    %3623 = vmatpush1.msra.mxu0 0.0
    %3624 = vmatprep.subr.mxu0 0.0
    %3625 = vmatpush1.msra.mxu0 0.0
    %3626 = vmatprep.mubr.f32.mxu0 0.0
    %3627 = vmatmul.mubr.f32.gmra.mrb[0].mxu0 %v3554
    %v3628 = vpop.f32.mrb[0].mxu0
    %v3629 = vadd.f32 0.0, %v3628
    %v3630 = vpop.f32.mrb[0].mxu0
    %3631 = vmatprep.mubr.f32.mxu0 0.0
    %3632 = vmatmul.mubr.f32.gmra.mrb[0].mxu0 %v3557
    %v3633 = vpop.f32.mrb[0].mxu0
    %v3634 = vadd.f32 0.0, %v3633
    %v3635 = vpop.f32.mrb[0].mxu0
    %3636 = vdwg.mxu0
    %v3638 = vsel %vm3156, %v3343, 0
    %v3641 = vsel %vm3156, %v3348, 0
    %v3643 = vsel %vm3559, %v3148, 0
    %3645 = vmatprep.subr.mxu0 0.0
    %3646 = vmatpush1.msra.mxu0 %v3643
    %3647 = vmatprep.subr.mxu0 0.0
    %3648 = vmatpush1.msra.mxu0 0.0
    %3649 = vmatprep.subr.mxu0 0.0
    %3650 = vmatpush1.msra.mxu0 0.0
    %3651 = vmatprep.subr.mxu0 0.0
    %3652 = vmatpush1.msra.mxu0 0.0
    %3653 = vmatprep.subr.mxu0 0.0
    %3654 = vmatpush1.msra.mxu0 0.0
    %3655 = vmatprep.subr.mxu0 0.0
    %3656 = vmatpush1.msra.mxu0 0.0
    %3657 = vmatprep.subr.mxu0 0.0
    %3658 = vmatpush1.msra.mxu0 0.0
    %3659 = vmatprep.subr.mxu0 0.0
    %3660 = vmatpush1.msra.mxu0 0.0
    %3661 = vmatprep.subr.mxu0 0.0
    %3662 = vmatpush1.msra.mxu0 0.0
    %3663 = vmatprep.subr.mxu0 0.0
    %3664 = vmatpush1.msra.mxu0 0.0
    %3665 = vmatprep.subr.mxu0 0.0
    %3666 = vmatpush1.msra.mxu0 0.0
    %3667 = vmatprep.subr.mxu0 0.0
    %3668 = vmatpush1.msra.mxu0 0.0
    %3669 = vmatprep.subr.mxu0 0.0
    %3670 = vmatpush1.msra.mxu0 0.0
    %3671 = vmatprep.subr.mxu0 0.0
    %3672 = vmatpush1.msra.mxu0 0.0
    %3673 = vmatprep.subr.mxu0 0.0
    %3674 = vmatpush1.msra.mxu0 0.0
    %3675 = vmatprep.subr.mxu0 0.0
    %3676 = vmatpush1.msra.mxu0 0.0
    %3677 = vmatprep.subr.mxu0 0.0
    %3678 = vmatpush1.msra.mxu0 0.0
    %3679 = vmatprep.subr.mxu0 0.0
    %3680 = vmatpush1.msra.mxu0 0.0
    %3681 = vmatprep.subr.mxu0 0.0
    %3682 = vmatpush1.msra.mxu0 0.0
    %3683 = vmatprep.subr.mxu0 0.0
    %3684 = vmatpush1.msra.mxu0 0.0
    %3685 = vmatprep.subr.mxu0 0.0
    %3686 = vmatpush1.msra.mxu0 0.0
    %3687 = vmatprep.subr.mxu0 0.0
    %3688 = vmatpush1.msra.mxu0 0.0
    %3689 = vmatprep.subr.mxu0 0.0
    %3690 = vmatpush1.msra.mxu0 0.0
    %3691 = vmatprep.subr.mxu0 0.0
    %3692 = vmatpush1.msra.mxu0 0.0
    %3693 = vmatprep.subr.mxu0 0.0
    %3694 = vmatpush1.msra.mxu0 0.0
    %3695 = vmatprep.subr.mxu0 0.0
    %3696 = vmatpush1.msra.mxu0 0.0
    %3697 = vmatprep.subr.mxu0 0.0
    %3698 = vmatpush1.msra.mxu0 0.0
    %3699 = vmatprep.subr.mxu0 0.0
    %3700 = vmatpush1.msra.mxu0 0.0
    %3701 = vmatprep.subr.mxu0 0.0
    %3702 = vmatpush1.msra.mxu0 0.0
    %3703 = vmatprep.subr.mxu0 0.0
    %3704 = vmatpush1.msra.mxu0 0.0
    %3705 = vmatprep.subr.mxu0 0.0
    %3706 = vmatpush1.msra.mxu0 0.0
    %3707 = vmatprep.subr.mxu0 0.0
    %3708 = vmatpush1.msra.mxu0 0.0
    %3709 = vmatprep.mubr.f32.mxu0 0.0
    %3710 = vmatmul.mubr.f32.gmra.mrb[0].mxu0 %v3638
    %v3711 = vpop.f32.mrb[0].mxu0
    %v3712 = vadd.f32 %v3629, %v3711
    %v3713 = vpop.f32.mrb[0].mxu0
    %3714 = vmatprep.mubr.f32.mxu0 0.0
    %3715 = vmatmul.mubr.f32.gmra.mrb[0].mxu0 %v3641
    %v3716 = vpop.f32.mrb[0].mxu0
    %v3717 = vadd.f32 %v3634, %v3716
    %v3718 = vpop.f32.mrb[0].mxu0
    %3719 = vdwg.mxu0
    %3720 = vrot.lane.b32.xlu0 %v3146, 124
    %v3721 = vpop.permute.xlu0 %3720
    %3722 = vrot.lane.b32.xlu0 %v3147, 124
    %v3723 = vpop.permute.xlu0 %3722
    %3724 = vrot.lane.b32.xlu0 %v3138, 108
    %v3725 = vpop.permute.xlu0 %3724
    %3726 = vrot.lane.b32.xlu0 %v3143, 108
    %v3727 = vpop.permute.xlu0 %3726
    %v3728 = vsel %vm3156, %v3721, 0
    %v3730 = vsel %vm3156, %v3723, 0
    %v3732 = vsel %vm3156, %v3725, 0
    %v3734 = vsel %vm3156, %v3727, 0
    %3736 = vmatprep.subr.mxu0 0.0
    %3737 = vmatpush1.xpose.msra.mxu0 %v3732
    %3738 = vmatprep.subr.mxu0 0.0
    %3739 = vmatpush1.xpose.msra.mxu0 %v3734
    %3740 = vmatprep.subr.mxu0 0.0
    %3741 = vmatpush1.xpose.msra.mxu0 0.0
    %3742 = vmatprep.subr.mxu0 0.0
    %3743 = vmatpush1.xpose.msra.mxu0 0.0
    %3744 = vmatprep.subr.mxu0 0.0
    %3745 = vmatpush1.xpose.msra.mxu0 0.0
    %3746 = vmatprep.subr.mxu0 0.0
    %3747 = vmatpush1.xpose.msra.mxu0 0.0
    %3748 = vmatprep.subr.mxu0 0.0
    %3749 = vmatpush1.xpose.msra.mxu0 0.0
    %3750 = vmatprep.subr.mxu0 0.0
    %3751 = vmatpush1.xpose.msra.mxu0 0.0
    %3752 = vmatprep.subr.mxu0 0.0
    %3753 = vmatpush1.xpose.msra.mxu0 0.0
    %3754 = vmatprep.subr.mxu0 0.0
    %3755 = vmatpush1.xpose.msra.mxu0 0.0
    %3756 = vmatprep.subr.mxu0 0.0
    %3757 = vmatpush1.xpose.msra.mxu0 0.0
    %3758 = vmatprep.subr.mxu0 0.0
    %3759 = vmatpush1.xpose.msra.mxu0 0.0
    %3760 = vmatprep.subr.mxu0 0.0
    %3761 = vmatpush1.xpose.msra.mxu0 0.0
    %3762 = vmatprep.subr.mxu0 0.0
    %3763 = vmatpush1.xpose.msra.mxu0 0.0
    %3764 = vmatprep.subr.mxu0 0.0
    %3765 = vmatpush1.xpose.msra.mxu0 0.0
    %3766 = vmatprep.subr.mxu0 0.0
    %3767 = vmatpush1.xpose.msra.mxu0 0.0
    %3768 = vmatprep.subr.mxu0 0.0
    %3769 = vmatpush1.xpose.msra.mxu0 0.0
    %3770 = vmatprep.subr.mxu0 0.0
    %3771 = vmatpush1.xpose.msra.mxu0 0.0
    %3772 = vmatprep.subr.mxu0 0.0
    %3773 = vmatpush1.xpose.msra.mxu0 0.0
    %3774 = vmatprep.subr.mxu0 0.0
    %3775 = vmatpush1.xpose.msra.mxu0 0.0
    %3776 = vmatprep.subr.mxu0 0.0
    %3777 = vmatpush1.xpose.msra.mxu0 0.0
    %3778 = vmatprep.subr.mxu0 0.0
    %3779 = vmatpush1.xpose.msra.mxu0 0.0
    %3780 = vmatprep.subr.mxu0 0.0
    %3781 = vmatpush1.xpose.msra.mxu0 0.0
    %3782 = vmatprep.subr.mxu0 0.0
    %3783 = vmatpush1.xpose.msra.mxu0 0.0
    %3784 = vmatprep.subr.mxu0 0.0
    %3785 = vmatpush1.xpose.msra.mxu0 0.0
    %3786 = vmatprep.subr.mxu0 0.0
    %3787 = vmatpush1.xpose.msra.mxu0 0.0
    %3788 = vmatprep.subr.mxu0 0.0
    %3789 = vmatpush1.xpose.msra.mxu0 0.0
    %3790 = vmatprep.subr.mxu0 0.0
    %3791 = vmatpush1.xpose.msra.mxu0 0.0
    %3792 = vmatprep.subr.mxu0 0.0
    %3793 = vmatpush1.xpose.msra.mxu0 0.0
    %3794 = vmatprep.subr.mxu0 0.0
    %3795 = vmatpush1.xpose.msra.mxu0 0.0
    %3796 = vmatprep.subr.mxu0 0.0
    %3797 = vmatpush1.xpose.msra.mxu0 0.0
    %3798 = vmatprep.subr.mxu0 0.0
    %3799 = vmatpush1.xpose.msra.mxu0 0.0
    %3800 = vmatprep.mubr.f32.mxu0 0.0
    %3801 = vmatmul.mubr.f32.gmra.mrb[0].mxu0 %v3728
    %v3802 = vpop.f32.mrb[0].mxu0
    %v3803 = vadd.f32 %v187, %v3802
    %v3804 = vpop.f32.mrb[0].mxu0
    %3805 = vmatprep.mubr.f32.mxu0 0.0
    %3806 = vmatmul.mubr.f32.gmra.mrb[0].mxu0 %v3730
    %v3807 = vpop.f32.mrb[0].mxu0
    %v3808 = vadd.f32 %v188, %v3807
    %v3809 = vpop.f32.mrb[0].mxu0
    %3810 = vdwg.mxu0
    %v3811 = vsel %vm191, %v3803, -inf
    %3812 = vmax.xlane.f32.xlu0 %v3811
    %v3813 = vpop.xlane.xlu0 %3812
    %v3814 = vsel %vm191, %v3808, -inf
    %3815 = vmax.xlane.f32.xlu0 %v3814
    %v3816 = vpop.xlane.xlu0 %3815
    %v3817 = vsub.f32 %v3803, %v3813
    %v3818 = vsub.f32 %v3808, %v3816
    %v3819 = vmul.f32 %v3817, 1.442695
    %v3820 = vpow.pop %v3819
    %v3821 = vmul.f32 %v3818, 1.442695
    %v3822 = vpow.pop %v3821
    %v3823 = vsel %vm191, %v3820, 0.0
    %3824 = vadd.xlane.f32.xlu0 %v3823
    %v3825 = vpop.xlane.xlu0 %3824
    %v3826 = vsel %vm191, %v3822, 0.0
    %3827 = vadd.xlane.f32.xlu0 %v3826
    %v3828 = vpop.xlane.xlu0 %3827
    %v3829 = vrcp.pop %v3825
    %v3830 = vrcp.pop %v3828
    %v3831 = vmul.f32 %v3820, %v3829
    %v3832 = vmul.f32 %v3822, %v3830
    %3833 = vrot.lane.b32.xlu0 %v3138, 92
    %v3834 = vpop.permute.xlu0 %3833
    %3835 = vrot.lane.b32.xlu0 %v3143, 92
    %v3836 = vpop.permute.xlu0 %3835
    %v3840 = vsel %vm191, %v3831, 0
    %v3843 = vsel %vm191, %v3832, 0
    %3845 = vmatprep.subr.mxu0 0.0
    %3846 = vmatpush1.msra.mxu0 %v3834
    %3847 = vmatprep.subr.mxu0 0.0
    %3848 = vmatpush1.msra.mxu0 %v3836
    %3849 = vmatprep.subr.mxu0 0.0
    %3850 = vmatpush1.msra.mxu0 0.0
    %3851 = vmatprep.subr.mxu0 0.0
    %3852 = vmatpush1.msra.mxu0 0.0
    %3853 = vmatprep.subr.mxu0 0.0
    %3854 = vmatpush1.msra.mxu0 0.0
    %3855 = vmatprep.subr.mxu0 0.0
    %3856 = vmatpush1.msra.mxu0 0.0
    %3857 = vmatprep.subr.mxu0 0.0
    %3858 = vmatpush1.msra.mxu0 0.0
    %3859 = vmatprep.subr.mxu0 0.0
    %3860 = vmatpush1.msra.mxu0 0.0
    %3861 = vmatprep.subr.mxu0 0.0
    %3862 = vmatpush1.msra.mxu0 0.0
    %3863 = vmatprep.subr.mxu0 0.0
    %3864 = vmatpush1.msra.mxu0 0.0
    %3865 = vmatprep.subr.mxu0 0.0
    %3866 = vmatpush1.msra.mxu0 0.0
    %3867 = vmatprep.subr.mxu0 0.0
    %3868 = vmatpush1.msra.mxu0 0.0
    %3869 = vmatprep.subr.mxu0 0.0
    %3870 = vmatpush1.msra.mxu0 0.0
    %3871 = vmatprep.subr.mxu0 0.0
    %3872 = vmatpush1.msra.mxu0 0.0
    %3873 = vmatprep.subr.mxu0 0.0
    %3874 = vmatpush1.msra.mxu0 0.0
    %3875 = vmatprep.subr.mxu0 0.0
    %3876 = vmatpush1.msra.mxu0 0.0
    %3877 = vmatprep.subr.mxu0 0.0
    %3878 = vmatpush1.msra.mxu0 0.0
    %3879 = vmatprep.subr.mxu0 0.0
    %3880 = vmatpush1.msra.mxu0 0.0
    %3881 = vmatprep.subr.mxu0 0.0
    %3882 = vmatpush1.msra.mxu0 0.0
    %3883 = vmatprep.subr.mxu0 0.0
    %3884 = vmatpush1.msra.mxu0 0.0
    %3885 = vmatprep.subr.mxu0 0.0
    %3886 = vmatpush1.msra.mxu0 0.0
    %3887 = vmatprep.subr.mxu0 0.0
    %3888 = vmatpush1.msra.mxu0 0.0
    %3889 = vmatprep.subr.mxu0 0.0
    %3890 = vmatpush1.msra.mxu0 0.0
    %3891 = vmatprep.subr.mxu0 0.0
    %3892 = vmatpush1.msra.mxu0 0.0
    %3893 = vmatprep.subr.mxu0 0.0
    %3894 = vmatpush1.msra.mxu0 0.0
    %3895 = vmatprep.subr.mxu0 0.0
    %3896 = vmatpush1.msra.mxu0 0.0
    %3897 = vmatprep.subr.mxu0 0.0
    %3898 = vmatpush1.msra.mxu0 0.0
    %3899 = vmatprep.subr.mxu0 0.0
    %3900 = vmatpush1.msra.mxu0 0.0
    %3901 = vmatprep.subr.mxu0 0.0
    %3902 = vmatpush1.msra.mxu0 0.0
    %3903 = vmatprep.subr.mxu0 0.0
    %3904 = vmatpush1.msra.mxu0 0.0
    %3905 = vmatprep.subr.mxu0 0.0
    %3906 = vmatpush1.msra.mxu0 0.0
    %3907 = vmatprep.subr.mxu0 0.0
    %3908 = vmatpush1.msra.mxu0 0.0
    %3909 = vmatprep.mubr.f32.mxu0 0.0
    %3910 = vmatmul.mubr.f32.gmra.mrb[0].mxu0 %v3840
    %v3911 = vpop.f32.mrb[0].mxu0
    %v3912 = vadd.f32 0.0, %v3911
    %v3913 = vpop.f32.mrb[0].mxu0
    %3914 = vmatprep.mubr.f32.mxu0 0.0
    %3915 = vmatmul.mubr.f32.gmra.mrb[0].mxu0 %v3843
    %v3916 = vpop.f32.mrb[0].mxu0
    %v3917 = vadd.f32 0.0, %v3916
    %v3918 = vpop.f32.mrb[0].mxu0
    %3919 = vdwg.mxu0
    %v3920 = vrot.slane %v3148, 4
    %v3922 = vsel %vm3156, %v3912, 0
    %v3925 = vsel %vm3156, %v3917, 0
    %v3927 = vsel %vm3559, %v3920, 0
    %3929 = vmatprep.subr.mxu0 0.0
    %3930 = vmatpush1.msra.mxu0 %v3927
    %3931 = vmatprep.subr.mxu0 0.0
    %3932 = vmatpush1.msra.mxu0 0.0
    %3933 = vmatprep.subr.mxu0 0.0
    %3934 = vmatpush1.msra.mxu0 0.0
    %3935 = vmatprep.subr.mxu0 0.0
    %3936 = vmatpush1.msra.mxu0 0.0
    %3937 = vmatprep.subr.mxu0 0.0
    %3938 = vmatpush1.msra.mxu0 0.0
    %3939 = vmatprep.subr.mxu0 0.0
    %3940 = vmatpush1.msra.mxu0 0.0
    %3941 = vmatprep.subr.mxu0 0.0
    %3942 = vmatpush1.msra.mxu0 0.0
    %3943 = vmatprep.subr.mxu0 0.0
    %3944 = vmatpush1.msra.mxu0 0.0
    %3945 = vmatprep.subr.mxu0 0.0
    %3946 = vmatpush1.msra.mxu0 0.0
    %3947 = vmatprep.subr.mxu0 0.0
    %3948 = vmatpush1.msra.mxu0 0.0
    %3949 = vmatprep.subr.mxu0 0.0
    %3950 = vmatpush1.msra.mxu0 0.0
    %3951 = vmatprep.subr.mxu0 0.0
    %3952 = vmatpush1.msra.mxu0 0.0
    %3953 = vmatprep.subr.mxu0 0.0
    %3954 = vmatpush1.msra.mxu0 0.0
    %3955 = vmatprep.subr.mxu0 0.0
    %3956 = vmatpush1.msra.mxu0 0.0
    %3957 = vmatprep.subr.mxu0 0.0
    %3958 = vmatpush1.msra.mxu0 0.0
    %3959 = vmatprep.subr.mxu0 0.0
    %3960 = vmatpush1.msra.mxu0 0.0
    %3961 = vmatprep.subr.mxu0 0.0
    %3962 = vmatpush1.msra.mxu0 0.0
    %3963 = vmatprep.subr.mxu0 0.0
    %3964 = vmatpush1.msra.mxu0 0.0
    %3965 = vmatprep.subr.mxu0 0.0
    %3966 = vmatpush1.msra.mxu0 0.0
    %3967 = vmatprep.subr.mxu0 0.0
    %3968 = vmatpush1.msra.mxu0 0.0
    %3969 = vmatprep.subr.mxu0 0.0
    %3970 = vmatpush1.msra.mxu0 0.0
    %3971 = vmatprep.subr.mxu0 0.0
    %3972 = vmatpush1.msra.mxu0 0.0
    %3973 = vmatprep.subr.mxu0 0.0
    %3974 = vmatpush1.msra.mxu0 0.0
    %3975 = vmatprep.subr.mxu0 0.0
    %3976 = vmatpush1.msra.mxu0 0.0
    %3977 = vmatprep.subr.mxu0 0.0
    %3978 = vmatpush1.msra.mxu0 0.0
    %3979 = vmatprep.subr.mxu0 0.0
    %3980 = vmatpush1.msra.mxu0 0.0
    %3981 = vmatprep.subr.mxu0 0.0
    %3982 = vmatpush1.msra.mxu0 0.0
    %3983 = vmatprep.subr.mxu0 0.0
    %3984 = vmatpush1.msra.mxu0 0.0
    %3985 = vmatprep.subr.mxu0 0.0
    %3986 = vmatpush1.msra.mxu0 0.0
    %3987 = vmatprep.subr.mxu0 0.0
    %3988 = vmatpush1.msra.mxu0 0.0
    %3989 = vmatprep.subr.mxu0 0.0
    %3990 = vmatpush1.msra.mxu0 0.0
    %3991 = vmatprep.subr.mxu0 0.0
    %3992 = vmatpush1.msra.mxu0 0.0
    %3993 = vmatprep.mubr.f32.mxu0 0.0
    %3994 = vmatmul.mubr.f32.gmra.mrb[0].mxu0 %v3922
    %v3995 = vpop.f32.mrb[0].mxu0
    %v3996 = vadd.f32 0.0, %v3995
    %v3997 = vpop.f32.mrb[0].mxu0
    %3998 = vmatprep.mubr.f32.mxu0 0.0
    %3999 = vmatmul.mubr.f32.gmra.mrb[0].mxu0 %v3925
    %v4000 = vpop.f32.mrb[0].mxu0
    %v4001 = vadd.f32 0.0, %v4000
    %v4002 = vpop.f32.mrb[0].mxu0
    %4003 = vdwg.mxu0
    %v4004 = vadd.f32 %v3712, %v3996
    %v4005 = vadd.f32 %v3717, %v4001
    %4006 = vrot.lane.b32.xlu0 %v3146, 122
    %v4007 = vpop.permute.xlu0 %4006
    %4008 = vrot.lane.b32.xlu0 %v3147, 122
    %v4009 = vpop.permute.xlu0 %4008
    %4010 = vrot.lane.b32.xlu0 %v3138, 106
    %v4011 = vpop.permute.xlu0 %4010
    %4012 = vrot.lane.b32.xlu0 %v3143, 106
    %v4013 = vpop.permute.xlu0 %4012
    %v4014 = vsel %vm3156, %v4007, 0
    %v4016 = vsel %vm3156, %v4009, 0
    %v4018 = vsel %vm3156, %v4011, 0
    %v4020 = vsel %vm3156, %v4013, 0
    %4022 = vmatprep.subr.mxu0 0.0
    %4023 = vmatpush1.xpose.msra.mxu0 %v4018
    %4024 = vmatprep.subr.mxu0 0.0
    %4025 = vmatpush1.xpose.msra.mxu0 %v4020
    %4026 = vmatprep.subr.mxu0 0.0
    %4027 = vmatpush1.xpose.msra.mxu0 0.0
    %4028 = vmatprep.subr.mxu0 0.0
    %4029 = vmatpush1.xpose.msra.mxu0 0.0
    %4030 = vmatprep.subr.mxu0 0.0
    %4031 = vmatpush1.xpose.msra.mxu0 0.0
    %4032 = vmatprep.subr.mxu0 0.0
    %4033 = vmatpush1.xpose.msra.mxu0 0.0
    %4034 = vmatprep.subr.mxu0 0.0
    %4035 = vmatpush1.xpose.msra.mxu0 0.0
    %4036 = vmatprep.subr.mxu0 0.0
    %4037 = vmatpush1.xpose.msra.mxu0 0.0
    %4038 = vmatprep.subr.mxu0 0.0
    %4039 = vmatpush1.xpose.msra.mxu0 0.0
    %4040 = vmatprep.subr.mxu0 0.0
    %4041 = vmatpush1.xpose.msra.mxu0 0.0
    %4042 = vmatprep.subr.mxu0 0.0
    %4043 = vmatpush1.xpose.msra.mxu0 0.0
    %4044 = vmatprep.subr.mxu0 0.0
    %4045 = vmatpush1.xpose.msra.mxu0 0.0
    %4046 = vmatprep.subr.mxu0 0.0
    %4047 = vmatpush1.xpose.msra.mxu0 0.0
    %4048 = vmatprep.subr.mxu0 0.0
    %4049 = vmatpush1.xpose.msra.mxu0 0.0
    %4050 = vmatprep.subr.mxu0 0.0
    %4051 = vmatpush1.xpose.msra.mxu0 0.0
    %4052 = vmatprep.subr.mxu0 0.0
    %4053 = vmatpush1.xpose.msra.mxu0 0.0
    %4054 = vmatprep.subr.mxu0 0.0
    %4055 = vmatpush1.xpose.msra.mxu0 0.0
    %4056 = vmatprep.subr.mxu0 0.0
    %4057 = vmatpush1.xpose.msra.mxu0 0.0
    %4058 = vmatprep.subr.mxu0 0.0
    %4059 = vmatpush1.xpose.msra.mxu0 0.0
    %4060 = vmatprep.subr.mxu0 0.0
    %4061 = vmatpush1.xpose.msra.mxu0 0.0
    %4062 = vmatprep.subr.mxu0 0.0
    %4063 = vmatpush1.xpose.msra.mxu0 0.0
    %4064 = vmatprep.subr.mxu0 0.0
    %4065 = vmatpush1.xpose.msra.mxu0 0.0
    %4066 = vmatprep.subr.mxu0 0.0
    %4067 = vmatpush1.xpose.msra.mxu0 0.0
    %4068 = vmatprep.subr.mxu0 0.0
    %4069 = vmatpush1.xpose.msra.mxu0 0.0
    %4070 = vmatprep.subr.mxu0 0.0
    %4071 = vmatpush1.xpose.msra.mxu0 0.0
    %4072 = vmatprep.subr.mxu0 0.0
    %4073 = vmatpush1.xpose.msra.mxu0 0.0
    %4074 = vmatprep.subr.mxu0 0.0
    %4075 = vmatpush1.xpose.msra.mxu0 0.0
    %4076 = vmatprep.subr.mxu0 0.0
    %4077 = vmatpush1.xpose.msra.mxu0 0.0
    %4078 = vmatprep.subr.mxu0 0.0
    %4079 = vmatpush1.xpose.msra.mxu0 0.0
    %4080 = vmatprep.subr.mxu0 0.0
    %4081 = vmatpush1.xpose.msra.mxu0 0.0
    %4082 = vmatprep.subr.mxu0 0.0
    %4083 = vmatpush1.xpose.msra.mxu0 0.0
    %4084 = vmatprep.subr.mxu0 0.0
    %4085 = vmatpush1.xpose.msra.mxu0 0.0
    %4086 = vmatprep.mubr.f32.mxu0 0.0
    %4087 = vmatmul.mubr.f32.gmra.mrb[0].mxu0 %v4014
    %v4088 = vpop.f32.mrb[0].mxu0
    %v4089 = vadd.f32 %v187, %v4088
    %v4090 = vpop.f32.mrb[0].mxu0
    %4091 = vmatprep.mubr.f32.mxu0 0.0
    %4092 = vmatmul.mubr.f32.gmra.mrb[0].mxu0 %v4016
    %v4093 = vpop.f32.mrb[0].mxu0
    %v4094 = vadd.f32 %v188, %v4093
    %v4095 = vpop.f32.mrb[0].mxu0
    %4096 = vdwg.mxu0
    %v4097 = vsel %vm191, %v4089, -inf
    %4098 = vmax.xlane.f32.xlu0 %v4097
    %v4099 = vpop.xlane.xlu0 %4098
    %v4100 = vsel %vm191, %v4094, -inf
    %4101 = vmax.xlane.f32.xlu0 %v4100
    %v4102 = vpop.xlane.xlu0 %4101
    %v4103 = vsub.f32 %v4089, %v4099
    %v4104 = vsub.f32 %v4094, %v4102
    %v4105 = vmul.f32 %v4103, 1.442695
    %v4106 = vpow.pop %v4105
    %v4107 = vmul.f32 %v4104, 1.442695
    %v4108 = vpow.pop %v4107
    %v4109 = vsel %vm191, %v4106, 0.0
    %4110 = vadd.xlane.f32.xlu0 %v4109
    %v4111 = vpop.xlane.xlu0 %4110
    %v4112 = vsel %vm191, %v4108, 0.0
    %4113 = vadd.xlane.f32.xlu0 %v4112
    %v4114 = vpop.xlane.xlu0 %4113
    %v4115 = vrcp.pop %v4111
    %v4116 = vrcp.pop %v4114
    %v4117 = vmul.f32 %v4106, %v4115
    %v4118 = vmul.f32 %v4108, %v4116
    %4119 = vrot.lane.b32.xlu0 %v3138, 90
    %v4120 = vpop.permute.xlu0 %4119
    %4121 = vrot.lane.b32.xlu0 %v3143, 90
    %v4122 = vpop.permute.xlu0 %4121
    %v4126 = vsel %vm191, %v4117, 0
    %v4129 = vsel %vm191, %v4118, 0
    %4131 = vmatprep.subr.mxu0 0.0
    %4132 = vmatpush1.msra.mxu0 %v4120
    %4133 = vmatprep.subr.mxu0 0.0
    %4134 = vmatpush1.msra.mxu0 %v4122
    %4135 = vmatprep.subr.mxu0 0.0
    %4136 = vmatpush1.msra.mxu0 0.0
    %4137 = vmatprep.subr.mxu0 0.0
    %4138 = vmatpush1.msra.mxu0 0.0
    %4139 = vmatprep.subr.mxu0 0.0
    %4140 = vmatpush1.msra.mxu0 0.0
    %4141 = vmatprep.subr.mxu0 0.0
    %4142 = vmatpush1.msra.mxu0 0.0
    %4143 = vmatprep.subr.mxu0 0.0
    %4144 = vmatpush1.msra.mxu0 0.0
    %4145 = vmatprep.subr.mxu0 0.0
    %4146 = vmatpush1.msra.mxu0 0.0
    %4147 = vmatprep.subr.mxu0 0.0
    %4148 = vmatpush1.msra.mxu0 0.0
    %4149 = vmatprep.subr.mxu0 0.0
    %4150 = vmatpush1.msra.mxu0 0.0
    %4151 = vmatprep.subr.mxu0 0.0
    %4152 = vmatpush1.msra.mxu0 0.0
    %4153 = vmatprep.subr.mxu0 0.0
    %4154 = vmatpush1.msra.mxu0 0.0
    %4155 = vmatprep.subr.mxu0 0.0
    %4156 = vmatpush1.msra.mxu0 0.0
    %4157 = vmatprep.subr.mxu0 0.0
    %4158 = vmatpush1.msra.mxu0 0.0
    %4159 = vmatprep.subr.mxu0 0.0
    %4160 = vmatpush1.msra.mxu0 0.0
    %4161 = vmatprep.subr.mxu0 0.0
    %4162 = vmatpush1.msra.mxu0 0.0
    %4163 = vmatprep.subr.mxu0 0.0
    %4164 = vmatpush1.msra.mxu0 0.0
    %4165 = vmatprep.subr.mxu0 0.0
    %4166 = vmatpush1.msra.mxu0 0.0
    %4167 = vmatprep.subr.mxu0 0.0
    %4168 = vmatpush1.msra.mxu0 0.0
    %4169 = vmatprep.subr.mxu0 0.0
    %4170 = vmatpush1.msra.mxu0 0.0
    %4171 = vmatprep.subr.mxu0 0.0
    %4172 = vmatpush1.msra.mxu0 0.0
    %4173 = vmatprep.subr.mxu0 0.0
    %4174 = vmatpush1.msra.mxu0 0.0
    %4175 = vmatprep.subr.mxu0 0.0
    %4176 = vmatpush1.msra.mxu0 0.0
    %4177 = vmatprep.subr.mxu0 0.0
    %4178 = vmatpush1.msra.mxu0 0.0
    %4179 = vmatprep.subr.mxu0 0.0
    %4180 = vmatpush1.msra.mxu0 0.0
    %4181 = vmatprep.subr.mxu0 0.0
    %4182 = vmatpush1.msra.mxu0 0.0
    %4183 = vmatprep.subr.mxu0 0.0
    %4184 = vmatpush1.msra.mxu0 0.0
    %4185 = vmatprep.subr.mxu0 0.0
    %4186 = vmatpush1.msra.mxu0 0.0
    %4187 = vmatprep.subr.mxu0 0.0
    %4188 = vmatpush1.msra.mxu0 0.0
    %4189 = vmatprep.subr.mxu0 0.0
    %4190 = vmatpush1.msra.mxu0 0.0
    %4191 = vmatprep.subr.mxu0 0.0
    %4192 = vmatpush1.msra.mxu0 0.0
    %4193 = vmatprep.subr.mxu0 0.0
    %4194 = vmatpush1.msra.mxu0 0.0
    %4195 = vmatprep.mubr.f32.mxu0 0.0
    %4196 = vmatmul.mubr.f32.gmra.mrb[0].mxu0 %v4126
    %v4197 = vpop.f32.mrb[0].mxu0
    %v4198 = vadd.f32 0.0, %v4197
    %v4199 = vpop.f32.mrb[0].mxu0
    %4200 = vmatprep.mubr.f32.mxu0 0.0
    %4201 = vmatmul.mubr.f32.gmra.mrb[0].mxu0 %v4129
    %v4202 = vpop.f32.mrb[0].mxu0
    %v4203 = vadd.f32 0.0, %v4202
    %v4204 = vpop.f32.mrb[0].mxu0
    %4205 = vdwg.mxu0
    %v4206 = vrot.slane %v3148, 6
    %v4208 = vsel %vm3156, %v4198, 0
    %v4211 = vsel %vm3156, %v4203, 0
    %v4213 = vsel %vm3559, %v4206, 0
    %4215 = vmatprep.subr.mxu0 0.0
    %4216 = vmatpush1.msra.mxu0 %v4213
    %4217 = vmatprep.subr.mxu0 0.0
    %4218 = vmatpush1.msra.mxu0 0.0
    %4219 = vmatprep.subr.mxu0 0.0
    %4220 = vmatpush1.msra.mxu0 0.0
    %4221 = vmatprep.subr.mxu0 0.0
    %4222 = vmatpush1.msra.mxu0 0.0
    %4223 = vmatprep.subr.mxu0 0.0
    %4224 = vmatpush1.msra.mxu0 0.0
    %4225 = vmatprep.subr.mxu0 0.0
    %4226 = vmatpush1.msra.mxu0 0.0
    %4227 = vmatprep.subr.mxu0 0.0
    %4228 = vmatpush1.msra.mxu0 0.0
    %4229 = vmatprep.subr.mxu0 0.0
    %4230 = vmatpush1.msra.mxu0 0.0
    %4231 = vmatprep.subr.mxu0 0.0
    %4232 = vmatpush1.msra.mxu0 0.0
    %4233 = vmatprep.subr.mxu0 0.0
    %4234 = vmatpush1.msra.mxu0 0.0
    %4235 = vmatprep.subr.mxu0 0.0
    %4236 = vmatpush1.msra.mxu0 0.0
    %4237 = vmatprep.subr.mxu0 0.0
    %4238 = vmatpush1.msra.mxu0 0.0
    %4239 = vmatprep.subr.mxu0 0.0
    %4240 = vmatpush1.msra.mxu0 0.0
    %4241 = vmatprep.subr.mxu0 0.0
    %4242 = vmatpush1.msra.mxu0 0.0
    %4243 = vmatprep.subr.mxu0 0.0
    %4244 = vmatpush1.msra.mxu0 0.0
    %4245 = vmatprep.subr.mxu0 0.0
    %4246 = vmatpush1.msra.mxu0 0.0
    %4247 = vmatprep.subr.mxu0 0.0
    %4248 = vmatpush1.msra.mxu0 0.0
    %4249 = vmatprep.subr.mxu0 0.0
    %4250 = vmatpush1.msra.mxu0 0.0
    %4251 = vmatprep.subr.mxu0 0.0
    %4252 = vmatpush1.msra.mxu0 0.0
    %4253 = vmatprep.subr.mxu0 0.0
    %4254 = vmatpush1.msra.mxu0 0.0
    %4255 = vmatprep.subr.mxu0 0.0
    %4256 = vmatpush1.msra.mxu0 0.0
    %4257 = vmatprep.subr.mxu0 0.0
    %4258 = vmatpush1.msra.mxu0 0.0
    %4259 = vmatprep.subr.mxu0 0.0
    %4260 = vmatpush1.msra.mxu0 0.0
    %4261 = vmatprep.subr.mxu0 0.0
    %4262 = vmatpush1.msra.mxu0 0.0
    %4263 = vmatprep.subr.mxu0 0.0
    %4264 = vmatpush1.msra.mxu0 0.0
    %4265 = vmatprep.subr.mxu0 0.0
    %4266 = vmatpush1.msra.mxu0 0.0
    %4267 = vmatprep.subr.mxu0 0.0
    %4268 = vmatpush1.msra.mxu0 0.0
    %4269 = vmatprep.subr.mxu0 0.0
    %4270 = vmatpush1.msra.mxu0 0.0
    %4271 = vmatprep.subr.mxu0 0.0
    %4272 = vmatpush1.msra.mxu0 0.0
    %4273 = vmatprep.subr.mxu0 0.0
    %4274 = vmatpush1.msra.mxu0 0.0
    %4275 = vmatprep.subr.mxu0 0.0
    %4276 = vmatpush1.msra.mxu0 0.0
    %4277 = vmatprep.subr.mxu0 0.0
    %4278 = vmatpush1.msra.mxu0 0.0
    %4279 = vmatprep.mubr.f32.mxu0 0.0
    %4280 = vmatmul.mubr.f32.gmra.mrb[0].mxu0 %v4208
    %v4281 = vpop.f32.mrb[0].mxu0
    %v4282 = vadd.f32 0.0, %v4281
    %v4283 = vpop.f32.mrb[0].mxu0
    %4284 = vmatprep.mubr.f32.mxu0 0.0
    %4285 = vmatmul.mubr.f32.gmra.mrb[0].mxu0 %v4211
    %v4286 = vpop.f32.mrb[0].mxu0
    %v4287 = vadd.f32 0.0, %v4286
    %v4288 = vpop.f32.mrb[0].mxu0
    %4289 = vdwg.mxu0
    %v4290 = vadd.f32 %v4004, %v4282
    %v4291 = vadd.f32 %v4005, %v4287
    %4292 = vrot.lane.b32.xlu0 %v3146, 120
    %v4293 = vpop.permute.xlu0 %4292
    %4294 = vrot.lane.b32.xlu0 %v3147, 120
    %v4295 = vpop.permute.xlu0 %4294
    %4296 = vrot.lane.b32.xlu0 %v3138, 104
    %v4297 = vpop.permute.xlu0 %4296
    %4298 = vrot.lane.b32.xlu0 %v3143, 104
    %v4299 = vpop.permute.xlu0 %4298
    %v4300 = vsel %vm3156, %v4293, 0
    %v4302 = vsel %vm3156, %v4295, 0
    %v4304 = vsel %vm3156, %v4297, 0
    %v4306 = vsel %vm3156, %v4299, 0
    %4308 = vmatprep.subr.mxu0 0.0
    %4309 = vmatpush1.xpose.msra.mxu0 %v4304
    %4310 = vmatprep.subr.mxu0 0.0
    %4311 = vmatpush1.xpose.msra.mxu0 %v4306
    %4312 = vmatprep.subr.mxu0 0.0
    %4313 = vmatpush1.xpose.msra.mxu0 0.0
    %4314 = vmatprep.subr.mxu0 0.0
    %4315 = vmatpush1.xpose.msra.mxu0 0.0
    %4316 = vmatprep.subr.mxu0 0.0
    %4317 = vmatpush1.xpose.msra.mxu0 0.0
    %4318 = vmatprep.subr.mxu0 0.0
    %4319 = vmatpush1.xpose.msra.mxu0 0.0
    %4320 = vmatprep.subr.mxu0 0.0
    %4321 = vmatpush1.xpose.msra.mxu0 0.0
    %4322 = vmatprep.subr.mxu0 0.0
    %4323 = vmatpush1.xpose.msra.mxu0 0.0
    %4324 = vmatprep.subr.mxu0 0.0
    %4325 = vmatpush1.xpose.msra.mxu0 0.0
    %4326 = vmatprep.subr.mxu0 0.0
    %4327 = vmatpush1.xpose.msra.mxu0 0.0
    %4328 = vmatprep.subr.mxu0 0.0
    %4329 = vmatpush1.xpose.msra.mxu0 0.0
    %4330 = vmatprep.subr.mxu0 0.0
    %4331 = vmatpush1.xpose.msra.mxu0 0.0
    %4332 = vmatprep.subr.mxu0 0.0
    %4333 = vmatpush1.xpose.msra.mxu0 0.0
    %4334 = vmatprep.subr.mxu0 0.0
    %4335 = vmatpush1.xpose.msra.mxu0 0.0
    %4336 = vmatprep.subr.mxu0 0.0
    %4337 = vmatpush1.xpose.msra.mxu0 0.0
    %4338 = vmatprep.subr.mxu0 0.0
    %4339 = vmatpush1.xpose.msra.mxu0 0.0
    %4340 = vmatprep.subr.mxu0 0.0
    %4341 = vmatpush1.xpose.msra.mxu0 0.0
    %4342 = vmatprep.subr.mxu0 0.0
    %4343 = vmatpush1.xpose.msra.mxu0 0.0
    %4344 = vmatprep.subr.mxu0 0.0
    %4345 = vmatpush1.xpose.msra.mxu0 0.0
    %4346 = vmatprep.subr.mxu0 0.0
    %4347 = vmatpush1.xpose.msra.mxu0 0.0
    %4348 = vmatprep.subr.mxu0 0.0
    %4349 = vmatpush1.xpose.msra.mxu0 0.0
    %4350 = vmatprep.subr.mxu0 0.0
    %4351 = vmatpush1.xpose.msra.mxu0 0.0
    %4352 = vmatprep.subr.mxu0 0.0
    %4353 = vmatpush1.xpose.msra.mxu0 0.0
    %4354 = vmatprep.subr.mxu0 0.0
    %4355 = vmatpush1.xpose.msra.mxu0 0.0
    %4356 = vmatprep.subr.mxu0 0.0
    %4357 = vmatpush1.xpose.msra.mxu0 0.0
    %4358 = vmatprep.subr.mxu0 0.0
    %4359 = vmatpush1.xpose.msra.mxu0 0.0
    %4360 = vmatprep.subr.mxu0 0.0
    %4361 = vmatpush1.xpose.msra.mxu0 0.0
    %4362 = vmatprep.subr.mxu0 0.0
    %4363 = vmatpush1.xpose.msra.mxu0 0.0
    %4364 = vmatprep.subr.mxu0 0.0
    %4365 = vmatpush1.xpose.msra.mxu0 0.0
    %4366 = vmatprep.subr.mxu0 0.0
    %4367 = vmatpush1.xpose.msra.mxu0 0.0
    %4368 = vmatprep.subr.mxu0 0.0
    %4369 = vmatpush1.xpose.msra.mxu0 0.0
    %4370 = vmatprep.subr.mxu0 0.0
    %4371 = vmatpush1.xpose.msra.mxu0 0.0
    %4372 = vmatprep.mubr.f32.mxu0 0.0
    %4373 = vmatmul.mubr.f32.gmra.mrb[0].mxu0 %v4300
    %v4374 = vpop.f32.mrb[0].mxu0
    %v4375 = vadd.f32 %v187, %v4374
    %v4376 = vpop.f32.mrb[0].mxu0
    %4377 = vmatprep.mubr.f32.mxu0 0.0
    %4378 = vmatmul.mubr.f32.gmra.mrb[0].mxu0 %v4302
    %v4379 = vpop.f32.mrb[0].mxu0
    %v4380 = vadd.f32 %v188, %v4379
    %v4381 = vpop.f32.mrb[0].mxu0
    %4382 = vdwg.mxu0
    %v4383 = vsel %vm191, %v4375, -inf
    %4384 = vmax.xlane.f32.xlu0 %v4383
    %v4385 = vpop.xlane.xlu0 %4384
    %v4386 = vsel %vm191, %v4380, -inf
    %4387 = vmax.xlane.f32.xlu0 %v4386
    %v4388 = vpop.xlane.xlu0 %4387
    %v4389 = vsub.f32 %v4375, %v4385
    %v4390 = vsub.f32 %v4380, %v4388
    %v4391 = vmul.f32 %v4389, 1.442695
    %v4392 = vpow.pop %v4391
    %v4393 = vmul.f32 %v4390, 1.442695
    %v4394 = vpow.pop %v4393
    %v4395 = vsel %vm191, %v4392, 0.0
    %4396 = vadd.xlane.f32.xlu0 %v4395
    %v4397 = vpop.xlane.xlu0 %4396
    %v4398 = vsel %vm191, %v4394, 0.0
    %4399 = vadd.xlane.f32.xlu0 %v4398
    %v4400 = vpop.xlane.xlu0 %4399
    %v4401 = vrcp.pop %v4397
    %v4402 = vrcp.pop %v4400
    %v4403 = vmul.f32 %v4392, %v4401
    %v4404 = vmul.f32 %v4394, %v4402
    %4405 = vrot.lane.b32.xlu0 %v3138, 88
    %v4406 = vpop.permute.xlu0 %4405
    %4407 = vrot.lane.b32.xlu0 %v3143, 88
    %v4408 = vpop.permute.xlu0 %4407
    %v4412 = vsel %vm191, %v4403, 0
    %v4415 = vsel %vm191, %v4404, 0
    %4417 = vmatprep.subr.mxu0 0.0
    %4418 = vmatpush1.msra.mxu0 %v4406
    %4419 = vmatprep.subr.mxu0 0.0
    %4420 = vmatpush1.msra.mxu0 %v4408
    %4421 = vmatprep.subr.mxu0 0.0
    %4422 = vmatpush1.msra.mxu0 0.0
    %4423 = vmatprep.subr.mxu0 0.0
    %4424 = vmatpush1.msra.mxu0 0.0
    %4425 = vmatprep.subr.mxu0 0.0
    %4426 = vmatpush1.msra.mxu0 0.0
    %4427 = vmatprep.subr.mxu0 0.0
    %4428 = vmatpush1.msra.mxu0 0.0
    %4429 = vmatprep.subr.mxu0 0.0
    %4430 = vmatpush1.msra.mxu0 0.0
    %4431 = vmatprep.subr.mxu0 0.0
    %4432 = vmatpush1.msra.mxu0 0.0
    %4433 = vmatprep.subr.mxu0 0.0
    %4434 = vmatpush1.msra.mxu0 0.0
    %4435 = vmatprep.subr.mxu0 0.0
    %4436 = vmatpush1.msra.mxu0 0.0
    %4437 = vmatprep.subr.mxu0 0.0
    %4438 = vmatpush1.msra.mxu0 0.0
    %4439 = vmatprep.subr.mxu0 0.0
    %4440 = vmatpush1.msra.mxu0 0.0
    %4441 = vmatprep.subr.mxu0 0.0
    %4442 = vmatpush1.msra.mxu0 0.0
    %4443 = vmatprep.subr.mxu0 0.0
    %4444 = vmatpush1.msra.mxu0 0.0
    %4445 = vmatprep.subr.mxu0 0.0
    %4446 = vmatpush1.msra.mxu0 0.0
    %4447 = vmatprep.subr.mxu0 0.0
    %4448 = vmatpush1.msra.mxu0 0.0
    %4449 = vmatprep.subr.mxu0 0.0
    %4450 = vmatpush1.msra.mxu0 0.0
    %4451 = vmatprep.subr.mxu0 0.0
    %4452 = vmatpush1.msra.mxu0 0.0
    %4453 = vmatprep.subr.mxu0 0.0
    %4454 = vmatpush1.msra.mxu0 0.0
    %4455 = vmatprep.subr.mxu0 0.0
    %4456 = vmatpush1.msra.mxu0 0.0
    %4457 = vmatprep.subr.mxu0 0.0
    %4458 = vmatpush1.msra.mxu0 0.0
    %4459 = vmatprep.subr.mxu0 0.0
    %4460 = vmatpush1.msra.mxu0 0.0
    %4461 = vmatprep.subr.mxu0 0.0
    %4462 = vmatpush1.msra.mxu0 0.0
    %4463 = vmatprep.subr.mxu0 0.0
    %4464 = vmatpush1.msra.mxu0 0.0
    %4465 = vmatprep.subr.mxu0 0.0
    %4466 = vmatpush1.msra.mxu0 0.0
    %4467 = vmatprep.subr.mxu0 0.0
    %4468 = vmatpush1.msra.mxu0 0.0
    %4469 = vmatprep.subr.mxu0 0.0
    %4470 = vmatpush1.msra.mxu0 0.0
    %4471 = vmatprep.subr.mxu0 0.0
    %4472 = vmatpush1.msra.mxu0 0.0
    %4473 = vmatprep.subr.mxu0 0.0
    %4474 = vmatpush1.msra.mxu0 0.0
    %4475 = vmatprep.subr.mxu0 0.0
    %4476 = vmatpush1.msra.mxu0 0.0
    %4477 = vmatprep.subr.mxu0 0.0
    %4478 = vmatpush1.msra.mxu0 0.0
    %4479 = vmatprep.subr.mxu0 0.0
    %4480 = vmatpush1.msra.mxu0 0.0
    %4481 = vmatprep.mubr.f32.mxu0 0.0
    %4482 = vmatmul.mubr.f32.gmra.mrb[0].mxu0 %v4412
    %v4483 = vpop.f32.mrb[0].mxu0
    %v4484 = vadd.f32 0.0, %v4483
    %v4485 = vpop.f32.mrb[0].mxu0
    %4486 = vmatprep.mubr.f32.mxu0 0.0
    %4487 = vmatmul.mubr.f32.gmra.mrb[0].mxu0 %v4415
    %v4488 = vpop.f32.mrb[0].mxu0
    %v4489 = vadd.f32 0.0, %v4488
    %v4490 = vpop.f32.mrb[0].mxu0
    %4491 = vdwg.mxu0
    %v4493 = vsel %vm3156, %v4484, 0
    %v4496 = vsel %vm3156, %v4489, 0
    %v4499 = vsel %vm3559, %v3149, 0
    %4501 = vmatprep.subr.mxu0 0.0
    %4502 = vmatpush1.msra.mxu0 %v4499
    %4503 = vmatprep.subr.mxu0 0.0
    %4504 = vmatpush1.msra.mxu0 0.0
    %4505 = vmatprep.subr.mxu0 0.0
    %4506 = vmatpush1.msra.mxu0 0.0
    %4507 = vmatprep.subr.mxu0 0.0
    %4508 = vmatpush1.msra.mxu0 0.0
    %4509 = vmatprep.subr.mxu0 0.0
    %4510 = vmatpush1.msra.mxu0 0.0
    %4511 = vmatprep.subr.mxu0 0.0
    %4512 = vmatpush1.msra.mxu0 0.0
    %4513 = vmatprep.subr.mxu0 0.0
    %4514 = vmatpush1.msra.mxu0 0.0
    %4515 = vmatprep.subr.mxu0 0.0
    %4516 = vmatpush1.msra.mxu0 0.0
    %4517 = vmatprep.subr.mxu0 0.0
    %4518 = vmatpush1.msra.mxu0 0.0
    %4519 = vmatprep.subr.mxu0 0.0
    %4520 = vmatpush1.msra.mxu0 0.0
    %4521 = vmatprep.subr.mxu0 0.0
    %4522 = vmatpush1.msra.mxu0 0.0
    %4523 = vmatprep.subr.mxu0 0.0
    %4524 = vmatpush1.msra.mxu0 0.0
    %4525 = vmatprep.subr.mxu0 0.0
    %4526 = vmatpush1.msra.mxu0 0.0
    %4527 = vmatprep.subr.mxu0 0.0
    %4528 = vmatpush1.msra.mxu0 0.0
    %4529 = vmatprep.subr.mxu0 0.0
    %4530 = vmatpush1.msra.mxu0 0.0
    %4531 = vmatprep.subr.mxu0 0.0
    %4532 = vmatpush1.msra.mxu0 0.0
    %4533 = vmatprep.subr.mxu0 0.0
    %4534 = vmatpush1.msra.mxu0 0.0
    %4535 = vmatprep.subr.mxu0 0.0
    %4536 = vmatpush1.msra.mxu0 0.0
    %4537 = vmatprep.subr.mxu0 0.0
    %4538 = vmatpush1.msra.mxu0 0.0
    %4539 = vmatprep.subr.mxu0 0.0
    %4540 = vmatpush1.msra.mxu0 0.0
    %4541 = vmatprep.subr.mxu0 0.0
    %4542 = vmatpush1.msra.mxu0 0.0
    %4543 = vmatprep.subr.mxu0 0.0
    %4544 = vmatpush1.msra.mxu0 0.0
    %4545 = vmatprep.subr.mxu0 0.0
    %4546 = vmatpush1.msra.mxu0 0.0
    %4547 = vmatprep.subr.mxu0 0.0
    %4548 = vmatpush1.msra.mxu0 0.0
    %4549 = vmatprep.subr.mxu0 0.0
    %4550 = vmatpush1.msra.mxu0 0.0
    %4551 = vmatprep.subr.mxu0 0.0
    %4552 = vmatpush1.msra.mxu0 0.0
    %4553 = vmatprep.subr.mxu0 0.0
    %4554 = vmatpush1.msra.mxu0 0.0
    %4555 = vmatprep.subr.mxu0 0.0
    %4556 = vmatpush1.msra.mxu0 0.0
    %4557 = vmatprep.subr.mxu0 0.0
    %4558 = vmatpush1.msra.mxu0 0.0
    %4559 = vmatprep.subr.mxu0 0.0
    %4560 = vmatpush1.msra.mxu0 0.0
    %4561 = vmatprep.subr.mxu0 0.0
    %4562 = vmatpush1.msra.mxu0 0.0
    %4563 = vmatprep.subr.mxu0 0.0
    %4564 = vmatpush1.msra.mxu0 0.0
    %4565 = vmatprep.mubr.f32.mxu0 0.0
    %4566 = vmatmul.mubr.f32.gmra.mrb[0].mxu0 %v4493
    %v4567 = vpop.f32.mrb[0].mxu0
    %v4568 = vadd.f32 0.0, %v4567
    %v4569 = vpop.f32.mrb[0].mxu0
    %4570 = vmatprep.mubr.f32.mxu0 0.0
    %4571 = vmatmul.mubr.f32.gmra.mrb[0].mxu0 %v4496
    %v4572 = vpop.f32.mrb[0].mxu0
    %v4573 = vadd.f32 0.0, %v4572
    %v4574 = vpop.f32.mrb[0].mxu0
    %4575 = vdwg.mxu0
    %v4576 = vadd.f32 %v4290, %v4568
    %v4577 = vadd.f32 %v4291, %v4573
    %4578 = vrot.lane.b32.xlu0 %v3146, 118
    %v4579 = vpop.permute.xlu0 %4578
    %4580 = vrot.lane.b32.xlu0 %v3147, 118
    %v4581 = vpop.permute.xlu0 %4580
    %4582 = vrot.lane.b32.xlu0 %v3138, 102
    %v4583 = vpop.permute.xlu0 %4582
    %4584 = vrot.lane.b32.xlu0 %v3143, 102
    %v4585 = vpop.permute.xlu0 %4584
    %v4586 = vsel %vm3156, %v4579, 0
    %v4588 = vsel %vm3156, %v4581, 0
    %v4590 = vsel %vm3156, %v4583, 0
    %v4592 = vsel %vm3156, %v4585, 0
    %4594 = vmatprep.subr.mxu0 0.0
    %4595 = vmatpush1.xpose.msra.mxu0 %v4590
    %4596 = vmatprep.subr.mxu0 0.0
    %4597 = vmatpush1.xpose.msra.mxu0 %v4592
    %4598 = vmatprep.subr.mxu0 0.0
    %4599 = vmatpush1.xpose.msra.mxu0 0.0
    %4600 = vmatprep.subr.mxu0 0.0
    %4601 = vmatpush1.xpose.msra.mxu0 0.0
    %4602 = vmatprep.subr.mxu0 0.0
    %4603 = vmatpush1.xpose.msra.mxu0 0.0
    %4604 = vmatprep.subr.mxu0 0.0
    %4605 = vmatpush1.xpose.msra.mxu0 0.0
    %4606 = vmatprep.subr.mxu0 0.0
    %4607 = vmatpush1.xpose.msra.mxu0 0.0
    %4608 = vmatprep.subr.mxu0 0.0
    %4609 = vmatpush1.xpose.msra.mxu0 0.0
    %4610 = vmatprep.subr.mxu0 0.0
    %4611 = vmatpush1.xpose.msra.mxu0 0.0
    %4612 = vmatprep.subr.mxu0 0.0
    %4613 = vmatpush1.xpose.msra.mxu0 0.0
    %4614 = vmatprep.subr.mxu0 0.0
    %4615 = vmatpush1.xpose.msra.mxu0 0.0
    %4616 = vmatprep.subr.mxu0 0.0
    %4617 = vmatpush1.xpose.msra.mxu0 0.0
    %4618 = vmatprep.subr.mxu0 0.0
    %4619 = vmatpush1.xpose.msra.mxu0 0.0
    %4620 = vmatprep.subr.mxu0 0.0
    %4621 = vmatpush1.xpose.msra.mxu0 0.0
    %4622 = vmatprep.subr.mxu0 0.0
    %4623 = vmatpush1.xpose.msra.mxu0 0.0
    %4624 = vmatprep.subr.mxu0 0.0
    %4625 = vmatpush1.xpose.msra.mxu0 0.0
    %4626 = vmatprep.subr.mxu0 0.0
    %4627 = vmatpush1.xpose.msra.mxu0 0.0
    %4628 = vmatprep.subr.mxu0 0.0
    %4629 = vmatpush1.xpose.msra.mxu0 0.0
    %4630 = vmatprep.subr.mxu0 0.0
    %4631 = vmatpush1.xpose.msra.mxu0 0.0
    %4632 = vmatprep.subr.mxu0 0.0
    %4633 = vmatpush1.xpose.msra.mxu0 0.0
    %4634 = vmatprep.subr.mxu0 0.0
    %4635 = vmatpush1.xpose.msra.mxu0 0.0
    %4636 = vmatprep.subr.mxu0 0.0
    %4637 = vmatpush1.xpose.msra.mxu0 0.0
    %4638 = vmatprep.subr.mxu0 0.0
    %4639 = vmatpush1.xpose.msra.mxu0 0.0
    %4640 = vmatprep.subr.mxu0 0.0
    %4641 = vmatpush1.xpose.msra.mxu0 0.0
    %4642 = vmatprep.subr.mxu0 0.0
    %4643 = vmatpush1.xpose.msra.mxu0 0.0
    %4644 = vmatprep.subr.mxu0 0.0
    %4645 = vmatpush1.xpose.msra.mxu0 0.0
    %4646 = vmatprep.subr.mxu0 0.0
    %4647 = vmatpush1.xpose.msra.mxu0 0.0
    %4648 = vmatprep.subr.mxu0 0.0
    %4649 = vmatpush1.xpose.msra.mxu0 0.0
    %4650 = vmatprep.subr.mxu0 0.0
    %4651 = vmatpush1.xpose.msra.mxu0 0.0
    %4652 = vmatprep.subr.mxu0 0.0
    %4653 = vmatpush1.xpose.msra.mxu0 0.0
    %4654 = vmatprep.subr.mxu0 0.0
    %4655 = vmatpush1.xpose.msra.mxu0 0.0
    %4656 = vmatprep.subr.mxu0 0.0
    %4657 = vmatpush1.xpose.msra.mxu0 0.0
    %4658 = vmatprep.mubr.f32.mxu0 0.0
    %4659 = vmatmul.mubr.f32.gmra.mrb[0].mxu0 %v4586
    %v4660 = vpop.f32.mrb[0].mxu0
    %v4661 = vadd.f32 %v187, %v4660
    %v4662 = vpop.f32.mrb[0].mxu0
    %4663 = vmatprep.mubr.f32.mxu0 0.0
    %4664 = vmatmul.mubr.f32.gmra.mrb[0].mxu0 %v4588
    %v4665 = vpop.f32.mrb[0].mxu0
    %v4666 = vadd.f32 %v188, %v4665
    %v4667 = vpop.f32.mrb[0].mxu0
    %4668 = vdwg.mxu0
    %v4669 = vsel %vm191, %v4661, -inf
    %4670 = vmax.xlane.f32.xlu0 %v4669
    %v4671 = vpop.xlane.xlu0 %4670
    %v4672 = vsel %vm191, %v4666, -inf
    %4673 = vmax.xlane.f32.xlu0 %v4672
    %v4674 = vpop.xlane.xlu0 %4673
    %v4675 = vsub.f32 %v4661, %v4671
    %v4676 = vsub.f32 %v4666, %v4674
    %v4677 = vmul.f32 %v4675, 1.442695
    %v4678 = vpow.pop %v4677
    %v4679 = vmul.f32 %v4676, 1.442695
    %v4680 = vpow.pop %v4679
    %v4681 = vsel %vm191, %v4678, 0.0
    %4682 = vadd.xlane.f32.xlu0 %v4681
    %v4683 = vpop.xlane.xlu0 %4682
    %v4684 = vsel %vm191, %v4680, 0.0
    %4685 = vadd.xlane.f32.xlu0 %v4684
    %v4686 = vpop.xlane.xlu0 %4685
    %v4687 = vrcp.pop %v4683
    %v4688 = vrcp.pop %v4686
    %v4689 = vmul.f32 %v4678, %v4687
    %v4690 = vmul.f32 %v4680, %v4688
    %4691 = vrot.lane.b32.xlu0 %v3138, 86
    %v4692 = vpop.permute.xlu0 %4691
    %4693 = vrot.lane.b32.xlu0 %v3143, 86
    %v4694 = vpop.permute.xlu0 %4693
    %v4698 = vsel %vm191, %v4689, 0
    %v4701 = vsel %vm191, %v4690, 0
    %4703 = vmatprep.subr.mxu0 0.0
    %4704 = vmatpush1.msra.mxu0 %v4692
    %4705 = vmatprep.subr.mxu0 0.0
    %4706 = vmatpush1.msra.mxu0 %v4694
    %4707 = vmatprep.subr.mxu0 0.0
    %4708 = vmatpush1.msra.mxu0 0.0
    %4709 = vmatprep.subr.mxu0 0.0
    %4710 = vmatpush1.msra.mxu0 0.0
    %4711 = vmatprep.subr.mxu0 0.0
    %4712 = vmatpush1.msra.mxu0 0.0
    %4713 = vmatprep.subr.mxu0 0.0
    %4714 = vmatpush1.msra.mxu0 0.0
    %4715 = vmatprep.subr.mxu0 0.0
    %4716 = vmatpush1.msra.mxu0 0.0
    %4717 = vmatprep.subr.mxu0 0.0
    %4718 = vmatpush1.msra.mxu0 0.0
    %4719 = vmatprep.subr.mxu0 0.0
    %4720 = vmatpush1.msra.mxu0 0.0
    %4721 = vmatprep.subr.mxu0 0.0
    %4722 = vmatpush1.msra.mxu0 0.0
    %4723 = vmatprep.subr.mxu0 0.0
    %4724 = vmatpush1.msra.mxu0 0.0
    %4725 = vmatprep.subr.mxu0 0.0
    %4726 = vmatpush1.msra.mxu0 0.0
    %4727 = vmatprep.subr.mxu0 0.0
    %4728 = vmatpush1.msra.mxu0 0.0
    %4729 = vmatprep.subr.mxu0 0.0
    %4730 = vmatpush1.msra.mxu0 0.0
    %4731 = vmatprep.subr.mxu0 0.0
    %4732 = vmatpush1.msra.mxu0 0.0
    %4733 = vmatprep.subr.mxu0 0.0
    %4734 = vmatpush1.msra.mxu0 0.0
    %4735 = vmatprep.subr.mxu0 0.0
    %4736 = vmatpush1.msra.mxu0 0.0
    %4737 = vmatprep.subr.mxu0 0.0
    %4738 = vmatpush1.msra.mxu0 0.0
    %4739 = vmatprep.subr.mxu0 0.0
    %4740 = vmatpush1.msra.mxu0 0.0
    %4741 = vmatprep.subr.mxu0 0.0
    %4742 = vmatpush1.msra.mxu0 0.0
    %4743 = vmatprep.subr.mxu0 0.0
    %4744 = vmatpush1.msra.mxu0 0.0
    %4745 = vmatprep.subr.mxu0 0.0
    %4746 = vmatpush1.msra.mxu0 0.0
    %4747 = vmatprep.subr.mxu0 0.0
    %4748 = vmatpush1.msra.mxu0 0.0
    %4749 = vmatprep.subr.mxu0 0.0
    %4750 = vmatpush1.msra.mxu0 0.0
    %4751 = vmatprep.subr.mxu0 0.0
    %4752 = vmatpush1.msra.mxu0 0.0
    %4753 = vmatprep.subr.mxu0 0.0
    %4754 = vmatpush1.msra.mxu0 0.0
    %4755 = vmatprep.subr.mxu0 0.0
    %4756 = vmatpush1.msra.mxu0 0.0
    %4757 = vmatprep.subr.mxu0 0.0
    %4758 = vmatpush1.msra.mxu0 0.0
    %4759 = vmatprep.subr.mxu0 0.0
    %4760 = vmatpush1.msra.mxu0 0.0
    %4761 = vmatprep.subr.mxu0 0.0
    %4762 = vmatpush1.msra.mxu0 0.0
    %4763 = vmatprep.subr.mxu0 0.0
    %4764 = vmatpush1.msra.mxu0 0.0
    %4765 = vmatprep.subr.mxu0 0.0
    %4766 = vmatpush1.msra.mxu0 0.0
    %4767 = vmatprep.mubr.f32.mxu0 0.0
    %4768 = vmatmul.mubr.f32.gmra.mrb[0].mxu0 %v4698
    %v4769 = vpop.f32.mrb[0].mxu0
    %v4770 = vadd.f32 0.0, %v4769
    %v4771 = vpop.f32.mrb[0].mxu0
    %4772 = vmatprep.mubr.f32.mxu0 0.0
    %4773 = vmatmul.mubr.f32.gmra.mrb[0].mxu0 %v4701
    %v4774 = vpop.f32.mrb[0].mxu0
    %v4775 = vadd.f32 0.0, %v4774
    %v4776 = vpop.f32.mrb[0].mxu0
    %4777 = vdwg.mxu0
    %v4778 = vrot.slane %v3149, 2
    %v4780 = vsel %vm3156, %v4770, 0
    %v4783 = vsel %vm3156, %v4775, 0
    %v4785 = vsel %vm3559, %v4778, 0
    %4787 = vmatprep.subr.mxu0 0.0
    %4788 = vmatpush1.msra.mxu0 %v4785
    %4789 = vmatprep.subr.mxu0 0.0
    %4790 = vmatpush1.msra.mxu0 0.0
    %4791 = vmatprep.subr.mxu0 0.0
    %4792 = vmatpush1.msra.mxu0 0.0
    %4793 = vmatprep.subr.mxu0 0.0
    %4794 = vmatpush1.msra.mxu0 0.0
    %4795 = vmatprep.subr.mxu0 0.0
    %4796 = vmatpush1.msra.mxu0 0.0
    %4797 = vmatprep.subr.mxu0 0.0
    %4798 = vmatpush1.msra.mxu0 0.0
    %4799 = vmatprep.subr.mxu0 0.0
    %4800 = vmatpush1.msra.mxu0 0.0
    %4801 = vmatprep.subr.mxu0 0.0
    %4802 = vmatpush1.msra.mxu0 0.0
    %4803 = vmatprep.subr.mxu0 0.0
    %4804 = vmatpush1.msra.mxu0 0.0
    %4805 = vmatprep.subr.mxu0 0.0
    %4806 = vmatpush1.msra.mxu0 0.0
    %4807 = vmatprep.subr.mxu0 0.0
    %4808 = vmatpush1.msra.mxu0 0.0
    %4809 = vmatprep.subr.mxu0 0.0
    %4810 = vmatpush1.msra.mxu0 0.0
    %4811 = vmatprep.subr.mxu0 0.0
    %4812 = vmatpush1.msra.mxu0 0.0
    %4813 = vmatprep.subr.mxu0 0.0
    %4814 = vmatpush1.msra.mxu0 0.0
    %4815 = vmatprep.subr.mxu0 0.0
    %4816 = vmatpush1.msra.mxu0 0.0
    %4817 = vmatprep.subr.mxu0 0.0
    %4818 = vmatpush1.msra.mxu0 0.0
    %4819 = vmatprep.subr.mxu0 0.0
    %4820 = vmatpush1.msra.mxu0 0.0
    %4821 = vmatprep.subr.mxu0 0.0
    %4822 = vmatpush1.msra.mxu0 0.0
    %4823 = vmatprep.subr.mxu0 0.0
    %4824 = vmatpush1.msra.mxu0 0.0
    %4825 = vmatprep.subr.mxu0 0.0
    %4826 = vmatpush1.msra.mxu0 0.0
    %4827 = vmatprep.subr.mxu0 0.0
    %4828 = vmatpush1.msra.mxu0 0.0
    %4829 = vmatprep.subr.mxu0 0.0
    %4830 = vmatpush1.msra.mxu0 0.0
    %4831 = vmatprep.subr.mxu0 0.0
    %4832 = vmatpush1.msra.mxu0 0.0
    %4833 = vmatprep.subr.mxu0 0.0
    %4834 = vmatpush1.msra.mxu0 0.0
    %4835 = vmatprep.subr.mxu0 0.0
    %4836 = vmatpush1.msra.mxu0 0.0
    %4837 = vmatprep.subr.mxu0 0.0
    %4838 = vmatpush1.msra.mxu0 0.0
    %4839 = vmatprep.subr.mxu0 0.0
    %4840 = vmatpush1.msra.mxu0 0.0
    %4841 = vmatprep.subr.mxu0 0.0
    %4842 = vmatpush1.msra.mxu0 0.0
    %4843 = vmatprep.subr.mxu0 0.0
    %4844 = vmatpush1.msra.mxu0 0.0
    %4845 = vmatprep.subr.mxu0 0.0
    %4846 = vmatpush1.msra.mxu0 0.0
    %4847 = vmatprep.subr.mxu0 0.0
    %4848 = vmatpush1.msra.mxu0 0.0
    %4849 = vmatprep.subr.mxu0 0.0
    %4850 = vmatpush1.msra.mxu0 0.0
    %4851 = vmatprep.mubr.f32.mxu0 0.0
    %4852 = vmatmul.mubr.f32.gmra.mrb[0].mxu0 %v4780
    %v4853 = vpop.f32.mrb[0].mxu0
    %v4854 = vadd.f32 0.0, %v4853
    %v4855 = vpop.f32.mrb[0].mxu0
    %4856 = vmatprep.mubr.f32.mxu0 0.0
    %4857 = vmatmul.mubr.f32.gmra.mrb[0].mxu0 %v4783
    %v4858 = vpop.f32.mrb[0].mxu0
    %v4859 = vadd.f32 0.0, %v4858
    %v4860 = vpop.f32.mrb[0].mxu0
    %4861 = vdwg.mxu0
    %v4862 = vadd.f32 %v4576, %v4854
    %v4863 = vadd.f32 %v4577, %v4859
    %4864 = vrot.lane.b32.xlu0 %v3146, 116
    %v4865 = vpop.permute.xlu0 %4864
    %4866 = vrot.lane.b32.xlu0 %v3147, 116
    %v4867 = vpop.permute.xlu0 %4866
    %4868 = vrot.lane.b32.xlu0 %v3138, 100
    %v4869 = vpop.permute.xlu0 %4868
    %4870 = vrot.lane.b32.xlu0 %v3143, 100
    %v4871 = vpop.permute.xlu0 %4870
    %v4872 = vsel %vm3156, %v4865, 0
    %v4874 = vsel %vm3156, %v4867, 0
    %v4876 = vsel %vm3156, %v4869, 0
    %v4878 = vsel %vm3156, %v4871, 0
    %4880 = vmatprep.subr.mxu0 0.0
    %4881 = vmatpush1.xpose.msra.mxu0 %v4876
    %4882 = vmatprep.subr.mxu0 0.0
    %4883 = vmatpush1.xpose.msra.mxu0 %v4878
    %4884 = vmatprep.subr.mxu0 0.0
    %4885 = vmatpush1.xpose.msra.mxu0 0.0
    %4886 = vmatprep.subr.mxu0 0.0
    %4887 = vmatpush1.xpose.msra.mxu0 0.0
    %4888 = vmatprep.subr.mxu0 0.0
    %4889 = vmatpush1.xpose.msra.mxu0 0.0
    %4890 = vmatprep.subr.mxu0 0.0
    %4891 = vmatpush1.xpose.msra.mxu0 0.0
    %4892 = vmatprep.subr.mxu0 0.0
    %4893 = vmatpush1.xpose.msra.mxu0 0.0
    %4894 = vmatprep.subr.mxu0 0.0
    %4895 = vmatpush1.xpose.msra.mxu0 0.0
    %4896 = vmatprep.subr.mxu0 0.0
    %4897 = vmatpush1.xpose.msra.mxu0 0.0
    %4898 = vmatprep.subr.mxu0 0.0
    %4899 = vmatpush1.xpose.msra.mxu0 0.0
    %4900 = vmatprep.subr.mxu0 0.0
    %4901 = vmatpush1.xpose.msra.mxu0 0.0
    %4902 = vmatprep.subr.mxu0 0.0
    %4903 = vmatpush1.xpose.msra.mxu0 0.0
    %4904 = vmatprep.subr.mxu0 0.0
    %4905 = vmatpush1.xpose.msra.mxu0 0.0
    %4906 = vmatprep.subr.mxu0 0.0
    %4907 = vmatpush1.xpose.msra.mxu0 0.0
    %4908 = vmatprep.subr.mxu0 0.0
    %4909 = vmatpush1.xpose.msra.mxu0 0.0
    %4910 = vmatprep.subr.mxu0 0.0
    %4911 = vmatpush1.xpose.msra.mxu0 0.0
    %4912 = vmatprep.subr.mxu0 0.0
    %4913 = vmatpush1.xpose.msra.mxu0 0.0
    %4914 = vmatprep.subr.mxu0 0.0
    %4915 = vmatpush1.xpose.msra.mxu0 0.0
    %4916 = vmatprep.subr.mxu0 0.0
    %4917 = vmatpush1.xpose.msra.mxu0 0.0
    %4918 = vmatprep.subr.mxu0 0.0
    %4919 = vmatpush1.xpose.msra.mxu0 0.0
    %4920 = vmatprep.subr.mxu0 0.0
    %4921 = vmatpush1.xpose.msra.mxu0 0.0
    %4922 = vmatprep.subr.mxu0 0.0
    %4923 = vmatpush1.xpose.msra.mxu0 0.0
    %4924 = vmatprep.subr.mxu0 0.0
    %4925 = vmatpush1.xpose.msra.mxu0 0.0
    %4926 = vmatprep.subr.mxu0 0.0
    %4927 = vmatpush1.xpose.msra.mxu0 0.0
    %4928 = vmatprep.subr.mxu0 0.0
    %4929 = vmatpush1.xpose.msra.mxu0 0.0
    %4930 = vmatprep.subr.mxu0 0.0
    %4931 = vmatpush1.xpose.msra.mxu0 0.0
    %4932 = vmatprep.subr.mxu0 0.0
    %4933 = vmatpush1.xpose.msra.mxu0 0.0
    %4934 = vmatprep.subr.mxu0 0.0
    %4935 = vmatpush1.xpose.msra.mxu0 0.0
    %4936 = vmatprep.subr.mxu0 0.0
    %4937 = vmatpush1.xpose.msra.mxu0 0.0
    %4938 = vmatprep.subr.mxu0 0.0
    %4939 = vmatpush1.xpose.msra.mxu0 0.0
    %4940 = vmatprep.subr.mxu0 0.0
    %4941 = vmatpush1.xpose.msra.mxu0 0.0
    %4942 = vmatprep.subr.mxu0 0.0
    %4943 = vmatpush1.xpose.msra.mxu0 0.0
    %4944 = vmatprep.mubr.f32.mxu0 0.0
    %4945 = vmatmul.mubr.f32.gmra.mrb[0].mxu0 %v4872
    %v4946 = vpop.f32.mrb[0].mxu0
    %v4947 = vadd.f32 %v187, %v4946
    %v4948 = vpop.f32.mrb[0].mxu0
    %4949 = vmatprep.mubr.f32.mxu0 0.0
    %4950 = vmatmul.mubr.f32.gmra.mrb[0].mxu0 %v4874
    %v4951 = vpop.f32.mrb[0].mxu0
    %v4952 = vadd.f32 %v188, %v4951
    %v4953 = vpop.f32.mrb[0].mxu0
    %4954 = vdwg.mxu0
    %v4955 = vsel %vm191, %v4947, -inf
    %4956 = vmax.xlane.f32.xlu0 %v4955
    %v4957 = vpop.xlane.xlu0 %4956
    %v4958 = vsel %vm191, %v4952, -inf
    %4959 = vmax.xlane.f32.xlu0 %v4958
    %v4960 = vpop.xlane.xlu0 %4959
    %v4961 = vsub.f32 %v4947, %v4957
    %v4962 = vsub.f32 %v4952, %v4960
    %v4963 = vmul.f32 %v4961, 1.442695
    %v4964 = vpow.pop %v4963
    %v4965 = vmul.f32 %v4962, 1.442695
    %v4966 = vpow.pop %v4965
    %v4967 = vsel %vm191, %v4964, 0.0
    %4968 = vadd.xlane.f32.xlu0 %v4967
    %v4969 = vpop.xlane.xlu0 %4968
    %v4970 = vsel %vm191, %v4966, 0.0
    %4971 = vadd.xlane.f32.xlu0 %v4970
    %v4972 = vpop.xlane.xlu0 %4971
    %v4973 = vrcp.pop %v4969
    %v4974 = vrcp.pop %v4972
    %v4975 = vmul.f32 %v4964, %v4973
    %v4976 = vmul.f32 %v4966, %v4974
    %4977 = vrot.lane.b32.xlu0 %v3138, 84
    %v4978 = vpop.permute.xlu0 %4977
    %4979 = vrot.lane.b32.xlu0 %v3143, 84
    %v4980 = vpop.permute.xlu0 %4979
    %v4984 = vsel %vm191, %v4975, 0
    %v4987 = vsel %vm191, %v4976, 0
    %4989 = vmatprep.subr.mxu0 0.0
    %4990 = vmatpush1.msra.mxu0 %v4978
    %4991 = vmatprep.subr.mxu0 0.0
    %4992 = vmatpush1.msra.mxu0 %v4980
    %4993 = vmatprep.subr.mxu0 0.0
    %4994 = vmatpush1.msra.mxu0 0.0
    %4995 = vmatprep.subr.mxu0 0.0
    %4996 = vmatpush1.msra.mxu0 0.0
    %4997 = vmatprep.subr.mxu0 0.0
    %4998 = vmatpush1.msra.mxu0 0.0
    %4999 = vmatprep.subr.mxu0 0.0
    %5000 = vmatpush1.msra.mxu0 0.0
    %5001 = vmatprep.subr.mxu0 0.0
    %5002 = vmatpush1.msra.mxu0 0.0
    %5003 = vmatprep.subr.mxu0 0.0
    %5004 = vmatpush1.msra.mxu0 0.0
    %5005 = vmatprep.subr.mxu0 0.0
    %5006 = vmatpush1.msra.mxu0 0.0
    %5007 = vmatprep.subr.mxu0 0.0
    %5008 = vmatpush1.msra.mxu0 0.0
    %5009 = vmatprep.subr.mxu0 0.0
    %5010 = vmatpush1.msra.mxu0 0.0
    %5011 = vmatprep.subr.mxu0 0.0
    %5012 = vmatpush1.msra.mxu0 0.0
    %5013 = vmatprep.subr.mxu0 0.0
    %5014 = vmatpush1.msra.mxu0 0.0
    %5015 = vmatprep.subr.mxu0 0.0
    %5016 = vmatpush1.msra.mxu0 0.0
    %5017 = vmatprep.subr.mxu0 0.0
    %5018 = vmatpush1.msra.mxu0 0.0
    %5019 = vmatprep.subr.mxu0 0.0
    %5020 = vmatpush1.msra.mxu0 0.0
    %5021 = vmatprep.subr.mxu0 0.0
    %5022 = vmatpush1.msra.mxu0 0.0
    %5023 = vmatprep.subr.mxu0 0.0
    %5024 = vmatpush1.msra.mxu0 0.0
    %5025 = vmatprep.subr.mxu0 0.0
    %5026 = vmatpush1.msra.mxu0 0.0
    %5027 = vmatprep.subr.mxu0 0.0
    %5028 = vmatpush1.msra.mxu0 0.0
    %5029 = vmatprep.subr.mxu0 0.0
    %5030 = vmatpush1.msra.mxu0 0.0
    %5031 = vmatprep.subr.mxu0 0.0
    %5032 = vmatpush1.msra.mxu0 0.0
    %5033 = vmatprep.subr.mxu0 0.0
    %5034 = vmatpush1.msra.mxu0 0.0
    %5035 = vmatprep.subr.mxu0 0.0
    %5036 = vmatpush1.msra.mxu0 0.0
    %5037 = vmatprep.subr.mxu0 0.0
    %5038 = vmatpush1.msra.mxu0 0.0
    %5039 = vmatprep.subr.mxu0 0.0
    %5040 = vmatpush1.msra.mxu0 0.0
    %5041 = vmatprep.subr.mxu0 0.0
    %5042 = vmatpush1.msra.mxu0 0.0
    %5043 = vmatprep.subr.mxu0 0.0
    %5044 = vmatpush1.msra.mxu0 0.0
    %5045 = vmatprep.subr.mxu0 0.0
    %5046 = vmatpush1.msra.mxu0 0.0
    %5047 = vmatprep.subr.mxu0 0.0
    %5048 = vmatpush1.msra.mxu0 0.0
    %5049 = vmatprep.subr.mxu0 0.0
    %5050 = vmatpush1.msra.mxu0 0.0
    %5051 = vmatprep.subr.mxu0 0.0
    %5052 = vmatpush1.msra.mxu0 0.0
    %5053 = vmatprep.mubr.f32.mxu0 0.0
    %5054 = vmatmul.mubr.f32.gmra.mrb[0].mxu0 %v4984
    %v5055 = vpop.f32.mrb[0].mxu0
    %v5056 = vadd.f32 0.0, %v5055
    %v5057 = vpop.f32.mrb[0].mxu0
    %5058 = vmatprep.mubr.f32.mxu0 0.0
    %5059 = vmatmul.mubr.f32.gmra.mrb[0].mxu0 %v4987
    %v5060 = vpop.f32.mrb[0].mxu0
    %v5061 = vadd.f32 0.0, %v5060
    %v5062 = vpop.f32.mrb[0].mxu0
    %5063 = vdwg.mxu0
    %v5064 = vrot.slane %v3149, 4
    %v5066 = vsel %vm3156, %v5056, 0
    %v5069 = vsel %vm3156, %v5061, 0
    %v5071 = vsel %vm3559, %v5064, 0
    %5073 = vmatprep.subr.mxu0 0.0
    %5074 = vmatpush1.msra.mxu0 %v5071
    %5075 = vmatprep.subr.mxu0 0.0
    %5076 = vmatpush1.msra.mxu0 0.0
    %5077 = vmatprep.subr.mxu0 0.0
    %5078 = vmatpush1.msra.mxu0 0.0
    %5079 = vmatprep.subr.mxu0 0.0
    %5080 = vmatpush1.msra.mxu0 0.0
    %5081 = vmatprep.subr.mxu0 0.0
    %5082 = vmatpush1.msra.mxu0 0.0
    %5083 = vmatprep.subr.mxu0 0.0
    %5084 = vmatpush1.msra.mxu0 0.0
    %5085 = vmatprep.subr.mxu0 0.0
    %5086 = vmatpush1.msra.mxu0 0.0
    %5087 = vmatprep.subr.mxu0 0.0
    %5088 = vmatpush1.msra.mxu0 0.0
    %5089 = vmatprep.subr.mxu0 0.0
    %5090 = vmatpush1.msra.mxu0 0.0
    %5091 = vmatprep.subr.mxu0 0.0
    %5092 = vmatpush1.msra.mxu0 0.0
    %5093 = vmatprep.subr.mxu0 0.0
    %5094 = vmatpush1.msra.mxu0 0.0
    %5095 = vmatprep.subr.mxu0 0.0
    %5096 = vmatpush1.msra.mxu0 0.0
    %5097 = vmatprep.subr.mxu0 0.0
    %5098 = vmatpush1.msra.mxu0 0.0
    %5099 = vmatprep.subr.mxu0 0.0
    %5100 = vmatpush1.msra.mxu0 0.0
    %5101 = vmatprep.subr.mxu0 0.0
    %5102 = vmatpush1.msra.mxu0 0.0
    %5103 = vmatprep.subr.mxu0 0.0
    %5104 = vmatpush1.msra.mxu0 0.0
    %5105 = vmatprep.subr.mxu0 0.0
    %5106 = vmatpush1.msra.mxu0 0.0
    %5107 = vmatprep.subr.mxu0 0.0
    %5108 = vmatpush1.msra.mxu0 0.0
    %5109 = vmatprep.subr.mxu0 0.0
    %5110 = vmatpush1.msra.mxu0 0.0
    %5111 = vmatprep.subr.mxu0 0.0
    %5112 = vmatpush1.msra.mxu0 0.0
    %5113 = vmatprep.subr.mxu0 0.0
    %5114 = vmatpush1.msra.mxu0 0.0
    %5115 = vmatprep.subr.mxu0 0.0
    %5116 = vmatpush1.msra.mxu0 0.0
    %5117 = vmatprep.subr.mxu0 0.0
    %5118 = vmatpush1.msra.mxu0 0.0
    %5119 = vmatprep.subr.mxu0 0.0
    %5120 = vmatpush1.msra.mxu0 0.0
    %5121 = vmatprep.subr.mxu0 0.0
    %5122 = vmatpush1.msra.mxu0 0.0
    %5123 = vmatprep.subr.mxu0 0.0
    %5124 = vmatpush1.msra.mxu0 0.0
    %5125 = vmatprep.subr.mxu0 0.0
    %5126 = vmatpush1.msra.mxu0 0.0
    %5127 = vmatprep.subr.mxu0 0.0
    %5128 = vmatpush1.msra.mxu0 0.0
    %5129 = vmatprep.subr.mxu0 0.0
    %5130 = vmatpush1.msra.mxu0 0.0
    %5131 = vmatprep.subr.mxu0 0.0
    %5132 = vmatpush1.msra.mxu0 0.0
    %5133 = vmatprep.subr.mxu0 0.0
    %5134 = vmatpush1.msra.mxu0 0.0
    %5135 = vmatprep.subr.mxu0 0.0
    %5136 = vmatpush1.msra.mxu0 0.0
    %5137 = vmatprep.mubr.f32.mxu0 0.0
    %5138 = vmatmul.mubr.f32.gmra.mrb[0].mxu0 %v5066
    %v5139 = vpop.f32.mrb[0].mxu0
    %v5140 = vadd.f32 0.0, %v5139
    %v5141 = vpop.f32.mrb[0].mxu0
    %5142 = vmatprep.mubr.f32.mxu0 0.0
    %5143 = vmatmul.mubr.f32.gmra.mrb[0].mxu0 %v5069
    %v5144 = vpop.f32.mrb[0].mxu0
    %v5145 = vadd.f32 0.0, %v5144
    %v5146 = vpop.f32.mrb[0].mxu0
    %5147 = vdwg.mxu0
    %v5148 = vadd.f32 %v4862, %v5140
    %v5149 = vadd.f32 %v4863, %v5145
    %5150 = vrot.lane.b32.xlu0 %v3146, 114
    %v5151 = vpop.permute.xlu0 %5150
    %5152 = vrot.lane.b32.xlu0 %v3147, 114
    %v5153 = vpop.permute.xlu0 %5152
    %5154 = vrot.lane.b32.xlu0 %v3138, 98
    %v5155 = vpop.permute.xlu0 %5154
    %5156 = vrot.lane.b32.xlu0 %v3143, 98
    %v5157 = vpop.permute.xlu0 %5156
    %v5158 = vsel %vm3156, %v5151, 0
    %v5160 = vsel %vm3156, %v5153, 0
    %v5162 = vsel %vm3156, %v5155, 0
    %v5164 = vsel %vm3156, %v5157, 0
    %5166 = vmatprep.subr.mxu0 0.0
    %5167 = vmatpush1.xpose.msra.mxu0 %v5162
    %5168 = vmatprep.subr.mxu0 0.0
    %5169 = vmatpush1.xpose.msra.mxu0 %v5164
    %5170 = vmatprep.subr.mxu0 0.0
    %5171 = vmatpush1.xpose.msra.mxu0 0.0
    %5172 = vmatprep.subr.mxu0 0.0
    %5173 = vmatpush1.xpose.msra.mxu0 0.0
    %5174 = vmatprep.subr.mxu0 0.0
    %5175 = vmatpush1.xpose.msra.mxu0 0.0
    %5176 = vmatprep.subr.mxu0 0.0
    %5177 = vmatpush1.xpose.msra.mxu0 0.0
    %5178 = vmatprep.subr.mxu0 0.0
    %5179 = vmatpush1.xpose.msra.mxu0 0.0
    %5180 = vmatprep.subr.mxu0 0.0
    %5181 = vmatpush1.xpose.msra.mxu0 0.0
    %5182 = vmatprep.subr.mxu0 0.0
    %5183 = vmatpush1.xpose.msra.mxu0 0.0
    %5184 = vmatprep.subr.mxu0 0.0
    %5185 = vmatpush1.xpose.msra.mxu0 0.0
    %5186 = vmatprep.subr.mxu0 0.0
    %5187 = vmatpush1.xpose.msra.mxu0 0.0
    %5188 = vmatprep.subr.mxu0 0.0
    %5189 = vmatpush1.xpose.msra.mxu0 0.0
    %5190 = vmatprep.subr.mxu0 0.0
    %5191 = vmatpush1.xpose.msra.mxu0 0.0
    %5192 = vmatprep.subr.mxu0 0.0
    %5193 = vmatpush1.xpose.msra.mxu0 0.0
    %5194 = vmatprep.subr.mxu0 0.0
    %5195 = vmatpush1.xpose.msra.mxu0 0.0
    %5196 = vmatprep.subr.mxu0 0.0
    %5197 = vmatpush1.xpose.msra.mxu0 0.0
    %5198 = vmatprep.subr.mxu0 0.0
    %5199 = vmatpush1.xpose.msra.mxu0 0.0
    %5200 = vmatprep.subr.mxu0 0.0
    %5201 = vmatpush1.xpose.msra.mxu0 0.0
    %5202 = vmatprep.subr.mxu0 0.0
    %5203 = vmatpush1.xpose.msra.mxu0 0.0
    %5204 = vmatprep.subr.mxu0 0.0
    %5205 = vmatpush1.xpose.msra.mxu0 0.0
    %5206 = vmatprep.subr.mxu0 0.0
    %5207 = vmatpush1.xpose.msra.mxu0 0.0
    %5208 = vmatprep.subr.mxu0 0.0
    %5209 = vmatpush1.xpose.msra.mxu0 0.0
    %5210 = vmatprep.subr.mxu0 0.0
    %5211 = vmatpush1.xpose.msra.mxu0 0.0
    %5212 = vmatprep.subr.mxu0 0.0
    %5213 = vmatpush1.xpose.msra.mxu0 0.0
    %5214 = vmatprep.subr.mxu0 0.0
    %5215 = vmatpush1.xpose.msra.mxu0 0.0
    %5216 = vmatprep.subr.mxu0 0.0
    %5217 = vmatpush1.xpose.msra.mxu0 0.0
    %5218 = vmatprep.subr.mxu0 0.0
    %5219 = vmatpush1.xpose.msra.mxu0 0.0
    %5220 = vmatprep.subr.mxu0 0.0
    %5221 = vmatpush1.xpose.msra.mxu0 0.0
    %5222 = vmatprep.subr.mxu0 0.0
    %5223 = vmatpush1.xpose.msra.mxu0 0.0
    %5224 = vmatprep.subr.mxu0 0.0
    %5225 = vmatpush1.xpose.msra.mxu0 0.0
    %5226 = vmatprep.subr.mxu0 0.0
    %5227 = vmatpush1.xpose.msra.mxu0 0.0
    %5228 = vmatprep.subr.mxu0 0.0
    %5229 = vmatpush1.xpose.msra.mxu0 0.0
    %5230 = vmatprep.mubr.f32.mxu0 0.0
    %5231 = vmatmul.mubr.f32.gmra.mrb[0].mxu0 %v5158
    %v5232 = vpop.f32.mrb[0].mxu0
    %v5233 = vadd.f32 %v187, %v5232
    %v5234 = vpop.f32.mrb[0].mxu0
    %5235 = vmatprep.mubr.f32.mxu0 0.0
    %5236 = vmatmul.mubr.f32.gmra.mrb[0].mxu0 %v5160
    %v5237 = vpop.f32.mrb[0].mxu0
    %v5238 = vadd.f32 %v188, %v5237
    %v5239 = vpop.f32.mrb[0].mxu0
    %5240 = vdwg.mxu0
    %v5241 = vsel %vm191, %v5233, -inf
    %5242 = vmax.xlane.f32.xlu0 %v5241
    %v5243 = vpop.xlane.xlu0 %5242
    %v5244 = vsel %vm191, %v5238, -inf
    %5245 = vmax.xlane.f32.xlu0 %v5244
    %v5246 = vpop.xlane.xlu0 %5245
    %v5247 = vsub.f32 %v5233, %v5243
    %v5248 = vsub.f32 %v5238, %v5246
    %v5249 = vmul.f32 %v5247, 1.442695
    %v5250 = vpow.pop %v5249
    %v5251 = vmul.f32 %v5248, 1.442695
    %v5252 = vpow.pop %v5251
    %v5253 = vsel %vm191, %v5250, 0.0
    %5254 = vadd.xlane.f32.xlu0 %v5253
    %v5255 = vpop.xlane.xlu0 %5254
    %v5256 = vsel %vm191, %v5252, 0.0
    %5257 = vadd.xlane.f32.xlu0 %v5256
    %v5258 = vpop.xlane.xlu0 %5257
    %v5259 = vrcp.pop %v5255
    %v5260 = vrcp.pop %v5258
    %v5261 = vmul.f32 %v5250, %v5259
    %v5262 = vmul.f32 %v5252, %v5260
    %5263 = vrot.lane.b32.xlu0 %v3138, 82
    %v5264 = vpop.permute.xlu0 %5263
    %5265 = vrot.lane.b32.xlu0 %v3143, 82
    %v5266 = vpop.permute.xlu0 %5265
    %v5270 = vsel %vm191, %v5261, 0
    %v5273 = vsel %vm191, %v5262, 0
    %5275 = vmatprep.subr.mxu0 0.0
    %5276 = vmatpush1.msra.mxu0 %v5264
    %5277 = vmatprep.subr.mxu0 0.0
    %5278 = vmatpush1.msra.mxu0 %v5266
    %5279 = vmatprep.subr.mxu0 0.0
    %5280 = vmatpush1.msra.mxu0 0.0
    %5281 = vmatprep.subr.mxu0 0.0
    %5282 = vmatpush1.msra.mxu0 0.0
    %5283 = vmatprep.subr.mxu0 0.0
    %5284 = vmatpush1.msra.mxu0 0.0
    %5285 = vmatprep.subr.mxu0 0.0
    %5286 = vmatpush1.msra.mxu0 0.0
    %5287 = vmatprep.subr.mxu0 0.0
    %5288 = vmatpush1.msra.mxu0 0.0
    %5289 = vmatprep.subr.mxu0 0.0
    %5290 = vmatpush1.msra.mxu0 0.0
    %5291 = vmatprep.subr.mxu0 0.0
    %5292 = vmatpush1.msra.mxu0 0.0
    %5293 = vmatprep.subr.mxu0 0.0
    %5294 = vmatpush1.msra.mxu0 0.0
    %5295 = vmatprep.subr.mxu0 0.0
    %5296 = vmatpush1.msra.mxu0 0.0
    %5297 = vmatprep.subr.mxu0 0.0
    %5298 = vmatpush1.msra.mxu0 0.0
    %5299 = vmatprep.subr.mxu0 0.0
    %5300 = vmatpush1.msra.mxu0 0.0
    %5301 = vmatprep.subr.mxu0 0.0
    %5302 = vmatpush1.msra.mxu0 0.0
    %5303 = vmatprep.subr.mxu0 0.0
    %5304 = vmatpush1.msra.mxu0 0.0
    %5305 = vmatprep.subr.mxu0 0.0
    %5306 = vmatpush1.msra.mxu0 0.0
    %5307 = vmatprep.subr.mxu0 0.0
    %5308 = vmatpush1.msra.mxu0 0.0
    %5309 = vmatprep.subr.mxu0 0.0
    %5310 = vmatpush1.msra.mxu0 0.0
    %5311 = vmatprep.subr.mxu0 0.0
    %5312 = vmatpush1.msra.mxu0 0.0
    %5313 = vmatprep.subr.mxu0 0.0
    %5314 = vmatpush1.msra.mxu0 0.0
    %5315 = vmatprep.subr.mxu0 0.0
    %5316 = vmatpush1.msra.mxu0 0.0
    %5317 = vmatprep.subr.mxu0 0.0
    %5318 = vmatpush1.msra.mxu0 0.0
    %5319 = vmatprep.subr.mxu0 0.0
    %5320 = vmatpush1.msra.mxu0 0.0
    %5321 = vmatprep.subr.mxu0 0.0
    %5322 = vmatpush1.msra.mxu0 0.0
    %5323 = vmatprep.subr.mxu0 0.0
    %5324 = vmatpush1.msra.mxu0 0.0
    %5325 = vmatprep.subr.mxu0 0.0
    %5326 = vmatpush1.msra.mxu0 0.0
    %5327 = vmatprep.subr.mxu0 0.0
    %5328 = vmatpush1.msra.mxu0 0.0
    %5329 = vmatprep.subr.mxu0 0.0
    %5330 = vmatpush1.msra.mxu0 0.0
    %5331 = vmatprep.subr.mxu0 0.0
    %5332 = vmatpush1.msra.mxu0 0.0
    %5333 = vmatprep.subr.mxu0 0.0
    %5334 = vmatpush1.msra.mxu0 0.0
    %5335 = vmatprep.subr.mxu0 0.0
    %5336 = vmatpush1.msra.mxu0 0.0
    %5337 = vmatprep.subr.mxu0 0.0
    %5338 = vmatpush1.msra.mxu0 0.0
    %5339 = vmatprep.mubr.f32.mxu0 0.0
    %5340 = vmatmul.mubr.f32.gmra.mrb[0].mxu0 %v5270
    %v5341 = vpop.f32.mrb[0].mxu0
    %v5342 = vadd.f32 0.0, %v5341
    %v5343 = vpop.f32.mrb[0].mxu0
    %5344 = vmatprep.mubr.f32.mxu0 0.0
    %5345 = vmatmul.mubr.f32.gmra.mrb[0].mxu0 %v5273
    %v5346 = vpop.f32.mrb[0].mxu0
    %v5347 = vadd.f32 0.0, %v5346
    %v5348 = vpop.f32.mrb[0].mxu0
    %5349 = vdwg.mxu0
    %v5350 = vrot.slane %v3149, 6
    %v5352 = vsel %vm3156, %v5342, 0
    %v5355 = vsel %vm3156, %v5347, 0
    %v5357 = vsel %vm3559, %v5350, 0
    %5359 = vmatprep.subr.mxu0 0.0
    %5360 = vmatpush1.msra.mxu0 %v5357
    %5361 = vmatprep.subr.mxu0 0.0
    %5362 = vmatpush1.msra.mxu0 0.0
    %5363 = vmatprep.subr.mxu0 0.0
    %5364 = vmatpush1.msra.mxu0 0.0
    %5365 = vmatprep.subr.mxu0 0.0
    %5366 = vmatpush1.msra.mxu0 0.0
    %5367 = vmatprep.subr.mxu0 0.0
    %5368 = vmatpush1.msra.mxu0 0.0
    %5369 = vmatprep.subr.mxu0 0.0
    %5370 = vmatpush1.msra.mxu0 0.0
    %5371 = vmatprep.subr.mxu0 0.0
    %5372 = vmatpush1.msra.mxu0 0.0
    %5373 = vmatprep.subr.mxu0 0.0
    %5374 = vmatpush1.msra.mxu0 0.0
    %5375 = vmatprep.subr.mxu0 0.0
    %5376 = vmatpush1.msra.mxu0 0.0
    %5377 = vmatprep.subr.mxu0 0.0
    %5378 = vmatpush1.msra.mxu0 0.0
    %5379 = vmatprep.subr.mxu0 0.0
    %5380 = vmatpush1.msra.mxu0 0.0
    %5381 = vmatprep.subr.mxu0 0.0
    %5382 = vmatpush1.msra.mxu0 0.0
    %5383 = vmatprep.subr.mxu0 0.0
    %5384 = vmatpush1.msra.mxu0 0.0
    %5385 = vmatprep.subr.mxu0 0.0
    %5386 = vmatpush1.msra.mxu0 0.0
    %5387 = vmatprep.subr.mxu0 0.0
    %5388 = vmatpush1.msra.mxu0 0.0
    %5389 = vmatprep.subr.mxu0 0.0
    %5390 = vmatpush1.msra.mxu0 0.0
    %5391 = vmatprep.subr.mxu0 0.0
    %5392 = vmatpush1.msra.mxu0 0.0
    %5393 = vmatprep.subr.mxu0 0.0
    %5394 = vmatpush1.msra.mxu0 0.0
    %5395 = vmatprep.subr.mxu0 0.0
    %5396 = vmatpush1.msra.mxu0 0.0
    %5397 = vmatprep.subr.mxu0 0.0
    %5398 = vmatpush1.msra.mxu0 0.0
    %5399 = vmatprep.subr.mxu0 0.0
    %5400 = vmatpush1.msra.mxu0 0.0
    %5401 = vmatprep.subr.mxu0 0.0
    %5402 = vmatpush1.msra.mxu0 0.0
    %5403 = vmatprep.subr.mxu0 0.0
    %5404 = vmatpush1.msra.mxu0 0.0
    %5405 = vmatprep.subr.mxu0 0.0
    %5406 = vmatpush1.msra.mxu0 0.0
    %5407 = vmatprep.subr.mxu0 0.0
    %5408 = vmatpush1.msra.mxu0 0.0
    %5409 = vmatprep.subr.mxu0 0.0
    %5410 = vmatpush1.msra.mxu0 0.0
    %5411 = vmatprep.subr.mxu0 0.0
    %5412 = vmatpush1.msra.mxu0 0.0
    %5413 = vmatprep.subr.mxu0 0.0
    %5414 = vmatpush1.msra.mxu0 0.0
    %5415 = vmatprep.subr.mxu0 0.0
    %5416 = vmatpush1.msra.mxu0 0.0
    %5417 = vmatprep.subr.mxu0 0.0
    %5418 = vmatpush1.msra.mxu0 0.0
    %5419 = vmatprep.subr.mxu0 0.0
    %5420 = vmatpush1.msra.mxu0 0.0
    %5421 = vmatprep.subr.mxu0 0.0
    %5422 = vmatpush1.msra.mxu0 0.0
    %5423 = vmatprep.mubr.f32.mxu0 0.0
    %5424 = vmatmul.mubr.f32.gmra.mrb[0].mxu0 %v5352
    %v5425 = vpop.f32.mrb[0].mxu0
    %v5426 = vadd.f32 0.0, %v5425
    %v5427 = vpop.f32.mrb[0].mxu0
    %5428 = vmatprep.mubr.f32.mxu0 0.0
    %5429 = vmatmul.mubr.f32.gmra.mrb[0].mxu0 %v5355
    %v5430 = vpop.f32.mrb[0].mxu0
    %v5431 = vadd.f32 0.0, %v5430
    %v5432 = vpop.f32.mrb[0].mxu0
    %5433 = vdwg.mxu0
    %v5434 = vadd.f32 %v5148, %v5426
    %v5435 = vadd.f32 %v5149, %v5431
    %v5436 = vld [vmem:[%s14] sm:$0x1]
    %v5438 = vlaneseq
    %v5439 = vshrl.u32 %v5438, 7
    %v5440 = vsub.s32 0, %v5439
    %v5441 = vrot.slane %v5436, %v5440
    %v5443 = vadd.f32 %v5434, %v5441
    %v5444 = vadd.f32 %v5435, %v5441
    %5445 = vmatprep.subr.mxu0 0.0
    %5446 = vmatpush1.msra.mxu0 %v5443
    %5447 = vmatprep.subr.mxu0 0.0
    %5448 = vmatpush1.msra.mxu0 %v5444
    %5449 = vmatprep.subr.mxu0 0.0
    %5450 = vmatpush1.msra.mxu0 0.0
    %5451 = vmatprep.subr.mxu0 0.0
    %5452 = vmatpush1.msra.mxu0 0.0
    %5453 = vmatprep.subr.mxu0 0.0
    %5454 = vmatpush1.msra.mxu0 0.0
    %5455 = vmatprep.subr.mxu0 0.0
    %5456 = vmatpush1.msra.mxu0 0.0
    %5457 = vmatprep.subr.mxu0 0.0
    %5458 = vmatpush1.msra.mxu0 0.0
    %5459 = vmatprep.subr.mxu0 0.0
    %5460 = vmatpush1.msra.mxu0 0.0
    %5461 = vmatprep.subr.mxu0 0.0
    %5462 = vmatpush1.msra.mxu0 0.0
    %5463 = vmatprep.subr.mxu0 0.0
    %5464 = vmatpush1.msra.mxu0 0.0
    %5465 = vmatprep.subr.mxu0 0.0
    %5466 = vmatpush1.msra.mxu0 0.0
    %5467 = vmatprep.subr.mxu0 0.0
    %5468 = vmatpush1.msra.mxu0 0.0
    %5469 = vmatprep.subr.mxu0 0.0
    %5470 = vmatpush1.msra.mxu0 0.0
    %5471 = vmatprep.subr.mxu0 0.0
    %5472 = vmatpush1.msra.mxu0 0.0
    %5473 = vmatprep.subr.mxu0 0.0
    %5474 = vmatpush1.msra.mxu0 0.0
    %5475 = vmatprep.subr.mxu0 0.0
    %5476 = vmatpush1.msra.mxu0 0.0
    %5477 = vmatprep.subr.mxu0 0.0
    %5478 = vmatpush1.msra.mxu0 0.0
    %5479 = vmatprep.subr.mxu0 0.0
    %5480 = vmatpush1.msra.mxu0 0.0
    %5481 = vmatprep.subr.mxu0 0.0
    %5482 = vmatpush1.msra.mxu0 0.0
    %5483 = vmatprep.subr.mxu0 0.0
    %5484 = vmatpush1.msra.mxu0 0.0
    %5485 = vmatprep.subr.mxu0 0.0
    %5486 = vmatpush1.msra.mxu0 0.0
    %5487 = vmatprep.subr.mxu0 0.0
    %5488 = vmatpush1.msra.mxu0 0.0
    %5489 = vmatprep.subr.mxu0 0.0
    %5490 = vmatpush1.msra.mxu0 0.0
    %5491 = vmatprep.subr.mxu0 0.0
    %5492 = vmatpush1.msra.mxu0 0.0
    %5493 = vmatprep.subr.mxu0 0.0
    %5494 = vmatpush1.msra.mxu0 0.0
    %5495 = vmatprep.subr.mxu0 0.0
    %5496 = vmatpush1.msra.mxu0 0.0
    %5497 = vmatprep.subr.mxu0 0.0
    %5498 = vmatpush1.msra.mxu0 0.0
    %5499 = vmatprep.subr.mxu0 0.0
    %5500 = vmatpush1.msra.mxu0 0.0
    %5501 = vmatprep.subr.mxu0 0.0
    %5502 = vmatpush1.msra.mxu0 0.0
    %5503 = vmatprep.subr.mxu0 0.0
    %5504 = vmatpush1.msra.mxu0 0.0
    %5505 = vmatprep.subr.mxu0 0.0
    %5506 = vmatpush1.msra.mxu0 0.0
    %5507 = vmatprep.subr.mxu0 0.0
    %5508 = vmatpush1.msra.mxu0 0.0
    %5509 = vmatprep.mubr.f32.mxu0 0.0
    %5510 = vmatmul.mubr.f32.gmra.mrb[0].mxu0 %v2737
    %v5511 = vpop.f32.mrb[0].mxu0
    %v5512 = vadd.f32 %v5443, %v5511
    %v5513 = vpop.f32.mrb[0].mxu0
    %5514 = vmatprep.mubr.f32.mxu0 0.0
    %5515 = vmatmul.mubr.f32.gmra.mrb[0].mxu0 %v2740
    %v5516 = vpop.f32.mrb[0].mxu0
    %v5517 = vadd.f32 %v5444, %v5516
    %v5518 = vpop.f32.mrb[0].mxu0
    %5519 = vdwg.mxu0
    %v5520 = vld [vmem:[#allocation17] sm:$0xff]
    %v5521 = vld [vmem:[#allocation17 + $0x8] sm:$0xff]
    %v5522 = vld [vmem:[%s16] sm:$0x1]
    %v5524 = vlaneseq
    %v5525 = vshrl.u32 %v5524, 7
    %v5526 = vsub.s32 0, %v5525
    %v5527 = vrot.slane %v5522, %v5526
    %v5530 = vsel %vm191, %v5512, 0
    %v5533 = vsel %vm191, %v5517, 0
    %5535 = vmatprep.subr.mxu0 0.0
    %5536 = vmatpush1.msra.mxu0 %v5520
    %5537 = vmatprep.subr.mxu0 0.0
    %5538 = vmatpush1.msra.mxu0 %v5521
    %5539 = vmatprep.subr.mxu0 0.0
    %5540 = vmatpush1.msra.mxu0 0.0
    %5541 = vmatprep.subr.mxu0 0.0
    %5542 = vmatpush1.msra.mxu0 0.0
    %5543 = vmatprep.subr.mxu0 0.0
    %5544 = vmatpush1.msra.mxu0 0.0
    %5545 = vmatprep.subr.mxu0 0.0
    %5546 = vmatpush1.msra.mxu0 0.0
    %5547 = vmatprep.subr.mxu0 0.0
    %5548 = vmatpush1.msra.mxu0 0.0
    %5549 = vmatprep.subr.mxu0 0.0
    %5550 = vmatpush1.msra.mxu0 0.0
    %5551 = vmatprep.subr.mxu0 0.0
    %5552 = vmatpush1.msra.mxu0 0.0
    %5553 = vmatprep.subr.mxu0 0.0
    %5554 = vmatpush1.msra.mxu0 0.0
    %5555 = vmatprep.subr.mxu0 0.0
    %5556 = vmatpush1.msra.mxu0 0.0
    %5557 = vmatprep.subr.mxu0 0.0
    %5558 = vmatpush1.msra.mxu0 0.0
    %5559 = vmatprep.subr.mxu0 0.0
    %5560 = vmatpush1.msra.mxu0 0.0
    %5561 = vmatprep.subr.mxu0 0.0
    %5562 = vmatpush1.msra.mxu0 0.0
    %5563 = vmatprep.subr.mxu0 0.0
    %5564 = vmatpush1.msra.mxu0 0.0
    %5565 = vmatprep.subr.mxu0 0.0
    %5566 = vmatpush1.msra.mxu0 0.0
    %5567 = vmatprep.subr.mxu0 0.0
    %5568 = vmatpush1.msra.mxu0 0.0
    %5569 = vmatprep.subr.mxu0 0.0
    %5570 = vmatpush1.msra.mxu0 0.0
    %5571 = vmatprep.subr.mxu0 0.0
    %5572 = vmatpush1.msra.mxu0 0.0
    %5573 = vmatprep.subr.mxu0 0.0
    %5574 = vmatpush1.msra.mxu0 0.0
    %5575 = vmatprep.subr.mxu0 0.0
    %5576 = vmatpush1.msra.mxu0 0.0
    %5577 = vmatprep.subr.mxu0 0.0
    %5578 = vmatpush1.msra.mxu0 0.0
    %5579 = vmatprep.subr.mxu0 0.0
    %5580 = vmatpush1.msra.mxu0 0.0
    %5581 = vmatprep.subr.mxu0 0.0
    %5582 = vmatpush1.msra.mxu0 0.0
    %5583 = vmatprep.subr.mxu0 0.0
    %5584 = vmatpush1.msra.mxu0 0.0
    %5585 = vmatprep.subr.mxu0 0.0
    %5586 = vmatpush1.msra.mxu0 0.0
    %5587 = vmatprep.subr.mxu0 0.0
    %5588 = vmatpush1.msra.mxu0 0.0
    %5589 = vmatprep.subr.mxu0 0.0
    %5590 = vmatpush1.msra.mxu0 0.0
    %5591 = vmatprep.subr.mxu0 0.0
    %5592 = vmatpush1.msra.mxu0 0.0
    %5593 = vmatprep.subr.mxu0 0.0
    %5594 = vmatpush1.msra.mxu0 0.0
    %5595 = vmatprep.subr.mxu0 0.0
    %5596 = vmatpush1.msra.mxu0 0.0
    %5597 = vmatprep.subr.mxu0 0.0
    %5598 = vmatpush1.msra.mxu0 0.0
    %5599 = vmatprep.mubr.f32.mxu0 0.0
    %5600 = vmatmul.mubr.f32.gmra.mrb[0].mxu0 %v5530
    %v5601 = vpop.f32.mrb[0].mxu0
    %v5602 = vadd.f32 %v5527, %v5601
    %v5603 = vpop.f32.mrb[0].mxu0
    %5604 = vmatprep.mubr.f32.mxu0 0.0
    %5605 = vmatmul.mubr.f32.gmra.mrb[0].mxu0 %v5533
    %v5606 = vpop.f32.mrb[0].mxu0
    %v5607 = vadd.f32 %v5527, %v5606
    %v5608 = vpop.f32.mrb[0].mxu0
    %5609 = vdwg.mxu0
    %v5610 = vmax.f32 %v5602, 0.0
    %v5611 = vmax.f32 %v5607, 0.0
    %5612 = vmatprep.subr.mxu0 0.0
    %5613 = vmatpush1.msra.mxu0 %v5610
    %5614 = vmatprep.subr.mxu0 0.0
    %5615 = vmatpush1.msra.mxu0 %v5611
    %5616 = vmatprep.subr.mxu0 0.0
    %5617 = vmatpush1.msra.mxu0 0.0
    %5618 = vmatprep.subr.mxu0 0.0
    %5619 = vmatpush1.msra.mxu0 0.0
    %5620 = vmatprep.subr.mxu0 0.0
    %5621 = vmatpush1.msra.mxu0 0.0
    %5622 = vmatprep.subr.mxu0 0.0
    %5623 = vmatpush1.msra.mxu0 0.0
    %5624 = vmatprep.subr.mxu0 0.0
    %5625 = vmatpush1.msra.mxu0 0.0
    %5626 = vmatprep.subr.mxu0 0.0
    %5627 = vmatpush1.msra.mxu0 0.0
    %5628 = vmatprep.subr.mxu0 0.0
    %5629 = vmatpush1.msra.mxu0 0.0
    %5630 = vmatprep.subr.mxu0 0.0
    %5631 = vmatpush1.msra.mxu0 0.0
    %5632 = vmatprep.subr.mxu0 0.0
    %5633 = vmatpush1.msra.mxu0 0.0
    %5634 = vmatprep.subr.mxu0 0.0
    %5635 = vmatpush1.msra.mxu0 0.0
    %5636 = vmatprep.subr.mxu0 0.0
    %5637 = vmatpush1.msra.mxu0 0.0
    %5638 = vmatprep.subr.mxu0 0.0
    %5639 = vmatpush1.msra.mxu0 0.0
    %5640 = vmatprep.subr.mxu0 0.0
    %5641 = vmatpush1.msra.mxu0 0.0
    %5642 = vmatprep.subr.mxu0 0.0
    %5643 = vmatpush1.msra.mxu0 0.0
    %5644 = vmatprep.subr.mxu0 0.0
    %5645 = vmatpush1.msra.mxu0 0.0
    %5646 = vmatprep.subr.mxu0 0.0
    %5647 = vmatpush1.msra.mxu0 0.0
    %5648 = vmatprep.subr.mxu0 0.0
    %5649 = vmatpush1.msra.mxu0 0.0
    %5650 = vmatprep.subr.mxu0 0.0
    %5651 = vmatpush1.msra.mxu0 0.0
    %5652 = vmatprep.subr.mxu0 0.0
    %5653 = vmatpush1.msra.mxu0 0.0
    %5654 = vmatprep.subr.mxu0 0.0
    %5655 = vmatpush1.msra.mxu0 0.0
    %5656 = vmatprep.subr.mxu0 0.0
    %5657 = vmatpush1.msra.mxu0 0.0
    %5658 = vmatprep.subr.mxu0 0.0
    %5659 = vmatpush1.msra.mxu0 0.0
    %5660 = vmatprep.subr.mxu0 0.0
    %5661 = vmatpush1.msra.mxu0 0.0
    %5662 = vmatprep.subr.mxu0 0.0
    %5663 = vmatpush1.msra.mxu0 0.0
    %5664 = vmatprep.subr.mxu0 0.0
    %5665 = vmatpush1.msra.mxu0 0.0
    %5666 = vmatprep.subr.mxu0 0.0
    %5667 = vmatpush1.msra.mxu0 0.0
    %5668 = vmatprep.subr.mxu0 0.0
    %5669 = vmatpush1.msra.mxu0 0.0
    %5670 = vmatprep.subr.mxu0 0.0
    %5671 = vmatpush1.msra.mxu0 0.0
    %5672 = vmatprep.subr.mxu0 0.0
    %5673 = vmatpush1.msra.mxu0 0.0
    %5674 = vmatprep.subr.mxu0 0.0
    %5675 = vmatpush1.msra.mxu0 0.0
    %5676 = vmatprep.mubr.f32.mxu0 0.0
    %5677 = vmatmul.mubr.f32.gmra.mrb[0].mxu0 %v193
    %v5678 = vpop.f32.mrb[0].mxu0
    %v5679 = vadd.f32 0.0, %v5678
    %v5680 = vpop.f32.mrb[0].mxu0
    %5681 = vdwg.mxu0
    %5682 = vmatprep.subr.mxu0 0.0
    %5683 = vmatpush1.msra.mxu0 %v5610
    %5684 = vmatprep.subr.mxu0 0.0
    %5685 = vmatpush1.msra.mxu0 %v5611
    %5686 = vmatprep.subr.mxu0 0.0
    %5687 = vmatpush1.msra.mxu0 0.0
    %5688 = vmatprep.subr.mxu0 0.0
    %5689 = vmatpush1.msra.mxu0 0.0
    %5690 = vmatprep.subr.mxu0 0.0
    %5691 = vmatpush1.msra.mxu0 0.0
    %5692 = vmatprep.subr.mxu0 0.0
    %5693 = vmatpush1.msra.mxu0 0.0
    %5694 = vmatprep.subr.mxu0 0.0
    %5695 = vmatpush1.msra.mxu0 0.0
    %5696 = vmatprep.subr.mxu0 0.0
    %5697 = vmatpush1.msra.mxu0 0.0
    %5698 = vmatprep.subr.mxu0 0.0
    %5699 = vmatpush1.msra.mxu0 0.0
    %5700 = vmatprep.subr.mxu0 0.0
    %5701 = vmatpush1.msra.mxu0 0.0
    %5702 = vmatprep.subr.mxu0 0.0
    %5703 = vmatpush1.msra.mxu0 0.0
    %5704 = vmatprep.subr.mxu0 0.0
    %5705 = vmatpush1.msra.mxu0 0.0
    %5706 = vmatprep.subr.mxu0 0.0
    %5707 = vmatpush1.msra.mxu0 0.0
    %5708 = vmatprep.subr.mxu0 0.0
    %5709 = vmatpush1.msra.mxu0 0.0
    %5710 = vmatprep.subr.mxu0 0.0
    %5711 = vmatpush1.msra.mxu0 0.0
    %5712 = vmatprep.subr.mxu0 0.0
    %5713 = vmatpush1.msra.mxu0 0.0
    %5714 = vmatprep.subr.mxu0 0.0
    %5715 = vmatpush1.msra.mxu0 0.0
    %5716 = vmatprep.subr.mxu0 0.0
    %5717 = vmatpush1.msra.mxu0 0.0
    %5718 = vmatprep.subr.mxu0 0.0
    %5719 = vmatpush1.msra.mxu0 0.0
    %5720 = vmatprep.subr.mxu0 0.0
    %5721 = vmatpush1.msra.mxu0 0.0
    %5722 = vmatprep.subr.mxu0 0.0
    %5723 = vmatpush1.msra.mxu0 0.0
    %5724 = vmatprep.subr.mxu0 0.0
    %5725 = vmatpush1.msra.mxu0 0.0
    %5726 = vmatprep.subr.mxu0 0.0
    %5727 = vmatpush1.msra.mxu0 0.0
    %5728 = vmatprep.subr.mxu0 0.0
    %5729 = vmatpush1.msra.mxu0 0.0
    %5730 = vmatprep.subr.mxu0 0.0
    %5731 = vmatpush1.msra.mxu0 0.0
    %5732 = vmatprep.subr.mxu0 0.0
    %5733 = vmatpush1.msra.mxu0 0.0
    %5734 = vmatprep.subr.mxu0 0.0
    %5735 = vmatpush1.msra.mxu0 0.0
    %5736 = vmatprep.subr.mxu0 0.0
    %5737 = vmatpush1.msra.mxu0 0.0
    %5738 = vmatprep.subr.mxu0 0.0
    %5739 = vmatpush1.msra.mxu0 0.0
    %5740 = vmatprep.subr.mxu0 0.0
    %5741 = vmatpush1.msra.mxu0 0.0
    %5742 = vmatprep.subr.mxu0 0.0
    %5743 = vmatpush1.msra.mxu0 0.0
    %5744 = vmatprep.subr.mxu0 0.0
    %5745 = vmatpush1.msra.mxu0 0.0
    %5746 = vmatprep.mubr.f32.mxu0 0.0
    %5747 = vmatmul.mubr.f32.gmra.mrb[0].mxu0 %v266
    %v5748 = vpop.f32.mrb[0].mxu0
    %v5749 = vadd.f32 0.0, %v5748
    %v5750 = vpop.f32.mrb[0].mxu0
    %5751 = vdwg.mxu0
    %v5752 = vmul.f32 %v5679, %v5749
    %v5753 = vsel %vm191, %v5752, 0.0
    %5754 = vadd.xlane.f32.xlu0 %v5753
    %v5755 = vpop.xlane.xlu0 %5754
    %v5756 = vadd.f32 %v3055, %v5755
    %5757 = vst [vmem:[#allocation19] sm:$0xff] %v5756
    // Predicated region
    $region110: #{tpu_custom_call.1} parent=1 // pred_check
      _
    $region111: #{tpu_custom_call.1} parent=1 // pred_check_branch
      %5759 = sbr.rel (0) target = $region113
    $region112: #{tpu_custom_call.1} parent=1 // pred_region
      %s5761 = ssub.s32 128, 128
      %5762 = vsyncadd [#allocation4], %s5761
      %s5764 = sshll.u32 [#allocation19], 4
      %s5765 = int_to_ptr.vmem [resolvable:$true] %s5764
      %5767 = dma.vmem_to_hbm [thread:$0]  %s5765, 128, %s17, [#allocation4]
    $region113: #{tpu_custom_call.1} parent=1 // pred_fallthru
      _
    // Predicated region
    $region114: #{tpu_custom_call.1} parent=1 // pred_check
      _
    $region115: #{tpu_custom_call.1} parent=1 // pred_check_branch
      %5769 = sbr.rel (0) target = $region117
    $region116: #{tpu_custom_call.1} parent=1 // pred_region
      %5770 = dma.done [#allocation4], 128
    $region117: #{tpu_custom_call.1} parent=1 // pred_fallthru
      _
    %5771 = vsyncpa [#allocation3], 1
    %5772 = vsyncpa [#allocation6], 1
    %5773 = vsyncpa [#allocation9], 1
    %5774 = vsyncpa [#allocation12], 1
    %5775 = vsyncpa [#allocation15], 1
    %5776 = vsyncpa [#allocation18], 1
    %5777 = vsyncpa [#allocation4], 1

</llo_original>
